<compile_context>
chip_gen: v7x
topology: tpu7x:2x2x1
jax: 0.10.0
libtpu: 0.0.40
codegen_flags: <defaults>
</compile_context>

<pallas_src>
import math

import jax
import jax.numpy as jnp
from jax.experimental import pallas as pl
from jax.experimental.pallas import tpu as pltpu


# ---------------------------------------------------------------------------
# Tiling helpers
# ---------------------------------------------------------------------------
def _pick_tile(dim, cap, align):
    """Largest tile <= cap that divides `dim` and is a multiple of `align`
    (falls back to the full dim, which is always a legal block)."""
    if dim <= cap:
        return dim
    t = (cap // align) * align
    while t >= align:
        if dim % t == 0:
            return t
        t -= align
    return dim


# ---------------------------------------------------------------------------
# Pallas kernels
# ---------------------------------------------------------------------------
def _linear_kernel_single_k(act):
    """y = act(x @ w + b) with the whole K dim in one block (no scratch)."""

    def kernel(x_ref, w_ref, b_ref, o_ref):
        z = jnp.dot(x_ref[...], w_ref[...],
                    preferred_element_type=jnp.float32) + b_ref[...]
        if act == "relu":
            z = jnp.maximum(z, 0.0)
        o_ref[...] = z.astype(o_ref.dtype)

    return kernel


def _linear_kernel_multi_k(act):
    """y = act(x @ w + b), accumulated over the (innermost) K grid axis."""

    def kernel(x_ref, w_ref, b_ref, o_ref, acc_ref):
        k = pl.program_id(2)

        @pl.when(k == 0)
        def _():
            acc_ref[...] = jnp.zeros_like(acc_ref)

        acc_ref[...] += jnp.dot(x_ref[...], w_ref[...],
                                preferred_element_type=jnp.float32)

        @pl.when(k == pl.num_programs(2) - 1)
        def _():
            z = acc_ref[...] + b_ref[...]
            if act == "relu":
                z = jnp.maximum(z, 0.0)
            o_ref[...] = z.astype(o_ref.dtype)

    return kernel


def linear(x, w, b, act="none", out_dtype=jnp.bfloat16):
    """act(x @ w + b).  x: (M, K) bf16, w: (K, N) bf16, b: (1, N) f32."""
    M, K = x.shape
    K2, N = w.shape
    assert K == K2 and b.shape == (1, N)

    tm = _pick_tile(M, 256, 8)
    tn = _pick_tile(N, 512, 128)
    # If there is only a single (M, N) block, split N so the v7x megacore has
    # at least two parallel blocks (e.g. conv3: N=256 -> 2 x 128 lanes).
    if M // tm == 1 and N // tn == 1 and N % 256 == 0:
        tn = N // 2
    tk = K if K <= 2048 else _pick_tile(K, 1024, 128)
    nm, nn, nk = M // tm, N // tn, K // tk

    if nk == 1:
        kernel = _linear_kernel_single_k(act)
        scratch = []
    else:
        kernel = _linear_kernel_multi_k(act)
        scratch = [pltpu.VMEM((tm, tn), jnp.float32)]

    return pl.pallas_call(
        kernel,
        out_shape=jax.ShapeDtypeStruct((M, N), out_dtype),
        grid_spec=pltpu.PrefetchScalarGridSpec(
            num_scalar_prefetch=0,
            grid=(nm, nn, nk),
            in_specs=[
                pl.BlockSpec((tm, tk), lambda i, j, k: (i, k)),
                pl.BlockSpec((tk, tn), lambda i, j, k: (k, j)),
                pl.BlockSpec((1, tn), lambda i, j, k: (0, j)),
            ],
            out_specs=pl.BlockSpec((tm, tn), lambda i, j, k: (i, j)),
            scratch_shapes=scratch,
        ),
        compiler_params=pltpu.CompilerParams(
            dimension_semantics=("parallel", "parallel", "arbitrary")
        ),
    )(x, w, b)


def _head_kernel(x_ref, w_ref, b_ref, o_ref):
    """Fused fc_energy + fc2 + softmax.  Column 0 = raw energy, columns 1..10
    = softmax probabilities, remaining (padded) columns are zero weights."""
    z = jnp.dot(x_ref[...], w_ref[...],
                preferred_element_type=jnp.float32) + b_ref[...]
    col = jax.lax.broadcasted_iota(jnp.int32, z.shape, 1)
    is_logit = (col >= 1) & (col <= 10)
    zl = jnp.where(is_logit, z, -jnp.inf)
    m = jnp.max(zl, axis=-1, keepdims=True)
    e = jnp.exp(zl - m)                       # masked cols -> exp(-inf) = 0
    probs = e / jnp.sum(e, axis=-1, keepdims=True)
    o_ref[...] = jnp.where(col == 0, z, probs).astype(o_ref.dtype)


def head_linear(x, w, b):
    """x: (B, 2048) bf16, w: (2048, 128) bf16, b: (1, 128) f32 -> (B, 128) f32."""
    B, K = x.shape
    _, N = w.shape
    return pl.pallas_call(
        _head_kernel,
        out_shape=jax.ShapeDtypeStruct((B, N), jnp.float32),
        grid=(1,),
        in_specs=[
            pl.BlockSpec((B, K), lambda i: (0, 0)),
            pl.BlockSpec((K, N), lambda i: (0, 0)),
            pl.BlockSpec((1, N), lambda i: (0, 0)),
        ],
        out_specs=pl.BlockSpec((B, N), lambda i: (0, 0)),
        compiler_params=pltpu.CompilerParams(
            dimension_semantics=("arbitrary",)
        ),
    )(x, w, b)


def _maxpool_kernel(Ho, C):
    def kernel(x_ref, o_ref):
        # x_ref: (1, H, Wo, 2*C)  (width pairs folded into the lane dim)
        # o_ref: (1, Ho, Wo, C)
        for r in range(Ho):
            m = jnp.maximum(x_ref[0, 2 * r], x_ref[0, 2 * r + 1])   # (Wo, 2C)
            o_ref[0, r] = jnp.maximum(m[:, :C], m[:, C:])

    return kernel


def maxpool2x2(y):
    """2x2 / stride-2 max pool on NHWC.  Reads the activation exactly once:
    the only wrapper op is a free contiguous reshape folding width pairs into
    the channel (lane) dim; both reductions happen inside the kernel."""
    B, H, W, C = y.shape
    Ho, Wo = H // 2, W // 2
    y2 = y.reshape(B, H, Wo, 2 * C)            # contiguous reshape, no copy
    return pl.pallas_call(
        _maxpool_kernel(Ho, C),
        out_shape=jax.ShapeDtypeStruct((B, Ho, Wo, C), y.dtype),
        grid=(B,),
        in_specs=[pl.BlockSpec((1, H, Wo, 2 * C), lambda b: (b, 0, 0, 0))],
        out_specs=pl.BlockSpec((1, Ho, Wo, C), lambda b: (b, 0, 0, 0)),
        compiler_params=pltpu.CompilerParams(
            dimension_semantics=("parallel",)
        ),
    )(y2)


# ---------------------------------------------------------------------------
# Glue (data movement / one-time parameter preparation only)
# ---------------------------------------------------------------------------
def im2col_3x3(x):
    """x: (B, H, W, C) NHWC bf16, padding=1, stride=1 -> (B*H*W, 9*C).
    Patch channel order is [kh, kw, cin]."""
    B, H, W, C = x.shape
    xp = jnp.pad(x, ((0, 0), (1, 1), (1, 1), (0, 0)))
    cols = [xp[:, kh:kh + H, kw:kw + W, :] for kh in range(3) for kw in range(3)]
    patches = jnp.concatenate(cols, axis=-1)          # (B, H, W, 9*C)
    return patches.reshape(B * H * W, 9 * C)


def init_params(key):
    """PyTorch-layout params, PyTorch default init U(-1/sqrt(fan_in), ...)."""

    def u(k, shape, fan_in):
        bound = 1.0 / math.sqrt(fan_in)
        return jax.random.uniform(k, shape, jnp.float32, -bound, bound)

    ks = jax.random.split(key, 12)
    return {
        "conv1_w": u(ks[0], (64, 3, 3, 3), 3 * 9),
        "conv1_b": u(ks[1], (64,), 3 * 9),
        "conv2_w": u(ks[2], (128, 64, 3, 3), 64 * 9),
        "conv2_b": u(ks[3], (128,), 64 * 9),
        "conv3_w": u(ks[4], (256, 128, 3, 3), 128 * 9),
        "conv3_b": u(ks[5], (256,), 128 * 9),
        "fc1_w": u(ks[6], (2048, 4096), 4096),
        "fc1_b": u(ks[7], (2048,), 4096),
        "fce_w": u(ks[8], (1, 2048), 2048),
        "fce_b": u(ks[9], (1,), 2048),
        "fc2_w": u(ks[10], (10, 2048), 2048),
        "fc2_b": u(ks[11], (10,), 2048),
    }


def prepare_params(p):
    """One-time conversion (outside the jitted forward) of PyTorch-layout f32
    params into the compute layout: bf16 (K, N) GEMM weights, f32 (1, N)
    biases, fc1 rows permuted to NHWC-flatten order, fused+padded head."""

    def conv_w(w):  # (Cout, Cin, 3, 3) -> (9*Cin, Cout) in [kh, kw, cin] order
        Cout, Cin = w.shape[0], w.shape[1]
        return (jnp.transpose(w, (2, 3, 1, 0))
                .reshape(9 * Cin, Cout).astype(jnp.bfloat16))

    # fc1: PyTorch (2048, 4096) with inputs flattened NCHW (c, h, w) ->
    # (4096, 2048) with rows ordered NHWC (h, w, c).
    fc1 = p["fc1_w"].reshape(2048, 256, 4, 4)
    fc1 = jnp.transpose(fc1, (2, 3, 1, 0)).reshape(4096, 2048)

    # Fused head: col 0 = fc_energy, cols 1..10 = fc2, cols 11..127 zero pad.
    head_w = jnp.zeros((2048, 128), jnp.float32)
    head_w = head_w.at[:, 0:1].set(p["fce_w"].T)
    head_w = head_w.at[:, 1:11].set(p["fc2_w"].T)
    head_b = jnp.zeros((128,), jnp.float32)
    head_b = head_b.at[0:1].set(p["fce_b"])
    head_b = head_b.at[1:11].set(p["fc2_b"])

    return {
        "conv1_w": conv_w(p["conv1_w"]), "conv1_b": p["conv1_b"].reshape(1, -1),
        "conv2_w": conv_w(p["conv2_w"]), "conv2_b": p["conv2_b"].reshape(1, -1),
        "conv3_w": conv_w(p["conv3_w"]), "conv3_b": p["conv3_b"].reshape(1, -1),
        "fc1_w": fc1.astype(jnp.bfloat16), "fc1_b": p["fc1_b"].reshape(1, -1),
        "head_w": head_w.astype(jnp.bfloat16), "head_b": head_b.reshape(1, -1),
    }


def cnn_forward(p, x_nchw):
    """Returns (energy (B,1), probs (B,10)) exactly like CNNModel.forward."""
    B = x_nchw.shape[0]
    x = jnp.transpose(x_nchw, (0, 2, 3, 1)).astype(jnp.bfloat16)  # NCHW->NHWC

    def conv_relu_pool(x, wm, b):
        Bx, H, W, _ = x.shape
        Cout = wm.shape[1]
        y = linear(im2col_3x3(x), wm, b, act="relu", out_dtype=jnp.bfloat16)
        return maxpool2x2(y.reshape(Bx, H, W, Cout))

    x = conv_relu_pool(x, p["conv1_w"], p["conv1_b"])   # (B, 16, 16,  64)
    x = conv_relu_pool(x, p["conv2_w"], p["conv2_b"])   # (B,  8,  8, 128)
    x = conv_relu_pool(x, p["conv3_w"], p["conv3_b"])   # (B,  4,  4, 256)

    # fc1 rows are pre-permuted to NHWC order -> plain (free) flatten.
    feat = x.reshape(B, 4 * 4 * 256)                                # bf16
    shared = linear(feat, p["fc1_w"], p["fc1_b"], act="relu",
                    out_dtype=jnp.bfloat16)                         # (B, 2048)

    head = head_linear(shared, p["head_w"], p["head_b"])            # (B, 128) f32
    energy = head[:, 0:1]                                           # (B, 1)
    probs = head[:, 1:11]                                           # (B, 10)
    return energy, probs


if __name__ == "__main__":
    key = jax.random.PRNGKey(0)
    pkey, xkey = jax.random.split(key)
    params = prepare_params(init_params(pkey))
    x = jax.random.normal(xkey, (2, 3, 32, 32), jnp.float32)

    energy, probs = jax.jit(cnn_forward)(params, x)
    jax.block_until_ready((energy, probs))

    assert energy.shape == (2, 1) and probs.shape == (2, 10)
    assert bool(jnp.all(jnp.isfinite(energy))) and bool(jnp.all(jnp.isfinite(probs)))
    assert bool(jnp.allclose(jnp.sum(probs, axis=-1), 1.0, atol=1e-2))
    print("KERNEL_OK")
</pallas_src>

<mosaic_0001>
module attributes {stable_mosaic.version = 11 : i64} {
  func.func @kernel(%arg0: i32, %arg1: i32, %arg2: i32, %arg3: memref<256x27xbf16, #tpu.memory_space<vmem>>, %arg4: memref<27x64xbf16, #tpu.memory_space<vmem>>, %arg5: memref<1x64xf32, #tpu.memory_space<vmem>>, %arg6: memref<256x64xbf16, #tpu.memory_space<vmem>>) attributes {dimension_semantics = [#tpu.dimension_semantics<parallel>, #tpu.dimension_semantics<parallel>, #tpu.dimension_semantics<arbitrary>], iteration_bounds = array<i64: 8, 1, 1>, scalar_prefetch = 0 : i64, scratch_operands = 0 : i64, tpu.core_type = #tpu.core_type<tc>, window_params = [{transform_indices = @transform_0, window_bounds = array<i64: 256, 27>}, {transform_indices = @transform_1, window_bounds = array<i64: 27, 64>}, {transform_indices = @transform_2, window_bounds = array<i64: 1, 64>}, {transform_indices = @transform_3, window_bounds = array<i64: 256, 64>}]} {
    %c0 = arith.constant 0 : index
    %c0_0 = arith.constant 0 : index
    %0 = vector.load %arg3[%c0, %c0_0] : memref<256x27xbf16, #tpu.memory_space<vmem>>, vector<256x27xbf16>
    %c0_1 = arith.constant 0 : index
    %c0_2 = arith.constant 0 : index
    %1 = vector.load %arg4[%c0_1, %c0_2] : memref<27x64xbf16, #tpu.memory_space<vmem>>, vector<27x64xbf16>
    %cst = arith.constant dense<0.000000e+00> : vector<256x64xf32>
    %2 = tpu.matmul %0, %1, %cst {dimension_numbers = #tpu.dot_dimension_numbers<[1], [0], [0], [1], [0, 0, 1, 1], [], []>} : vector<256x27xbf16>, vector<27x64xbf16>, vector<256x64xf32> -> vector<256x64xf32>
    %c0_3 = arith.constant 0 : index
    %c0_4 = arith.constant 0 : index
    %3 = vector.load %arg5[%c0_3, %c0_4] : memref<1x64xf32, #tpu.memory_space<vmem>>, vector<1x64xf32>
    %4 = vector.broadcast %3 : vector<1x64xf32> to vector<256x64xf32>
    %5 = arith.addf %2, %4 : vector<256x64xf32>
    %cst_5 = arith.constant 0.000000e+00 : f32
    %6 = vector.broadcast %cst_5 : f32 to vector<256x64xf32>
    %7 = arith.maximumf %5, %6 : vector<256x64xf32>
    %8 = arith.truncf %7 : vector<256x64xf32> to vector<256x64xbf16>
    %c0_6 = arith.constant 0 : index
    %c0_7 = arith.constant 0 : index
    %9 = vector.load %arg6[%c0_6, %c0_7] : memref<256x64xbf16, #tpu.memory_space<vmem>>, vector<256x64xbf16>
    tpu.vector_store %arg6[%c0_6, %c0_7], %8 {strides = array<i32>} : memref<256x64xbf16, #tpu.memory_space<vmem>>, vector<256x64xbf16>,
    return
  }
  func.func @transform_0(%arg0: i32, %arg1: i32, %arg2: i32) -> (i32, i32) {
    %c0_i32 = arith.constant 0 : i32
    return %arg0, %arg2 : i32, i32
  }
  func.func @transform_1(%arg0: i32, %arg1: i32, %arg2: i32) -> (i32, i32) {
    %c0_i32 = arith.constant 0 : i32
    return %arg2, %arg1 : i32, i32
  }
  func.func @transform_2(%arg0: i32, %arg1: i32, %arg2: i32) -> (i32, i32) {
    %c0_i32 = arith.constant 0 : i32
    %c0_i32_0 = arith.constant 0 : i32
    return %c0_i32, %arg1 : i32, i32
  }
  func.func @transform_3(%arg0: i32, %arg1: i32, %arg2: i32) -> (i32, i32) {
    %c0_i32 = arith.constant 0 : i32
    return %arg0, %arg1 : i32, i32
  }
}

module attributes {stable_mosaic.version = 11 : i64} {
  func.func @kernel(%arg0: i32, %arg1: memref<1x32x16x128xbf16, #tpu.memory_space<vmem>>, %arg2: memref<1x16x16x64xbf16, #tpu.memory_space<vmem>>) attributes {dimension_semantics = [#tpu.dimension_semantics<parallel>], iteration_bounds = array<i64: 2>, scalar_prefetch = 0 : i64, scratch_operands = 0 : i64, tpu.core_type = #tpu.core_type<tc>, window_params = [{transform_indices = @transform_0, window_bounds = array<i64: 1, 32, 16, 128>}, {transform_indices = @transform_1, window_bounds = array<i64: 1, 16, 16, 64>}]} {
    %c0 = arith.constant 0 : index
    %c0_0 = arith.constant 0 : index
    %c0_1 = arith.constant 0 : index
    %c0_2 = arith.constant 0 : index
    %0 = vector.load %arg1[%c0, %c0_0, %c0_1, %c0_2] : memref<1x32x16x128xbf16, #tpu.memory_space<vmem>>, vector<1x1x16x128xbf16>
    %1 = vector.shape_cast %0 : vector<1x1x16x128xbf16> to vector<16x128xbf16>
    %c0_3 = arith.constant 0 : index
    %c1 = arith.constant 1 : index
    %c0_4 = arith.constant 0 : index
    %c0_5 = arith.constant 0 : index
    %2 = vector.load %arg1[%c0_3, %c1, %c0_4, %c0_5] : memref<1x32x16x128xbf16, #tpu.memory_space<vmem>>, vector<1x1x16x128xbf16>
    %3 = vector.shape_cast %2 : vector<1x1x16x128xbf16> to vector<16x128xbf16>
    %4 = arith.maximumf %1, %3 : vector<16x128xbf16>
    %5 = vector.extract_strided_slice %4 {offsets = [0, 0], sizes = [16, 64], strides = [1, 1]} : vector<16x128xbf16> to vector<16x64xbf16>
    %6 = vector.extract_strided_slice %4 {offsets = [0, 64], sizes = [16, 64], strides = [1, 1]} : vector<16x128xbf16> to vector<16x64xbf16>
    %7 = arith.maximumf %5, %6 : vector<16x64xbf16>
    %c0_6 = arith.constant 0 : index
    %c0_7 = arith.constant 0 : index
    %c0_8 = arith.constant 0 : index
    %c0_9 = arith.constant 0 : index
    %8 = vector.load %arg2[%c0_6, %c0_7, %c0_8, %c0_9] : memref<1x16x16x64xbf16, #tpu.memory_space<vmem>>, vector<1x1x16x64xbf16>
    %9 = vector.shape_cast %8 : vector<1x1x16x64xbf16> to vector<16x64xbf16>
    %10 = vector.shape_cast %7 : vector<16x64xbf16> to vector<1x1x16x64xbf16>
    tpu.vector_store %arg2[%c0_6, %c0_7, %c0_8, %c0_9], %10 {strides = array<i32>} : memref<1x16x16x64xbf16, #tpu.memory_space<vmem>>, vector<1x1x16x64xbf16>,
    %c0_10 = arith.constant 0 : index
    %c2 = arith.constant 2 : index
    %c0_11 = arith.constant 0 : index
    %c0_12 = arith.constant 0 : index
    %11 = vector.load %arg1[%c0_10, %c2, %c0_11, %c0_12] : memref<1x32x16x128xbf16, #tpu.memory_space<vmem>>, vector<1x1x16x128xbf16>
    %12 = vector.shape_cast %11 : vector<1x1x16x128xbf16> to vector<16x128xbf16>
    %c0_13 = arith.constant 0 : index
    %c3 = arith.constant 3 : index
    %c0_14 = arith.constant 0 : index
    %c0_15 = arith.constant 0 : index
    %13 = vector.load %arg1[%c0_13, %c3, %c0_14, %c0_15] : memref<1x32x16x128xbf16, #tpu.memory_space<vmem>>, vector<1x1x16x128xbf16>
    %14 = vector.shape_cast %13 : vector<1x1x16x128xbf16> to vector<16x128xbf16>
    %15 = arith.maximumf %12, %14 : vector<16x128xbf16>
    %16 = vector.extract_strided_slice %15 {offsets = [0, 0], sizes = [16, 64], strides = [1, 1]} : vector<16x128xbf16> to vector<16x64xbf16>
    %17 = vector.extract_strided_slice %15 {offsets = [0, 64], sizes = [16, 64], strides = [1, 1]} : vector<16x128xbf16> to vector<16x64xbf16>
    %18 = arith.maximumf %16, %17 : vector<16x64xbf16>
    %c0_16 = arith.constant 0 : index
    %c1_17 = arith.constant 1 : index
    %c0_18 = arith.constant 0 : index
    %c0_19 = arith.constant 0 : index
    %19 = vector.load %arg2[%c0_16, %c1_17, %c0_18, %c0_19] : memref<1x16x16x64xbf16, #tpu.memory_space<vmem>>, vector<1x1x16x64xbf16>
    %20 = vector.shape_cast %19 : vector<1x1x16x64xbf16> to vector<16x64xbf16>
    %21 = vector.shape_cast %18 : vector<16x64xbf16> to vector<1x1x16x64xbf16>
    tpu.vector_store %arg2[%c0_16, %c1_17, %c0_18, %c0_19], %21 {strides = array<i32>} : memref<1x16x16x64xbf16, #tpu.memory_space<vmem>>, vector<1x1x16x64xbf16>,
    %c0_20 = arith.constant 0 : index
    %c4 = arith.constant 4 : index
    %c0_21 = arith.constant 0 : index
    %c0_22 = arith.constant 0 : index
    %22 = vector.load %arg1[%c0_20, %c4, %c0_21, %c0_22] : memref<1x32x16x128xbf16, #tpu.memory_space<vmem>>, vector<1x1x16x128xbf16>
    %23 = vector.shape_cast %22 : vector<1x1x16x128xbf16> to vector<16x128xbf16>
    %c0_23 = arith.constant 0 : index
    %c5 = arith.constant 5 : index
    %c0_24 = arith.constant 0 : index
    %c0_25 = arith.constant 0 : index
    %24 = vector.load %arg1[%c0_23, %c5, %c0_24, %c0_25] : memref<1x32x16x128xbf16, #tpu.memory_space<vmem>>, vector<1x1x16x128xbf16>
    %25 = vector.shape_cast %24 : vector<1x1x16x128xbf16> to vector<16x128xbf16>
    %26 = arith.maximumf %23, %25 : vector<16x128xbf16>
    %27 = vector.extract_strided_slice %26 {offsets = [0, 0], sizes = [16, 64], strides = [1, 1]} : vector<16x128xbf16> to vector<16x64xbf16>
    %28 = vector.extract_strided_slice %26 {offsets = [0, 64], sizes = [16, 64], strides = [1, 1]} : vector<16x128xbf16> to vector<16x64xbf16>
    %29 = arith.maximumf %27, %28 : vector<16x64xbf16>
    %c0_26 = arith.constant 0 : index
    %c2_27 = arith.constant 2 : index
    %c0_28 = arith.constant 0 : index
    %c0_29 = arith.constant 0 : index
    %30 = vector.load %arg2[%c0_26, %c2_27, %c0_28, %c0_29] : memref<1x16x16x64xbf16, #tpu.memory_space<vmem>>, vector<1x1x16x64xbf16>
    %31 = vector.shape_cast %30 : vector<1x1x16x64xbf16> to vector<16x64xbf16>
    %32 = vector.shape_cast %29 : vector<16x64xbf16> to vector<1x1x16x64xbf16>
    tpu.vector_store %arg2[%c0_26, %c2_27, %c0_28, %c0_29], %32 {strides = array<i32>} : memref<1x16x16x64xbf16, #tpu.memory_space<vmem>>, vector<1x1x16x64xbf16>,
    %c0_30 = arith.constant 0 : index
    %c6 = arith.constant 6 : index
    %c0_31 = arith.constant 0 : index
    %c0_32 = arith.constant 0 : index
    %33 = vector.load %arg1[%c0_30, %c6, %c0_31, %c0_32] : memref<1x32x16x128xbf16, #tpu.memory_space<vmem>>, vector<1x1x16x128xbf16>
    %34 = vector.shape_cast %33 : vector<1x1x16x128xbf16> to vector<16x128xbf16>
    %c0_33 = arith.constant 0 : index
    %c7 = arith.constant 7 : index
    %c0_34 = arith.constant 0 : index
    %c0_35 = arith.constant 0 : index
    %35 = vector.load %arg1[%c0_33, %c7, %c0_34, %c0_35] : memref<1x32x16x128xbf16, #tpu.memory_space<vmem>>, vector<1x1x16x128xbf16>
    %36 = vector.shape_cast %35 : vector<1x1x16x128xbf16> to vector<16x128xbf16>
    %37 = arith.maximumf %34, %36 : vector<16x128xbf16>
    %38 = vector.extract_strided_slice %37 {offsets = [0, 0], sizes = [16, 64], strides = [1, 1]} : vector<16x128xbf16> to vector<16x64xbf16>
    %39 = vector.extract_strided_slice %37 {offsets = [0, 64], sizes = [16, 64], strides = [1, 1]} : vector<16x128xbf16> to vector<16x64xbf16>
    %40 = arith.maximumf %38, %39 : vector<16x64xbf16>
    %c0_36 = arith.constant 0 : index
    %c3_37 = arith.constant 3 : index
    %c0_38 = arith.constant 0 : index
    %c0_39 = arith.constant 0 : index
    %41 = vector.load %arg2[%c0_36, %c3_37, %c0_38, %c0_39] : memref<1x16x16x64xbf16, #tpu.memory_space<vmem>>, vector<1x1x16x64xbf16>
    %42 = vector.shape_cast %41 : vector<1x1x16x64xbf16> to vector<16x64xbf16>
    %43 = vector.shape_cast %40 : vector<16x64xbf16> to vector<1x1x16x64xbf16>
    tpu.vector_store %arg2[%c0_36, %c3_37, %c0_38, %c0_39], %43 {strides = array<i32>} : memref<1x16x16x64xbf16, #tpu.memory_space<vmem>>, vector<1x1x16x64xbf16>,
    %c0_40 = arith.constant 0 : index
    %c8 = arith.constant 8 : index
    %c0_41 = arith.constant 0 : index
    %c0_42 = arith.constant 0 : index
    %44 = vector.load %arg1[%c0_40, %c8, %c0_41, %c0_42] : memref<1x32x16x128xbf16, #tpu.memory_space<vmem>>, vector<1x1x16x128xbf16>
    %45 = vector.shape_cast %44 : vector<1x1x16x128xbf16> to vector<16x128xbf16>
    %c0_43 = arith.constant 0 : index
    %c9 = arith.constant 9 : index
    %c0_44 = arith.constant 0 : index
    %c0_45 = arith.constant 0 : index
    %46 = vector.load %arg1[%c0_43, %c9, %c0_44, %c0_45] : memref<1x32x16x128xbf16, #tpu.memory_space<vmem>>, vector<1x1x16x128xbf16>
    %47 = vector.shape_cast %46 : vector<1x1x16x128xbf16> to vector<16x128xbf16>
    %48 = arith.maximumf %45, %47 : vector<16x128xbf16>
    %49 = vector.extract_strided_slice %48 {offsets = [0, 0], sizes = [16, 64], strides = [1, 1]} : vector<16x128xbf16> to vector<16x64xbf16>
    %50 = vector.extract_strided_slice %48 {offsets = [0, 64], sizes = [16, 64], strides = [1, 1]} : vector<16x128xbf16> to vector<16x64xbf16>
    %51 = arith.maximumf %49, %50 : vector<16x64xbf16>
    %c0_46 = arith.constant 0 : index
    %c4_47 = arith.constant 4 : index
    %c0_48 = arith.constant 0 : index
    %c0_49 = arith.constant 0 : index
    %52 = vector.load %arg2[%c0_46, %c4_47, %c0_48, %c0_49] : memref<1x16x16x64xbf16, #tpu.memory_space<vmem>>, vector<1x1x16x64xbf16>
    %53 = vector.shape_cast %52 : vector<1x1x16x64xbf16> to vector<16x64xbf16>
    %54 = vector.shape_cast %51 : vector<16x64xbf16> to vector<1x1x16x64xbf16>
    tpu.vector_store %arg2[%c0_46, %c4_47, %c0_48, %c0_49], %54 {strides = array<i32>} : memref<1x16x16x64xbf16, #tpu.memory_space<vmem>>, vector<1x1x16x64xbf16>,
    %c0_50 = arith.constant 0 : index
    %c10 = arith.constant 10 : index
    %c0_51 = arith.constant 0 : index
    %c0_52 = arith.constant 0 : index
    %55 = vector.load %arg1[%c0_50, %c10, %c0_51, %c0_52] : memref<1x32x16x128xbf16, #tpu.memory_space<vmem>>, vector<1x1x16x128xbf16>
    %56 = vector.shape_cast %55 : vector<1x1x16x128xbf16> to vector<16x128xbf16>
    %c0_53 = arith.constant 0 : index
    %c11 = arith.constant 11 : index
    %c0_54 = arith.constant 0 : index
    %c0_55 = arith.constant 0 : index
    %57 = vector.load %arg1[%c0_53, %c11, %c0_54, %c0_55] : memref<1x32x16x128xbf16, #tpu.memory_space<vmem>>, vector<1x1x16x128xbf16>
    %58 = vector.shape_cast %57 : vector<1x1x16x128xbf16> to vector<16x128xbf16>
    %59 = arith.maximumf %56, %58 : vector<16x128xbf16>
    %60 = vector.extract_strided_slice %59 {offsets = [0, 0], sizes = [16, 64], strides = [1, 1]} : vector<16x128xbf16> to vector<16x64xbf16>
    %61 = vector.extract_strided_slice %59 {offsets = [0, 64], sizes = [16, 64], strides = [1, 1]} : vector<16x128xbf16> to vector<16x64xbf16>
    %62 = arith.maximumf %60, %61 : vector<16x64xbf16>
    %c0_56 = arith.constant 0 : index
    %c5_57 = arith.constant 5 : index
    %c0_58 = arith.constant 0 : index
    %c0_59 = arith.constant 0 : index
    %63 = vector.load %arg2[%c0_56, %c5_57, %c0_58, %c0_59] : memref<1x16x16x64xbf16, #tpu.memory_space<vmem>>, vector<1x1x16x64xbf16>
    %64 = vector.shape_cast %63 : vector<1x1x16x64xbf16> to vector<16x64xbf16>
    %65 = vector.shape_cast %62 : vector<16x64xbf16> to vector<1x1x16x64xbf16>
    tpu.vector_store %arg2[%c0_56, %c5_57, %c0_58, %c0_59], %65 {strides = array<i32>} : memref<1x16x16x64xbf16, #tpu.memory_space<vmem>>, vector<1x1x16x64xbf16>,
    %c0_60 = arith.constant 0 : index
    %c12 = arith.constant 12 : index
    %c0_61 = arith.constant 0 : index
    %c0_62 = arith.constant 0 : index
    %66 = vector.load %arg1[%c0_60, %c12, %c0_61, %c0_62] : memref<1x32x16x128xbf16, #tpu.memory_space<vmem>>, vector<1x1x16x128xbf16>
    %67 = vector.shape_cast %66 : vector<1x1x16x128xbf16> to vector<16x128xbf16>
    %c0_63 = arith.constant 0 : index
    %c13 = arith.constant 13 : index
    %c0_64 = arith.constant 0 : index
    %c0_65 = arith.constant 0 : index
    %68 = vector.load %arg1[%c0_63, %c13, %c0_64, %c0_65] : memref<1x32x16x128xbf16, #tpu.memory_space<vmem>>, vector<1x1x16x128xbf16>
    %69 = vector.shape_cast %68 : vector<1x1x16x128xbf16> to vector<16x128xbf16>
    %70 = arith.maximumf %67, %69 : vector<16x128xbf16>
    %71 = vector.extract_strided_slice %70 {offsets = [0, 0], sizes = [16, 64], strides = [1, 1]} : vector<16x128xbf16> to vector<16x64xbf16>
    %72 = vector.extract_strided_slice %70 {offsets = [0, 64], sizes = [16, 64], strides = [1, 1]} : vector<16x128xbf16> to vector<16x64xbf16>
    %73 = arith.maximumf %71, %72 : vector<16x64xbf16>
    %c0_66 = arith.constant 0 : index
    %c6_67 = arith.constant 6 : index
    %c0_68 = arith.constant 0 : index
    %c0_69 = arith.constant 0 : index
    %74 = vector.load %arg2[%c0_66, %c6_67, %c0_68, %c0_69] : memref<1x16x16x64xbf16, #tpu.memory_space<vmem>>, vector<1x1x16x64xbf16>
    %75 = vector.shape_cast %74 : vector<1x1x16x64xbf16> to vector<16x64xbf16>
    %76 = vector.shape_cast %73 : vector<16x64xbf16> to vector<1x1x16x64xbf16>
    tpu.vector_store %arg2[%c0_66, %c6_67, %c0_68, %c0_69], %76 {strides = array<i32>} : memref<1x16x16x64xbf16, #tpu.memory_space<vmem>>, vector<1x1x16x64xbf16>,
    %c0_70 = arith.constant 0 : index
    %c14 = arith.constant 14 : index
    %c0_71 = arith.constant 0 : index
    %c0_72 = arith.constant 0 : index
    %77 = vector.load %arg1[%c0_70, %c14, %c0_71, %c0_72] : memref<1x32x16x128xbf16, #tpu.memory_space<vmem>>, vector<1x1x16x128xbf16>
    %78 = vector.shape_cast %77 : vector<1x1x16x128xbf16> to vector<16x128xbf16>
    %c0_73 = arith.constant 0 : index
    %c15 = arith.constant 15 : index
    %c0_74 = arith.constant 0 : index
    %c0_75 = arith.constant 0 : index
    %79 = vector.load %arg1[%c0_73, %c15, %c0_74, %c0_75] : memref<1x32x16x128xbf16, #tpu.memory_space<vmem>>, vector<1x1x16x128xbf16>
    %80 = vector.shape_cast %79 : vector<1x1x16x128xbf16> to vector<16x128xbf16>
    %81 = arith.maximumf %78, %80 : vector<16x128xbf16>
    %82 = vector.extract_strided_slice %81 {offsets = [0, 0], sizes = [16, 64], strides = [1, 1]} : vector<16x128xbf16> to vector<16x64xbf16>
    %83 = vector.extract_strided_slice %81 {offsets = [0, 64], sizes = [16, 64], strides = [1, 1]} : vector<16x128xbf16> to vector<16x64xbf16>
    %84 = arith.maximumf %82, %83 : vector<16x64xbf16>
    %c0_76 = arith.constant 0 : index
    %c7_77 = arith.constant 7 : index
    %c0_78 = arith.constant 0 : index
    %c0_79 = arith.constant 0 : index
    %85 = vector.load %arg2[%c0_76, %c7_77, %c0_78, %c0_79] : memref<1x16x16x64xbf16, #tpu.memory_space<vmem>>, vector<1x1x16x64xbf16>
    %86 = vector.shape_cast %85 : vector<1x1x16x64xbf16> to vector<16x64xbf16>
    %87 = vector.shape_cast %84 : vector<16x64xbf16> to vector<1x1x16x64xbf16>
    tpu.vector_store %arg2[%c0_76, %c7_77, %c0_78, %c0_79], %87 {strides = array<i32>} : memref<1x16x16x64xbf16, #tpu.memory_space<vmem>>, vector<1x1x16x64xbf16>,
    %c0_80 = arith.constant 0 : index
    %c16 = arith.constant 16 : index
    %c0_81 = arith.constant 0 : index
    %c0_82 = arith.constant 0 : index
    %88 = vector.load %arg1[%c0_80, %c16, %c0_81, %c0_82] : memref<1x32x16x128xbf16, #tpu.memory_space<vmem>>, vector<1x1x16x128xbf16>
    %89 = vector.shape_cast %88 : vector<1x1x16x128xbf16> to vector<16x128xbf16>
    %c0_83 = arith.constant 0 : index
    %c17 = arith.constant 17 : index
    %c0_84 = arith.constant 0 : index
    %c0_85 = arith.constant 0 : index
    %90 = vector.load %arg1[%c0_83, %c17, %c0_84, %c0_85] : memref<1x32x16x128xbf16, #tpu.memory_space<vmem>>, vector<1x1x16x128xbf16>
    %91 = vector.shape_cast %90 : vector<1x1x16x128xbf16> to vector<16x128xbf16>
    %92 = arith.maximumf %89, %91 : vector<16x128xbf16>
    %93 = vector.extract_strided_slice %92 {offsets = [0, 0], sizes = [16, 64], strides = [1, 1]} : vector<16x128xbf16> to vector<16x64xbf16>
    %94 = vector.extract_strided_slice %92 {offsets = [0, 64], sizes = [16, 64], strides = [1, 1]} : vector<16x128xbf16> to vector<16x64xbf16>
    %95 = arith.maximumf %93, %94 : vector<16x64xbf16>
    %c0_86 = arith.constant 0 : index
    %c8_87 = arith.constant 8 : index
    %c0_88 = arith.constant 0 : index
    %c0_89 = arith.constant 0 : index
    %96 = vector.load %arg2[%c0_86, %c8_87, %c0_88, %c0_89] : memref<1x16x16x64xbf16, #tpu.memory_space<vmem>>, vector<1x1x16x64xbf16>
    %97 = vector.shape_cast %96 : vector<1x1x16x64xbf16> to vector<16x64xbf16>
    %98 = vector.shape_cast %95 : vector<16x64xbf16> to vector<1x1x16x64xbf16>
    tpu.vector_store %arg2[%c0_86, %c8_87, %c0_88, %c0_89], %98 {strides = array<i32>} : memref<1x16x16x64xbf16, #tpu.memory_space<vmem>>, vector<1x1x16x64xbf16>,
    %c0_90 = arith.constant 0 : index
    %c18 = arith.constant 18 : index
    %c0_91 = arith.constant 0 : index
    %c0_92 = arith.constant 0 : index
    %99 = vector.load %arg1[%c0_90, %c18, %c0_91, %c0_92] : memref<1x32x16x128xbf16, #tpu.memory_space<vmem>>, vector<1x1x16x128xbf16>
    %100 = vector.shape_cast %99 : vector<1x1x16x128xbf16> to vector<16x128xbf16>
    %c0_93 = arith.constant 0 : index
    %c19 = arith.constant 19 : index
    %c0_94 = arith.constant 0 : index
    %c0_95 = arith.constant 0 : index
    %101 = vector.load %arg1[%c0_93, %c19, %c0_94, %c0_95] : memref<1x32x16x128xbf16, #tpu.memory_space<vmem>>, vector<1x1x16x128xbf16>
    %102 = vector.shape_cast %101 : vector<1x1x16x128xbf16> to vector<16x128xbf16>
    %103 = arith.maximumf %100, %102 : vector<16x128xbf16>
    %104 = vector.extract_strided_slice %103 {offsets = [0, 0], sizes = [16, 64], strides = [1, 1]} : vector<16x128xbf16> to vector<16x64xbf16>
    %105 = vector.extract_strided_slice %103 {offsets = [0, 64], sizes = [16, 64], strides = [1, 1]} : vector<16x128xbf16> to vector<16x64xbf16>
    %106 = arith.maximumf %104, %105 : vector<16x64xbf16>
    %c0_96 = arith.constant 0 : index
    %c9_97 = arith.constant 9 : index
    %c0_98 = arith.constant 0 : index
    %c0_99 = arith.constant 0 : index
    %107 = vector.load %arg2[%c0_96, %c9_97, %c0_98, %c0_99] : memref<1x16x16x64xbf16, #tpu.memory_space<vmem>>, vector<1x1x16x64xbf16>
    %108 = vector.shape_cast %107 : vector<1x1x16x64xbf16> to vector<16x64xbf16>
    %109 = vector.shape_cast %106 : vector<16x64xbf16> to vector<1x1x16x64xbf16>
    tpu.vector_store %arg2[%c0_96, %c9_97, %c0_98, %c0_99], %109 {strides = array<i32>} : memref<1x16x16x64xbf16, #tpu.memory_space<vmem>>, vector<1x1x16x64xbf16>,
    %c0_100 = arith.constant 0 : index
    %c20 = arith.constant 20 : index
    %c0_101 = arith.constant 0 : index
    %c0_102 = arith.constant 0 : index
    %110 = vector.load %arg1[%c0_100, %c20, %c0_101, %c0_102] : memref<1x32x16x128xbf16, #tpu.memory_space<vmem>>, vector<1x1x16x128xbf16>
    %111 = vector.shape_cast %110 : vector<1x1x16x128xbf16> to vector<16x128xbf16>
    %c0_103 = arith.constant 0 : index
    %c21 = arith.constant 21 : index
    %c0_104 = arith.constant 0 : index
    %c0_105 = arith.constant 0 : index
    %112 = vector.load %arg1[%c0_103, %c21, %c0_104, %c0_105] : memref<1x32x16x128xbf16, #tpu.memory_space<vmem>>, vector<1x1x16x128xbf16>
    %113 = vector.shape_cast %112 : vector<1x1x16x128xbf16> to vector<16x128xbf16>
    %114 = arith.maximumf %111, %113 : vector<16x128xbf16>
    %115 = vector.extract_strided_slice %114 {offsets = [0, 0], sizes = [16, 64], strides = [1, 1]} : vector<16x128xbf16> to vector<16x64xbf16>
    %116 = vector.extract_strided_slice %114 {offsets = [0, 64], sizes = [16, 64], strides = [1, 1]} : vector<16x128xbf16> to vector<16x64xbf16>
    %117 = arith.maximumf %115, %116 : vector<16x64xbf16>
    %c0_106 = arith.constant 0 : index
    %c10_107 = arith.constant 10 : index
    %c0_108 = arith.constant 0 : index
    %c0_109 = arith.constant 0 : index
    %118 = vector.load %arg2[%c0_106, %c10_107, %c0_108, %c0_109] : memref<1x16x16x64xbf16, #tpu.memory_space<vmem>>, vector<1x1x16x64xbf16>
    %119 = vector.shape_cast %118 : vector<1x1x16x64xbf16> to vector<16x64xbf16>
    %120 = vector.shape_cast %117 : vector<16x64xbf16> to vector<1x1x16x64xbf16>
    tpu.vector_store %arg2[%c0_106, %c10_107, %c0_108, %c0_109], %120 {strides = array<i32>} : memref<1x16x16x64xbf16, #tpu.memory_space<vmem>>, vector<1x1x16x64xbf16>,
    %c0_110 = arith.constant 0 : index
    %c22 = arith.constant 22 : index
    %c0_111 = arith.constant 0 : index
    %c0_112 = arith.constant 0 : index
    %121 = vector.load %arg1[%c0_110, %c22, %c0_111, %c0_112] : memref<1x32x16x128xbf16, #tpu.memory_space<vmem>>, vector<1x1x16x128xbf16>
    %122 = vector.shape_cast %121 : vector<1x1x16x128xbf16> to vector<16x128xbf16>
    %c0_113 = arith.constant 0 : index
    %c23 = arith.constant 23 : index
    %c0_114 = arith.constant 0 : index
    %c0_115 = arith.constant 0 : index
    %123 = vector.load %arg1[%c0_113, %c23, %c0_114, %c0_115] : memref<1x32x16x128xbf16, #tpu.memory_space<vmem>>, vector<1x1x16x128xbf16>
    %124 = vector.shape_cast %123 : vector<1x1x16x128xbf16> to vector<16x128xbf16>
    %125 = arith.maximumf %122, %124 : vector<16x128xbf16>
    %126 = vector.extract_strided_slice %125 {offsets = [0, 0], sizes = [16, 64], strides = [1, 1]} : vector<16x128xbf16> to vector<16x64xbf16>
    %127 = vector.extract_strided_slice %125 {offsets = [0, 64], sizes = [16, 64], strides = [1, 1]} : vector<16x128xbf16> to vector<16x64xbf16>
    %128 = arith.maximumf %126, %127 : vector<16x64xbf16>
    %c0_116 = arith.constant 0 : index
    %c11_117 = arith.constant 11 : index
    %c0_118 = arith.constant 0 : index
    %c0_119 = arith.constant 0 : index
    %129 = vector.load %arg2[%c0_116, %c11_117, %c0_118, %c0_119] : memref<1x16x16x64xbf16, #tpu.memory_space<vmem>>, vector<1x1x16x64xbf16>
    %130 = vector.shape_cast %129 : vector<1x1x16x64xbf16> to vector<16x64xbf16>
    %131 = vector.shape_cast %128 : vector<16x64xbf16> to vector<1x1x16x64xbf16>
    tpu.vector_store %arg2[%c0_116, %c11_117, %c0_118, %c0_119], %131 {strides = array<i32>} : memref<1x16x16x64xbf16, #tpu.memory_space<vmem>>, vector<1x1x16x64xbf16>,
    %c0_120 = arith.constant 0 : index
    %c24 = arith.constant 24 : index
    %c0_121 = arith.constant 0 : index
    %c0_122 = arith.constant 0 : index
    %132 = vector.load %arg1[%c0_120, %c24, %c0_121, %c0_122] : memref<1x32x16x128xbf16, #tpu.memory_space<vmem>>, vector<1x1x16x128xbf16>
    %133 = vector.shape_cast %132 : vector<1x1x16x128xbf16> to vector<16x128xbf16>
    %c0_123 = arith.constant 0 : index
    %c25 = arith.constant 25 : index
    %c0_124 = arith.constant 0 : index
    %c0_125 = arith.constant 0 : index
    %134 = vector.load %arg1[%c0_123, %c25, %c0_124, %c0_125] : memref<1x32x16x128xbf16, #tpu.memory_space<vmem>>, vector<1x1x16x128xbf16>
    %135 = vector.shape_cast %134 : vector<1x1x16x128xbf16> to vector<16x128xbf16>
    %136 = arith.maximumf %133, %135 : vector<16x128xbf16>
    %137 = vector.extract_strided_slice %136 {offsets = [0, 0], sizes = [16, 64], strides = [1, 1]} : vector<16x128xbf16> to vector<16x64xbf16>
    %138 = vector.extract_strided_slice %136 {offsets = [0, 64], sizes = [16, 64], strides = [1, 1]} : vector<16x128xbf16> to vector<16x64xbf16>
    %139 = arith.maximumf %137, %138 : vector<16x64xbf16>
    %c0_126 = arith.constant 0 : index
    %c12_127 = arith.constant 12 : index
    %c0_128 = arith.constant 0 : index
    %c0_129 = arith.constant 0 : index
    %140 = vector.load %arg2[%c0_126, %c12_127, %c0_128, %c0_129] : memref<1x16x16x64xbf16, #tpu.memory_space<vmem>>, vector<1x1x16x64xbf16>
    %141 = vector.shape_cast %140 : vector<1x1x16x64xbf16> to vector<16x64xbf16>
    %142 = vector.shape_cast %139 : vector<16x64xbf16> to vector<1x1x16x64xbf16>
    tpu.vector_store %arg2[%c0_126, %c12_127, %c0_128, %c0_129], %142 {strides = array<i32>} : memref<1x16x16x64xbf16, #tpu.memory_space<vmem>>, vector<1x1x16x64xbf16>,
    %c0_130 = arith.constant 0 : index
    %c26 = arith.constant 26 : index
    %c0_131 = arith.constant 0 : index
    %c0_132 = arith.constant 0 : index
    %143 = vector.load %arg1[%c0_130, %c26, %c0_131, %c0_132] : memref<1x32x16x128xbf16, #tpu.memory_space<vmem>>, vector<1x1x16x128xbf16>
    %144 = vector.shape_cast %143 : vector<1x1x16x128xbf16> to vector<16x128xbf16>
    %c0_133 = arith.constant 0 : index
    %c27 = arith.constant 27 : index
    %c0_134 = arith.constant 0 : index
    %c0_135 = arith.constant 0 : index
    %145 = vector.load %arg1[%c0_133, %c27, %c0_134, %c0_135] : memref<1x32x16x128xbf16, #tpu.memory_space<vmem>>, vector<1x1x16x128xbf16>
    %146 = vector.shape_cast %145 : vector<1x1x16x128xbf16> to vector<16x128xbf16>
    %147 = arith.maximumf %144, %146 : vector<16x128xbf16>
    %148 = vector.extract_strided_slice %147 {offsets = [0, 0], sizes = [16, 64], strides = [1, 1]} : vector<16x128xbf16> to vector<16x64xbf16>
    %149 = vector.extract_strided_slice %147 {offsets = [0, 64], sizes = [16, 64], strides = [1, 1]} : vector<16x128xbf16> to vector<16x64xbf16>
    %150 = arith.maximumf %148, %149 : vector<16x64xbf16>
    %c0_136 = arith.constant 0 : index
    %c13_137 = arith.constant 13 : index
    %c0_138 = arith.constant 0 : index
    %c0_139 = arith.constant 0 : index
    %151 = vector.load %arg2[%c0_136, %c13_137, %c0_138, %c0_139] : memref<1x16x16x64xbf16, #tpu.memory_space<vmem>>, vector<1x1x16x64xbf16>
    %152 = vector.shape_cast %151 : vector<1x1x16x64xbf16> to vector<16x64xbf16>
    %153 = vector.shape_cast %150 : vector<16x64xbf16> to vector<1x1x16x64xbf16>
    tpu.vector_store %arg2[%c0_136, %c13_137, %c0_138, %c0_139], %153 {strides = array<i32>} : memref<1x16x16x64xbf16, #tpu.memory_space<vmem>>, vector<1x1x16x64xbf16>,
    %c0_140 = arith.constant 0 : index
    %c28 = arith.constant 28 : index
    %c0_141 = arith.constant 0 : index
    %c0_142 = arith.constant 0 : index
    %154 = vector.load %arg1[%c0_140, %c28, %c0_141, %c0_142] : memref<1x32x16x128xbf16, #tpu.memory_space<vmem>>, vector<1x1x16x128xbf16>
    %155 = vector.shape_cast %154 : vector<1x1x16x128xbf16> to vector<16x128xbf16>
    %c0_143 = arith.constant 0 : index
    %c29 = arith.constant 29 : index
    %c0_144 = arith.constant 0 : index
    %c0_145 = arith.constant 0 : index
    %156 = vector.load %arg1[%c0_143, %c29, %c0_144, %c0_145] : memref<1x32x16x128xbf16, #tpu.memory_space<vmem>>, vector<1x1x16x128xbf16>
    %157 = vector.shape_cast %156 : vector<1x1x16x128xbf16> to vector<16x128xbf16>
    %158 = arith.maximumf %155, %157 : vector<16x128xbf16>
    %159 = vector.extract_strided_slice %158 {offsets = [0, 0], sizes = [16, 64], strides = [1, 1]} : vector<16x128xbf16> to vector<16x64xbf16>
    %160 = vector.extract_strided_slice %158 {offsets = [0, 64], sizes = [16, 64], strides = [1, 1]} : vector<16x128xbf16> to vector<16x64xbf16>
    %161 = arith.maximumf %159, %160 : vector<16x64xbf16>
    %c0_146 = arith.constant 0 : index
    %c14_147 = arith.constant 14 : index
    %c0_148 = arith.constant 0 : index
    %c0_149 = arith.constant 0 : index
    %162 = vector.load %arg2[%c0_146, %c14_147, %c0_148, %c0_149] : memref<1x16x16x64xbf16, #tpu.memory_space<vmem>>, vector<1x1x16x64xbf16>
    %163 = vector.shape_cast %162 : vector<1x1x16x64xbf16> to vector<16x64xbf16>
    %164 = vector.shape_cast %161 : vector<16x64xbf16> to vector<1x1x16x64xbf16>
    tpu.vector_store %arg2[%c0_146, %c14_147, %c0_148, %c0_149], %164 {strides = array<i32>} : memref<1x16x16x64xbf16, #tpu.memory_space<vmem>>, vector<1x1x16x64xbf16>,
    %c0_150 = arith.constant 0 : index
    %c30 = arith.constant 30 : index
    %c0_151 = arith.constant 0 : index
    %c0_152 = arith.constant 0 : index
    %165 = vector.load %arg1[%c0_150, %c30, %c0_151, %c0_152] : memref<1x32x16x128xbf16, #tpu.memory_space<vmem>>, vector<1x1x16x128xbf16>
    %166 = vector.shape_cast %165 : vector<1x1x16x128xbf16> to vector<16x128xbf16>
    %c0_153 = arith.constant 0 : index
    %c31 = arith.constant 31 : index
    %c0_154 = arith.constant 0 : index
    %c0_155 = arith.constant 0 : index
    %167 = vector.load %arg1[%c0_153, %c31, %c0_154, %c0_155] : memref<1x32x16x128xbf16, #tpu.memory_space<vmem>>, vector<1x1x16x128xbf16>
    %168 = vector.shape_cast %167 : vector<1x1x16x128xbf16> to vector<16x128xbf16>
    %169 = arith.maximumf %166, %168 : vector<16x128xbf16>
    %170 = vector.extract_strided_slice %169 {offsets = [0, 0], sizes = [16, 64], strides = [1, 1]} : vector<16x128xbf16> to vector<16x64xbf16>
    %171 = vector.extract_strided_slice %169 {offsets = [0, 64], sizes = [16, 64], strides = [1, 1]} : vector<16x128xbf16> to vector<16x64xbf16>
    %172 = arith.maximumf %170, %171 : vector<16x64xbf16>
    %c0_156 = arith.constant 0 : index
    %c15_157 = arith.constant 15 : index
    %c0_158 = arith.constant 0 : index
    %c0_159 = arith.constant 0 : index
    %173 = vector.load %arg2[%c0_156, %c15_157, %c0_158, %c0_159] : memref<1x16x16x64xbf16, #tpu.memory_space<vmem>>, vector<1x1x16x64xbf16>
    %174 = vector.shape_cast %173 : vector<1x1x16x64xbf16> to vector<16x64xbf16>
    %175 = vector.shape_cast %172 : vector<16x64xbf16> to vector<1x1x16x64xbf16>
    tpu.vector_store %arg2[%c0_156, %c15_157, %c0_158, %c0_159], %175 {strides = array<i32>} : memref<1x16x16x64xbf16, #tpu.memory_space<vmem>>, vector<1x1x16x64xbf16>,
    return
  }
  func.func @transform_0(%arg0: i32) -> (i32, i32, i32, i32) {
    %c0_i32 = arith.constant 0 : i32
    %c0_i32_0 = arith.constant 0 : i32
    %c0_i32_1 = arith.constant 0 : i32
    %c0_i32_2 = arith.constant 0 : i32
    return %arg0, %c0_i32, %c0_i32_0, %c0_i32_1 : i32, i32, i32, i32
  }
  func.func @transform_1(%arg0: i32) -> (i32, i32, i32, i32) {
    %c0_i32 = arith.constant 0 : i32
    %c0_i32_0 = arith.constant 0 : i32
    %c0_i32_1 = arith.constant 0 : i32
    %c0_i32_2 = arith.constant 0 : i32
    return %arg0, %c0_i32, %c0_i32_0, %c0_i32_1 : i32, i32, i32, i32
  }
}

module attributes {stable_mosaic.version = 11 : i64} {
  func.func @kernel(%arg0: i32, %arg1: i32, %arg2: i32, %arg3: memref<256x576xbf16, #tpu.memory_space<vmem>>, %arg4: memref<576x128xbf16, #tpu.memory_space<vmem>>, %arg5: memref<1x128xf32, #tpu.memory_space<vmem>>, %arg6: memref<256x128xbf16, #tpu.memory_space<vmem>>) attributes {dimension_semantics = [#tpu.dimension_semantics<parallel>, #tpu.dimension_semantics<parallel>, #tpu.dimension_semantics<arbitrary>], iteration_bounds = array<i64: 2, 1, 1>, scalar_prefetch = 0 : i64, scratch_operands = 0 : i64, tpu.core_type = #tpu.core_type<tc>, window_params = [{transform_indices = @transform_0, window_bounds = array<i64: 256, 576>}, {transform_indices = @transform_1, window_bounds = array<i64: 576, 128>}, {transform_indices = @transform_2, window_bounds = array<i64: 1, 128>}, {transform_indices = @transform_3, window_bounds = array<i64: 256, 128>}]} {
    %c0 = arith.constant 0 : index
    %c0_0 = arith.constant 0 : index
    %0 = vector.load %arg3[%c0, %c0_0] : memref<256x576xbf16, #tpu.memory_space<vmem>>, vector<256x576xbf16>
    %c0_1 = arith.constant 0 : index
    %c0_2 = arith.constant 0 : index
    %1 = vector.load %arg4[%c0_1, %c0_2] : memref<576x128xbf16, #tpu.memory_space<vmem>>, vector<576x128xbf16>
    %cst = arith.constant dense<0.000000e+00> : vector<256x128xf32>
    %2 = tpu.matmul %0, %1, %cst {dimension_numbers = #tpu.dot_dimension_numbers<[1], [0], [0], [1], [0, 0, 1, 1], [], []>} : vector<256x576xbf16>, vector<576x128xbf16>, vector<256x128xf32> -> vector<256x128xf32>
    %c0_3 = arith.constant 0 : index
    %c0_4 = arith.constant 0 : index
    %3 = vector.load %arg5[%c0_3, %c0_4] : memref<1x128xf32, #tpu.memory_space<vmem>>, vector<1x128xf32>
    %4 = vector.broadcast %3 : vector<1x128xf32> to vector<256x128xf32>
    %5 = arith.addf %2, %4 : vector<256x128xf32>
    %cst_5 = arith.constant 0.000000e+00 : f32
    %6 = vector.broadcast %cst_5 : f32 to vector<256x128xf32>
    %7 = arith.maximumf %5, %6 : vector<256x128xf32>
    %8 = arith.truncf %7 : vector<256x128xf32> to vector<256x128xbf16>
    %c0_6 = arith.constant 0 : index
    %c0_7 = arith.constant 0 : index
    %9 = vector.load %arg6[%c0_6, %c0_7] : memref<256x128xbf16, #tpu.memory_space<vmem>>, vector<256x128xbf16>
    tpu.vector_store %arg6[%c0_6, %c0_7], %8 {strides = array<i32>} : memref<256x128xbf16, #tpu.memory_space<vmem>>, vector<256x128xbf16>,
    return
  }
  func.func @transform_0(%arg0: i32, %arg1: i32, %arg2: i32) -> (i32, i32) {
    %c0_i32 = arith.constant 0 : i32
    return %arg0, %arg2 : i32, i32
  }
  func.func @transform_1(%arg0: i32, %arg1: i32, %arg2: i32) -> (i32, i32) {
    %c0_i32 = arith.constant 0 : i32
    return %arg2, %arg1 : i32, i32
  }
  func.func @transform_2(%arg0: i32, %arg1: i32, %arg2: i32) -> (i32, i32) {
    %c0_i32 = arith.constant 0 : i32
    %c0_i32_0 = arith.constant 0 : i32
    return %c0_i32, %arg1 : i32, i32
  }
  func.func @transform_3(%arg0: i32, %arg1: i32, %arg2: i32) -> (i32, i32) {
    %c0_i32 = arith.constant 0 : i32
    return %arg0, %arg1 : i32, i32
  }
}

module attributes {stable_mosaic.version = 11 : i64} {
  func.func @kernel(%arg0: i32, %arg1: memref<1x16x8x256xbf16, #tpu.memory_space<vmem>>, %arg2: memref<1x8x8x128xbf16, #tpu.memory_space<vmem>>) attributes {dimension_semantics = [#tpu.dimension_semantics<parallel>], iteration_bounds = array<i64: 2>, scalar_prefetch = 0 : i64, scratch_operands = 0 : i64, tpu.core_type = #tpu.core_type<tc>, window_params = [{transform_indices = @transform_0, window_bounds = array<i64: 1, 16, 8, 256>}, {transform_indices = @transform_1, window_bounds = array<i64: 1, 8, 8, 128>}]} {
    %c0 = arith.constant 0 : index
    %c0_0 = arith.constant 0 : index
    %c0_1 = arith.constant 0 : index
    %c0_2 = arith.constant 0 : index
    %0 = vector.load %arg1[%c0, %c0_0, %c0_1, %c0_2] : memref<1x16x8x256xbf16, #tpu.memory_space<vmem>>, vector<1x1x8x256xbf16>
    %1 = vector.shape_cast %0 : vector<1x1x8x256xbf16> to vector<8x256xbf16>
    %c0_3 = arith.constant 0 : index
    %c1 = arith.constant 1 : index
    %c0_4 = arith.constant 0 : index
    %c0_5 = arith.constant 0 : index
    %2 = vector.load %arg1[%c0_3, %c1, %c0_4, %c0_5] : memref<1x16x8x256xbf16, #tpu.memory_space<vmem>>, vector<1x1x8x256xbf16>
    %3 = vector.shape_cast %2 : vector<1x1x8x256xbf16> to vector<8x256xbf16>
    %4 = arith.maximumf %1, %3 : vector<8x256xbf16>
    %5 = vector.extract_strided_slice %4 {offsets = [0, 0], sizes = [8, 128], strides = [1, 1]} : vector<8x256xbf16> to vector<8x128xbf16>
    %6 = vector.extract_strided_slice %4 {offsets = [0, 128], sizes = [8, 128], strides = [1, 1]} : vector<8x256xbf16> to vector<8x128xbf16>
    %7 = arith.maximumf %5, %6 : vector<8x128xbf16>
    %c0_6 = arith.constant 0 : index
    %c0_7 = arith.constant 0 : index
    %c0_8 = arith.constant 0 : index
    %c0_9 = arith.constant 0 : index
    %8 = vector.load %arg2[%c0_6, %c0_7, %c0_8, %c0_9] : memref<1x8x8x128xbf16, #tpu.memory_space<vmem>>, vector<1x1x8x128xbf16>
    %9 = vector.shape_cast %8 : vector<1x1x8x128xbf16> to vector<8x128xbf16>
    %10 = vector.shape_cast %7 : vector<8x128xbf16> to vector<1x1x8x128xbf16>
    tpu.vector_store %arg2[%c0_6, %c0_7, %c0_8, %c0_9], %10 {strides = array<i32>} : memref<1x8x8x128xbf16, #tpu.memory_space<vmem>>, vector<1x1x8x128xbf16>,
    %c0_10 = arith.constant 0 : index
    %c2 = arith.constant 2 : index
    %c0_11 = arith.constant 0 : index
    %c0_12 = arith.constant 0 : index
    %11 = vector.load %arg1[%c0_10, %c2, %c0_11, %c0_12] : memref<1x16x8x256xbf16, #tpu.memory_space<vmem>>, vector<1x1x8x256xbf16>
    %12 = vector.shape_cast %11 : vector<1x1x8x256xbf16> to vector<8x256xbf16>
    %c0_13 = arith.constant 0 : index
    %c3 = arith.constant 3 : index
    %c0_14 = arith.constant 0 : index
    %c0_15 = arith.constant 0 : index
    %13 = vector.load %arg1[%c0_13, %c3, %c0_14, %c0_15] : memref<1x16x8x256xbf16, #tpu.memory_space<vmem>>, vector<1x1x8x256xbf16>
    %14 = vector.shape_cast %13 : vector<1x1x8x256xbf16> to vector<8x256xbf16>
    %15 = arith.maximumf %12, %14 : vector<8x256xbf16>
    %16 = vector.extract_strided_slice %15 {offsets = [0, 0], sizes = [8, 128], strides = [1, 1]} : vector<8x256xbf16> to vector<8x128xbf16>
    %17 = vector.extract_strided_slice %15 {offsets = [0, 128], sizes = [8, 128], strides = [1, 1]} : vector<8x256xbf16> to vector<8x128xbf16>
    %18 = arith.maximumf %16, %17 : vector<8x128xbf16>
    %c0_16 = arith.constant 0 : index
    %c1_17 = arith.constant 1 : index
    %c0_18 = arith.constant 0 : index
    %c0_19 = arith.constant 0 : index
    %19 = vector.load %arg2[%c0_16, %c1_17, %c0_18, %c0_19] : memref<1x8x8x128xbf16, #tpu.memory_space<vmem>>, vector<1x1x8x128xbf16>
    %20 = vector.shape_cast %19 : vector<1x1x8x128xbf16> to vector<8x128xbf16>
    %21 = vector.shape_cast %18 : vector<8x128xbf16> to vector<1x1x8x128xbf16>
    tpu.vector_store %arg2[%c0_16, %c1_17, %c0_18, %c0_19], %21 {strides = array<i32>} : memref<1x8x8x128xbf16, #tpu.memory_space<vmem>>, vector<1x1x8x128xbf16>,
    %c0_20 = arith.constant 0 : index
    %c4 = arith.constant 4 : index
    %c0_21 = arith.constant 0 : index
    %c0_22 = arith.constant 0 : index
    %22 = vector.load %arg1[%c0_20, %c4, %c0_21, %c0_22] : memref<1x16x8x256xbf16, #tpu.memory_space<vmem>>, vector<1x1x8x256xbf16>
    %23 = vector.shape_cast %22 : vector<1x1x8x256xbf16> to vector<8x256xbf16>
    %c0_23 = arith.constant 0 : index
    %c5 = arith.constant 5 : index
    %c0_24 = arith.constant 0 : index
    %c0_25 = arith.constant 0 : index
    %24 = vector.load %arg1[%c0_23, %c5, %c0_24, %c0_25] : memref<1x16x8x256xbf16, #tpu.memory_space<vmem>>, vector<1x1x8x256xbf16>
    %25 = vector.shape_cast %24 : vector<1x1x8x256xbf16> to vector<8x256xbf16>
    %26 = arith.maximumf %23, %25 : vector<8x256xbf16>
    %27 = vector.extract_strided_slice %26 {offsets = [0, 0], sizes = [8, 128], strides = [1, 1]} : vector<8x256xbf16> to vector<8x128xbf16>
    %28 = vector.extract_strided_slice %26 {offsets = [0, 128], sizes = [8, 128], strides = [1, 1]} : vector<8x256xbf16> to vector<8x128xbf16>
    %29 = arith.maximumf %27, %28 : vector<8x128xbf16>
    %c0_26 = arith.constant 0 : index
    %c2_27 = arith.constant 2 : index
    %c0_28 = arith.constant 0 : index
    %c0_29 = arith.constant 0 : index
    %30 = vector.load %arg2[%c0_26, %c2_27, %c0_28, %c0_29] : memref<1x8x8x128xbf16, #tpu.memory_space<vmem>>, vector<1x1x8x128xbf16>
    %31 = vector.shape_cast %30 : vector<1x1x8x128xbf16> to vector<8x128xbf16>
    %32 = vector.shape_cast %29 : vector<8x128xbf16> to vector<1x1x8x128xbf16>
    tpu.vector_store %arg2[%c0_26, %c2_27, %c0_28, %c0_29], %32 {strides = array<i32>} : memref<1x8x8x128xbf16, #tpu.memory_space<vmem>>, vector<1x1x8x128xbf16>,
    %c0_30 = arith.constant 0 : index
    %c6 = arith.constant 6 : index
    %c0_31 = arith.constant 0 : index
    %c0_32 = arith.constant 0 : index
    %33 = vector.load %arg1[%c0_30, %c6, %c0_31, %c0_32] : memref<1x16x8x256xbf16, #tpu.memory_space<vmem>>, vector<1x1x8x256xbf16>
    %34 = vector.shape_cast %33 : vector<1x1x8x256xbf16> to vector<8x256xbf16>
    %c0_33 = arith.constant 0 : index
    %c7 = arith.constant 7 : index
    %c0_34 = arith.constant 0 : index
    %c0_35 = arith.constant 0 : index
    %35 = vector.load %arg1[%c0_33, %c7, %c0_34, %c0_35] : memref<1x16x8x256xbf16, #tpu.memory_space<vmem>>, vector<1x1x8x256xbf16>
    %36 = vector.shape_cast %35 : vector<1x1x8x256xbf16> to vector<8x256xbf16>
    %37 = arith.maximumf %34, %36 : vector<8x256xbf16>
    %38 = vector.extract_strided_slice %37 {offsets = [0, 0], sizes = [8, 128], strides = [1, 1]} : vector<8x256xbf16> to vector<8x128xbf16>
    %39 = vector.extract_strided_slice %37 {offsets = [0, 128], sizes = [8, 128], strides = [1, 1]} : vector<8x256xbf16> to vector<8x128xbf16>
    %40 = arith.maximumf %38, %39 : vector<8x128xbf16>
    %c0_36 = arith.constant 0 : index
    %c3_37 = arith.constant 3 : index
    %c0_38 = arith.constant 0 : index
    %c0_39 = arith.constant 0 : index
    %41 = vector.load %arg2[%c0_36, %c3_37, %c0_38, %c0_39] : memref<1x8x8x128xbf16, #tpu.memory_space<vmem>>, vector<1x1x8x128xbf16>
    %42 = vector.shape_cast %41 : vector<1x1x8x128xbf16> to vector<8x128xbf16>
    %43 = vector.shape_cast %40 : vector<8x128xbf16> to vector<1x1x8x128xbf16>
    tpu.vector_store %arg2[%c0_36, %c3_37, %c0_38, %c0_39], %43 {strides = array<i32>} : memref<1x8x8x128xbf16, #tpu.memory_space<vmem>>, vector<1x1x8x128xbf16>,
    %c0_40 = arith.constant 0 : index
    %c8 = arith.constant 8 : index
    %c0_41 = arith.constant 0 : index
    %c0_42 = arith.constant 0 : index
    %44 = vector.load %arg1[%c0_40, %c8, %c0_41, %c0_42] : memref<1x16x8x256xbf16, #tpu.memory_space<vmem>>, vector<1x1x8x256xbf16>
    %45 = vector.shape_cast %44 : vector<1x1x8x256xbf16> to vector<8x256xbf16>
    %c0_43 = arith.constant 0 : index
    %c9 = arith.constant 9 : index
    %c0_44 = arith.constant 0 : index
    %c0_45 = arith.constant 0 : index
    %46 = vector.load %arg1[%c0_43, %c9, %c0_44, %c0_45] : memref<1x16x8x256xbf16, #tpu.memory_space<vmem>>, vector<1x1x8x256xbf16>
    %47 = vector.shape_cast %46 : vector<1x1x8x256xbf16> to vector<8x256xbf16>
    %48 = arith.maximumf %45, %47 : vector<8x256xbf16>
    %49 = vector.extract_strided_slice %48 {offsets = [0, 0], sizes = [8, 128], strides = [1, 1]} : vector<8x256xbf16> to vector<8x128xbf16>
    %50 = vector.extract_strided_slice %48 {offsets = [0, 128], sizes = [8, 128], strides = [1, 1]} : vector<8x256xbf16> to vector<8x128xbf16>
    %51 = arith.maximumf %49, %50 : vector<8x128xbf16>
    %c0_46 = arith.constant 0 : index
    %c4_47 = arith.constant 4 : index
    %c0_48 = arith.constant 0 : index
    %c0_49 = arith.constant 0 : index
    %52 = vector.load %arg2[%c0_46, %c4_47, %c0_48, %c0_49] : memref<1x8x8x128xbf16, #tpu.memory_space<vmem>>, vector<1x1x8x128xbf16>
    %53 = vector.shape_cast %52 : vector<1x1x8x128xbf16> to vector<8x128xbf16>
    %54 = vector.shape_cast %51 : vector<8x128xbf16> to vector<1x1x8x128xbf16>
    tpu.vector_store %arg2[%c0_46, %c4_47, %c0_48, %c0_49], %54 {strides = array<i32>} : memref<1x8x8x128xbf16, #tpu.memory_space<vmem>>, vector<1x1x8x128xbf16>,
    %c0_50 = arith.constant 0 : index
    %c10 = arith.constant 10 : index
    %c0_51 = arith.constant 0 : index
    %c0_52 = arith.constant 0 : index
    %55 = vector.load %arg1[%c0_50, %c10, %c0_51, %c0_52] : memref<1x16x8x256xbf16, #tpu.memory_space<vmem>>, vector<1x1x8x256xbf16>
    %56 = vector.shape_cast %55 : vector<1x1x8x256xbf16> to vector<8x256xbf16>
    %c0_53 = arith.constant 0 : index
    %c11 = arith.constant 11 : index
    %c0_54 = arith.constant 0 : index
    %c0_55 = arith.constant 0 : index
    %57 = vector.load %arg1[%c0_53, %c11, %c0_54, %c0_55] : memref<1x16x8x256xbf16, #tpu.memory_space<vmem>>, vector<1x1x8x256xbf16>
    %58 = vector.shape_cast %57 : vector<1x1x8x256xbf16> to vector<8x256xbf16>
    %59 = arith.maximumf %56, %58 : vector<8x256xbf16>
    %60 = vector.extract_strided_slice %59 {offsets = [0, 0], sizes = [8, 128], strides = [1, 1]} : vector<8x256xbf16> to vector<8x128xbf16>
    %61 = vector.extract_strided_slice %59 {offsets = [0, 128], sizes = [8, 128], strides = [1, 1]} : vector<8x256xbf16> to vector<8x128xbf16>
    %62 = arith.maximumf %60, %61 : vector<8x128xbf16>
    %c0_56 = arith.constant 0 : index
    %c5_57 = arith.constant 5 : index
    %c0_58 = arith.constant 0 : index
    %c0_59 = arith.constant 0 : index
    %63 = vector.load %arg2[%c0_56, %c5_57, %c0_58, %c0_59] : memref<1x8x8x128xbf16, #tpu.memory_space<vmem>>, vector<1x1x8x128xbf16>
    %64 = vector.shape_cast %63 : vector<1x1x8x128xbf16> to vector<8x128xbf16>
    %65 = vector.shape_cast %62 : vector<8x128xbf16> to vector<1x1x8x128xbf16>
    tpu.vector_store %arg2[%c0_56, %c5_57, %c0_58, %c0_59], %65 {strides = array<i32>} : memref<1x8x8x128xbf16, #tpu.memory_space<vmem>>, vector<1x1x8x128xbf16>,
    %c0_60 = arith.constant 0 : index
    %c12 = arith.constant 12 : index
    %c0_61 = arith.constant 0 : index
    %c0_62 = arith.constant 0 : index
    %66 = vector.load %arg1[%c0_60, %c12, %c0_61, %c0_62] : memref<1x16x8x256xbf16, #tpu.memory_space<vmem>>, vector<1x1x8x256xbf16>
    %67 = vector.shape_cast %66 : vector<1x1x8x256xbf16> to vector<8x256xbf16>
    %c0_63 = arith.constant 0 : index
    %c13 = arith.constant 13 : index
    %c0_64 = arith.constant 0 : index
    %c0_65 = arith.constant 0 : index
    %68 = vector.load %arg1[%c0_63, %c13, %c0_64, %c0_65] : memref<1x16x8x256xbf16, #tpu.memory_space<vmem>>, vector<1x1x8x256xbf16>
    %69 = vector.shape_cast %68 : vector<1x1x8x256xbf16> to vector<8x256xbf16>
    %70 = arith.maximumf %67, %69 : vector<8x256xbf16>
    %71 = vector.extract_strided_slice %70 {offsets = [0, 0], sizes = [8, 128], strides = [1, 1]} : vector<8x256xbf16> to vector<8x128xbf16>
    %72 = vector.extract_strided_slice %70 {offsets = [0, 128], sizes = [8, 128], strides = [1, 1]} : vector<8x256xbf16> to vector<8x128xbf16>
    %73 = arith.maximumf %71, %72 : vector<8x128xbf16>
    %c0_66 = arith.constant 0 : index
    %c6_67 = arith.constant 6 : index
    %c0_68 = arith.constant 0 : index
    %c0_69 = arith.constant 0 : index
    %74 = vector.load %arg2[%c0_66, %c6_67, %c0_68, %c0_69] : memref<1x8x8x128xbf16, #tpu.memory_space<vmem>>, vector<1x1x8x128xbf16>
    %75 = vector.shape_cast %74 : vector<1x1x8x128xbf16> to vector<8x128xbf16>
    %76 = vector.shape_cast %73 : vector<8x128xbf16> to vector<1x1x8x128xbf16>
    tpu.vector_store %arg2[%c0_66, %c6_67, %c0_68, %c0_69], %76 {strides = array<i32>} : memref<1x8x8x128xbf16, #tpu.memory_space<vmem>>, vector<1x1x8x128xbf16>,
    %c0_70 = arith.constant 0 : index
    %c14 = arith.constant 14 : index
    %c0_71 = arith.constant 0 : index
    %c0_72 = arith.constant 0 : index
    %77 = vector.load %arg1[%c0_70, %c14, %c0_71, %c0_72] : memref<1x16x8x256xbf16, #tpu.memory_space<vmem>>, vector<1x1x8x256xbf16>
    %78 = vector.shape_cast %77 : vector<1x1x8x256xbf16> to vector<8x256xbf16>
    %c0_73 = arith.constant 0 : index
    %c15 = arith.constant 15 : index
    %c0_74 = arith.constant 0 : index
    %c0_75 = arith.constant 0 : index
    %79 = vector.load %arg1[%c0_73, %c15, %c0_74, %c0_75] : memref<1x16x8x256xbf16, #tpu.memory_space<vmem>>, vector<1x1x8x256xbf16>
    %80 = vector.shape_cast %79 : vector<1x1x8x256xbf16> to vector<8x256xbf16>
    %81 = arith.maximumf %78, %80 : vector<8x256xbf16>
    %82 = vector.extract_strided_slice %81 {offsets = [0, 0], sizes = [8, 128], strides = [1, 1]} : vector<8x256xbf16> to vector<8x128xbf16>
    %83 = vector.extract_strided_slice %81 {offsets = [0, 128], sizes = [8, 128], strides = [1, 1]} : vector<8x256xbf16> to vector<8x128xbf16>
    %84 = arith.maximumf %82, %83 : vector<8x128xbf16>
    %c0_76 = arith.constant 0 : index
    %c7_77 = arith.constant 7 : index
    %c0_78 = arith.constant 0 : index
    %c0_79 = arith.constant 0 : index
    %85 = vector.load %arg2[%c0_76, %c7_77, %c0_78, %c0_79] : memref<1x8x8x128xbf16, #tpu.memory_space<vmem>>, vector<1x1x8x128xbf16>
    %86 = vector.shape_cast %85 : vector<1x1x8x128xbf16> to vector<8x128xbf16>
    %87 = vector.shape_cast %84 : vector<8x128xbf16> to vector<1x1x8x128xbf16>
    tpu.vector_store %arg2[%c0_76, %c7_77, %c0_78, %c0_79], %87 {strides = array<i32>} : memref<1x8x8x128xbf16, #tpu.memory_space<vmem>>, vector<1x1x8x128xbf16>,
    return
  }
  func.func @transform_0(%arg0: i32) -> (i32, i32, i32, i32) {
    %c0_i32 = arith.constant 0 : i32
    %c0_i32_0 = arith.constant 0 : i32
    %c0_i32_1 = arith.constant 0 : i32
    %c0_i32_2 = arith.constant 0 : i32
    return %arg0, %c0_i32, %c0_i32_0, %c0_i32_1 : i32, i32, i32, i32
  }
  func.func @transform_1(%arg0: i32) -> (i32, i32, i32, i32) {
    %c0_i32 = arith.constant 0 : i32
    %c0_i32_0 = arith.constant 0 : i32
    %c0_i32_1 = arith.constant 0 : i32
    %c0_i32_2 = arith.constant 0 : i32
    return %arg0, %c0_i32, %c0_i32_0, %c0_i32_1 : i32, i32, i32, i32
  }
}

module attributes {stable_mosaic.version = 11 : i64} {
  func.func @kernel(%arg0: i32, %arg1: i32, %arg2: i32, %arg3: memref<128x1152xbf16, #tpu.memory_space<vmem>>, %arg4: memref<1152x128xbf16, #tpu.memory_space<vmem>>, %arg5: memref<1x128xf32, #tpu.memory_space<vmem>>, %arg6: memref<128x128xbf16, #tpu.memory_space<vmem>>) attributes {dimension_semantics = [#tpu.dimension_semantics<parallel>, #tpu.dimension_semantics<parallel>, #tpu.dimension_semantics<arbitrary>], iteration_bounds = array<i64: 1, 2, 1>, scalar_prefetch = 0 : i64, scratch_operands = 0 : i64, tpu.core_type = #tpu.core_type<tc>, window_params = [{transform_indices = @transform_0, window_bounds = array<i64: 128, 1152>}, {transform_indices = @transform_1, window_bounds = array<i64: 1152, 128>}, {transform_indices = @transform_2, window_bounds = array<i64: 1, 128>}, {transform_indices = @transform_3, window_bounds = array<i64: 128, 128>}]} {
    %c0 = arith.constant 0 : index
    %c0_0 = arith.constant 0 : index
    %0 = vector.load %arg3[%c0, %c0_0] : memref<128x1152xbf16, #tpu.memory_space<vmem>>, vector<128x1152xbf16>
    %c0_1 = arith.constant 0 : index
    %c0_2 = arith.constant 0 : index
    %1 = vector.load %arg4[%c0_1, %c0_2] : memref<1152x128xbf16, #tpu.memory_space<vmem>>, vector<1152x128xbf16>
    %cst = arith.constant dense<0.000000e+00> : vector<128x128xf32>
    %2 = tpu.matmul %0, %1, %cst {dimension_numbers = #tpu.dot_dimension_numbers<[1], [0], [0], [1], [0, 0, 1, 1], [], []>} : vector<128x1152xbf16>, vector<1152x128xbf16>, vector<128x128xf32> -> vector<128x128xf32>
    %c0_3 = arith.constant 0 : index
    %c0_4 = arith.constant 0 : index
    %3 = vector.load %arg5[%c0_3, %c0_4] : memref<1x128xf32, #tpu.memory_space<vmem>>, vector<1x128xf32>
    %4 = vector.broadcast %3 : vector<1x128xf32> to vector<128x128xf32>
    %5 = arith.addf %2, %4 : vector<128x128xf32>
    %cst_5 = arith.constant 0.000000e+00 : f32
    %6 = vector.broadcast %cst_5 : f32 to vector<128x128xf32>
    %7 = arith.maximumf %5, %6 : vector<128x128xf32>
    %8 = arith.truncf %7 : vector<128x128xf32> to vector<128x128xbf16>
    %c0_6 = arith.constant 0 : index
    %c0_7 = arith.constant 0 : index
    %9 = vector.load %arg6[%c0_6, %c0_7] : memref<128x128xbf16, #tpu.memory_space<vmem>>, vector<128x128xbf16>
    tpu.vector_store %arg6[%c0_6, %c0_7], %8 {strides = array<i32>} : memref<128x128xbf16, #tpu.memory_space<vmem>>, vector<128x128xbf16>,
    return
  }
  func.func @transform_0(%arg0: i32, %arg1: i32, %arg2: i32) -> (i32, i32) {
    %c0_i32 = arith.constant 0 : i32
    return %arg0, %arg2 : i32, i32
  }
  func.func @transform_1(%arg0: i32, %arg1: i32, %arg2: i32) -> (i32, i32) {
    %c0_i32 = arith.constant 0 : i32
    return %arg2, %arg1 : i32, i32
  }
  func.func @transform_2(%arg0: i32, %arg1: i32, %arg2: i32) -> (i32, i32) {
    %c0_i32 = arith.constant 0 : i32
    %c0_i32_0 = arith.constant 0 : i32
    return %c0_i32, %arg1 : i32, i32
  }
  func.func @transform_3(%arg0: i32, %arg1: i32, %arg2: i32) -> (i32, i32) {
    %c0_i32 = arith.constant 0 : i32
    return %arg0, %arg1 : i32, i32
  }
}

module attributes {stable_mosaic.version = 11 : i64} {
  func.func @kernel(%arg0: i32, %arg1: memref<1x8x4x512xbf16, #tpu.memory_space<vmem>>, %arg2: memref<1x4x4x256xbf16, #tpu.memory_space<vmem>>) attributes {dimension_semantics = [#tpu.dimension_semantics<parallel>], iteration_bounds = array<i64: 2>, scalar_prefetch = 0 : i64, scratch_operands = 0 : i64, tpu.core_type = #tpu.core_type<tc>, window_params = [{transform_indices = @transform_0, window_bounds = array<i64: 1, 8, 4, 512>}, {transform_indices = @transform_1, window_bounds = array<i64: 1, 4, 4, 256>}]} {
    %c0 = arith.constant 0 : index
    %c0_0 = arith.constant 0 : index
    %c0_1 = arith.constant 0 : index
    %c0_2 = arith.constant 0 : index
    %0 = vector.load %arg1[%c0, %c0_0, %c0_1, %c0_2] : memref<1x8x4x512xbf16, #tpu.memory_space<vmem>>, vector<1x1x4x512xbf16>
    %1 = vector.shape_cast %0 : vector<1x1x4x512xbf16> to vector<4x512xbf16>
    %c0_3 = arith.constant 0 : index
    %c1 = arith.constant 1 : index
    %c0_4 = arith.constant 0 : index
    %c0_5 = arith.constant 0 : index
    %2 = vector.load %arg1[%c0_3, %c1, %c0_4, %c0_5] : memref<1x8x4x512xbf16, #tpu.memory_space<vmem>>, vector<1x1x4x512xbf16>
    %3 = vector.shape_cast %2 : vector<1x1x4x512xbf16> to vector<4x512xbf16>
    %4 = arith.maximumf %1, %3 : vector<4x512xbf16>
    %5 = vector.extract_strided_slice %4 {offsets = [0, 0], sizes = [4, 256], strides = [1, 1]} : vector<4x512xbf16> to vector<4x256xbf16>
    %6 = vector.extract_strided_slice %4 {offsets = [0, 256], sizes = [4, 256], strides = [1, 1]} : vector<4x512xbf16> to vector<4x256xbf16>
    %7 = arith.maximumf %5, %6 : vector<4x256xbf16>
    %c0_6 = arith.constant 0 : index
    %c0_7 = arith.constant 0 : index
    %c0_8 = arith.constant 0 : index
    %c0_9 = arith.constant 0 : index
    %8 = vector.load %arg2[%c0_6, %c0_7, %c0_8, %c0_9] : memref<1x4x4x256xbf16, #tpu.memory_space<vmem>>, vector<1x1x4x256xbf16>
    %9 = vector.shape_cast %8 : vector<1x1x4x256xbf16> to vector<4x256xbf16>
    %10 = vector.shape_cast %7 : vector<4x256xbf16> to vector<1x1x4x256xbf16>
    tpu.vector_store %arg2[%c0_6, %c0_7, %c0_8, %c0_9], %10 {strides = array<i32>} : memref<1x4x4x256xbf16, #tpu.memory_space<vmem>>, vector<1x1x4x256xbf16>,
    %c0_10 = arith.constant 0 : index
    %c2 = arith.constant 2 : index
    %c0_11 = arith.constant 0 : index
    %c0_12 = arith.constant 0 : index
    %11 = vector.load %arg1[%c0_10, %c2, %c0_11, %c0_12] : memref<1x8x4x512xbf16, #tpu.memory_space<vmem>>, vector<1x1x4x512xbf16>
    %12 = vector.shape_cast %11 : vector<1x1x4x512xbf16> to vector<4x512xbf16>
    %c0_13 = arith.constant 0 : index
    %c3 = arith.constant 3 : index
    %c0_14 = arith.constant 0 : index
    %c0_15 = arith.constant 0 : index
    %13 = vector.load %arg1[%c0_13, %c3, %c0_14, %c0_15] : memref<1x8x4x512xbf16, #tpu.memory_space<vmem>>, vector<1x1x4x512xbf16>
    %14 = vector.shape_cast %13 : vector<1x1x4x512xbf16> to vector<4x512xbf16>
    %15 = arith.maximumf %12, %14 : vector<4x512xbf16>
    %16 = vector.extract_strided_slice %15 {offsets = [0, 0], sizes = [4, 256], strides = [1, 1]} : vector<4x512xbf16> to vector<4x256xbf16>
    %17 = vector.extract_strided_slice %15 {offsets = [0, 256], sizes = [4, 256], strides = [1, 1]} : vector<4x512xbf16> to vector<4x256xbf16>
    %18 = arith.maximumf %16, %17 : vector<4x256xbf16>
    %c0_16 = arith.constant 0 : index
    %c1_17 = arith.constant 1 : index
    %c0_18 = arith.constant 0 : index
    %c0_19 = arith.constant 0 : index
    %19 = vector.load %arg2[%c0_16, %c1_17, %c0_18, %c0_19] : memref<1x4x4x256xbf16, #tpu.memory_space<vmem>>, vector<1x1x4x256xbf16>
    %20 = vector.shape_cast %19 : vector<1x1x4x256xbf16> to vector<4x256xbf16>
    %21 = vector.shape_cast %18 : vector<4x256xbf16> to vector<1x1x4x256xbf16>
    tpu.vector_store %arg2[%c0_16, %c1_17, %c0_18, %c0_19], %21 {strides = array<i32>} : memref<1x4x4x256xbf16, #tpu.memory_space<vmem>>, vector<1x1x4x256xbf16>,
    %c0_20 = arith.constant 0 : index
    %c4 = arith.constant 4 : index
    %c0_21 = arith.constant 0 : index
    %c0_22 = arith.constant 0 : index
    %22 = vector.load %arg1[%c0_20, %c4, %c0_21, %c0_22] : memref<1x8x4x512xbf16, #tpu.memory_space<vmem>>, vector<1x1x4x512xbf16>
    %23 = vector.shape_cast %22 : vector<1x1x4x512xbf16> to vector<4x512xbf16>
    %c0_23 = arith.constant 0 : index
    %c5 = arith.constant 5 : index
    %c0_24 = arith.constant 0 : index
    %c0_25 = arith.constant 0 : index
    %24 = vector.load %arg1[%c0_23, %c5, %c0_24, %c0_25] : memref<1x8x4x512xbf16, #tpu.memory_space<vmem>>, vector<1x1x4x512xbf16>
    %25 = vector.shape_cast %24 : vector<1x1x4x512xbf16> to vector<4x512xbf16>
    %26 = arith.maximumf %23, %25 : vector<4x512xbf16>
    %27 = vector.extract_strided_slice %26 {offsets = [0, 0], sizes = [4, 256], strides = [1, 1]} : vector<4x512xbf16> to vector<4x256xbf16>
    %28 = vector.extract_strided_slice %26 {offsets = [0, 256], sizes = [4, 256], strides = [1, 1]} : vector<4x512xbf16> to vector<4x256xbf16>
    %29 = arith.maximumf %27, %28 : vector<4x256xbf16>
    %c0_26 = arith.constant 0 : index
    %c2_27 = arith.constant 2 : index
    %c0_28 = arith.constant 0 : index
    %c0_29 = arith.constant 0 : index
    %30 = vector.load %arg2[%c0_26, %c2_27, %c0_28, %c0_29] : memref<1x4x4x256xbf16, #tpu.memory_space<vmem>>, vector<1x1x4x256xbf16>
    %31 = vector.shape_cast %30 : vector<1x1x4x256xbf16> to vector<4x256xbf16>
    %32 = vector.shape_cast %29 : vector<4x256xbf16> to vector<1x1x4x256xbf16>
    tpu.vector_store %arg2[%c0_26, %c2_27, %c0_28, %c0_29], %32 {strides = array<i32>} : memref<1x4x4x256xbf16, #tpu.memory_space<vmem>>, vector<1x1x4x256xbf16>,
    %c0_30 = arith.constant 0 : index
    %c6 = arith.constant 6 : index
    %c0_31 = arith.constant 0 : index
    %c0_32 = arith.constant 0 : index
    %33 = vector.load %arg1[%c0_30, %c6, %c0_31, %c0_32] : memref<1x8x4x512xbf16, #tpu.memory_space<vmem>>, vector<1x1x4x512xbf16>
    %34 = vector.shape_cast %33 : vector<1x1x4x512xbf16> to vector<4x512xbf16>
    %c0_33 = arith.constant 0 : index
    %c7 = arith.constant 7 : index
    %c0_34 = arith.constant 0 : index
    %c0_35 = arith.constant 0 : index
    %35 = vector.load %arg1[%c0_33, %c7, %c0_34, %c0_35] : memref<1x8x4x512xbf16, #tpu.memory_space<vmem>>, vector<1x1x4x512xbf16>
    %36 = vector.shape_cast %35 : vector<1x1x4x512xbf16> to vector<4x512xbf16>
    %37 = arith.maximumf %34, %36 : vector<4x512xbf16>
    %38 = vector.extract_strided_slice %37 {offsets = [0, 0], sizes = [4, 256], strides = [1, 1]} : vector<4x512xbf16> to vector<4x256xbf16>
    %39 = vector.extract_strided_slice %37 {offsets = [0, 256], sizes = [4, 256], strides = [1, 1]} : vector<4x512xbf16> to vector<4x256xbf16>
    %40 = arith.maximumf %38, %39 : vector<4x256xbf16>
    %c0_36 = arith.constant 0 : index
    %c3_37 = arith.constant 3 : index
    %c0_38 = arith.constant 0 : index
    %c0_39 = arith.constant 0 : index
    %41 = vector.load %arg2[%c0_36, %c3_37, %c0_38, %c0_39] : memref<1x4x4x256xbf16, #tpu.memory_space<vmem>>, vector<1x1x4x256xbf16>
    %42 = vector.shape_cast %41 : vector<1x1x4x256xbf16> to vector<4x256xbf16>
    %43 = vector.shape_cast %40 : vector<4x256xbf16> to vector<1x1x4x256xbf16>
    tpu.vector_store %arg2[%c0_36, %c3_37, %c0_38, %c0_39], %43 {strides = array<i32>} : memref<1x4x4x256xbf16, #tpu.memory_space<vmem>>, vector<1x1x4x256xbf16>,
    return
  }
  func.func @transform_0(%arg0: i32) -> (i32, i32, i32, i32) {
    %c0_i32 = arith.constant 0 : i32
    %c0_i32_0 = arith.constant 0 : i32
    %c0_i32_1 = arith.constant 0 : i32
    %c0_i32_2 = arith.constant 0 : i32
    return %arg0, %c0_i32, %c0_i32_0, %c0_i32_1 : i32, i32, i32, i32
  }
  func.func @transform_1(%arg0: i32) -> (i32, i32, i32, i32) {
    %c0_i32 = arith.constant 0 : i32
    %c0_i32_0 = arith.constant 0 : i32
    %c0_i32_1 = arith.constant 0 : i32
    %c0_i32_2 = arith.constant 0 : i32
    return %arg0, %c0_i32, %c0_i32_0, %c0_i32_1 : i32, i32, i32, i32
  }
}

module attributes {stable_mosaic.version = 11 : i64} {
  func.func @kernel(%arg0: i32, %arg1: i32, %arg2: i32, %arg3: memref<2x1024xbf16, #tpu.memory_space<vmem>>, %arg4: memref<1024x512xbf16, #tpu.memory_space<vmem>>, %arg5: memref<1x512xf32, #tpu.memory_space<vmem>>, %arg6: memref<2x512xbf16, #tpu.memory_space<vmem>>, %arg7: memref<2x512xf32, #tpu.memory_space<vmem>>) attributes {dimension_semantics = [#tpu.dimension_semantics<parallel>, #tpu.dimension_semantics<parallel>, #tpu.dimension_semantics<arbitrary>], iteration_bounds = array<i64: 1, 4, 4>, scalar_prefetch = 0 : i64, scratch_operands = 1 : i64, tpu.core_type = #tpu.core_type<tc>, window_params = [{transform_indices = @transform_0, window_bounds = array<i64: 2, 1024>}, {transform_indices = @transform_1, window_bounds = array<i64: 1024, 512>}, {transform_indices = @transform_2, window_bounds = array<i64: 1, 512>}, {transform_indices = @transform_3, window_bounds = array<i64: 2, 512>}]} {
    %c0_i32 = arith.constant 0 : i32
    %0 = arith.cmpi eq, %arg2, %c0_i32 : i32
    %1 = arith.extui %0 : i1 to i32
    %c0_i32_0 = arith.constant 0 : i32
    %2 = arith.cmpi ne, %1, %c0_i32_0 : i32
    scf.if %2 {
      %cst_9 = arith.constant 0.000000e+00 : f32
      %12 = vector.broadcast %cst_9 : f32 to vector<2x512xf32>
      %c0_10 = arith.constant 0 : index
      %c0_11 = arith.constant 0 : index
      %13 = vector.load %arg7[%c0_10, %c0_11] : memref<2x512xf32, #tpu.memory_space<vmem>>, vector<2x512xf32>
      tpu.vector_store %arg7[%c0_10, %c0_11], %12 {strides = array<i32>} : memref<2x512xf32, #tpu.memory_space<vmem>>, vector<2x512xf32>,
    } else {
    }
    %c0 = arith.constant 0 : index
    %c0_1 = arith.constant 0 : index
    %3 = vector.load %arg7[%c0, %c0_1] : memref<2x512xf32, #tpu.memory_space<vmem>>, vector<2x512xf32>
    %c0_2 = arith.constant 0 : index
    %c0_3 = arith.constant 0 : index
    %4 = vector.load %arg3[%c0_2, %c0_3] : memref<2x1024xbf16, #tpu.memory_space<vmem>>, vector<2x1024xbf16>
    %c0_4 = arith.constant 0 : index
    %c0_5 = arith.constant 0 : index
    %5 = vector.load %arg4[%c0_4, %c0_5] : memref<1024x512xbf16, #tpu.memory_space<vmem>>, vector<1024x512xbf16>
    %cst = arith.constant dense<0.000000e+00> : vector<2x512xf32>
    %6 = tpu.matmul %4, %5, %cst {dimension_numbers = #tpu.dot_dimension_numbers<[1], [0], [0], [1], [0, 0, 1, 1], [], []>} : vector<2x1024xbf16>, vector<1024x512xbf16>, vector<2x512xf32> -> vector<2x512xf32>
    %7 = arith.addf %3, %6 : vector<2x512xf32>
    %c0_6 = arith.constant 0 : index
    %c0_7 = arith.constant 0 : index
    %8 = vector.load %arg7[%c0_6, %c0_7] : memref<2x512xf32, #tpu.memory_space<vmem>>, vector<2x512xf32>
    tpu.vector_store %arg7[%c0_6, %c0_7], %7 {strides = array<i32>} : memref<2x512xf32, #tpu.memory_space<vmem>>, vector<2x512xf32>,
    %c3_i32 = arith.constant 3 : i32
    %9 = arith.cmpi eq, %arg2, %c3_i32 : i32
    %10 = arith.extui %9 : i1 to i32
    %c0_i32_8 = arith.constant 0 : i32
    %11 = arith.cmpi ne, %10, %c0_i32_8 : i32
    scf.if %11 {
      %c0_9 = arith.constant 0 : index
      %c0_10 = arith.constant 0 : index
      %12 = vector.load %arg7[%c0_9, %c0_10] : memref<2x512xf32, #tpu.memory_space<vmem>>, vector<2x512xf32>
      %c0_11 = arith.constant 0 : index
      %c0_12 = arith.constant 0 : index
      %13 = vector.load %arg5[%c0_11, %c0_12] : memref<1x512xf32, #tpu.memory_space<vmem>>, vector<1x512xf32>
      %14 = vector.broadcast %13 : vector<1x512xf32> to vector<2x512xf32>
      %15 = arith.addf %12, %14 : vector<2x512xf32>
      %cst_13 = arith.constant 0.000000e+00 : f32
      %16 = vector.broadcast %cst_13 : f32 to vector<2x512xf32>
      %17 = arith.maximumf %15, %16 : vector<2x512xf32>
      %18 = arith.truncf %17 : vector<2x512xf32> to vector<2x512xbf16>
      %c0_14 = arith.constant 0 : index
      %c0_15 = arith.constant 0 : index
      %19 = vector.load %arg6[%c0_14, %c0_15] : memref<2x512xbf16, #tpu.memory_space<vmem>>, vector<2x512xbf16>
      tpu.vector_store %arg6[%c0_14, %c0_15], %18 {strides = array<i32>} : memref<2x512xbf16, #tpu.memory_space<vmem>>, vector<2x512xbf16>,
    } else {
    }
    return
  }
  func.func @transform_0(%arg0: i32, %arg1: i32, %arg2: i32) -> (i32, i32) {
    %c0_i32 = arith.constant 0 : i32
    return %arg0, %arg2 : i32, i32
  }
  func.func @transform_1(%arg0: i32, %arg1: i32, %arg2: i32) -> (i32, i32) {
    %c0_i32 = arith.constant 0 : i32
    return %arg2, %arg1 : i32, i32
  }
  func.func @transform_2(%arg0: i32, %arg1: i32, %arg2: i32) -> (i32, i32) {
    %c0_i32 = arith.constant 0 : i32
    %c0_i32_0 = arith.constant 0 : i32
    return %c0_i32, %arg1 : i32, i32
  }
  func.func @transform_3(%arg0: i32, %arg1: i32, %arg2: i32) -> (i32, i32) {
    %c0_i32 = arith.constant 0 : i32
    return %arg0, %arg1 : i32, i32
  }
}

module attributes {stable_mosaic.version = 11 : i64} {
  func.func @_head_kernel(%arg0: i32, %arg1: memref<2x2048xbf16, #tpu.memory_space<vmem>>, %arg2: memref<2048x128xbf16, #tpu.memory_space<vmem>>, %arg3: memref<1x128xf32, #tpu.memory_space<vmem>>, %arg4: memref<2x128xf32, #tpu.memory_space<vmem>>) attributes {dimension_semantics = [#tpu.dimension_semantics<arbitrary>], iteration_bounds = array<i64: 1>, scalar_prefetch = 0 : i64, scratch_operands = 0 : i64, tpu.core_type = #tpu.core_type<tc>, window_params = [{pipeline_mode = #tpu.pipeline_mode<synchronous>, transform_indices = @transform_0, window_bounds = array<i64: 2, 2048>}, {pipeline_mode = #tpu.pipeline_mode<synchronous>, transform_indices = @transform_1, window_bounds = array<i64: 2048, 128>}, {pipeline_mode = #tpu.pipeline_mode<synchronous>, transform_indices = @transform_2, window_bounds = array<i64: 1, 128>}, {pipeline_mode = #tpu.pipeline_mode<synchronous>, transform_indices = @transform_3, window_bounds = array<i64: 2, 128>}]} {
    %c0 = arith.constant 0 : index
    %c0_0 = arith.constant 0 : index
    %0 = vector.load %arg1[%c0, %c0_0] : memref<2x2048xbf16, #tpu.memory_space<vmem>>, vector<2x2048xbf16>
    %c0_1 = arith.constant 0 : index
    %c0_2 = arith.constant 0 : index
    %1 = vector.load %arg2[%c0_1, %c0_2] : memref<2048x128xbf16, #tpu.memory_space<vmem>>, vector<2048x128xbf16>
    %cst = arith.constant dense<0.000000e+00> : vector<2x128xf32>
    %2 = tpu.matmul %0, %1, %cst {dimension_numbers = #tpu.dot_dimension_numbers<[1], [0], [0], [1], [0, 0, 1, 1], [], []>} : vector<2x2048xbf16>, vector<2048x128xbf16>, vector<2x128xf32> -> vector<2x128xf32>
    %c0_3 = arith.constant 0 : index
    %c0_4 = arith.constant 0 : index
    %3 = vector.load %arg3[%c0_3, %c0_4] : memref<1x128xf32, #tpu.memory_space<vmem>>, vector<1x128xf32>
    %4 = vector.broadcast %3 : vector<1x128xf32> to vector<2x128xf32>
    %5 = arith.addf %2, %4 : vector<2x128xf32>
    %6 = tpu.iota {dimensions = array<i32: 1>} : vector<2x128xi32>
    %c1_i32 = arith.constant 1 : i32
    %7 = vector.broadcast %c1_i32 : i32 to vector<2x128xi32>
    %8 = arith.cmpi sge, %6, %7 : vector<2x128xi32>
    %c10_i32 = arith.constant 10 : i32
    %9 = vector.broadcast %c10_i32 : i32 to vector<2x128xi32>
    %10 = arith.cmpi sle, %6, %9 : vector<2x128xi32>
    %11 = arith.andi %8, %10 : vector<2x128xi1>
    %cst_5 = arith.constant 0xFF800000 : f32
    %12 = vector.broadcast %cst_5 : f32 to vector<2x128xf32>
    %13 = arith.select %11, %5, %12 : vector<2x128xi1>, vector<2x128xf32>
    %cst_6 = arith.constant dense<0xFF800000> : vector<2xf32>
    %14 = vector.multi_reduction <maximumf>, %13, %cst_6 [1] : vector<2x128xf32> to vector<2xf32>
    %15 = vector.shape_cast %14 : vector<2xf32> to vector<2x1xf32>
    %16 = vector.broadcast %15 : vector<2x1xf32> to vector<2x128xf32>
    %17 = arith.subf %13, %16 : vector<2x128xf32>
    %18 = math.exp %17 : vector<2x128xf32>
    %cst_7 = arith.constant dense<0.000000e+00> : vector<2xf32>
    %19 = vector.multi_reduction <add>, %18, %cst_7 [1] : vector<2x128xf32> to vector<2xf32>
    %20 = vector.shape_cast %19 : vector<2xf32> to vector<2x1xf32>
    %21 = vector.broadcast %20 : vector<2x1xf32> to vector<2x128xf32>
    %22 = arith.divf %18, %21 : vector<2x128xf32>
    %c0_i32 = arith.constant 0 : i32
    %23 = vector.broadcast %c0_i32 : i32 to vector<2x128xi32>
    %24 = arith.cmpi eq, %6, %23 : vector<2x128xi32>
    %25 = arith.select %24, %5, %22 : vector<2x128xi1>, vector<2x128xf32>
    %c0_8 = arith.constant 0 : index
    %c0_9 = arith.constant 0 : index
    %26 = vector.load %arg4[%c0_8, %c0_9] : memref<2x128xf32, #tpu.memory_space<vmem>>, vector<2x128xf32>
    tpu.vector_store %arg4[%c0_8, %c0_9], %25 {strides = array<i32>} : memref<2x128xf32, #tpu.memory_space<vmem>>, vector<2x128xf32>,
    return
  }
  func.func @transform_0(%arg0: i32) -> (i32, i32) {
    %c0_i32 = arith.constant 0 : i32
    %c0_i32_0 = arith.constant 0 : i32
    %c0_i32_1 = arith.constant 0 : i32
    return %c0_i32, %c0_i32_0 : i32, i32
  }
  func.func @transform_1(%arg0: i32) -> (i32, i32) {
    %c0_i32 = arith.constant 0 : i32
    %c0_i32_0 = arith.constant 0 : i32
    %c0_i32_1 = arith.constant 0 : i32
    return %c0_i32, %c0_i32_0 : i32, i32
  }
  func.func @transform_2(%arg0: i32) -> (i32, i32) {
    %c0_i32 = arith.constant 0 : i32
    %c0_i32_0 = arith.constant 0 : i32
    %c0_i32_1 = arith.constant 0 : i32
    return %c0_i32, %c0_i32_0 : i32, i32
  }
  func.func @transform_3(%arg0: i32) -> (i32, i32) {
    %c0_i32 = arith.constant 0 : i32
    %c0_i32_0 = arith.constant 0 : i32
    %c0_i32_1 = arith.constant 0 : i32
    return %c0_i32, %c0_i32_0 : i32, i32
  }
}

</mosaic_0001>

<llo_original>
// kernel: cnn_forward.8
$region0: #{cnn_forward.8}
  #allocation0 [shape = 'u32[]', space=smem, size = 0x4, offset = 0x4, fixed_abs, tag = 'smem constant byte address 0x4 - core index']
  #allocation1 [shape = 'u32[144,128]{1,0:T(1,128)}', space=vmem, size = 0x12000, scoped, tag = 'internal scratch']
  %s0 = inlined_call_operand.vmem [shape: bf16[2048,27], index: 0, kind: input, shape index: {}]
  %s1 = inlined_call_operand.hbm [shape: bf16[27,64], index: 1, kind: input, shape index: {}]
  %s2 = inlined_call_operand.hbm [shape: f32[1,64], index: 2, kind: input, shape index: {}]
  %s3 = inlined_call_operand.vmem [shape: bf16[2048,64], index: 3, kind: output, shape index: {}]
  %s4 = sld [smem:[#allocation0]]
  $region53: #{cnn_forward.8} parent=0
    _
  %s6 = ssub.s32 1, %s4
  %s7 = scalar_select 0, %s6, %s4
  $region1: #{cnn_forward.8} parent=0
    #allocation2 [shape = 'u8[8192]{0}', space=vmem, size = 0x2000, scoped, tag = 'input window, operand 1, single buffered']
    #allocation3 [shape = 's32[2]{0}', space=sflag, size = 0x8, scoped, tag = 'scoped memory for cnn_forward.8']
    #allocation4 [shape = 'u8[512]{0}', space=vmem, size = 0x400, scoped, tag = 'input window, operand 2, single buffered']
    #allocation5 [shape = 's32[1]{0}', space=sflag, size = 0x4, scoped, tag = 'scoped memory for cnn_forward.8']
    %8 = vsyncpa [#allocation3], 0
    %9 = vsyncpa [#allocation5], 0
    loop: start=0, step=1, limit=10
    $region2: #{cnn_forward.8} parent=1 // loop_pre_header
      _
    $region3: #{cnn_forward.8} parent=1 // loop_header
      %s11 = sphi 0, %s15
      %p12 = scmp.ge.s32.totalorder %s11, 10
      %s18 = sphi 0, %s37
      %s19 = sphi 0, %s33
      %s20 = sphi 0, %s29
      %s21 = sphi 0, %s18
      %s22 = sphi 0, %s19
      %s23 = sphi 0, %s20
      %s24 = sphi 0, %s21
      %s25 = sphi 0, %s22
      %s26 = sphi 0, %s23
      %s42 = sphi 0, %s44
      %s45 = sphi 0, %s42
      %s46 = sphi 0, %s45
      %s62 = sphi 0, %s46
      %s70 = sphi 0, %s72
      %s73 = sphi 0, %s70
      %s74 = sphi 0, %s73
      %s90 = sphi 0, %s74
      %s96 = sphi 0, %s98
      %s99 = sphi 0, %s96
      %s100 = sphi 0, %s99
      %s116 = sphi 0, %s100
      %s124 = sphi 0, %s126
      %s127 = sphi 0, %s124
      %s128 = sphi 0, %s127
      %s144 = sphi 0, %s128
    $region4: #{cnn_forward.8} parent=1 // loop_header_branch
      %14 = sbr.rel (%p12) target = $region8
    $region5: #{cnn_forward.8} parent=1 // loop_body
      %s16 = ssub.s32 %s11, 1
      %s17 = ssub.s32 %s11, 2
      %s27 = sadd.s32 1, %s20
      %p28 = scmp.ge.s32.totalorder %s27, 1
      %s29 = scalar_select %p28, 0, %s27
      %s30 = sadd.s32 1, %s19
      %s31 = scalar_select %p28, %s30, %s19
      %p32 = scmp.ge.s32.totalorder %s31, 1
      %s33 = scalar_select %p32, 0, %s31
      %s34 = sadd.s32 1, %s18
      %s35 = scalar_select %p32, %s34, %s18
      %p36 = scmp.ge.s32.totalorder %s35, 8
      %s37 = scalar_select %p36, 0, %s35
      %s38 = ssub.s32 %s18, %s37
      %s39 = ssub.s32 %s20, %s29
      %s40 = sor.u32 %s38, %s39
      %p41 = scmp.eq.s32.totalorder %s40, 0
      %s43 = sadd.s32 %s42, 1
      %s44 = scalar_select %p41, %s42, %s43
      %p47 = pneg %p41
      %p48 = scmp.eq.s32.totalorder %s11, 7
      %p49 = por %p47, %p48
      %p50 = scmp.ne.s32.totalorder %s42, %s45
      %p51 = scmp.eq.s32.totalorder %s11, 0
      %p52 = por %p50, %p51
      %p53 = scmp.ne.s32.totalorder %s42, %s45
      %p54 = scmp.eq.s32.totalorder %s16, 7
      %p55 = por %p53, %p54
      %p56 = scmp.ne.s32.totalorder %s45, %s46
      %p57 = scmp.eq.s32.totalorder %s16, 0
      %p58 = por %p56, %p57
      %p59 = scmp.ne.s32.totalorder %s45, %s46
      %p60 = scmp.eq.s32.totalorder %s17, 7
      %p61 = por %p59, %p60
      %p63 = scmp.ne.s32.totalorder %s46, %s62
      %p64 = scmp.eq.s32.totalorder %s17, 0
      %p65 = por %p63, %p64
      %s66 = ssub.s32 %s20, %s29
      %s67 = ssub.s32 %s19, %s33
      %s68 = sor.u32 %s66, %s67
      %p69 = scmp.eq.s32.totalorder %s68, 0
      %s71 = sadd.s32 %s70, 1
      %s72 = scalar_select %p69, %s70, %s71
      %p75 = pneg %p69
      %p76 = scmp.eq.s32.totalorder %s11, 7
      %p77 = por %p75, %p76
      %p78 = scmp.ne.s32.totalorder %s70, %s73
      %p79 = scmp.eq.s32.totalorder %s11, 0
      %p80 = por %p78, %p79
      %p81 = scmp.ne.s32.totalorder %s70, %s73
      %p82 = scmp.eq.s32.totalorder %s16, 7
      %p83 = por %p81, %p82
      %p84 = scmp.ne.s32.totalorder %s73, %s74
      %p85 = scmp.eq.s32.totalorder %s16, 0
      %p86 = por %p84, %p85
      %p87 = scmp.ne.s32.totalorder %s73, %s74
      %p88 = scmp.eq.s32.totalorder %s17, 7
      %p89 = por %p87, %p88
      %p91 = scmp.ne.s32.totalorder %s74, %s90
      %p92 = scmp.eq.s32.totalorder %s17, 0
      %p93 = por %p91, %p92
      %s94 = ssub.s32 %s19, %s33
      %p95 = scmp.eq.s32.totalorder %s94, 0
      %s97 = sadd.s32 %s96, 1
      %s98 = scalar_select %p95, %s96, %s97
      %p101 = pneg %p95
      %p102 = scmp.eq.s32.totalorder %s11, 7
      %p103 = por %p101, %p102
      %p104 = scmp.ne.s32.totalorder %s96, %s99
      %p105 = scmp.eq.s32.totalorder %s11, 0
      %p106 = por %p104, %p105
      %p107 = scmp.ne.s32.totalorder %s96, %s99
      %p108 = scmp.eq.s32.totalorder %s16, 7
      %p109 = por %p107, %p108
      %p110 = scmp.ne.s32.totalorder %s99, %s100
      %p111 = scmp.eq.s32.totalorder %s16, 0
      %p112 = por %p110, %p111
      %p113 = scmp.ne.s32.totalorder %s99, %s100
      %p114 = scmp.eq.s32.totalorder %s17, 7
      %p115 = por %p113, %p114
      %p117 = scmp.ne.s32.totalorder %s100, %s116
      %p118 = scmp.eq.s32.totalorder %s17, 0
      %p119 = por %p117, %p118
      %s120 = ssub.s32 %s18, %s37
      %s121 = ssub.s32 %s19, %s33
      %s122 = sor.u32 %s120, %s121
      %p123 = scmp.eq.s32.totalorder %s122, 0
      %s125 = sadd.s32 %s124, 1
      %s126 = scalar_select %p123, %s124, %s125
      %p129 = pneg %p123
      %p130 = scmp.eq.s32.totalorder %s11, 7
      %p131 = por %p129, %p130
      %p132 = scmp.ne.s32.totalorder %s124, %s127
      %p133 = scmp.eq.s32.totalorder %s11, 0
      %p134 = por %p132, %p133
      %p135 = scmp.ne.s32.totalorder %s124, %s127
      %p136 = scmp.eq.s32.totalorder %s16, 7
      %p137 = por %p135, %p136
      %p138 = scmp.ne.s32.totalorder %s127, %s128
      %p139 = scmp.eq.s32.totalorder %s16, 0
      %p140 = por %p138, %p139
      %p141 = scmp.ne.s32.totalorder %s127, %s128
      %p142 = scmp.eq.s32.totalorder %s17, 7
      %p143 = por %p141, %p142
      %p145 = scmp.ne.s32.totalorder %s128, %s144
      %p146 = scmp.eq.s32.totalorder %s17, 0
      %p147 = por %p145, %p146
      %p148 = scmp.le.s32.totalorder 1, %s11
      %p149 = scmp.lt.s32.totalorder %s11, 9
      %p150 = pnand %p148, %p149
      %p151 = pneg %p150
      // Predicated region
      $region9: #{cnn_forward.8} parent=5 // pred_check
        _
      $region10: #{cnn_forward.8} parent=5 // pred_check_branch
        %153 = sbr.rel (%p150) target = $region12
      $region11: #{cnn_forward.8} parent=5 // pred_region
        %s154 = ssub.s32 %s11, 1
        // Predicated region
        $region13: #{cnn_forward.8} parent=11 // pred_check
          %p155 = pneg %p86
        $region14: #{cnn_forward.8} parent=11 // pred_check_branch
          %157 = sbr.rel (%p155) target = $region16
        $region15: #{cnn_forward.8} parent=11 // pred_region
          %s158 = smul.u32 4, %s23
          %s160 = ssub.s32 256, 256
          %161 = vsyncadd [#allocation3], %s160
          %s162 = sadd.s32 %s22, %s158
          %s163 = smul.addr %s162, 64
          %s164 = scalar_lea.hbm %s1, %s163
          %s165 = sshll.u32 [#allocation2], 4
          %s166 = int_to_ptr.vmem [resolvable:$true] %s165
          %171 = dma.hbm_to_vmem [thread:$0]  %s164, 256, %s166, [#allocation3], 64, 64, 4
        $region16: #{cnn_forward.8} parent=11 // pred_fallthru
          _
        // Predicated region
        $region17: #{cnn_forward.8} parent=11 // pred_check
          %p172 = pneg %p112
        $region18: #{cnn_forward.8} parent=11 // pred_check_branch
          %174 = sbr.rel (%p172) target = $region20
        $region19: #{cnn_forward.8} parent=11 // pred_region
          %s176 = ssub.s32 16, 16
          %177 = vsyncadd [#allocation5], %s176
          %s178 = smul.addr %s22, 16
          %s179 = scalar_lea.hbm %s2, %s178
          %s181 = sshll.u32 [#allocation4], 4
          %s182 = int_to_ptr.vmem [resolvable:$true] %s181
          %184 = dma.hbm_to_vmem [thread:$0]  %s179, 16, %s182, [#allocation5]
        $region20: #{cnn_forward.8} parent=11 // pred_fallthru
          _
      $region12: #{cnn_forward.8} parent=5 // pred_fallthru
        _
      %p185 = scmp.lt.s32.totalorder %s11, 8
      // Predicated region
      $region21: #{cnn_forward.8} parent=5 // pred_check
        %p186 = pneg %p185
      $region22: #{cnn_forward.8} parent=5 // pred_check_branch
        %188 = sbr.rel (%p186) target = $region24
      $region23: #{cnn_forward.8} parent=5 // pred_region
        // Predicated region
        $region25: #{cnn_forward.8} parent=23 // pred_check
          %p189 = pneg %p52
        $region26: #{cnn_forward.8} parent=23 // pred_check_branch
          %191 = sbr.rel (%p189) target = $region28
        $region27: #{cnn_forward.8} parent=23 // pred_region
          %s192 = smul.u32 32, %s18
          %p193 = scmp.lt.s32.totalorder %s192, 255
          %s194 = scalar_select %p193, %s192, 255
          %p195 = scmp.lt.s32.totalorder %s20, 0
          %s196 = scalar_select %p195, %s20, 0
          %s197 = sadd.s32 %s196, %s194
          %s198 = smul.addr %s197, 4
          %s199 = scalar_lea.vmem %s0, %s198
          %s200 = smul.u32 32, %s18
        $region28: #{cnn_forward.8} parent=23 // pred_fallthru
          _
      $region24: #{cnn_forward.8} parent=5 // pred_fallthru
        _
      %p201 = scmp.le.s32.totalorder 1, %s11
      %p202 = scmp.lt.s32.totalorder %s11, 9
      %p203 = pnand %p201, %p202
      %p204 = pneg %p203
      // Predicated region
      $region29: #{cnn_forward.8} parent=5 // pred_check
        _
      $region30: #{cnn_forward.8} parent=5 // pred_check_branch
        %206 = sbr.rel (%p203) target = $region32
      $region31: #{cnn_forward.8} parent=5 // pred_region
        %s207 = ssub.s32 %s11, 1
        // Predicated region
        $region33: #{cnn_forward.8} parent=31 // pred_check
          %p208 = pneg %p86
        $region34: #{cnn_forward.8} parent=31 // pred_check_branch
          %210 = sbr.rel (%p208) target = $region36
        $region35: #{cnn_forward.8} parent=31 // pred_region
          %211 = dma.done [#allocation3], 256
        $region36: #{cnn_forward.8} parent=31 // pred_fallthru
          _
        // Predicated region
        $region37: #{cnn_forward.8} parent=31 // pred_check
          %p212 = pneg %p112
        $region38: #{cnn_forward.8} parent=31 // pred_check_branch
          %214 = sbr.rel (%p212) target = $region40
        $region39: #{cnn_forward.8} parent=31 // pred_region
          %215 = dma.done [#allocation5], 16
        $region40: #{cnn_forward.8} parent=31 // pred_fallthru
          _
        %s216 = smul.u32 32, %s21
        %p217 = scmp.lt.s32.totalorder %s216, 255
        %s218 = scalar_select %p217, %s216, 255
        %p219 = scmp.lt.s32.totalorder %s23, 0
        %s220 = scalar_select %p219, %s23, 0
        %s221 = sadd.s32 %s220, %s218
        %s222 = smul.addr %s221, 4
        %s223 = scalar_lea.vmem %s0, %s222
        %p224 = pneg %p58
        %p225 = pneg %p55
        %p226 = pneg %p86
        %p227 = pneg %p83
        %p228 = pneg %p112
        %p229 = pneg %p109
        %p230 = pneg %p140
        %p231 = pneg %p137
        %s232 = smul.u32 32, %s21
        %p233 = scmp.lt.s32.totalorder %s232, 255
        %s234 = scalar_select %p233, %s232, 255
        %p235 = scmp.lt.s32.totalorder %s22, 0
        %s236 = scalar_select %p235, %s22, 0
        %s237 = sadd.s32 %s236, %s234
        %s238 = smul.addr %s237, 4
        %s239 = scalar_lea.vmem %s3, %s238
        %s240 = smul.u32 32, %s21
        %p241 = scmp.lt.s32.totalorder %s240, 255
        %s242 = scalar_select %p241, %s240, 255
        %p243 = scmp.lt.s32.totalorder %s23, 0
        %s244 = scalar_select %p243, %s23, 0
        %s245 = sadd.s32 %s244, %s242
        %s246 = smul.addr %s245, 4
        %s247 = scalar_lea.vmem %s0, %s246
        %s248 = smul.u32 32, %s21
        %s249 = smul.u32 4, %s23
        %s250 = smul.u32 32, %s21
        %p251 = scmp.lt.s32.totalorder %s250, 255
        %s252 = scalar_select %p251, %s250, 255
        %p253 = scmp.lt.s32.totalorder %s22, 0
        %s254 = scalar_select %p253, %s22, 0
        %s255 = sadd.s32 %s254, %s252
        %s256 = smul.addr %s255, 4
        %s257 = scalar_lea.vmem %s3, %s256
        %s258 = smul.u32 32, %s21
        %v260 = vld [vmem:[%s247] sm:$0xf]
        %v261 = vld [vmem:[%s247 + $0x4] sm:$0xf]
        %v262 = vld [vmem:[%s247 + $0x8] sm:$0xf]
        %v263 = vld [vmem:[%s247 + $0xc] sm:$0xf]
        %v264 = vld [vmem:[%s247 + $0x10] sm:$0xf]
        %v265 = vld [vmem:[%s247 + $0x14] sm:$0xf]
        %v266 = vld [vmem:[%s247 + $0x18] sm:$0xf]
        %v267 = vld [vmem:[%s247 + $0x1c] sm:$0xf]
        %v268 = vld [vmem:[%s247 + $0x20] sm:$0xf]
        %v269 = vld [vmem:[%s247 + $0x24] sm:$0xf]
        %v270 = vld [vmem:[%s247 + $0x28] sm:$0xf]
        %v271 = vld [vmem:[%s247 + $0x2c] sm:$0xf]
        %v272 = vld [vmem:[%s247 + $0x30] sm:$0xf]
        %v273 = vld [vmem:[%s247 + $0x34] sm:$0xf]
        %v274 = vld [vmem:[%s247 + $0x38] sm:$0xf]
        %v275 = vld [vmem:[%s247 + $0x3c] sm:$0xf]
        %v276 = vld [vmem:[%s247 + $0x40] sm:$0xf]
        %v277 = vld [vmem:[%s247 + $0x44] sm:$0xf]
        %v278 = vld [vmem:[%s247 + $0x48] sm:$0xf]
        %v279 = vld [vmem:[%s247 + $0x4c] sm:$0xf]
        %v280 = vld [vmem:[%s247 + $0x50] sm:$0xf]
        %v281 = vld [vmem:[%s247 + $0x54] sm:$0xf]
        %v282 = vld [vmem:[%s247 + $0x58] sm:$0xf]
        %v283 = vld [vmem:[%s247 + $0x5c] sm:$0xf]
        %v284 = vld [vmem:[%s247 + $0x60] sm:$0xf]
        %v285 = vld [vmem:[%s247 + $0x64] sm:$0xf]
        %v286 = vld [vmem:[%s247 + $0x68] sm:$0xf]
        %v287 = vld [vmem:[%s247 + $0x6c] sm:$0xf]
        %v288 = vld [vmem:[%s247 + $0x70] sm:$0xf]
        %v289 = vld [vmem:[%s247 + $0x74] sm:$0xf]
        %v290 = vld [vmem:[%s247 + $0x78] sm:$0xf]
        %v291 = vld [vmem:[%s247 + $0x7c] sm:$0xf]
        %v292 = vld [vmem:[#allocation2] sm:$0xf]
        %v293 = vld [vmem:[#allocation2 + $0x4] sm:$0xf]
        %v294 = vld [vmem:[#allocation2 + $0x8] sm:$0xf]
        %v295 = vld [vmem:[#allocation2 + $0xc] sm:$0x3]
        %v296 = vld [vmem:[#allocation4] sm:$0x1]
        %v298 = vlaneseq
        %v299 = vshrl.u32 %v298, 7
        %v300 = vsub.s32 0, %v299
        %v301 = vrot.slane %v296, %v300
        %v335 = vunpack.c.l.b16 %v260
        %v336 = vunpack.c.l.b16 %v261
        %v337 = vunpack.c.l.b16 %v262
        %v338 = vunpack.c.l.b16 %v263
        %v339 = vunpack.c.l.b16 %v264
        %v340 = vunpack.c.l.b16 %v265
        %v341 = vunpack.c.l.b16 %v266
        %v342 = vunpack.c.l.b16 %v267
        %v343 = vunpack.c.l.b16 %v268
        %v344 = vunpack.c.l.b16 %v269
        %v345 = vunpack.c.l.b16 %v270
        %v346 = vunpack.c.l.b16 %v271
        %v347 = vunpack.c.l.b16 %v272
        %v348 = vunpack.c.l.b16 %v273
        %v349 = vunpack.c.l.b16 %v274
        %v350 = vunpack.c.l.b16 %v275
        %v351 = vunpack.c.l.b16 %v276
        %v352 = vunpack.c.l.b16 %v277
        %v353 = vunpack.c.l.b16 %v278
        %v354 = vunpack.c.l.b16 %v279
        %v355 = vunpack.c.l.b16 %v280
        %v356 = vunpack.c.l.b16 %v281
        %v357 = vunpack.c.l.b16 %v282
        %v358 = vunpack.c.l.b16 %v283
        %v359 = vunpack.c.l.b16 %v284
        %v360 = vunpack.c.l.b16 %v285
        %v361 = vunpack.c.l.b16 %v286
        %v362 = vunpack.c.l.b16 %v287
        %v363 = vunpack.c.l.b16 %v288
        %v364 = vunpack.c.l.b16 %v289
        %v365 = vunpack.c.l.b16 %v290
        %v366 = vunpack.c.l.b16 %v291
        %v367 = vpack.c.b16 %v336, %v335
        %v368 = vpack.c.b16 %v338, %v337
        %v369 = vpack.c.b16 %v340, %v339
        %v370 = vpack.c.b16 %v342, %v341
        %v371 = vpack.c.b16 %v344, %v343
        %v372 = vpack.c.b16 %v346, %v345
        %v373 = vpack.c.b16 %v348, %v347
        %v374 = vpack.c.b16 %v350, %v349
        %v375 = vpack.c.b16 %v352, %v351
        %v376 = vpack.c.b16 %v354, %v353
        %v377 = vpack.c.b16 %v356, %v355
        %v378 = vpack.c.b16 %v358, %v357
        %v379 = vpack.c.b16 %v360, %v359
        %v380 = vpack.c.b16 %v362, %v361
        %v381 = vpack.c.b16 %v364, %v363
        %v382 = vpack.c.b16 %v366, %v365
        %v387 = vunpack.c.l.b16 %v292
        %v388 = vunpack.c.l.b16 %v293
        %v389 = vunpack.c.l.b16 %v294
        %v390 = vunpack.c.l.b16 %v295
        %v391 = vpack.c.b16 %v388, %v387
        %v392 = vpack.c.b16 %v390, %v389
        %vm394 = vcmask 220160
        %v396 = vsel %vm394, %v367, 0
        %v399 = vsel %vm394, %v368, 0
        %v402 = vsel %vm394, %v369, 0
        %v405 = vsel %vm394, %v370, 0
        %v408 = vsel %vm394, %v371, 0
        %v411 = vsel %vm394, %v372, 0
        %v414 = vsel %vm394, %v373, 0
        %v417 = vsel %vm394, %v374, 0
        %v420 = vsel %vm394, %v375, 0
        %v423 = vsel %vm394, %v376, 0
        %v426 = vsel %vm394, %v377, 0
        %v429 = vsel %vm394, %v378, 0
        %v432 = vsel %vm394, %v379, 0
        %v435 = vsel %vm394, %v380, 0
        %v438 = vsel %vm394, %v381, 0
        %v441 = vsel %vm394, %v382, 0
        %vm443 = vcmask 1044480
        %vm444 = vcmask 1045504
        %v445 = vsel %vm443, 4294967295, 65535
        %v446 = vsel %vm444, %v445, 0
        %v448 = vand.u32 %v392, %v446
        %450 = vmatprep.subr.bf16.mxu0 0
        %451 = vmatpush1.bf16.msra.mxu0 %v391
        %452 = vmatprep.subr.bf16.mxu0 0
        %453 = vmatpush1.bf16.msra.mxu0 %v448
        %454 = vmatprep.subr.bf16.mxu0 0
        %455 = vmatpush1.bf16.msra.mxu0 0
        %456 = vmatprep.subr.bf16.mxu0 0
        %457 = vmatpush1.bf16.msra.mxu0 0
        %458 = vmatprep.subr.bf16.mxu0 0
        %459 = vmatpush1.bf16.msra.mxu0 0
        %460 = vmatprep.subr.bf16.mxu0 0
        %461 = vmatpush1.bf16.msra.mxu0 0
        %462 = vmatprep.subr.bf16.mxu0 0
        %463 = vmatpush1.bf16.msra.mxu0 0
        %464 = vmatprep.subr.bf16.mxu0 0
        %465 = vmatpush1.bf16.msra.mxu0 0
        %466 = vmatprep.subr.bf16.mxu0 0
        %467 = vmatpush1.bf16.msra.mxu0 0
        %468 = vmatprep.subr.bf16.mxu0 0
        %469 = vmatpush1.bf16.msra.mxu0 0
        %470 = vmatprep.subr.bf16.mxu0 0
        %471 = vmatpush1.bf16.msra.mxu0 0
        %472 = vmatprep.subr.bf16.mxu0 0
        %473 = vmatpush1.bf16.msra.mxu0 0
        %474 = vmatprep.subr.bf16.mxu0 0
        %475 = vmatpush1.bf16.msra.mxu0 0
        %476 = vmatprep.subr.bf16.mxu0 0
        %477 = vmatpush1.bf16.msra.mxu0 0
        %478 = vmatprep.subr.bf16.mxu0 0
        %479 = vmatpush1.bf16.msra.mxu0 0
        %480 = vmatprep.subr.bf16.mxu0 0
        %481 = vmatpush1.bf16.msra.mxu0 0
        %482 = vmatprep.mubr.bf16.mxu0 0
        %483 = vmatmul.mubr.bf16.gmra.mrb[0].mxu0 %v396
        %v484 = vpop.f32.mrb[0].mxu0
        %v485 = vadd.f32 %v301, %v484
        %v486 = vpop.f32.mrb[0].mxu0
        %v487 = vpop.f32.mrb[0].mxu0
        %v488 = vadd.f32 %v301, %v487
        %v489 = vpop.f32.mrb[0].mxu0
        %490 = vmatprep.mubr.bf16.mxu0 0
        %491 = vmatmul.mubr.bf16.gmra.mrb[0].mxu0 %v399
        %v492 = vpop.f32.mrb[0].mxu0
        %v493 = vadd.f32 %v301, %v492
        %v494 = vpop.f32.mrb[0].mxu0
        %v495 = vpop.f32.mrb[0].mxu0
        %v496 = vadd.f32 %v301, %v495
        %v497 = vpop.f32.mrb[0].mxu0
        %498 = vmatprep.mubr.bf16.mxu0 0
        %499 = vmatmul.mubr.bf16.gmra.mrb[0].mxu0 %v402
        %v500 = vpop.f32.mrb[0].mxu0
        %v501 = vadd.f32 %v301, %v500
        %v502 = vpop.f32.mrb[0].mxu0
        %v503 = vpop.f32.mrb[0].mxu0
        %v504 = vadd.f32 %v301, %v503
        %v505 = vpop.f32.mrb[0].mxu0
        %506 = vmatprep.mubr.bf16.mxu0 0
        %507 = vmatmul.mubr.bf16.gmra.mrb[0].mxu0 %v405
        %v508 = vpop.f32.mrb[0].mxu0
        %v509 = vadd.f32 %v301, %v508
        %v510 = vpop.f32.mrb[0].mxu0
        %v511 = vpop.f32.mrb[0].mxu0
        %v512 = vadd.f32 %v301, %v511
        %v513 = vpop.f32.mrb[0].mxu0
        %514 = vmatprep.mubr.bf16.mxu0 0
        %515 = vmatmul.mubr.bf16.gmra.mrb[0].mxu0 %v408
        %v516 = vpop.f32.mrb[0].mxu0
        %v517 = vadd.f32 %v301, %v516
        %v518 = vpop.f32.mrb[0].mxu0
        %v519 = vpop.f32.mrb[0].mxu0
        %v520 = vadd.f32 %v301, %v519
        %v521 = vpop.f32.mrb[0].mxu0
        %522 = vmatprep.mubr.bf16.mxu0 0
        %523 = vmatmul.mubr.bf16.gmra.mrb[0].mxu0 %v411
        %v524 = vpop.f32.mrb[0].mxu0
        %v525 = vadd.f32 %v301, %v524
        %v526 = vpop.f32.mrb[0].mxu0
        %v527 = vpop.f32.mrb[0].mxu0
        %v528 = vadd.f32 %v301, %v527
        %v529 = vpop.f32.mrb[0].mxu0
        %530 = vmatprep.mubr.bf16.mxu0 0
        %531 = vmatmul.mubr.bf16.gmra.mrb[0].mxu0 %v414
        %v532 = vpop.f32.mrb[0].mxu0
        %v533 = vadd.f32 %v301, %v532
        %v534 = vpop.f32.mrb[0].mxu0
        %v535 = vpop.f32.mrb[0].mxu0
        %v536 = vadd.f32 %v301, %v535
        %v537 = vpop.f32.mrb[0].mxu0
        %538 = vmatprep.mubr.bf16.mxu0 0
        %539 = vmatmul.mubr.bf16.gmra.mrb[0].mxu0 %v417
        %v540 = vpop.f32.mrb[0].mxu0
        %v541 = vadd.f32 %v301, %v540
        %v542 = vpop.f32.mrb[0].mxu0
        %v543 = vpop.f32.mrb[0].mxu0
        %v544 = vadd.f32 %v301, %v543
        %v545 = vpop.f32.mrb[0].mxu0
        %546 = vmatprep.mubr.bf16.mxu0 0
        %547 = vmatmul.mubr.bf16.gmra.mrb[0].mxu0 %v420
        %v548 = vpop.f32.mrb[0].mxu0
        %v549 = vadd.f32 %v301, %v548
        %v550 = vpop.f32.mrb[0].mxu0
        %v551 = vpop.f32.mrb[0].mxu0
        %v552 = vadd.f32 %v301, %v551
        %v553 = vpop.f32.mrb[0].mxu0
        %554 = vmatprep.mubr.bf16.mxu0 0
        %555 = vmatmul.mubr.bf16.gmra.mrb[0].mxu0 %v423
        %v556 = vpop.f32.mrb[0].mxu0
        %v557 = vadd.f32 %v301, %v556
        %v558 = vpop.f32.mrb[0].mxu0
        %v559 = vpop.f32.mrb[0].mxu0
        %v560 = vadd.f32 %v301, %v559
        %v561 = vpop.f32.mrb[0].mxu0
        %562 = vmatprep.mubr.bf16.mxu0 0
        %563 = vmatmul.mubr.bf16.gmra.mrb[0].mxu0 %v426
        %v564 = vpop.f32.mrb[0].mxu0
        %v565 = vadd.f32 %v301, %v564
        %v566 = vpop.f32.mrb[0].mxu0
        %v567 = vpop.f32.mrb[0].mxu0
        %v568 = vadd.f32 %v301, %v567
        %v569 = vpop.f32.mrb[0].mxu0
        %570 = vmatprep.mubr.bf16.mxu0 0
        %571 = vmatmul.mubr.bf16.gmra.mrb[0].mxu0 %v429
        %v572 = vpop.f32.mrb[0].mxu0
        %v573 = vadd.f32 %v301, %v572
        %v574 = vpop.f32.mrb[0].mxu0
        %v575 = vpop.f32.mrb[0].mxu0
        %v576 = vadd.f32 %v301, %v575
        %v577 = vpop.f32.mrb[0].mxu0
        %578 = vmatprep.mubr.bf16.mxu0 0
        %579 = vmatmul.mubr.bf16.gmra.mrb[0].mxu0 %v432
        %v580 = vpop.f32.mrb[0].mxu0
        %v581 = vadd.f32 %v301, %v580
        %v582 = vpop.f32.mrb[0].mxu0
        %v583 = vpop.f32.mrb[0].mxu0
        %v584 = vadd.f32 %v301, %v583
        %v585 = vpop.f32.mrb[0].mxu0
        %586 = vmatprep.mubr.bf16.mxu0 0
        %587 = vmatmul.mubr.bf16.gmra.mrb[0].mxu0 %v435
        %v588 = vpop.f32.mrb[0].mxu0
        %v589 = vadd.f32 %v301, %v588
        %v590 = vpop.f32.mrb[0].mxu0
        %v591 = vpop.f32.mrb[0].mxu0
        %v592 = vadd.f32 %v301, %v591
        %v593 = vpop.f32.mrb[0].mxu0
        %594 = vmatprep.mubr.bf16.mxu0 0
        %595 = vmatmul.mubr.bf16.gmra.mrb[0].mxu0 %v438
        %v596 = vpop.f32.mrb[0].mxu0
        %v597 = vadd.f32 %v301, %v596
        %v598 = vpop.f32.mrb[0].mxu0
        %v599 = vpop.f32.mrb[0].mxu0
        %v600 = vadd.f32 %v301, %v599
        %v601 = vpop.f32.mrb[0].mxu0
        %602 = vmatprep.mubr.bf16.mxu0 0
        %603 = vmatmul.mubr.bf16.gmra.mrb[0].mxu0 %v441
        %v604 = vpop.f32.mrb[0].mxu0
        %v605 = vadd.f32 %v301, %v604
        %v606 = vpop.f32.mrb[0].mxu0
        %v607 = vpop.f32.mrb[0].mxu0
        %v608 = vadd.f32 %v301, %v607
        %v609 = vpop.f32.mrb[0].mxu0
        %610 = vdwg.mxu0
        %v611 = vmax.f32 %v485, 0.0
        %v612 = vmax.f32 %v488, 0.0
        %v613 = vmax.f32 %v493, 0.0
        %v614 = vmax.f32 %v496, 0.0
        %v615 = vmax.f32 %v501, 0.0
        %v616 = vmax.f32 %v504, 0.0
        %v617 = vmax.f32 %v509, 0.0
        %v618 = vmax.f32 %v512, 0.0
        %v619 = vmax.f32 %v517, 0.0
        %v620 = vmax.f32 %v520, 0.0
        %v621 = vmax.f32 %v525, 0.0
        %v622 = vmax.f32 %v528, 0.0
        %v623 = vmax.f32 %v533, 0.0
        %v624 = vmax.f32 %v536, 0.0
        %v625 = vmax.f32 %v541, 0.0
        %v626 = vmax.f32 %v544, 0.0
        %v627 = vmax.f32 %v549, 0.0
        %v628 = vmax.f32 %v552, 0.0
        %v629 = vmax.f32 %v557, 0.0
        %v630 = vmax.f32 %v560, 0.0
        %v631 = vmax.f32 %v565, 0.0
        %v632 = vmax.f32 %v568, 0.0
        %v633 = vmax.f32 %v573, 0.0
        %v634 = vmax.f32 %v576, 0.0
        %v635 = vmax.f32 %v581, 0.0
        %v636 = vmax.f32 %v584, 0.0
        %v637 = vmax.f32 %v589, 0.0
        %v638 = vmax.f32 %v592, 0.0
        %v639 = vmax.f32 %v597, 0.0
        %v640 = vmax.f32 %v600, 0.0
        %v641 = vmax.f32 %v605, 0.0
        %v642 = vmax.f32 %v608, 0.0
        %v643 = vpack.c.bf16 %v612, %v611
        %v644 = vpack.c.bf16 %v614, %v613
        %v645 = vpack.c.bf16 %v616, %v615
        %v646 = vpack.c.bf16 %v618, %v617
        %v647 = vpack.c.bf16 %v620, %v619
        %v648 = vpack.c.bf16 %v622, %v621
        %v649 = vpack.c.bf16 %v624, %v623
        %v650 = vpack.c.bf16 %v626, %v625
        %v651 = vpack.c.bf16 %v628, %v627
        %v652 = vpack.c.bf16 %v630, %v629
        %v653 = vpack.c.bf16 %v632, %v631
        %v654 = vpack.c.bf16 %v634, %v633
        %v655 = vpack.c.bf16 %v636, %v635
        %v656 = vpack.c.bf16 %v638, %v637
        %v657 = vpack.c.bf16 %v640, %v639
        %v658 = vpack.c.bf16 %v642, %v641
        %v675 = vunpack.c.l.b16 %v643
        %v676 = vunpack.c.h.b16 %v643
        %v677 = vunpack.c.l.b16 %v644
        %v678 = vunpack.c.h.b16 %v644
        %v679 = vunpack.c.l.b16 %v645
        %v680 = vunpack.c.h.b16 %v645
        %v681 = vunpack.c.l.b16 %v646
        %v682 = vunpack.c.h.b16 %v646
        %v683 = vunpack.c.l.b16 %v647
        %v684 = vunpack.c.h.b16 %v647
        %v685 = vunpack.c.l.b16 %v648
        %v686 = vunpack.c.h.b16 %v648
        %v687 = vunpack.c.l.b16 %v649
        %v688 = vunpack.c.h.b16 %v649
        %v689 = vunpack.c.l.b16 %v650
        %v690 = vunpack.c.h.b16 %v650
        %v691 = vunpack.c.l.b16 %v651
        %v692 = vunpack.c.h.b16 %v651
        %v693 = vunpack.c.l.b16 %v652
        %v694 = vunpack.c.h.b16 %v652
        %v695 = vunpack.c.l.b16 %v653
        %v696 = vunpack.c.h.b16 %v653
        %v697 = vunpack.c.l.b16 %v654
        %v698 = vunpack.c.h.b16 %v654
        %v699 = vunpack.c.l.b16 %v655
        %v700 = vunpack.c.h.b16 %v655
        %v701 = vunpack.c.l.b16 %v656
        %v702 = vunpack.c.h.b16 %v656
        %v703 = vunpack.c.l.b16 %v657
        %v704 = vunpack.c.h.b16 %v657
        %v705 = vunpack.c.l.b16 %v658
        %v706 = vunpack.c.h.b16 %v658
        %v707 = vpack.c.b16 %v675, %v675
        %v708 = vpack.c.b16 %v676, %v676
        %v709 = vpack.c.b16 %v677, %v677
        %v710 = vpack.c.b16 %v678, %v678
        %v711 = vpack.c.b16 %v679, %v679
        %v712 = vpack.c.b16 %v680, %v680
        %v713 = vpack.c.b16 %v681, %v681
        %v714 = vpack.c.b16 %v682, %v682
        %v715 = vpack.c.b16 %v683, %v683
        %v716 = vpack.c.b16 %v684, %v684
        %v717 = vpack.c.b16 %v685, %v685
        %v718 = vpack.c.b16 %v686, %v686
        %v719 = vpack.c.b16 %v687, %v687
        %v720 = vpack.c.b16 %v688, %v688
        %v721 = vpack.c.b16 %v689, %v689
        %v722 = vpack.c.b16 %v690, %v690
        %v723 = vpack.c.b16 %v691, %v691
        %v724 = vpack.c.b16 %v692, %v692
        %v725 = vpack.c.b16 %v693, %v693
        %v726 = vpack.c.b16 %v694, %v694
        %v727 = vpack.c.b16 %v695, %v695
        %v728 = vpack.c.b16 %v696, %v696
        %v729 = vpack.c.b16 %v697, %v697
        %v730 = vpack.c.b16 %v698, %v698
        %v731 = vpack.c.b16 %v699, %v699
        %v732 = vpack.c.b16 %v700, %v700
        %v733 = vpack.c.b16 %v701, %v701
        %v734 = vpack.c.b16 %v702, %v702
        %v735 = vpack.c.b16 %v703, %v703
        %v736 = vpack.c.b16 %v704, %v704
        %v737 = vpack.c.b16 %v705, %v705
        %v738 = vpack.c.b16 %v706, %v706
        %vm771 = vcmask 519168
        %772 = vst.msk [vmem:[%s257] sm:$0xf] %vm771, %v707
        %773 = vst.msk [vmem:[%s257 + $0x4] sm:$0xf] %vm771, %v708
        %774 = vst.msk [vmem:[%s257 + $0x8] sm:$0xf] %vm771, %v709
        %775 = vst.msk [vmem:[%s257 + $0xc] sm:$0xf] %vm771, %v710
        %776 = vst.msk [vmem:[%s257 + $0x10] sm:$0xf] %vm771, %v711
        %777 = vst.msk [vmem:[%s257 + $0x14] sm:$0xf] %vm771, %v712
        %778 = vst.msk [vmem:[%s257 + $0x18] sm:$0xf] %vm771, %v713
        %779 = vst.msk [vmem:[%s257 + $0x1c] sm:$0xf] %vm771, %v714
        %780 = vst.msk [vmem:[%s257 + $0x20] sm:$0xf] %vm771, %v715
        %781 = vst.msk [vmem:[%s257 + $0x24] sm:$0xf] %vm771, %v716
        %782 = vst.msk [vmem:[%s257 + $0x28] sm:$0xf] %vm771, %v717
        %783 = vst.msk [vmem:[%s257 + $0x2c] sm:$0xf] %vm771, %v718
        %784 = vst.msk [vmem:[%s257 + $0x30] sm:$0xf] %vm771, %v719
        %785 = vst.msk [vmem:[%s257 + $0x34] sm:$0xf] %vm771, %v720
        %786 = vst.msk [vmem:[%s257 + $0x38] sm:$0xf] %vm771, %v721
        %787 = vst.msk [vmem:[%s257 + $0x3c] sm:$0xf] %vm771, %v722
        %788 = vst.msk [vmem:[%s257 + $0x40] sm:$0xf] %vm771, %v723
        %789 = vst.msk [vmem:[%s257 + $0x44] sm:$0xf] %vm771, %v724
        %790 = vst.msk [vmem:[%s257 + $0x48] sm:$0xf] %vm771, %v725
        %791 = vst.msk [vmem:[%s257 + $0x4c] sm:$0xf] %vm771, %v726
        %792 = vst.msk [vmem:[%s257 + $0x50] sm:$0xf] %vm771, %v727
        %793 = vst.msk [vmem:[%s257 + $0x54] sm:$0xf] %vm771, %v728
        %794 = vst.msk [vmem:[%s257 + $0x58] sm:$0xf] %vm771, %v729
        %795 = vst.msk [vmem:[%s257 + $0x5c] sm:$0xf] %vm771, %v730
        %796 = vst.msk [vmem:[%s257 + $0x60] sm:$0xf] %vm771, %v731
        %797 = vst.msk [vmem:[%s257 + $0x64] sm:$0xf] %vm771, %v732
        %798 = vst.msk [vmem:[%s257 + $0x68] sm:$0xf] %vm771, %v733
        %799 = vst.msk [vmem:[%s257 + $0x6c] sm:$0xf] %vm771, %v734
        %800 = vst.msk [vmem:[%s257 + $0x70] sm:$0xf] %vm771, %v735
        %801 = vst.msk [vmem:[%s257 + $0x74] sm:$0xf] %vm771, %v736
        %802 = vst.msk [vmem:[%s257 + $0x78] sm:$0xf] %vm771, %v737
        %803 = vst.msk [vmem:[%s257 + $0x7c] sm:$0xf] %vm771, %v738
        %s804 = smul.u32 32, %s21
        %p805 = scmp.lt.s32.totalorder %s804, 255
        %s806 = scalar_select %p805, %s804, 255
        %p807 = scmp.lt.s32.totalorder %s22, 0
        %s808 = scalar_select %p807, %s22, 0
        %s809 = sadd.s32 %s808, %s806
        %s810 = smul.addr %s809, 4
        %s811 = scalar_lea.vmem %s3, %s810
        // Predicated region
        $region41: #{cnn_forward.8} parent=31 // pred_check
          %p812 = pneg %p137
        $region42: #{cnn_forward.8} parent=31 // pred_check_branch
          %814 = sbr.rel (%p812) target = $region44
        $region43: #{cnn_forward.8} parent=31 // pred_region
          %s815 = smul.u32 32, %s21
        $region44: #{cnn_forward.8} parent=31 // pred_fallthru
          _
      $region32: #{cnn_forward.8} parent=5 // pred_fallthru
        _
      %p816 = scmp.le.s32.totalorder 2, %s11
      // Predicated region
      $region45: #{cnn_forward.8} parent=5 // pred_check
        %p817 = pneg %p816
      $region46: #{cnn_forward.8} parent=5 // pred_check_branch
        %819 = sbr.rel (%p817) target = $region48
      $region47: #{cnn_forward.8} parent=5 // pred_region
        %s820 = ssub.s32 %s11, 2
        // Predicated region
        $region49: #{cnn_forward.8} parent=47 // pred_check
          %p821 = pneg %p143
        $region50: #{cnn_forward.8} parent=47 // pred_check_branch
          %823 = sbr.rel (%p821) target = $region52
        $region51: #{cnn_forward.8} parent=47 // pred_region
          %s824 = smul.u32 32, %s24
          %p825 = scmp.lt.s32.totalorder %s824, 255
          %s826 = scalar_select %p825, %s824, 255
          %p827 = scmp.lt.s32.totalorder %s25, 0
          %s828 = scalar_select %p827, %s25, 0
          %s829 = sadd.s32 %s828, %s826
          %s830 = smul.addr %s829, 4
          %s831 = scalar_lea.vmem %s3, %s830
        $region52: #{cnn_forward.8} parent=47 // pred_fallthru
          _
      $region48: #{cnn_forward.8} parent=5 // pred_fallthru
        _
    $region6: #{cnn_forward.8} parent=1 // loop_footer
      %s15 = sadd.s32 1, %s11
    $region7: #{cnn_forward.8} parent=1 // loop_footer_branch
      %10 = sbr.rel target = $region3
    $region8: #{cnn_forward.8} parent=1 // loop_exit
      _
    %832 = vsyncpa [#allocation3], 1
    %s833 = scalar_lea.sflag [#allocation3], 1
    %834 = vsyncpa %s833, 1
    %835 = vsyncpa [#allocation5], 1

// kernel: cnn_forward.9
$region0: #{cnn_forward.9}
  #allocation0 [shape = 'u32[]', space=smem, size = 0x4, offset = 0x4, fixed_abs, tag = 'smem constant byte address 0x4 - core index']
  #allocation1 [shape = 'u32[144,128]{1,0:T(1,128)}', space=vmem, size = 0x12000, scoped, tag = 'internal scratch']
  %s0 = inlined_call_operand.vmem [shape: bf16[2,32,16,128], index: 0, kind: input, shape index: {}]
  %s1 = inlined_call_operand.vmem [shape: bf16[2,16,16,64], index: 1, kind: output, shape index: {}]
  %s2 = sld [smem:[#allocation0]]
  $region37: #{cnn_forward.9} parent=0
    _
  %s4 = ssub.s32 1, %s2
  %s5 = scalar_select 0, %s4, %s2
  loop: start=0, step=1, limit=4
  $region2: #{cnn_forward.9} parent=0 // loop_pre_header
    _
  $region3: #{cnn_forward.9} parent=0 // loop_header
    %s7 = sphi 0, %s11
    %p8 = scmp.ge.s32.totalorder %s7, 4
    %s17 = sphi 0, %s19
    %s20 = sphi 0, %s17
    %s21 = sphi 0, %s20
    %s37 = sphi 0, %s21
    %s43 = sphi 0, %s45
    %s46 = sphi 0, %s43
    %s47 = sphi 0, %s46
    %s63 = sphi 0, %s47
  $region4: #{cnn_forward.9} parent=0 // loop_header_branch
    %10 = sbr.rel (%p8) target = $region8
  $region5: #{cnn_forward.9} parent=0 // loop_body
    %s12 = ssub.s32 %s7, 1
    %s13 = ssub.s32 %s7, 2
    %s14 = sadd.s32 %s7, 1
    %s15 = ssub.s32 %s7, %s14
    %p16 = scmp.eq.s32.totalorder %s15, 0
    %s18 = sadd.s32 %s17, 1
    %s19 = scalar_select %p16, %s17, %s18
    %p22 = pneg %p16
    %p23 = scmp.eq.s32.totalorder %s7, 1
    %p24 = por %p22, %p23
    %p25 = scmp.ne.s32.totalorder %s17, %s20
    %p26 = scmp.eq.s32.totalorder %s7, 0
    %p27 = por %p25, %p26
    %p28 = scmp.ne.s32.totalorder %s17, %s20
    %p29 = scmp.eq.s32.totalorder %s12, 1
    %p30 = por %p28, %p29
    %p31 = scmp.ne.s32.totalorder %s20, %s21
    %p32 = scmp.eq.s32.totalorder %s12, 0
    %p33 = por %p31, %p32
    %p34 = scmp.ne.s32.totalorder %s20, %s21
    %p35 = scmp.eq.s32.totalorder %s13, 1
    %p36 = por %p34, %p35
    %p38 = scmp.ne.s32.totalorder %s21, %s37
    %p39 = scmp.eq.s32.totalorder %s13, 0
    %p40 = por %p38, %p39
    %s41 = ssub.s32 %s7, %s14
    %p42 = scmp.eq.s32.totalorder %s41, 0
    %s44 = sadd.s32 %s43, 1
    %s45 = scalar_select %p42, %s43, %s44
    %p48 = pneg %p42
    %p49 = scmp.eq.s32.totalorder %s7, 1
    %p50 = por %p48, %p49
    %p51 = scmp.ne.s32.totalorder %s43, %s46
    %p52 = scmp.eq.s32.totalorder %s7, 0
    %p53 = por %p51, %p52
    %p54 = scmp.ne.s32.totalorder %s43, %s46
    %p55 = scmp.eq.s32.totalorder %s12, 1
    %p56 = por %p54, %p55
    %p57 = scmp.ne.s32.totalorder %s46, %s47
    %p58 = scmp.eq.s32.totalorder %s12, 0
    %p59 = por %p57, %p58
    %p60 = scmp.ne.s32.totalorder %s46, %s47
    %p61 = scmp.eq.s32.totalorder %s13, 1
    %p62 = por %p60, %p61
    %p64 = scmp.ne.s32.totalorder %s47, %s63
    %p65 = scmp.eq.s32.totalorder %s13, 0
    %p66 = por %p64, %p65
    %p67 = scmp.le.s32.totalorder 1, %s7
    %p68 = scmp.lt.s32.totalorder %s7, 3
    %p69 = pnand %p67, %p68
    %p70 = pneg %p69
    // Predicated region
    $region9: #{cnn_forward.9} parent=5 // pred_check
      _
    $region10: #{cnn_forward.9} parent=5 // pred_check_branch
      %72 = sbr.rel (%p69) target = $region12
    $region11: #{cnn_forward.9} parent=5 // pred_region
      %s73 = ssub.s32 %s7, 1
    $region12: #{cnn_forward.9} parent=5 // pred_fallthru
      _
    %p74 = scmp.lt.s32.totalorder %s7, 2
    // Predicated region
    $region13: #{cnn_forward.9} parent=5 // pred_check
      %p75 = pneg %p74
    $region14: #{cnn_forward.9} parent=5 // pred_check_branch
      %77 = sbr.rel (%p75) target = $region16
    $region15: #{cnn_forward.9} parent=5 // pred_region
      // Predicated region
      $region17: #{cnn_forward.9} parent=15 // pred_check
        %p78 = pneg %p27
      $region18: #{cnn_forward.9} parent=15 // pred_check_branch
        %80 = sbr.rel (%p78) target = $region20
      $region19: #{cnn_forward.9} parent=15 // pred_region
        %p81 = scmp.lt.s32.totalorder %s7, 1
        %s82 = scalar_select %p81, %s7, 1
        %s83 = smul.addr %s82, 64
        %s84 = smul.addr %s83, 4
        %s85 = scalar_lea.vmem %s0, %s84
      $region20: #{cnn_forward.9} parent=15 // pred_fallthru
        _
    $region16: #{cnn_forward.9} parent=5 // pred_fallthru
      _
    %p86 = scmp.le.s32.totalorder 1, %s7
    %p87 = scmp.lt.s32.totalorder %s7, 3
    %p88 = pnand %p86, %p87
    %p89 = pneg %p88
    // Predicated region
    $region21: #{cnn_forward.9} parent=5 // pred_check
      _
    $region22: #{cnn_forward.9} parent=5 // pred_check_branch
      %91 = sbr.rel (%p88) target = $region24
    $region23: #{cnn_forward.9} parent=5 // pred_region
      %s92 = ssub.s32 %s7, 1
      %p93 = scmp.lt.s32.totalorder %s12, 1
      %s94 = scalar_select %p93, %s12, 1
      %s95 = smul.addr %s94, 64
      %s96 = smul.addr %s95, 4
      %s97 = scalar_lea.vmem %s0, %s96
      %p98 = pneg %p33
      %p99 = pneg %p30
      %p100 = pneg %p59
      %p101 = pneg %p56
      %p102 = scmp.lt.s32.totalorder %s12, 1
      %s103 = scalar_select %p102, %s12, 1
      %s104 = smul.addr %s103, 32
      %s105 = smul.addr %s104, 4
      %s106 = scalar_lea.vmem %s1, %s105
      %p107 = scmp.lt.s32.totalorder %s12, 1
      %s108 = scalar_select %p107, %s12, 1
      %s109 = smul.addr %s108, 64
      %s110 = smul.addr %s109, 4
      %s111 = scalar_lea.vmem %s0, %s110
      %p112 = scmp.lt.s32.totalorder %s12, 1
      %s113 = scalar_select %p112, %s12, 1
      %s114 = smul.addr %s113, 32
      %s115 = smul.addr %s114, 4
      %s116 = scalar_lea.vmem %s1, %s115
      %v117 = vld [vmem:[%s111] sm:$0xf]
      %v118 = vld [vmem:[%s111 + $0x4] sm:$0xf]
      %s119 = scalar_lea.vmem %s111, 8
      %v120 = vld [vmem:[%s119] sm:$0xf]
      %v121 = vld [vmem:[%s119 + $0x4] sm:$0xf]
      %v122 = vmax.bf16 %v117, %v120
      %v123 = vmax.bf16 %v118, %v121
      %126 = vrot.lane.b32.xlu0 %v122, 64
      %v127 = vpop.permute.xlu0 %126
      %128 = vrot.lane.b32.xlu0 %v123, 64
      %v129 = vpop.permute.xlu0 %128
      %v132 = vmax.bf16 %v122, %v127
      %v133 = vmax.bf16 %v123, %v129
      %vm134 = vcmask 519168
      %135 = vst.msk [vmem:[%s116] sm:$0xf] %vm134, %v132
      %136 = vst.msk [vmem:[%s116 + $0x4] sm:$0xf] %vm134, %v133
      %s137 = scalar_lea.vmem %s111, 16
      %v138 = vld [vmem:[%s137] sm:$0xf]
      %v139 = vld [vmem:[%s137 + $0x4] sm:$0xf]
      %s140 = scalar_lea.vmem %s111, 24
      %v141 = vld [vmem:[%s140] sm:$0xf]
      %v142 = vld [vmem:[%s140 + $0x4] sm:$0xf]
      %v143 = vmax.bf16 %v138, %v141
      %v144 = vmax.bf16 %v139, %v142
      %147 = vrot.lane.b32.xlu0 %v143, 64
      %v148 = vpop.permute.xlu0 %147
      %149 = vrot.lane.b32.xlu0 %v144, 64
      %v150 = vpop.permute.xlu0 %149
      %v153 = vmax.bf16 %v143, %v148
      %v154 = vmax.bf16 %v144, %v150
      %s155 = scalar_lea.vmem %s116, 8
      %156 = vst.msk [vmem:[%s155] sm:$0xf] %vm134, %v153
      %157 = vst.msk [vmem:[%s155 + $0x4] sm:$0xf] %vm134, %v154
      %s158 = scalar_lea.vmem %s111, 32
      %v159 = vld [vmem:[%s158] sm:$0xf]
      %v160 = vld [vmem:[%s158 + $0x4] sm:$0xf]
      %s161 = scalar_lea.vmem %s111, 40
      %v162 = vld [vmem:[%s161] sm:$0xf]
      %v163 = vld [vmem:[%s161 + $0x4] sm:$0xf]
      %v164 = vmax.bf16 %v159, %v162
      %v165 = vmax.bf16 %v160, %v163
      %168 = vrot.lane.b32.xlu0 %v164, 64
      %v169 = vpop.permute.xlu0 %168
      %170 = vrot.lane.b32.xlu0 %v165, 64
      %v171 = vpop.permute.xlu0 %170
      %v174 = vmax.bf16 %v164, %v169
      %v175 = vmax.bf16 %v165, %v171
      %s176 = scalar_lea.vmem %s116, 16
      %177 = vst.msk [vmem:[%s176] sm:$0xf] %vm134, %v174
      %178 = vst.msk [vmem:[%s176 + $0x4] sm:$0xf] %vm134, %v175
      %s179 = scalar_lea.vmem %s111, 48
      %v180 = vld [vmem:[%s179] sm:$0xf]
      %v181 = vld [vmem:[%s179 + $0x4] sm:$0xf]
      %s182 = scalar_lea.vmem %s111, 56
      %v183 = vld [vmem:[%s182] sm:$0xf]
      %v184 = vld [vmem:[%s182 + $0x4] sm:$0xf]
      %v185 = vmax.bf16 %v180, %v183
      %v186 = vmax.bf16 %v181, %v184
      %189 = vrot.lane.b32.xlu0 %v185, 64
      %v190 = vpop.permute.xlu0 %189
      %191 = vrot.lane.b32.xlu0 %v186, 64
      %v192 = vpop.permute.xlu0 %191
      %v195 = vmax.bf16 %v185, %v190
      %v196 = vmax.bf16 %v186, %v192
      %s197 = scalar_lea.vmem %s116, 24
      %198 = vst.msk [vmem:[%s197] sm:$0xf] %vm134, %v195
      %199 = vst.msk [vmem:[%s197 + $0x4] sm:$0xf] %vm134, %v196
      %s200 = scalar_lea.vmem %s111, 64
      %v201 = vld [vmem:[%s200] sm:$0xf]
      %v202 = vld [vmem:[%s200 + $0x4] sm:$0xf]
      %s203 = scalar_lea.vmem %s111, 72
      %v204 = vld [vmem:[%s203] sm:$0xf]
      %v205 = vld [vmem:[%s203 + $0x4] sm:$0xf]
      %v206 = vmax.bf16 %v201, %v204
      %v207 = vmax.bf16 %v202, %v205
      %210 = vrot.lane.b32.xlu0 %v206, 64
      %v211 = vpop.permute.xlu0 %210
      %212 = vrot.lane.b32.xlu0 %v207, 64
      %v213 = vpop.permute.xlu0 %212
      %v216 = vmax.bf16 %v206, %v211
      %v217 = vmax.bf16 %v207, %v213
      %s218 = scalar_lea.vmem %s116, 32
      %219 = vst.msk [vmem:[%s218] sm:$0xf] %vm134, %v216
      %220 = vst.msk [vmem:[%s218 + $0x4] sm:$0xf] %vm134, %v217
      %s221 = scalar_lea.vmem %s111, 80
      %v222 = vld [vmem:[%s221] sm:$0xf]
      %v223 = vld [vmem:[%s221 + $0x4] sm:$0xf]
      %s224 = scalar_lea.vmem %s111, 88
      %v225 = vld [vmem:[%s224] sm:$0xf]
      %v226 = vld [vmem:[%s224 + $0x4] sm:$0xf]
      %v227 = vmax.bf16 %v222, %v225
      %v228 = vmax.bf16 %v223, %v226
      %231 = vrot.lane.b32.xlu0 %v227, 64
      %v232 = vpop.permute.xlu0 %231
      %233 = vrot.lane.b32.xlu0 %v228, 64
      %v234 = vpop.permute.xlu0 %233
      %v237 = vmax.bf16 %v227, %v232
      %v238 = vmax.bf16 %v228, %v234
      %s239 = scalar_lea.vmem %s116, 40
      %240 = vst.msk [vmem:[%s239] sm:$0xf] %vm134, %v237
      %241 = vst.msk [vmem:[%s239 + $0x4] sm:$0xf] %vm134, %v238
      %s242 = scalar_lea.vmem %s111, 96
      %v243 = vld [vmem:[%s242] sm:$0xf]
      %v244 = vld [vmem:[%s242 + $0x4] sm:$0xf]
      %s245 = scalar_lea.vmem %s111, 104
      %v246 = vld [vmem:[%s245] sm:$0xf]
      %v247 = vld [vmem:[%s245 + $0x4] sm:$0xf]
      %v248 = vmax.bf16 %v243, %v246
      %v249 = vmax.bf16 %v244, %v247
      %252 = vrot.lane.b32.xlu0 %v248, 64
      %v253 = vpop.permute.xlu0 %252
      %254 = vrot.lane.b32.xlu0 %v249, 64
      %v255 = vpop.permute.xlu0 %254
      %v258 = vmax.bf16 %v248, %v253
      %v259 = vmax.bf16 %v249, %v255
      %s260 = scalar_lea.vmem %s116, 48
      %261 = vst.msk [vmem:[%s260] sm:$0xf] %vm134, %v258
      %262 = vst.msk [vmem:[%s260 + $0x4] sm:$0xf] %vm134, %v259
      %s263 = scalar_lea.vmem %s111, 112
      %v264 = vld [vmem:[%s263] sm:$0xf]
      %v265 = vld [vmem:[%s263 + $0x4] sm:$0xf]
      %s266 = scalar_lea.vmem %s111, 120
      %v267 = vld [vmem:[%s266] sm:$0xf]
      %v268 = vld [vmem:[%s266 + $0x4] sm:$0xf]
      %v269 = vmax.bf16 %v264, %v267
      %v270 = vmax.bf16 %v265, %v268
      %273 = vrot.lane.b32.xlu0 %v269, 64
      %v274 = vpop.permute.xlu0 %273
      %275 = vrot.lane.b32.xlu0 %v270, 64
      %v276 = vpop.permute.xlu0 %275
      %v279 = vmax.bf16 %v269, %v274
      %v280 = vmax.bf16 %v270, %v276
      %s281 = scalar_lea.vmem %s116, 56
      %282 = vst.msk [vmem:[%s281] sm:$0xf] %vm134, %v279
      %283 = vst.msk [vmem:[%s281 + $0x4] sm:$0xf] %vm134, %v280
      %s284 = scalar_lea.vmem %s111, 128
      %v285 = vld [vmem:[%s284] sm:$0xf]
      %v286 = vld [vmem:[%s284 + $0x4] sm:$0xf]
      %s287 = scalar_lea.vmem %s111, 136
      %v288 = vld [vmem:[%s287] sm:$0xf]
      %v289 = vld [vmem:[%s287 + $0x4] sm:$0xf]
      %v290 = vmax.bf16 %v285, %v288
      %v291 = vmax.bf16 %v286, %v289
      %294 = vrot.lane.b32.xlu0 %v290, 64
      %v295 = vpop.permute.xlu0 %294
      %296 = vrot.lane.b32.xlu0 %v291, 64
      %v297 = vpop.permute.xlu0 %296
      %v300 = vmax.bf16 %v290, %v295
      %v301 = vmax.bf16 %v291, %v297
      %s302 = scalar_lea.vmem %s116, 64
      %303 = vst.msk [vmem:[%s302] sm:$0xf] %vm134, %v300
      %304 = vst.msk [vmem:[%s302 + $0x4] sm:$0xf] %vm134, %v301
      %s305 = scalar_lea.vmem %s111, 144
      %v306 = vld [vmem:[%s305] sm:$0xf]
      %v307 = vld [vmem:[%s305 + $0x4] sm:$0xf]
      %s308 = scalar_lea.vmem %s111, 152
      %v309 = vld [vmem:[%s308] sm:$0xf]
      %v310 = vld [vmem:[%s308 + $0x4] sm:$0xf]
      %v311 = vmax.bf16 %v306, %v309
      %v312 = vmax.bf16 %v307, %v310
      %315 = vrot.lane.b32.xlu0 %v311, 64
      %v316 = vpop.permute.xlu0 %315
      %317 = vrot.lane.b32.xlu0 %v312, 64
      %v318 = vpop.permute.xlu0 %317
      %v321 = vmax.bf16 %v311, %v316
      %v322 = vmax.bf16 %v312, %v318
      %s323 = scalar_lea.vmem %s116, 72
      %324 = vst.msk [vmem:[%s323] sm:$0xf] %vm134, %v321
      %325 = vst.msk [vmem:[%s323 + $0x4] sm:$0xf] %vm134, %v322
      %s326 = scalar_lea.vmem %s111, 160
      %v327 = vld [vmem:[%s326] sm:$0xf]
      %v328 = vld [vmem:[%s326 + $0x4] sm:$0xf]
      %s329 = scalar_lea.vmem %s111, 168
      %v330 = vld [vmem:[%s329] sm:$0xf]
      %v331 = vld [vmem:[%s329 + $0x4] sm:$0xf]
      %v332 = vmax.bf16 %v327, %v330
      %v333 = vmax.bf16 %v328, %v331
      %336 = vrot.lane.b32.xlu0 %v332, 64
      %v337 = vpop.permute.xlu0 %336
      %338 = vrot.lane.b32.xlu0 %v333, 64
      %v339 = vpop.permute.xlu0 %338
      %v342 = vmax.bf16 %v332, %v337
      %v343 = vmax.bf16 %v333, %v339
      %s344 = scalar_lea.vmem %s116, 80
      %345 = vst.msk [vmem:[%s344] sm:$0xf] %vm134, %v342
      %346 = vst.msk [vmem:[%s344 + $0x4] sm:$0xf] %vm134, %v343
      %s347 = scalar_lea.vmem %s111, 176
      %v348 = vld [vmem:[%s347] sm:$0xf]
      %v349 = vld [vmem:[%s347 + $0x4] sm:$0xf]
      %s350 = scalar_lea.vmem %s111, 184
      %v351 = vld [vmem:[%s350] sm:$0xf]
      %v352 = vld [vmem:[%s350 + $0x4] sm:$0xf]
      %v353 = vmax.bf16 %v348, %v351
      %v354 = vmax.bf16 %v349, %v352
      %357 = vrot.lane.b32.xlu0 %v353, 64
      %v358 = vpop.permute.xlu0 %357
      %359 = vrot.lane.b32.xlu0 %v354, 64
      %v360 = vpop.permute.xlu0 %359
      %v363 = vmax.bf16 %v353, %v358
      %v364 = vmax.bf16 %v354, %v360
      %s365 = scalar_lea.vmem %s116, 88
      %366 = vst.msk [vmem:[%s365] sm:$0xf] %vm134, %v363
      %367 = vst.msk [vmem:[%s365 + $0x4] sm:$0xf] %vm134, %v364
      %s368 = scalar_lea.vmem %s111, 192
      %v369 = vld [vmem:[%s368] sm:$0xf]
      %v370 = vld [vmem:[%s368 + $0x4] sm:$0xf]
      %s371 = scalar_lea.vmem %s111, 200
      %v372 = vld [vmem:[%s371] sm:$0xf]
      %v373 = vld [vmem:[%s371 + $0x4] sm:$0xf]
      %v374 = vmax.bf16 %v369, %v372
      %v375 = vmax.bf16 %v370, %v373
      %378 = vrot.lane.b32.xlu0 %v374, 64
      %v379 = vpop.permute.xlu0 %378
      %380 = vrot.lane.b32.xlu0 %v375, 64
      %v381 = vpop.permute.xlu0 %380
      %v384 = vmax.bf16 %v374, %v379
      %v385 = vmax.bf16 %v375, %v381
      %s386 = scalar_lea.vmem %s116, 96
      %387 = vst.msk [vmem:[%s386] sm:$0xf] %vm134, %v384
      %388 = vst.msk [vmem:[%s386 + $0x4] sm:$0xf] %vm134, %v385
      %s389 = scalar_lea.vmem %s111, 208
      %v390 = vld [vmem:[%s389] sm:$0xf]
      %v391 = vld [vmem:[%s389 + $0x4] sm:$0xf]
      %s392 = scalar_lea.vmem %s111, 216
      %v393 = vld [vmem:[%s392] sm:$0xf]
      %v394 = vld [vmem:[%s392 + $0x4] sm:$0xf]
      %v395 = vmax.bf16 %v390, %v393
      %v396 = vmax.bf16 %v391, %v394
      %399 = vrot.lane.b32.xlu0 %v395, 64
      %v400 = vpop.permute.xlu0 %399
      %401 = vrot.lane.b32.xlu0 %v396, 64
      %v402 = vpop.permute.xlu0 %401
      %v405 = vmax.bf16 %v395, %v400
      %v406 = vmax.bf16 %v396, %v402
      %s407 = scalar_lea.vmem %s116, 104
      %408 = vst.msk [vmem:[%s407] sm:$0xf] %vm134, %v405
      %409 = vst.msk [vmem:[%s407 + $0x4] sm:$0xf] %vm134, %v406
      %s410 = scalar_lea.vmem %s111, 224
      %v411 = vld [vmem:[%s410] sm:$0xf]
      %v412 = vld [vmem:[%s410 + $0x4] sm:$0xf]
      %s413 = scalar_lea.vmem %s111, 232
      %v414 = vld [vmem:[%s413] sm:$0xf]
      %v415 = vld [vmem:[%s413 + $0x4] sm:$0xf]
      %v416 = vmax.bf16 %v411, %v414
      %v417 = vmax.bf16 %v412, %v415
      %420 = vrot.lane.b32.xlu0 %v416, 64
      %v421 = vpop.permute.xlu0 %420
      %422 = vrot.lane.b32.xlu0 %v417, 64
      %v423 = vpop.permute.xlu0 %422
      %v426 = vmax.bf16 %v416, %v421
      %v427 = vmax.bf16 %v417, %v423
      %s428 = scalar_lea.vmem %s116, 112
      %429 = vst.msk [vmem:[%s428] sm:$0xf] %vm134, %v426
      %430 = vst.msk [vmem:[%s428 + $0x4] sm:$0xf] %vm134, %v427
      %s431 = scalar_lea.vmem %s111, 240
      %v432 = vld [vmem:[%s431] sm:$0xf]
      %v433 = vld [vmem:[%s431 + $0x4] sm:$0xf]
      %s434 = scalar_lea.vmem %s111, 248
      %v435 = vld [vmem:[%s434] sm:$0xf]
      %v436 = vld [vmem:[%s434 + $0x4] sm:$0xf]
      %v437 = vmax.bf16 %v432, %v435
      %v438 = vmax.bf16 %v433, %v436
      %441 = vrot.lane.b32.xlu0 %v437, 64
      %v442 = vpop.permute.xlu0 %441
      %443 = vrot.lane.b32.xlu0 %v438, 64
      %v444 = vpop.permute.xlu0 %443
      %v447 = vmax.bf16 %v437, %v442
      %v448 = vmax.bf16 %v438, %v444
      %s449 = scalar_lea.vmem %s116, 120
      %450 = vst.msk [vmem:[%s449] sm:$0xf] %vm134, %v447
      %451 = vst.msk [vmem:[%s449 + $0x4] sm:$0xf] %vm134, %v448
      %p452 = scmp.lt.s32.totalorder %s12, 1
      %s453 = scalar_select %p452, %s12, 1
      %s454 = smul.addr %s453, 32
      %s455 = smul.addr %s454, 4
      %s456 = scalar_lea.vmem %s1, %s455
      // Predicated region
      $region25: #{cnn_forward.9} parent=23 // pred_check
        %p457 = pneg %p56
      $region26: #{cnn_forward.9} parent=23 // pred_check_branch
        %459 = sbr.rel (%p457) target = $region28
      $region27: #{cnn_forward.9} parent=23 // pred_region
        _
      $region28: #{cnn_forward.9} parent=23 // pred_fallthru
        _
    $region24: #{cnn_forward.9} parent=5 // pred_fallthru
      _
    %p460 = scmp.le.s32.totalorder 2, %s7
    // Predicated region
    $region29: #{cnn_forward.9} parent=5 // pred_check
      %p461 = pneg %p460
    $region30: #{cnn_forward.9} parent=5 // pred_check_branch
      %463 = sbr.rel (%p461) target = $region32
    $region31: #{cnn_forward.9} parent=5 // pred_region
      %s464 = ssub.s32 %s7, 2
      // Predicated region
      $region33: #{cnn_forward.9} parent=31 // pred_check
        %p465 = pneg %p62
      $region34: #{cnn_forward.9} parent=31 // pred_check_branch
        %467 = sbr.rel (%p465) target = $region36
      $region35: #{cnn_forward.9} parent=31 // pred_region
        %p468 = scmp.lt.s32.totalorder %s13, 1
        %s469 = scalar_select %p468, %s13, 1
        %s470 = smul.addr %s469, 32
        %s471 = smul.addr %s470, 4
        %s472 = scalar_lea.vmem %s1, %s471
      $region36: #{cnn_forward.9} parent=31 // pred_fallthru
        _
    $region32: #{cnn_forward.9} parent=5 // pred_fallthru
      _
  $region6: #{cnn_forward.9} parent=0 // loop_footer
    %s11 = sadd.s32 1, %s7
  $region7: #{cnn_forward.9} parent=0 // loop_footer_branch
    %6 = sbr.rel target = $region3
  $region8: #{cnn_forward.9} parent=0 // loop_exit
    _

// kernel: cnn_forward.10
$region0: #{cnn_forward.10}
  #allocation0 [shape = 'u32[]', space=smem, size = 0x4, offset = 0x4, fixed_abs, tag = 'smem constant byte address 0x4 - core index']
  #allocation1 [shape = 'u32[144,128]{1,0:T(1,128)}', space=vmem, size = 0x12000, scoped, tag = 'internal scratch']
  %s0 = inlined_call_operand.vmem [shape: bf16[512,576], index: 0, kind: input, shape index: {}]
  %s1 = inlined_call_operand.hbm [shape: bf16[576,128], index: 1, kind: input, shape index: {}]
  %s2 = inlined_call_operand.hbm [shape: f32[1,128], index: 2, kind: input, shape index: {}]
  %s3 = inlined_call_operand.vmem [shape: bf16[512,128], index: 3, kind: output, shape index: {}]
  %s4 = sld [smem:[#allocation0]]
  $region53: #{cnn_forward.10} parent=0
    _
  %s6 = ssub.s32 1, %s4
  %s7 = scalar_select 0, %s6, %s4
  $region1: #{cnn_forward.10} parent=0
    #allocation2 [shape = 'u8[147456]{0}', space=vmem, size = 0x24000, scoped, tag = 'input window, operand 1, single buffered']
    #allocation3 [shape = 's32[2]{0}', space=sflag, size = 0x8, scoped, tag = 'scoped memory for cnn_forward.10']
    #allocation4 [shape = 'u8[512]{0}', space=vmem, size = 0x400, scoped, tag = 'input window, operand 2, single buffered']
    #allocation5 [shape = 's32[1]{0}', space=sflag, size = 0x4, scoped, tag = 'scoped memory for cnn_forward.10']
    %8 = vsyncpa [#allocation3], 0
    %9 = vsyncpa [#allocation5], 0
    loop: start=0, step=1, limit=4
    $region2: #{cnn_forward.10} parent=1 // loop_pre_header
      _
    $region3: #{cnn_forward.10} parent=1 // loop_header
      %s11 = sphi 0, %s15
      %p12 = scmp.ge.s32.totalorder %s11, 4
      %s18 = sphi 0, %s37
      %s19 = sphi 0, %s33
      %s20 = sphi 0, %s29
      %s21 = sphi 0, %s18
      %s22 = sphi 0, %s19
      %s23 = sphi 0, %s20
      %s24 = sphi 0, %s21
      %s25 = sphi 0, %s22
      %s26 = sphi 0, %s23
      %s42 = sphi 0, %s44
      %s45 = sphi 0, %s42
      %s46 = sphi 0, %s45
      %s62 = sphi 0, %s46
      %s70 = sphi 0, %s72
      %s73 = sphi 0, %s70
      %s74 = sphi 0, %s73
      %s90 = sphi 0, %s74
      %s96 = sphi 0, %s98
      %s99 = sphi 0, %s96
      %s100 = sphi 0, %s99
      %s116 = sphi 0, %s100
      %s124 = sphi 0, %s126
      %s127 = sphi 0, %s124
      %s128 = sphi 0, %s127
      %s144 = sphi 0, %s128
    $region4: #{cnn_forward.10} parent=1 // loop_header_branch
      %14 = sbr.rel (%p12) target = $region8
    $region5: #{cnn_forward.10} parent=1 // loop_body
      %s16 = ssub.s32 %s11, 1
      %s17 = ssub.s32 %s11, 2
      %s27 = sadd.s32 1, %s20
      %p28 = scmp.ge.s32.totalorder %s27, 1
      %s29 = scalar_select %p28, 0, %s27
      %s30 = sadd.s32 1, %s19
      %s31 = scalar_select %p28, %s30, %s19
      %p32 = scmp.ge.s32.totalorder %s31, 1
      %s33 = scalar_select %p32, 0, %s31
      %s34 = sadd.s32 1, %s18
      %s35 = scalar_select %p32, %s34, %s18
      %p36 = scmp.ge.s32.totalorder %s35, 2
      %s37 = scalar_select %p36, 0, %s35
      %s38 = ssub.s32 %s18, %s37
      %s39 = ssub.s32 %s20, %s29
      %s40 = sor.u32 %s38, %s39
      %p41 = scmp.eq.s32.totalorder %s40, 0
      %s43 = sadd.s32 %s42, 1
      %s44 = scalar_select %p41, %s42, %s43
      %p47 = pneg %p41
      %p48 = scmp.eq.s32.totalorder %s11, 1
      %p49 = por %p47, %p48
      %p50 = scmp.ne.s32.totalorder %s42, %s45
      %p51 = scmp.eq.s32.totalorder %s11, 0
      %p52 = por %p50, %p51
      %p53 = scmp.ne.s32.totalorder %s42, %s45
      %p54 = scmp.eq.s32.totalorder %s16, 1
      %p55 = por %p53, %p54
      %p56 = scmp.ne.s32.totalorder %s45, %s46
      %p57 = scmp.eq.s32.totalorder %s16, 0
      %p58 = por %p56, %p57
      %p59 = scmp.ne.s32.totalorder %s45, %s46
      %p60 = scmp.eq.s32.totalorder %s17, 1
      %p61 = por %p59, %p60
      %p63 = scmp.ne.s32.totalorder %s46, %s62
      %p64 = scmp.eq.s32.totalorder %s17, 0
      %p65 = por %p63, %p64
      %s66 = ssub.s32 %s20, %s29
      %s67 = ssub.s32 %s19, %s33
      %s68 = sor.u32 %s66, %s67
      %p69 = scmp.eq.s32.totalorder %s68, 0
      %s71 = sadd.s32 %s70, 1
      %s72 = scalar_select %p69, %s70, %s71
      %p75 = pneg %p69
      %p76 = scmp.eq.s32.totalorder %s11, 1
      %p77 = por %p75, %p76
      %p78 = scmp.ne.s32.totalorder %s70, %s73
      %p79 = scmp.eq.s32.totalorder %s11, 0
      %p80 = por %p78, %p79
      %p81 = scmp.ne.s32.totalorder %s70, %s73
      %p82 = scmp.eq.s32.totalorder %s16, 1
      %p83 = por %p81, %p82
      %p84 = scmp.ne.s32.totalorder %s73, %s74
      %p85 = scmp.eq.s32.totalorder %s16, 0
      %p86 = por %p84, %p85
      %p87 = scmp.ne.s32.totalorder %s73, %s74
      %p88 = scmp.eq.s32.totalorder %s17, 1
      %p89 = por %p87, %p88
      %p91 = scmp.ne.s32.totalorder %s74, %s90
      %p92 = scmp.eq.s32.totalorder %s17, 0
      %p93 = por %p91, %p92
      %s94 = ssub.s32 %s19, %s33
      %p95 = scmp.eq.s32.totalorder %s94, 0
      %s97 = sadd.s32 %s96, 1
      %s98 = scalar_select %p95, %s96, %s97
      %p101 = pneg %p95
      %p102 = scmp.eq.s32.totalorder %s11, 1
      %p103 = por %p101, %p102
      %p104 = scmp.ne.s32.totalorder %s96, %s99
      %p105 = scmp.eq.s32.totalorder %s11, 0
      %p106 = por %p104, %p105
      %p107 = scmp.ne.s32.totalorder %s96, %s99
      %p108 = scmp.eq.s32.totalorder %s16, 1
      %p109 = por %p107, %p108
      %p110 = scmp.ne.s32.totalorder %s99, %s100
      %p111 = scmp.eq.s32.totalorder %s16, 0
      %p112 = por %p110, %p111
      %p113 = scmp.ne.s32.totalorder %s99, %s100
      %p114 = scmp.eq.s32.totalorder %s17, 1
      %p115 = por %p113, %p114
      %p117 = scmp.ne.s32.totalorder %s100, %s116
      %p118 = scmp.eq.s32.totalorder %s17, 0
      %p119 = por %p117, %p118
      %s120 = ssub.s32 %s18, %s37
      %s121 = ssub.s32 %s19, %s33
      %s122 = sor.u32 %s120, %s121
      %p123 = scmp.eq.s32.totalorder %s122, 0
      %s125 = sadd.s32 %s124, 1
      %s126 = scalar_select %p123, %s124, %s125
      %p129 = pneg %p123
      %p130 = scmp.eq.s32.totalorder %s11, 1
      %p131 = por %p129, %p130
      %p132 = scmp.ne.s32.totalorder %s124, %s127
      %p133 = scmp.eq.s32.totalorder %s11, 0
      %p134 = por %p132, %p133
      %p135 = scmp.ne.s32.totalorder %s124, %s127
      %p136 = scmp.eq.s32.totalorder %s16, 1
      %p137 = por %p135, %p136
      %p138 = scmp.ne.s32.totalorder %s127, %s128
      %p139 = scmp.eq.s32.totalorder %s16, 0
      %p140 = por %p138, %p139
      %p141 = scmp.ne.s32.totalorder %s127, %s128
      %p142 = scmp.eq.s32.totalorder %s17, 1
      %p143 = por %p141, %p142
      %p145 = scmp.ne.s32.totalorder %s128, %s144
      %p146 = scmp.eq.s32.totalorder %s17, 0
      %p147 = por %p145, %p146
      %p148 = scmp.le.s32.totalorder 1, %s11
      %p149 = scmp.lt.s32.totalorder %s11, 3
      %p150 = pnand %p148, %p149
      %p151 = pneg %p150
      // Predicated region
      $region9: #{cnn_forward.10} parent=5 // pred_check
        _
      $region10: #{cnn_forward.10} parent=5 // pred_check_branch
        %153 = sbr.rel (%p150) target = $region12
      $region11: #{cnn_forward.10} parent=5 // pred_region
        %s154 = ssub.s32 %s11, 1
        // Predicated region
        $region13: #{cnn_forward.10} parent=11 // pred_check
          %p155 = pneg %p86
        $region14: #{cnn_forward.10} parent=11 // pred_check_branch
          %157 = sbr.rel (%p155) target = $region16
        $region15: #{cnn_forward.10} parent=11 // pred_region
          %s158 = smul.u32 72, %s23
          %s160 = ssub.s32 4608, 4608
          %161 = vsyncadd [#allocation3], %s160
          %s162 = sadd.s32 %s22, %s158
          %s163 = smul.addr %s162, 64
          %s164 = scalar_lea.hbm %s1, %s163
          %s165 = sshll.u32 [#allocation2], 4
          %s166 = int_to_ptr.vmem [resolvable:$true] %s165
          %171 = dma.hbm_to_vmem [thread:$0]  %s164, 4608, %s166, [#allocation3], 64, 64, 4
        $region16: #{cnn_forward.10} parent=11 // pred_fallthru
          _
        // Predicated region
        $region17: #{cnn_forward.10} parent=11 // pred_check
          %p172 = pneg %p112
        $region18: #{cnn_forward.10} parent=11 // pred_check_branch
          %174 = sbr.rel (%p172) target = $region20
        $region19: #{cnn_forward.10} parent=11 // pred_region
          %s176 = ssub.s32 16, 16
          %177 = vsyncadd [#allocation5], %s176
          %s178 = smul.addr %s22, 16
          %s179 = scalar_lea.hbm %s2, %s178
          %s181 = sshll.u32 [#allocation4], 4
          %s182 = int_to_ptr.vmem [resolvable:$true] %s181
          %184 = dma.hbm_to_vmem [thread:$0]  %s179, 16, %s182, [#allocation5]
        $region20: #{cnn_forward.10} parent=11 // pred_fallthru
          _
      $region12: #{cnn_forward.10} parent=5 // pred_fallthru
        _
      %p185 = scmp.lt.s32.totalorder %s11, 2
      // Predicated region
      $region21: #{cnn_forward.10} parent=5 // pred_check
        %p186 = pneg %p185
      $region22: #{cnn_forward.10} parent=5 // pred_check_branch
        %188 = sbr.rel (%p186) target = $region24
      $region23: #{cnn_forward.10} parent=5 // pred_region
        // Predicated region
        $region25: #{cnn_forward.10} parent=23 // pred_check
          %p189 = pneg %p52
        $region26: #{cnn_forward.10} parent=23 // pred_check_branch
          %191 = sbr.rel (%p189) target = $region28
        $region27: #{cnn_forward.10} parent=23 // pred_region
          %s192 = smul.u32 32, %s18
          %s193 = smul.u32 5, %s20
          %p194 = scmp.lt.s32.totalorder %s192, 63
          %s195 = scalar_select %p194, %s192, 63
          %p196 = scmp.lt.s32.totalorder %s193, 4
          %s197 = scalar_select %p196, %s193, 4
          %s198 = smul.addr %s195, 5
          %s199 = sadd.s32 %s197, %s198
          %s200 = smul.addr %s199, 4
          %s201 = scalar_lea.vmem %s0, %s200
          %s202 = smul.u32 32, %s18
          %s203 = smul.u32 5, %s20
        $region28: #{cnn_forward.10} parent=23 // pred_fallthru
          _
      $region24: #{cnn_forward.10} parent=5 // pred_fallthru
        _
      %p204 = scmp.le.s32.totalorder 1, %s11
      %p205 = scmp.lt.s32.totalorder %s11, 3
      %p206 = pnand %p204, %p205
      %p207 = pneg %p206
      // Predicated region
      $region29: #{cnn_forward.10} parent=5 // pred_check
        _
      $region30: #{cnn_forward.10} parent=5 // pred_check_branch
        %209 = sbr.rel (%p206) target = $region32
      $region31: #{cnn_forward.10} parent=5 // pred_region
        %s210 = ssub.s32 %s11, 1
        // Predicated region
        $region33: #{cnn_forward.10} parent=31 // pred_check
          %p211 = pneg %p86
        $region34: #{cnn_forward.10} parent=31 // pred_check_branch
          %213 = sbr.rel (%p211) target = $region36
        $region35: #{cnn_forward.10} parent=31 // pred_region
          %214 = dma.done [#allocation3], 4608
        $region36: #{cnn_forward.10} parent=31 // pred_fallthru
          _
        // Predicated region
        $region37: #{cnn_forward.10} parent=31 // pred_check
          %p215 = pneg %p112
        $region38: #{cnn_forward.10} parent=31 // pred_check_branch
          %217 = sbr.rel (%p215) target = $region40
        $region39: #{cnn_forward.10} parent=31 // pred_region
          %218 = dma.done [#allocation5], 16
        $region40: #{cnn_forward.10} parent=31 // pred_fallthru
          _
        %s219 = smul.u32 32, %s21
        %s220 = smul.u32 5, %s23
        %p221 = scmp.lt.s32.totalorder %s219, 63
        %s222 = scalar_select %p221, %s219, 63
        %p223 = scmp.lt.s32.totalorder %s220, 4
        %s224 = scalar_select %p223, %s220, 4
        %s225 = smul.addr %s222, 5
        %s226 = sadd.s32 %s224, %s225
        %s227 = smul.addr %s226, 4
        %s228 = scalar_lea.vmem %s0, %s227
        %p229 = pneg %p58
        %p230 = pneg %p55
        %p231 = pneg %p86
        %p232 = pneg %p83
        %p233 = pneg %p112
        %p234 = pneg %p109
        %p235 = pneg %p140
        %p236 = pneg %p137
        %s237 = smul.u32 32, %s21
        %p238 = scmp.lt.s32.totalorder %s237, 63
        %s239 = scalar_select %p238, %s237, 63
        %p240 = scmp.lt.s32.totalorder %s22, 0
        %s241 = scalar_select %p240, %s22, 0
        %s242 = sadd.s32 %s241, %s239
        %s243 = smul.addr %s242, 4
        %s244 = scalar_lea.vmem %s3, %s243
        %s245 = smul.u32 32, %s21
        %s246 = smul.u32 5, %s23
        %p247 = scmp.lt.s32.totalorder %s245, 63
        %s248 = scalar_select %p247, %s245, 63
        %p249 = scmp.lt.s32.totalorder %s246, 4
        %s250 = scalar_select %p249, %s246, 4
        %s251 = smul.addr %s248, 5
        %s252 = sadd.s32 %s250, %s251
        %s253 = smul.addr %s252, 4
        %s254 = scalar_lea.vmem %s0, %s253
        %s255 = smul.u32 32, %s21
        %s256 = smul.u32 5, %s23
        %s257 = smul.u32 72, %s23
        %s258 = smul.u32 32, %s21
        %p259 = scmp.lt.s32.totalorder %s258, 63
        %s260 = scalar_select %p259, %s258, 63
        %p261 = scmp.lt.s32.totalorder %s22, 0
        %s262 = scalar_select %p261, %s22, 0
        %s263 = sadd.s32 %s262, %s260
        %s264 = smul.addr %s263, 4
        %s265 = scalar_lea.vmem %s3, %s264
        %s266 = smul.u32 32, %s21
        %v268 = vld [vmem:[%s254] sm:$0xff]
        %v269 = vld [vmem:[%s254 + $0x8] sm:$0xff]
        %v270 = vld [vmem:[%s254 + $0x10] sm:$0xf]
        %v271 = vld [vmem:[%s254 + $0x14] sm:$0xff]
        %v272 = vld [vmem:[%s254 + $0x1c] sm:$0xff]
        %v273 = vld [vmem:[%s254 + $0x24] sm:$0xf]
        %v274 = vld [vmem:[%s254 + $0x28] sm:$0xff]
        %v275 = vld [vmem:[%s254 + $0x30] sm:$0xff]
        %v276 = vld [vmem:[%s254 + $0x38] sm:$0xf]
        %v277 = vld [vmem:[%s254 + $0x3c] sm:$0xff]
        %v278 = vld [vmem:[%s254 + $0x44] sm:$0xff]
        %v279 = vld [vmem:[%s254 + $0x4c] sm:$0xf]
        %v280 = vld [vmem:[%s254 + $0x50] sm:$0xff]
        %v281 = vld [vmem:[%s254 + $0x58] sm:$0xff]
        %v282 = vld [vmem:[%s254 + $0x60] sm:$0xf]
        %v283 = vld [vmem:[%s254 + $0x64] sm:$0xff]
        %v284 = vld [vmem:[%s254 + $0x6c] sm:$0xff]
        %v285 = vld [vmem:[%s254 + $0x74] sm:$0xf]
        %v286 = vld [vmem:[%s254 + $0x78] sm:$0xff]
        %v287 = vld [vmem:[%s254 + $0x80] sm:$0xff]
        %v288 = vld [vmem:[%s254 + $0x88] sm:$0xf]
        %v289 = vld [vmem:[%s254 + $0x8c] sm:$0xff]
        %v290 = vld [vmem:[%s254 + $0x94] sm:$0xff]
        %v291 = vld [vmem:[%s254 + $0x9c] sm:$0xf]
        %v292 = vld [vmem:[%s254 + $0xa0] sm:$0xff]
        %v293 = vld [vmem:[%s254 + $0xa8] sm:$0xff]
        %v294 = vld [vmem:[%s254 + $0xb0] sm:$0xf]
        %v295 = vld [vmem:[%s254 + $0xb4] sm:$0xff]
        %v296 = vld [vmem:[%s254 + $0xbc] sm:$0xff]
        %v297 = vld [vmem:[%s254 + $0xc4] sm:$0xf]
        %v298 = vld [vmem:[%s254 + $0xc8] sm:$0xff]
        %v299 = vld [vmem:[%s254 + $0xd0] sm:$0xff]
        %v300 = vld [vmem:[%s254 + $0xd8] sm:$0xf]
        %v301 = vld [vmem:[%s254 + $0xdc] sm:$0xff]
        %v302 = vld [vmem:[%s254 + $0xe4] sm:$0xff]
        %v303 = vld [vmem:[%s254 + $0xec] sm:$0xf]
        %v304 = vld [vmem:[%s254 + $0xf0] sm:$0xff]
        %v305 = vld [vmem:[%s254 + $0xf8] sm:$0xff]
        %v306 = vld [vmem:[%s254 + $0x100] sm:$0xf]
        %v307 = vld [vmem:[%s254 + $0x104] sm:$0xff]
        %v308 = vld [vmem:[%s254 + $0x10c] sm:$0xff]
        %v309 = vld [vmem:[%s254 + $0x114] sm:$0xf]
        %v310 = vld [vmem:[%s254 + $0x118] sm:$0xff]
        %v311 = vld [vmem:[%s254 + $0x120] sm:$0xff]
        %v312 = vld [vmem:[%s254 + $0x128] sm:$0xf]
        %v313 = vld [vmem:[%s254 + $0x12c] sm:$0xff]
        %v314 = vld [vmem:[%s254 + $0x134] sm:$0xff]
        %v315 = vld [vmem:[%s254 + $0x13c] sm:$0xf]
        %v316 = vld [vmem:[%s254 + $0x140] sm:$0xff]
        %v317 = vld [vmem:[%s254 + $0x148] sm:$0xff]
        %v318 = vld [vmem:[%s254 + $0x150] sm:$0xf]
        %v319 = vld [vmem:[%s254 + $0x154] sm:$0xff]
        %v320 = vld [vmem:[%s254 + $0x15c] sm:$0xff]
        %v321 = vld [vmem:[%s254 + $0x164] sm:$0xf]
        %v322 = vld [vmem:[%s254 + $0x168] sm:$0xff]
        %v323 = vld [vmem:[%s254 + $0x170] sm:$0xff]
        %v324 = vld [vmem:[%s254 + $0x178] sm:$0xf]
        %v325 = vld [vmem:[%s254 + $0x17c] sm:$0xff]
        %v326 = vld [vmem:[%s254 + $0x184] sm:$0xff]
        %v327 = vld [vmem:[%s254 + $0x18c] sm:$0xf]
        %v328 = vld [vmem:[%s254 + $0x190] sm:$0xff]
        %v329 = vld [vmem:[%s254 + $0x198] sm:$0xff]
        %v330 = vld [vmem:[%s254 + $0x1a0] sm:$0xf]
        %v331 = vld [vmem:[%s254 + $0x1a4] sm:$0xff]
        %v332 = vld [vmem:[%s254 + $0x1ac] sm:$0xff]
        %v333 = vld [vmem:[%s254 + $0x1b4] sm:$0xf]
        %v334 = vld [vmem:[%s254 + $0x1b8] sm:$0xff]
        %v335 = vld [vmem:[%s254 + $0x1c0] sm:$0xff]
        %v336 = vld [vmem:[%s254 + $0x1c8] sm:$0xf]
        %v337 = vld [vmem:[%s254 + $0x1cc] sm:$0xff]
        %v338 = vld [vmem:[%s254 + $0x1d4] sm:$0xff]
        %v339 = vld [vmem:[%s254 + $0x1dc] sm:$0xf]
        %v340 = vld [vmem:[%s254 + $0x1e0] sm:$0xff]
        %v341 = vld [vmem:[%s254 + $0x1e8] sm:$0xff]
        %v342 = vld [vmem:[%s254 + $0x1f0] sm:$0xf]
        %v343 = vld [vmem:[%s254 + $0x1f4] sm:$0xff]
        %v344 = vld [vmem:[%s254 + $0x1fc] sm:$0xff]
        %v345 = vld [vmem:[%s254 + $0x204] sm:$0xf]
        %v346 = vld [vmem:[%s254 + $0x208] sm:$0xff]
        %v347 = vld [vmem:[%s254 + $0x210] sm:$0xff]
        %v348 = vld [vmem:[%s254 + $0x218] sm:$0xf]
        %v349 = vld [vmem:[%s254 + $0x21c] sm:$0xff]
        %v350 = vld [vmem:[%s254 + $0x224] sm:$0xff]
        %v351 = vld [vmem:[%s254 + $0x22c] sm:$0xf]
        %v352 = vld [vmem:[%s254 + $0x230] sm:$0xff]
        %v353 = vld [vmem:[%s254 + $0x238] sm:$0xff]
        %v354 = vld [vmem:[%s254 + $0x240] sm:$0xf]
        %v355 = vld [vmem:[%s254 + $0x244] sm:$0xff]
        %v356 = vld [vmem:[%s254 + $0x24c] sm:$0xff]
        %v357 = vld [vmem:[%s254 + $0x254] sm:$0xf]
        %v358 = vld [vmem:[%s254 + $0x258] sm:$0xff]
        %v359 = vld [vmem:[%s254 + $0x260] sm:$0xff]
        %v360 = vld [vmem:[%s254 + $0x268] sm:$0xf]
        %v361 = vld [vmem:[%s254 + $0x26c] sm:$0xff]
        %v362 = vld [vmem:[%s254 + $0x274] sm:$0xff]
        %v363 = vld [vmem:[%s254 + $0x27c] sm:$0xf]
        %v364 = vld [vmem:[#allocation2] sm:$0xf]
        %v365 = vld [vmem:[#allocation2 + $0x4] sm:$0xf]
        %v366 = vld [vmem:[#allocation2 + $0x8] sm:$0xf]
        %v367 = vld [vmem:[#allocation2 + $0xc] sm:$0xf]
        %v368 = vld [vmem:[#allocation2 + $0x10] sm:$0xf]
        %v369 = vld [vmem:[#allocation2 + $0x14] sm:$0xf]
        %v370 = vld [vmem:[#allocation2 + $0x18] sm:$0xf]
        %v371 = vld [vmem:[#allocation2 + $0x1c] sm:$0xf]
        %v372 = vld [vmem:[#allocation2 + $0x20] sm:$0xf]
        %v373 = vld [vmem:[#allocation2 + $0x24] sm:$0xf]
        %v374 = vld [vmem:[#allocation2 + $0x28] sm:$0xf]
        %v375 = vld [vmem:[#allocation2 + $0x2c] sm:$0xf]
        %v376 = vld [vmem:[#allocation2 + $0x30] sm:$0xf]
        %v377 = vld [vmem:[#allocation2 + $0x34] sm:$0xf]
        %v378 = vld [vmem:[#allocation2 + $0x38] sm:$0xf]
        %v379 = vld [vmem:[#allocation2 + $0x3c] sm:$0xf]
        %v380 = vld [vmem:[#allocation2 + $0x40] sm:$0xf]
        %v381 = vld [vmem:[#allocation2 + $0x44] sm:$0xf]
        %v382 = vld [vmem:[#allocation2 + $0x48] sm:$0xf]
        %v383 = vld [vmem:[#allocation2 + $0x4c] sm:$0xf]
        %v384 = vld [vmem:[#allocation2 + $0x50] sm:$0xf]
        %v385 = vld [vmem:[#allocation2 + $0x54] sm:$0xf]
        %v386 = vld [vmem:[#allocation2 + $0x58] sm:$0xf]
        %v387 = vld [vmem:[#allocation2 + $0x5c] sm:$0xf]
        %v388 = vld [vmem:[#allocation2 + $0x60] sm:$0xf]
        %v389 = vld [vmem:[#allocation2 + $0x64] sm:$0xf]
        %v390 = vld [vmem:[#allocation2 + $0x68] sm:$0xf]
        %v391 = vld [vmem:[#allocation2 + $0x6c] sm:$0xf]
        %v392 = vld [vmem:[#allocation2 + $0x70] sm:$0xf]
        %v393 = vld [vmem:[#allocation2 + $0x74] sm:$0xf]
        %v394 = vld [vmem:[#allocation2 + $0x78] sm:$0xf]
        %v395 = vld [vmem:[#allocation2 + $0x7c] sm:$0xf]
        %v396 = vld [vmem:[#allocation2 + $0x80] sm:$0xf]
        %v397 = vld [vmem:[#allocation2 + $0x84] sm:$0xf]
        %v398 = vld [vmem:[#allocation2 + $0x88] sm:$0xf]
        %v399 = vld [vmem:[#allocation2 + $0x8c] sm:$0xf]
        %v400 = vld [vmem:[#allocation2 + $0x90] sm:$0xf]
        %v401 = vld [vmem:[#allocation2 + $0x94] sm:$0xf]
        %v402 = vld [vmem:[#allocation2 + $0x98] sm:$0xf]
        %v403 = vld [vmem:[#allocation2 + $0x9c] sm:$0xf]
        %v404 = vld [vmem:[#allocation2 + $0xa0] sm:$0xf]
        %v405 = vld [vmem:[#allocation2 + $0xa4] sm:$0xf]
        %v406 = vld [vmem:[#allocation2 + $0xa8] sm:$0xf]
        %v407 = vld [vmem:[#allocation2 + $0xac] sm:$0xf]
        %v408 = vld [vmem:[#allocation2 + $0xb0] sm:$0xf]
        %v409 = vld [vmem:[#allocation2 + $0xb4] sm:$0xf]
        %v410 = vld [vmem:[#allocation2 + $0xb8] sm:$0xf]
        %v411 = vld [vmem:[#allocation2 + $0xbc] sm:$0xf]
        %v412 = vld [vmem:[#allocation2 + $0xc0] sm:$0xf]
        %v413 = vld [vmem:[#allocation2 + $0xc4] sm:$0xf]
        %v414 = vld [vmem:[#allocation2 + $0xc8] sm:$0xf]
        %v415 = vld [vmem:[#allocation2 + $0xcc] sm:$0xf]
        %v416 = vld [vmem:[#allocation2 + $0xd0] sm:$0xf]
        %v417 = vld [vmem:[#allocation2 + $0xd4] sm:$0xf]
        %v418 = vld [vmem:[#allocation2 + $0xd8] sm:$0xf]
        %v419 = vld [vmem:[#allocation2 + $0xdc] sm:$0xf]
        %v420 = vld [vmem:[#allocation2 + $0xe0] sm:$0xf]
        %v421 = vld [vmem:[#allocation2 + $0xe4] sm:$0xf]
        %v422 = vld [vmem:[#allocation2 + $0xe8] sm:$0xf]
        %v423 = vld [vmem:[#allocation2 + $0xec] sm:$0xf]
        %v424 = vld [vmem:[#allocation2 + $0xf0] sm:$0xf]
        %v425 = vld [vmem:[#allocation2 + $0xf4] sm:$0xf]
        %v426 = vld [vmem:[#allocation2 + $0xf8] sm:$0xf]
        %v427 = vld [vmem:[#allocation2 + $0xfc] sm:$0xf]
        %v428 = vld [vmem:[#allocation2 + $0x100] sm:$0xf]
        %v429 = vld [vmem:[#allocation2 + $0x104] sm:$0xf]
        %v430 = vld [vmem:[#allocation2 + $0x108] sm:$0xf]
        %v431 = vld [vmem:[#allocation2 + $0x10c] sm:$0xf]
        %v432 = vld [vmem:[#allocation2 + $0x110] sm:$0xf]
        %v433 = vld [vmem:[#allocation2 + $0x114] sm:$0xf]
        %v434 = vld [vmem:[#allocation2 + $0x118] sm:$0xf]
        %v435 = vld [vmem:[#allocation2 + $0x11c] sm:$0xf]
        %v436 = vld [vmem:[#allocation4] sm:$0x1]
        %v438 = vlaneseq
        %v439 = vshrl.u32 %v438, 7
        %v440 = vsub.s32 0, %v439
        %v441 = vrot.slane %v436, %v440
        %v539 = vunpack.c.l.b16 %v268
        %v540 = vunpack.c.h.b16 %v268
        %v541 = vunpack.c.l.b16 %v269
        %v542 = vunpack.c.h.b16 %v269
        %v543 = vunpack.c.l.b16 %v270
        %v544 = vunpack.c.l.b16 %v271
        %v545 = vunpack.c.h.b16 %v271
        %v546 = vunpack.c.l.b16 %v272
        %v547 = vunpack.c.h.b16 %v272
        %v548 = vunpack.c.l.b16 %v273
        %v549 = vunpack.c.l.b16 %v274
        %v550 = vunpack.c.h.b16 %v274
        %v551 = vunpack.c.l.b16 %v275
        %v552 = vunpack.c.h.b16 %v275
        %v553 = vunpack.c.l.b16 %v276
        %v554 = vunpack.c.l.b16 %v277
        %v555 = vunpack.c.h.b16 %v277
        %v556 = vunpack.c.l.b16 %v278
        %v557 = vunpack.c.h.b16 %v278
        %v558 = vunpack.c.l.b16 %v279
        %v559 = vunpack.c.l.b16 %v280
        %v560 = vunpack.c.h.b16 %v280
        %v561 = vunpack.c.l.b16 %v281
        %v562 = vunpack.c.h.b16 %v281
        %v563 = vunpack.c.l.b16 %v282
        %v564 = vunpack.c.l.b16 %v283
        %v565 = vunpack.c.h.b16 %v283
        %v566 = vunpack.c.l.b16 %v284
        %v567 = vunpack.c.h.b16 %v284
        %v568 = vunpack.c.l.b16 %v285
        %v569 = vunpack.c.l.b16 %v286
        %v570 = vunpack.c.h.b16 %v286
        %v571 = vunpack.c.l.b16 %v287
        %v572 = vunpack.c.h.b16 %v287
        %v573 = vunpack.c.l.b16 %v288
        %v574 = vunpack.c.l.b16 %v289
        %v575 = vunpack.c.h.b16 %v289
        %v576 = vunpack.c.l.b16 %v290
        %v577 = vunpack.c.h.b16 %v290
        %v578 = vunpack.c.l.b16 %v291
        %v579 = vunpack.c.l.b16 %v292
        %v580 = vunpack.c.h.b16 %v292
        %v581 = vunpack.c.l.b16 %v293
        %v582 = vunpack.c.h.b16 %v293
        %v583 = vunpack.c.l.b16 %v294
        %v584 = vunpack.c.l.b16 %v295
        %v585 = vunpack.c.h.b16 %v295
        %v586 = vunpack.c.l.b16 %v296
        %v587 = vunpack.c.h.b16 %v296
        %v588 = vunpack.c.l.b16 %v297
        %v589 = vunpack.c.l.b16 %v298
        %v590 = vunpack.c.h.b16 %v298
        %v591 = vunpack.c.l.b16 %v299
        %v592 = vunpack.c.h.b16 %v299
        %v593 = vunpack.c.l.b16 %v300
        %v594 = vunpack.c.l.b16 %v301
        %v595 = vunpack.c.h.b16 %v301
        %v596 = vunpack.c.l.b16 %v302
        %v597 = vunpack.c.h.b16 %v302
        %v598 = vunpack.c.l.b16 %v303
        %v599 = vunpack.c.l.b16 %v304
        %v600 = vunpack.c.h.b16 %v304
        %v601 = vunpack.c.l.b16 %v305
        %v602 = vunpack.c.h.b16 %v305
        %v603 = vunpack.c.l.b16 %v306
        %v604 = vunpack.c.l.b16 %v307
        %v605 = vunpack.c.h.b16 %v307
        %v606 = vunpack.c.l.b16 %v308
        %v607 = vunpack.c.h.b16 %v308
        %v608 = vunpack.c.l.b16 %v309
        %v609 = vunpack.c.l.b16 %v310
        %v610 = vunpack.c.h.b16 %v310
        %v611 = vunpack.c.l.b16 %v311
        %v612 = vunpack.c.h.b16 %v311
        %v613 = vunpack.c.l.b16 %v312
        %v614 = vunpack.c.l.b16 %v313
        %v615 = vunpack.c.h.b16 %v313
        %v616 = vunpack.c.l.b16 %v314
        %v617 = vunpack.c.h.b16 %v314
        %v618 = vunpack.c.l.b16 %v315
        %v619 = vunpack.c.l.b16 %v316
        %v620 = vunpack.c.h.b16 %v316
        %v621 = vunpack.c.l.b16 %v317
        %v622 = vunpack.c.h.b16 %v317
        %v623 = vunpack.c.l.b16 %v318
        %v624 = vunpack.c.l.b16 %v319
        %v625 = vunpack.c.h.b16 %v319
        %v626 = vunpack.c.l.b16 %v320
        %v627 = vunpack.c.h.b16 %v320
        %v628 = vunpack.c.l.b16 %v321
        %v629 = vunpack.c.l.b16 %v322
        %v630 = vunpack.c.h.b16 %v322
        %v631 = vunpack.c.l.b16 %v323
        %v632 = vunpack.c.h.b16 %v323
        %v633 = vunpack.c.l.b16 %v324
        %v634 = vunpack.c.l.b16 %v325
        %v635 = vunpack.c.h.b16 %v325
        %v636 = vunpack.c.l.b16 %v326
        %v637 = vunpack.c.h.b16 %v326
        %v638 = vunpack.c.l.b16 %v327
        %v639 = vunpack.c.l.b16 %v328
        %v640 = vunpack.c.h.b16 %v328
        %v641 = vunpack.c.l.b16 %v329
        %v642 = vunpack.c.h.b16 %v329
        %v643 = vunpack.c.l.b16 %v330
        %v644 = vunpack.c.l.b16 %v331
        %v645 = vunpack.c.h.b16 %v331
        %v646 = vunpack.c.l.b16 %v332
        %v647 = vunpack.c.h.b16 %v332
        %v648 = vunpack.c.l.b16 %v333
        %v649 = vunpack.c.l.b16 %v334
        %v650 = vunpack.c.h.b16 %v334
        %v651 = vunpack.c.l.b16 %v335
        %v652 = vunpack.c.h.b16 %v335
        %v653 = vunpack.c.l.b16 %v336
        %v654 = vunpack.c.l.b16 %v337
        %v655 = vunpack.c.h.b16 %v337
        %v656 = vunpack.c.l.b16 %v338
        %v657 = vunpack.c.h.b16 %v338
        %v658 = vunpack.c.l.b16 %v339
        %v659 = vunpack.c.l.b16 %v340
        %v660 = vunpack.c.h.b16 %v340
        %v661 = vunpack.c.l.b16 %v341
        %v662 = vunpack.c.h.b16 %v341
        %v663 = vunpack.c.l.b16 %v342
        %v664 = vunpack.c.l.b16 %v343
        %v665 = vunpack.c.h.b16 %v343
        %v666 = vunpack.c.l.b16 %v344
        %v667 = vunpack.c.h.b16 %v344
        %v668 = vunpack.c.l.b16 %v345
        %v669 = vunpack.c.l.b16 %v346
        %v670 = vunpack.c.h.b16 %v346
        %v671 = vunpack.c.l.b16 %v347
        %v672 = vunpack.c.h.b16 %v347
        %v673 = vunpack.c.l.b16 %v348
        %v674 = vunpack.c.l.b16 %v349
        %v675 = vunpack.c.h.b16 %v349
        %v676 = vunpack.c.l.b16 %v350
        %v677 = vunpack.c.h.b16 %v350
        %v678 = vunpack.c.l.b16 %v351
        %v679 = vunpack.c.l.b16 %v352
        %v680 = vunpack.c.h.b16 %v352
        %v681 = vunpack.c.l.b16 %v353
        %v682 = vunpack.c.h.b16 %v353
        %v683 = vunpack.c.l.b16 %v354
        %v684 = vunpack.c.l.b16 %v355
        %v685 = vunpack.c.h.b16 %v355
        %v686 = vunpack.c.l.b16 %v356
        %v687 = vunpack.c.h.b16 %v356
        %v688 = vunpack.c.l.b16 %v357
        %v689 = vunpack.c.l.b16 %v358
        %v690 = vunpack.c.h.b16 %v358
        %v691 = vunpack.c.l.b16 %v359
        %v692 = vunpack.c.h.b16 %v359
        %v693 = vunpack.c.l.b16 %v360
        %v694 = vunpack.c.l.b16 %v361
        %v695 = vunpack.c.h.b16 %v361
        %v696 = vunpack.c.l.b16 %v362
        %v697 = vunpack.c.h.b16 %v362
        %v698 = vunpack.c.l.b16 %v363
        %v699 = vpack.c.b16 %v544, %v539
        %v700 = vpack.c.b16 %v545, %v540
        %v701 = vpack.c.b16 %v546, %v541
        %v702 = vpack.c.b16 %v547, %v542
        %v703 = vpack.c.b16 %v548, %v543
        %v704 = vpack.c.b16 %v554, %v549
        %v705 = vpack.c.b16 %v555, %v550
        %v706 = vpack.c.b16 %v556, %v551
        %v707 = vpack.c.b16 %v557, %v552
        %v708 = vpack.c.b16 %v558, %v553
        %v709 = vpack.c.b16 %v564, %v559
        %v710 = vpack.c.b16 %v565, %v560
        %v711 = vpack.c.b16 %v566, %v561
        %v712 = vpack.c.b16 %v567, %v562
        %v713 = vpack.c.b16 %v568, %v563
        %v714 = vpack.c.b16 %v574, %v569
        %v715 = vpack.c.b16 %v575, %v570
        %v716 = vpack.c.b16 %v576, %v571
        %v717 = vpack.c.b16 %v577, %v572
        %v718 = vpack.c.b16 %v578, %v573
        %v719 = vpack.c.b16 %v584, %v579
        %v720 = vpack.c.b16 %v585, %v580
        %v721 = vpack.c.b16 %v586, %v581
        %v722 = vpack.c.b16 %v587, %v582
        %v723 = vpack.c.b16 %v588, %v583
        %v724 = vpack.c.b16 %v594, %v589
        %v725 = vpack.c.b16 %v595, %v590
        %v726 = vpack.c.b16 %v596, %v591
        %v727 = vpack.c.b16 %v597, %v592
        %v728 = vpack.c.b16 %v598, %v593
        %v729 = vpack.c.b16 %v604, %v599
        %v730 = vpack.c.b16 %v605, %v600
        %v731 = vpack.c.b16 %v606, %v601
        %v732 = vpack.c.b16 %v607, %v602
        %v733 = vpack.c.b16 %v608, %v603
        %v734 = vpack.c.b16 %v614, %v609
        %v735 = vpack.c.b16 %v615, %v610
        %v736 = vpack.c.b16 %v616, %v611
        %v737 = vpack.c.b16 %v617, %v612
        %v738 = vpack.c.b16 %v618, %v613
        %v739 = vpack.c.b16 %v624, %v619
        %v740 = vpack.c.b16 %v625, %v620
        %v741 = vpack.c.b16 %v626, %v621
        %v742 = vpack.c.b16 %v627, %v622
        %v743 = vpack.c.b16 %v628, %v623
        %v744 = vpack.c.b16 %v634, %v629
        %v745 = vpack.c.b16 %v635, %v630
        %v746 = vpack.c.b16 %v636, %v631
        %v747 = vpack.c.b16 %v637, %v632
        %v748 = vpack.c.b16 %v638, %v633
        %v749 = vpack.c.b16 %v644, %v639
        %v750 = vpack.c.b16 %v645, %v640
        %v751 = vpack.c.b16 %v646, %v641
        %v752 = vpack.c.b16 %v647, %v642
        %v753 = vpack.c.b16 %v648, %v643
        %v754 = vpack.c.b16 %v654, %v649
        %v755 = vpack.c.b16 %v655, %v650
        %v756 = vpack.c.b16 %v656, %v651
        %v757 = vpack.c.b16 %v657, %v652
        %v758 = vpack.c.b16 %v658, %v653
        %v759 = vpack.c.b16 %v664, %v659
        %v760 = vpack.c.b16 %v665, %v660
        %v761 = vpack.c.b16 %v666, %v661
        %v762 = vpack.c.b16 %v667, %v662
        %v763 = vpack.c.b16 %v668, %v663
        %v764 = vpack.c.b16 %v674, %v669
        %v765 = vpack.c.b16 %v675, %v670
        %v766 = vpack.c.b16 %v676, %v671
        %v767 = vpack.c.b16 %v677, %v672
        %v768 = vpack.c.b16 %v678, %v673
        %v769 = vpack.c.b16 %v684, %v679
        %v770 = vpack.c.b16 %v685, %v680
        %v771 = vpack.c.b16 %v686, %v681
        %v772 = vpack.c.b16 %v687, %v682
        %v773 = vpack.c.b16 %v688, %v683
        %v774 = vpack.c.b16 %v694, %v689
        %v775 = vpack.c.b16 %v695, %v690
        %v776 = vpack.c.b16 %v696, %v691
        %v777 = vpack.c.b16 %v697, %v692
        %v778 = vpack.c.b16 %v698, %v693
        %v915 = vunpack.c.l.b16 %v364
        %v916 = vunpack.c.l.b16 %v365
        %v917 = vunpack.c.l.b16 %v366
        %v918 = vunpack.c.l.b16 %v367
        %v919 = vunpack.c.l.b16 %v368
        %v920 = vunpack.c.l.b16 %v369
        %v921 = vunpack.c.l.b16 %v370
        %v922 = vunpack.c.l.b16 %v371
        %v923 = vunpack.c.l.b16 %v372
        %v924 = vunpack.c.l.b16 %v373
        %v925 = vunpack.c.l.b16 %v374
        %v926 = vunpack.c.l.b16 %v375
        %v927 = vunpack.c.l.b16 %v376
        %v928 = vunpack.c.l.b16 %v377
        %v929 = vunpack.c.l.b16 %v378
        %v930 = vunpack.c.l.b16 %v379
        %v931 = vunpack.c.l.b16 %v380
        %v932 = vunpack.c.l.b16 %v381
        %v933 = vunpack.c.l.b16 %v382
        %v934 = vunpack.c.l.b16 %v383
        %v935 = vunpack.c.l.b16 %v384
        %v936 = vunpack.c.l.b16 %v385
        %v937 = vunpack.c.l.b16 %v386
        %v938 = vunpack.c.l.b16 %v387
        %v939 = vunpack.c.l.b16 %v388
        %v940 = vunpack.c.l.b16 %v389
        %v941 = vunpack.c.l.b16 %v390
        %v942 = vunpack.c.l.b16 %v391
        %v943 = vunpack.c.l.b16 %v392
        %v944 = vunpack.c.l.b16 %v393
        %v945 = vunpack.c.l.b16 %v394
        %v946 = vunpack.c.l.b16 %v395
        %v947 = vunpack.c.l.b16 %v396
        %v948 = vunpack.c.l.b16 %v397
        %v949 = vunpack.c.l.b16 %v398
        %v950 = vunpack.c.l.b16 %v399
        %v951 = vunpack.c.l.b16 %v400
        %v952 = vunpack.c.l.b16 %v401
        %v953 = vunpack.c.l.b16 %v402
        %v954 = vunpack.c.l.b16 %v403
        %v955 = vunpack.c.l.b16 %v404
        %v956 = vunpack.c.l.b16 %v405
        %v957 = vunpack.c.l.b16 %v406
        %v958 = vunpack.c.l.b16 %v407
        %v959 = vunpack.c.l.b16 %v408
        %v960 = vunpack.c.l.b16 %v409
        %v961 = vunpack.c.l.b16 %v410
        %v962 = vunpack.c.l.b16 %v411
        %v963 = vunpack.c.l.b16 %v412
        %v964 = vunpack.c.l.b16 %v413
        %v965 = vunpack.c.l.b16 %v414
        %v966 = vunpack.c.l.b16 %v415
        %v967 = vunpack.c.l.b16 %v416
        %v968 = vunpack.c.l.b16 %v417
        %v969 = vunpack.c.l.b16 %v418
        %v970 = vunpack.c.l.b16 %v419
        %v971 = vunpack.c.l.b16 %v420
        %v972 = vunpack.c.l.b16 %v421
        %v973 = vunpack.c.l.b16 %v422
        %v974 = vunpack.c.l.b16 %v423
        %v975 = vunpack.c.l.b16 %v424
        %v976 = vunpack.c.l.b16 %v425
        %v977 = vunpack.c.l.b16 %v426
        %v978 = vunpack.c.l.b16 %v427
        %v979 = vunpack.c.l.b16 %v428
        %v980 = vunpack.c.l.b16 %v429
        %v981 = vunpack.c.l.b16 %v430
        %v982 = vunpack.c.l.b16 %v431
        %v983 = vunpack.c.l.b16 %v432
        %v984 = vunpack.c.l.b16 %v433
        %v985 = vunpack.c.l.b16 %v434
        %v986 = vunpack.c.l.b16 %v435
        %v987 = vpack.c.b16 %v916, %v915
        %v988 = vpack.c.b16 %v918, %v917
        %v989 = vpack.c.b16 %v920, %v919
        %v990 = vpack.c.b16 %v922, %v921
        %v991 = vpack.c.b16 %v924, %v923
        %v992 = vpack.c.b16 %v926, %v925
        %v993 = vpack.c.b16 %v928, %v927
        %v994 = vpack.c.b16 %v930, %v929
        %v995 = vpack.c.b16 %v932, %v931
        %v996 = vpack.c.b16 %v934, %v933
        %v997 = vpack.c.b16 %v936, %v935
        %v998 = vpack.c.b16 %v938, %v937
        %v999 = vpack.c.b16 %v940, %v939
        %v1000 = vpack.c.b16 %v942, %v941
        %v1001 = vpack.c.b16 %v944, %v943
        %v1002 = vpack.c.b16 %v946, %v945
        %v1003 = vpack.c.b16 %v948, %v947
        %v1004 = vpack.c.b16 %v950, %v949
        %v1005 = vpack.c.b16 %v952, %v951
        %v1006 = vpack.c.b16 %v954, %v953
        %v1007 = vpack.c.b16 %v956, %v955
        %v1008 = vpack.c.b16 %v958, %v957
        %v1009 = vpack.c.b16 %v960, %v959
        %v1010 = vpack.c.b16 %v962, %v961
        %v1011 = vpack.c.b16 %v964, %v963
        %v1012 = vpack.c.b16 %v966, %v965
        %v1013 = vpack.c.b16 %v968, %v967
        %v1014 = vpack.c.b16 %v970, %v969
        %v1015 = vpack.c.b16 %v972, %v971
        %v1016 = vpack.c.b16 %v974, %v973
        %v1017 = vpack.c.b16 %v976, %v975
        %v1018 = vpack.c.b16 %v978, %v977
        %v1019 = vpack.c.b16 %v980, %v979
        %v1020 = vpack.c.b16 %v982, %v981
        %v1021 = vpack.c.b16 %v984, %v983
        %v1022 = vpack.c.b16 %v986, %v985
        %vm1059 = vcmask 523264
        %v1061 = vsel %vm1059, %v703, 0
        %v1064 = vsel %vm1059, %v708, 0
        %v1067 = vsel %vm1059, %v713, 0
        %v1070 = vsel %vm1059, %v718, 0
        %v1073 = vsel %vm1059, %v723, 0
        %v1076 = vsel %vm1059, %v728, 0
        %v1079 = vsel %vm1059, %v733, 0
        %v1082 = vsel %vm1059, %v738, 0
        %v1085 = vsel %vm1059, %v743, 0
        %v1088 = vsel %vm1059, %v748, 0
        %v1091 = vsel %vm1059, %v753, 0
        %v1094 = vsel %vm1059, %v758, 0
        %v1097 = vsel %vm1059, %v763, 0
        %v1100 = vsel %vm1059, %v768, 0
        %v1103 = vsel %vm1059, %v773, 0
        %v1106 = vsel %vm1059, %v778, 0
        %1108 = vmatprep.subr.bf16.mxu0 0
        %1109 = vmatpush1.bf16.msra.mxu0 %v987
        %1110 = vmatprep.subr.bf16.mxu0 0
        %1111 = vmatpush1.bf16.msra.mxu0 %v988
        %1112 = vmatprep.subr.bf16.mxu0 0
        %1113 = vmatpush1.bf16.msra.mxu0 %v989
        %1114 = vmatprep.subr.bf16.mxu0 0
        %1115 = vmatpush1.bf16.msra.mxu0 %v990
        %1116 = vmatprep.subr.bf16.mxu0 0
        %1117 = vmatpush1.bf16.msra.mxu0 %v991
        %1118 = vmatprep.subr.bf16.mxu0 0
        %1119 = vmatpush1.bf16.msra.mxu0 %v992
        %1120 = vmatprep.subr.bf16.mxu0 0
        %1121 = vmatpush1.bf16.msra.mxu0 %v993
        %1122 = vmatprep.subr.bf16.mxu0 0
        %1123 = vmatpush1.bf16.msra.mxu0 %v994
        %1124 = vmatprep.subr.bf16.mxu0 0
        %1125 = vmatpush1.bf16.msra.mxu0 %v995
        %1126 = vmatprep.subr.bf16.mxu0 0
        %1127 = vmatpush1.bf16.msra.mxu0 %v996
        %1128 = vmatprep.subr.bf16.mxu0 0
        %1129 = vmatpush1.bf16.msra.mxu0 %v997
        %1130 = vmatprep.subr.bf16.mxu0 0
        %1131 = vmatpush1.bf16.msra.mxu0 %v998
        %1132 = vmatprep.subr.bf16.mxu0 0
        %1133 = vmatpush1.bf16.msra.mxu0 %v999
        %1134 = vmatprep.subr.bf16.mxu0 0
        %1135 = vmatpush1.bf16.msra.mxu0 %v1000
        %1136 = vmatprep.subr.bf16.mxu0 0
        %1137 = vmatpush1.bf16.msra.mxu0 %v1001
        %1138 = vmatprep.subr.bf16.mxu0 0
        %1139 = vmatpush1.bf16.msra.mxu0 %v1002
        %1140 = vmatprep.mubr.bf16.mxu0 %v700
        %1141 = vmatmul.mubr.bf16.gmra.mrb[0].mxu0 %v699
        %v1142 = vpop.f32.mrb[0].mxu0
        %v1143 = vadd.f32 %v441, %v1142
        %v1144 = vpop.f32.mrb[0].mxu0
        %v1145 = vpop.f32.mrb[0].mxu0
        %v1146 = vadd.f32 %v441, %v1145
        %v1147 = vpop.f32.mrb[0].mxu0
        %1148 = vmatprep.mubr.bf16.mxu0 %v705
        %1149 = vmatmul.mubr.bf16.gmra.mrb[0].mxu0 %v704
        %v1150 = vpop.f32.mrb[0].mxu0
        %v1151 = vadd.f32 %v441, %v1150
        %v1152 = vpop.f32.mrb[0].mxu0
        %v1153 = vpop.f32.mrb[0].mxu0
        %v1154 = vadd.f32 %v441, %v1153
        %v1155 = vpop.f32.mrb[0].mxu0
        %1156 = vmatprep.mubr.bf16.mxu0 %v710
        %1157 = vmatmul.mubr.bf16.gmra.mrb[0].mxu0 %v709
        %v1158 = vpop.f32.mrb[0].mxu0
        %v1159 = vadd.f32 %v441, %v1158
        %v1160 = vpop.f32.mrb[0].mxu0
        %v1161 = vpop.f32.mrb[0].mxu0
        %v1162 = vadd.f32 %v441, %v1161
        %v1163 = vpop.f32.mrb[0].mxu0
        %1164 = vmatprep.mubr.bf16.mxu0 %v715
        %1165 = vmatmul.mubr.bf16.gmra.mrb[0].mxu0 %v714
        %v1166 = vpop.f32.mrb[0].mxu0
        %v1167 = vadd.f32 %v441, %v1166
        %v1168 = vpop.f32.mrb[0].mxu0
        %v1169 = vpop.f32.mrb[0].mxu0
        %v1170 = vadd.f32 %v441, %v1169
        %v1171 = vpop.f32.mrb[0].mxu0
        %1172 = vmatprep.mubr.bf16.mxu0 %v720
        %1173 = vmatmul.mubr.bf16.gmra.mrb[0].mxu0 %v719
        %v1174 = vpop.f32.mrb[0].mxu0
        %v1175 = vadd.f32 %v441, %v1174
        %v1176 = vpop.f32.mrb[0].mxu0
        %v1177 = vpop.f32.mrb[0].mxu0
        %v1178 = vadd.f32 %v441, %v1177
        %v1179 = vpop.f32.mrb[0].mxu0
        %1180 = vmatprep.mubr.bf16.mxu0 %v725
        %1181 = vmatmul.mubr.bf16.gmra.mrb[0].mxu0 %v724
        %v1182 = vpop.f32.mrb[0].mxu0
        %v1183 = vadd.f32 %v441, %v1182
        %v1184 = vpop.f32.mrb[0].mxu0
        %v1185 = vpop.f32.mrb[0].mxu0
        %v1186 = vadd.f32 %v441, %v1185
        %v1187 = vpop.f32.mrb[0].mxu0
        %1188 = vmatprep.mubr.bf16.mxu0 %v730
        %1189 = vmatmul.mubr.bf16.gmra.mrb[0].mxu0 %v729
        %v1190 = vpop.f32.mrb[0].mxu0
        %v1191 = vadd.f32 %v441, %v1190
        %v1192 = vpop.f32.mrb[0].mxu0
        %v1193 = vpop.f32.mrb[0].mxu0
        %v1194 = vadd.f32 %v441, %v1193
        %v1195 = vpop.f32.mrb[0].mxu0
        %1196 = vmatprep.mubr.bf16.mxu0 %v735
        %1197 = vmatmul.mubr.bf16.gmra.mrb[0].mxu0 %v734
        %v1198 = vpop.f32.mrb[0].mxu0
        %v1199 = vadd.f32 %v441, %v1198
        %v1200 = vpop.f32.mrb[0].mxu0
        %v1201 = vpop.f32.mrb[0].mxu0
        %v1202 = vadd.f32 %v441, %v1201
        %v1203 = vpop.f32.mrb[0].mxu0
        %1204 = vmatprep.mubr.bf16.mxu0 %v740
        %1205 = vmatmul.mubr.bf16.gmra.mrb[0].mxu0 %v739
        %v1206 = vpop.f32.mrb[0].mxu0
        %v1207 = vadd.f32 %v441, %v1206
        %v1208 = vpop.f32.mrb[0].mxu0
        %v1209 = vpop.f32.mrb[0].mxu0
        %v1210 = vadd.f32 %v441, %v1209
        %v1211 = vpop.f32.mrb[0].mxu0
        %1212 = vmatprep.mubr.bf16.mxu0 %v745
        %1213 = vmatmul.mubr.bf16.gmra.mrb[0].mxu0 %v744
        %v1214 = vpop.f32.mrb[0].mxu0
        %v1215 = vadd.f32 %v441, %v1214
        %v1216 = vpop.f32.mrb[0].mxu0
        %v1217 = vpop.f32.mrb[0].mxu0
        %v1218 = vadd.f32 %v441, %v1217
        %v1219 = vpop.f32.mrb[0].mxu0
        %1220 = vmatprep.mubr.bf16.mxu0 %v750
        %1221 = vmatmul.mubr.bf16.gmra.mrb[0].mxu0 %v749
        %v1222 = vpop.f32.mrb[0].mxu0
        %v1223 = vadd.f32 %v441, %v1222
        %v1224 = vpop.f32.mrb[0].mxu0
        %v1225 = vpop.f32.mrb[0].mxu0
        %v1226 = vadd.f32 %v441, %v1225
        %v1227 = vpop.f32.mrb[0].mxu0
        %1228 = vmatprep.mubr.bf16.mxu0 %v755
        %1229 = vmatmul.mubr.bf16.gmra.mrb[0].mxu0 %v754
        %v1230 = vpop.f32.mrb[0].mxu0
        %v1231 = vadd.f32 %v441, %v1230
        %v1232 = vpop.f32.mrb[0].mxu0
        %v1233 = vpop.f32.mrb[0].mxu0
        %v1234 = vadd.f32 %v441, %v1233
        %v1235 = vpop.f32.mrb[0].mxu0
        %1236 = vmatprep.mubr.bf16.mxu0 %v760
        %1237 = vmatmul.mubr.bf16.gmra.mrb[0].mxu0 %v759
        %v1238 = vpop.f32.mrb[0].mxu0
        %v1239 = vadd.f32 %v441, %v1238
        %v1240 = vpop.f32.mrb[0].mxu0
        %v1241 = vpop.f32.mrb[0].mxu0
        %v1242 = vadd.f32 %v441, %v1241
        %v1243 = vpop.f32.mrb[0].mxu0
        %1244 = vmatprep.mubr.bf16.mxu0 %v765
        %1245 = vmatmul.mubr.bf16.gmra.mrb[0].mxu0 %v764
        %v1246 = vpop.f32.mrb[0].mxu0
        %v1247 = vadd.f32 %v441, %v1246
        %v1248 = vpop.f32.mrb[0].mxu0
        %v1249 = vpop.f32.mrb[0].mxu0
        %v1250 = vadd.f32 %v441, %v1249
        %v1251 = vpop.f32.mrb[0].mxu0
        %1252 = vmatprep.mubr.bf16.mxu0 %v770
        %1253 = vmatmul.mubr.bf16.gmra.mrb[0].mxu0 %v769
        %v1254 = vpop.f32.mrb[0].mxu0
        %v1255 = vadd.f32 %v441, %v1254
        %v1256 = vpop.f32.mrb[0].mxu0
        %v1257 = vpop.f32.mrb[0].mxu0
        %v1258 = vadd.f32 %v441, %v1257
        %v1259 = vpop.f32.mrb[0].mxu0
        %1260 = vmatprep.mubr.bf16.mxu0 %v775
        %1261 = vmatmul.mubr.bf16.gmra.mrb[0].mxu0 %v774
        %v1262 = vpop.f32.mrb[0].mxu0
        %v1263 = vadd.f32 %v441, %v1262
        %v1264 = vpop.f32.mrb[0].mxu0
        %v1265 = vpop.f32.mrb[0].mxu0
        %v1266 = vadd.f32 %v441, %v1265
        %v1267 = vpop.f32.mrb[0].mxu0
        %1268 = vdwg.mxu0
        %1269 = vmatprep.subr.bf16.mxu0 0
        %1270 = vmatpush1.bf16.msra.mxu0 %v1003
        %1271 = vmatprep.subr.bf16.mxu0 0
        %1272 = vmatpush1.bf16.msra.mxu0 %v1004
        %1273 = vmatprep.subr.bf16.mxu0 0
        %1274 = vmatpush1.bf16.msra.mxu0 %v1005
        %1275 = vmatprep.subr.bf16.mxu0 0
        %1276 = vmatpush1.bf16.msra.mxu0 %v1006
        %1277 = vmatprep.subr.bf16.mxu0 0
        %1278 = vmatpush1.bf16.msra.mxu0 %v1007
        %1279 = vmatprep.subr.bf16.mxu0 0
        %1280 = vmatpush1.bf16.msra.mxu0 %v1008
        %1281 = vmatprep.subr.bf16.mxu0 0
        %1282 = vmatpush1.bf16.msra.mxu0 %v1009
        %1283 = vmatprep.subr.bf16.mxu0 0
        %1284 = vmatpush1.bf16.msra.mxu0 %v1010
        %1285 = vmatprep.subr.bf16.mxu0 0
        %1286 = vmatpush1.bf16.msra.mxu0 %v1011
        %1287 = vmatprep.subr.bf16.mxu0 0
        %1288 = vmatpush1.bf16.msra.mxu0 %v1012
        %1289 = vmatprep.subr.bf16.mxu0 0
        %1290 = vmatpush1.bf16.msra.mxu0 %v1013
        %1291 = vmatprep.subr.bf16.mxu0 0
        %1292 = vmatpush1.bf16.msra.mxu0 %v1014
        %1293 = vmatprep.subr.bf16.mxu0 0
        %1294 = vmatpush1.bf16.msra.mxu0 %v1015
        %1295 = vmatprep.subr.bf16.mxu0 0
        %1296 = vmatpush1.bf16.msra.mxu0 %v1016
        %1297 = vmatprep.subr.bf16.mxu0 0
        %1298 = vmatpush1.bf16.msra.mxu0 %v1017
        %1299 = vmatprep.subr.bf16.mxu0 0
        %1300 = vmatpush1.bf16.msra.mxu0 %v1018
        %1301 = vmatprep.mubr.bf16.mxu0 %v702
        %1302 = vmatmul.mubr.bf16.gmra.mrb[0].mxu0 %v701
        %v1303 = vpop.f32.mrb[0].mxu0
        %v1304 = vadd.f32 %v1143, %v1303
        %v1305 = vpop.f32.mrb[0].mxu0
        %v1306 = vpop.f32.mrb[0].mxu0
        %v1307 = vadd.f32 %v1146, %v1306
        %v1308 = vpop.f32.mrb[0].mxu0
        %1309 = vmatprep.mubr.bf16.mxu0 %v707
        %1310 = vmatmul.mubr.bf16.gmra.mrb[0].mxu0 %v706
        %v1311 = vpop.f32.mrb[0].mxu0
        %v1312 = vadd.f32 %v1151, %v1311
        %v1313 = vpop.f32.mrb[0].mxu0
        %v1314 = vpop.f32.mrb[0].mxu0
        %v1315 = vadd.f32 %v1154, %v1314
        %v1316 = vpop.f32.mrb[0].mxu0
        %1317 = vmatprep.mubr.bf16.mxu0 %v712
        %1318 = vmatmul.mubr.bf16.gmra.mrb[0].mxu0 %v711
        %v1319 = vpop.f32.mrb[0].mxu0
        %v1320 = vadd.f32 %v1159, %v1319
        %v1321 = vpop.f32.mrb[0].mxu0
        %v1322 = vpop.f32.mrb[0].mxu0
        %v1323 = vadd.f32 %v1162, %v1322
        %v1324 = vpop.f32.mrb[0].mxu0
        %1325 = vmatprep.mubr.bf16.mxu0 %v717
        %1326 = vmatmul.mubr.bf16.gmra.mrb[0].mxu0 %v716
        %v1327 = vpop.f32.mrb[0].mxu0
        %v1328 = vadd.f32 %v1167, %v1327
        %v1329 = vpop.f32.mrb[0].mxu0
        %v1330 = vpop.f32.mrb[0].mxu0
        %v1331 = vadd.f32 %v1170, %v1330
        %v1332 = vpop.f32.mrb[0].mxu0
        %1333 = vmatprep.mubr.bf16.mxu0 %v722
        %1334 = vmatmul.mubr.bf16.gmra.mrb[0].mxu0 %v721
        %v1335 = vpop.f32.mrb[0].mxu0
        %v1336 = vadd.f32 %v1175, %v1335
        %v1337 = vpop.f32.mrb[0].mxu0
        %v1338 = vpop.f32.mrb[0].mxu0
        %v1339 = vadd.f32 %v1178, %v1338
        %v1340 = vpop.f32.mrb[0].mxu0
        %1341 = vmatprep.mubr.bf16.mxu0 %v727
        %1342 = vmatmul.mubr.bf16.gmra.mrb[0].mxu0 %v726
        %v1343 = vpop.f32.mrb[0].mxu0
        %v1344 = vadd.f32 %v1183, %v1343
        %v1345 = vpop.f32.mrb[0].mxu0
        %v1346 = vpop.f32.mrb[0].mxu0
        %v1347 = vadd.f32 %v1186, %v1346
        %v1348 = vpop.f32.mrb[0].mxu0
        %1349 = vmatprep.mubr.bf16.mxu0 %v732
        %1350 = vmatmul.mubr.bf16.gmra.mrb[0].mxu0 %v731
        %v1351 = vpop.f32.mrb[0].mxu0
        %v1352 = vadd.f32 %v1191, %v1351
        %v1353 = vpop.f32.mrb[0].mxu0
        %v1354 = vpop.f32.mrb[0].mxu0
        %v1355 = vadd.f32 %v1194, %v1354
        %v1356 = vpop.f32.mrb[0].mxu0
        %1357 = vmatprep.mubr.bf16.mxu0 %v737
        %1358 = vmatmul.mubr.bf16.gmra.mrb[0].mxu0 %v736
        %v1359 = vpop.f32.mrb[0].mxu0
        %v1360 = vadd.f32 %v1199, %v1359
        %v1361 = vpop.f32.mrb[0].mxu0
        %v1362 = vpop.f32.mrb[0].mxu0
        %v1363 = vadd.f32 %v1202, %v1362
        %v1364 = vpop.f32.mrb[0].mxu0
        %1365 = vmatprep.mubr.bf16.mxu0 %v742
        %1366 = vmatmul.mubr.bf16.gmra.mrb[0].mxu0 %v741
        %v1367 = vpop.f32.mrb[0].mxu0
        %v1368 = vadd.f32 %v1207, %v1367
        %v1369 = vpop.f32.mrb[0].mxu0
        %v1370 = vpop.f32.mrb[0].mxu0
        %v1371 = vadd.f32 %v1210, %v1370
        %v1372 = vpop.f32.mrb[0].mxu0
        %1373 = vmatprep.mubr.bf16.mxu0 %v747
        %1374 = vmatmul.mubr.bf16.gmra.mrb[0].mxu0 %v746
        %v1375 = vpop.f32.mrb[0].mxu0
        %v1376 = vadd.f32 %v1215, %v1375
        %v1377 = vpop.f32.mrb[0].mxu0
        %v1378 = vpop.f32.mrb[0].mxu0
        %v1379 = vadd.f32 %v1218, %v1378
        %v1380 = vpop.f32.mrb[0].mxu0
        %1381 = vmatprep.mubr.bf16.mxu0 %v752
        %1382 = vmatmul.mubr.bf16.gmra.mrb[0].mxu0 %v751
        %v1383 = vpop.f32.mrb[0].mxu0
        %v1384 = vadd.f32 %v1223, %v1383
        %v1385 = vpop.f32.mrb[0].mxu0
        %v1386 = vpop.f32.mrb[0].mxu0
        %v1387 = vadd.f32 %v1226, %v1386
        %v1388 = vpop.f32.mrb[0].mxu0
        %1389 = vmatprep.mubr.bf16.mxu0 %v757
        %1390 = vmatmul.mubr.bf16.gmra.mrb[0].mxu0 %v756
        %v1391 = vpop.f32.mrb[0].mxu0
        %v1392 = vadd.f32 %v1231, %v1391
        %v1393 = vpop.f32.mrb[0].mxu0
        %v1394 = vpop.f32.mrb[0].mxu0
        %v1395 = vadd.f32 %v1234, %v1394
        %v1396 = vpop.f32.mrb[0].mxu0
        %1397 = vmatprep.mubr.bf16.mxu0 %v762
        %1398 = vmatmul.mubr.bf16.gmra.mrb[0].mxu0 %v761
        %v1399 = vpop.f32.mrb[0].mxu0
        %v1400 = vadd.f32 %v1239, %v1399
        %v1401 = vpop.f32.mrb[0].mxu0
        %v1402 = vpop.f32.mrb[0].mxu0
        %v1403 = vadd.f32 %v1242, %v1402
        %v1404 = vpop.f32.mrb[0].mxu0
        %1405 = vmatprep.mubr.bf16.mxu0 %v767
        %1406 = vmatmul.mubr.bf16.gmra.mrb[0].mxu0 %v766
        %v1407 = vpop.f32.mrb[0].mxu0
        %v1408 = vadd.f32 %v1247, %v1407
        %v1409 = vpop.f32.mrb[0].mxu0
        %v1410 = vpop.f32.mrb[0].mxu0
        %v1411 = vadd.f32 %v1250, %v1410
        %v1412 = vpop.f32.mrb[0].mxu0
        %1413 = vmatprep.mubr.bf16.mxu0 %v772
        %1414 = vmatmul.mubr.bf16.gmra.mrb[0].mxu0 %v771
        %v1415 = vpop.f32.mrb[0].mxu0
        %v1416 = vadd.f32 %v1255, %v1415
        %v1417 = vpop.f32.mrb[0].mxu0
        %v1418 = vpop.f32.mrb[0].mxu0
        %v1419 = vadd.f32 %v1258, %v1418
        %v1420 = vpop.f32.mrb[0].mxu0
        %1421 = vmatprep.mubr.bf16.mxu0 %v777
        %1422 = vmatmul.mubr.bf16.gmra.mrb[0].mxu0 %v776
        %v1423 = vpop.f32.mrb[0].mxu0
        %v1424 = vadd.f32 %v1263, %v1423
        %v1425 = vpop.f32.mrb[0].mxu0
        %v1426 = vpop.f32.mrb[0].mxu0
        %v1427 = vadd.f32 %v1266, %v1426
        %v1428 = vpop.f32.mrb[0].mxu0
        %1429 = vdwg.mxu0
        %1430 = vmatprep.subr.bf16.mxu0 0
        %1431 = vmatpush1.bf16.msra.mxu0 %v1019
        %1432 = vmatprep.subr.bf16.mxu0 0
        %1433 = vmatpush1.bf16.msra.mxu0 %v1020
        %1434 = vmatprep.subr.bf16.mxu0 0
        %1435 = vmatpush1.bf16.msra.mxu0 %v1021
        %1436 = vmatprep.subr.bf16.mxu0 0
        %1437 = vmatpush1.bf16.msra.mxu0 %v1022
        %1438 = vmatprep.subr.bf16.mxu0 0
        %1439 = vmatpush1.bf16.msra.mxu0 0
        %1440 = vmatprep.subr.bf16.mxu0 0
        %1441 = vmatpush1.bf16.msra.mxu0 0
        %1442 = vmatprep.subr.bf16.mxu0 0
        %1443 = vmatpush1.bf16.msra.mxu0 0
        %1444 = vmatprep.subr.bf16.mxu0 0
        %1445 = vmatpush1.bf16.msra.mxu0 0
        %1446 = vmatprep.subr.bf16.mxu0 0
        %1447 = vmatpush1.bf16.msra.mxu0 0
        %1448 = vmatprep.subr.bf16.mxu0 0
        %1449 = vmatpush1.bf16.msra.mxu0 0
        %1450 = vmatprep.subr.bf16.mxu0 0
        %1451 = vmatpush1.bf16.msra.mxu0 0
        %1452 = vmatprep.subr.bf16.mxu0 0
        %1453 = vmatpush1.bf16.msra.mxu0 0
        %1454 = vmatprep.subr.bf16.mxu0 0
        %1455 = vmatpush1.bf16.msra.mxu0 0
        %1456 = vmatprep.subr.bf16.mxu0 0
        %1457 = vmatpush1.bf16.msra.mxu0 0
        %1458 = vmatprep.subr.bf16.mxu0 0
        %1459 = vmatpush1.bf16.msra.mxu0 0
        %1460 = vmatprep.subr.bf16.mxu0 0
        %1461 = vmatpush1.bf16.msra.mxu0 0
        %1462 = vmatprep.mubr.bf16.mxu0 0
        %1463 = vmatmul.mubr.bf16.gmra.mrb[0].mxu0 %v1061
        %v1464 = vpop.f32.mrb[0].mxu0
        %v1465 = vadd.f32 %v1304, %v1464
        %v1466 = vpop.f32.mrb[0].mxu0
        %v1467 = vpop.f32.mrb[0].mxu0
        %v1468 = vadd.f32 %v1307, %v1467
        %v1469 = vpop.f32.mrb[0].mxu0
        %1470 = vmatprep.mubr.bf16.mxu0 0
        %1471 = vmatmul.mubr.bf16.gmra.mrb[0].mxu0 %v1064
        %v1472 = vpop.f32.mrb[0].mxu0
        %v1473 = vadd.f32 %v1312, %v1472
        %v1474 = vpop.f32.mrb[0].mxu0
        %v1475 = vpop.f32.mrb[0].mxu0
        %v1476 = vadd.f32 %v1315, %v1475
        %v1477 = vpop.f32.mrb[0].mxu0
        %1478 = vmatprep.mubr.bf16.mxu0 0
        %1479 = vmatmul.mubr.bf16.gmra.mrb[0].mxu0 %v1067
        %v1480 = vpop.f32.mrb[0].mxu0
        %v1481 = vadd.f32 %v1320, %v1480
        %v1482 = vpop.f32.mrb[0].mxu0
        %v1483 = vpop.f32.mrb[0].mxu0
        %v1484 = vadd.f32 %v1323, %v1483
        %v1485 = vpop.f32.mrb[0].mxu0
        %1486 = vmatprep.mubr.bf16.mxu0 0
        %1487 = vmatmul.mubr.bf16.gmra.mrb[0].mxu0 %v1070
        %v1488 = vpop.f32.mrb[0].mxu0
        %v1489 = vadd.f32 %v1328, %v1488
        %v1490 = vpop.f32.mrb[0].mxu0
        %v1491 = vpop.f32.mrb[0].mxu0
        %v1492 = vadd.f32 %v1331, %v1491
        %v1493 = vpop.f32.mrb[0].mxu0
        %1494 = vmatprep.mubr.bf16.mxu0 0
        %1495 = vmatmul.mubr.bf16.gmra.mrb[0].mxu0 %v1073
        %v1496 = vpop.f32.mrb[0].mxu0
        %v1497 = vadd.f32 %v1336, %v1496
        %v1498 = vpop.f32.mrb[0].mxu0
        %v1499 = vpop.f32.mrb[0].mxu0
        %v1500 = vadd.f32 %v1339, %v1499
        %v1501 = vpop.f32.mrb[0].mxu0
        %1502 = vmatprep.mubr.bf16.mxu0 0
        %1503 = vmatmul.mubr.bf16.gmra.mrb[0].mxu0 %v1076
        %v1504 = vpop.f32.mrb[0].mxu0
        %v1505 = vadd.f32 %v1344, %v1504
        %v1506 = vpop.f32.mrb[0].mxu0
        %v1507 = vpop.f32.mrb[0].mxu0
        %v1508 = vadd.f32 %v1347, %v1507
        %v1509 = vpop.f32.mrb[0].mxu0
        %1510 = vmatprep.mubr.bf16.mxu0 0
        %1511 = vmatmul.mubr.bf16.gmra.mrb[0].mxu0 %v1079
        %v1512 = vpop.f32.mrb[0].mxu0
        %v1513 = vadd.f32 %v1352, %v1512
        %v1514 = vpop.f32.mrb[0].mxu0
        %v1515 = vpop.f32.mrb[0].mxu0
        %v1516 = vadd.f32 %v1355, %v1515
        %v1517 = vpop.f32.mrb[0].mxu0
        %1518 = vmatprep.mubr.bf16.mxu0 0
        %1519 = vmatmul.mubr.bf16.gmra.mrb[0].mxu0 %v1082
        %v1520 = vpop.f32.mrb[0].mxu0
        %v1521 = vadd.f32 %v1360, %v1520
        %v1522 = vpop.f32.mrb[0].mxu0
        %v1523 = vpop.f32.mrb[0].mxu0
        %v1524 = vadd.f32 %v1363, %v1523
        %v1525 = vpop.f32.mrb[0].mxu0
        %1526 = vmatprep.mubr.bf16.mxu0 0
        %1527 = vmatmul.mubr.bf16.gmra.mrb[0].mxu0 %v1085
        %v1528 = vpop.f32.mrb[0].mxu0
        %v1529 = vadd.f32 %v1368, %v1528
        %v1530 = vpop.f32.mrb[0].mxu0
        %v1531 = vpop.f32.mrb[0].mxu0
        %v1532 = vadd.f32 %v1371, %v1531
        %v1533 = vpop.f32.mrb[0].mxu0
        %1534 = vmatprep.mubr.bf16.mxu0 0
        %1535 = vmatmul.mubr.bf16.gmra.mrb[0].mxu0 %v1088
        %v1536 = vpop.f32.mrb[0].mxu0
        %v1537 = vadd.f32 %v1376, %v1536
        %v1538 = vpop.f32.mrb[0].mxu0
        %v1539 = vpop.f32.mrb[0].mxu0
        %v1540 = vadd.f32 %v1379, %v1539
        %v1541 = vpop.f32.mrb[0].mxu0
        %1542 = vmatprep.mubr.bf16.mxu0 0
        %1543 = vmatmul.mubr.bf16.gmra.mrb[0].mxu0 %v1091
        %v1544 = vpop.f32.mrb[0].mxu0
        %v1545 = vadd.f32 %v1384, %v1544
        %v1546 = vpop.f32.mrb[0].mxu0
        %v1547 = vpop.f32.mrb[0].mxu0
        %v1548 = vadd.f32 %v1387, %v1547
        %v1549 = vpop.f32.mrb[0].mxu0
        %1550 = vmatprep.mubr.bf16.mxu0 0
        %1551 = vmatmul.mubr.bf16.gmra.mrb[0].mxu0 %v1094
        %v1552 = vpop.f32.mrb[0].mxu0
        %v1553 = vadd.f32 %v1392, %v1552
        %v1554 = vpop.f32.mrb[0].mxu0
        %v1555 = vpop.f32.mrb[0].mxu0
        %v1556 = vadd.f32 %v1395, %v1555
        %v1557 = vpop.f32.mrb[0].mxu0
        %1558 = vmatprep.mubr.bf16.mxu0 0
        %1559 = vmatmul.mubr.bf16.gmra.mrb[0].mxu0 %v1097
        %v1560 = vpop.f32.mrb[0].mxu0
        %v1561 = vadd.f32 %v1400, %v1560
        %v1562 = vpop.f32.mrb[0].mxu0
        %v1563 = vpop.f32.mrb[0].mxu0
        %v1564 = vadd.f32 %v1403, %v1563
        %v1565 = vpop.f32.mrb[0].mxu0
        %1566 = vmatprep.mubr.bf16.mxu0 0
        %1567 = vmatmul.mubr.bf16.gmra.mrb[0].mxu0 %v1100
        %v1568 = vpop.f32.mrb[0].mxu0
        %v1569 = vadd.f32 %v1408, %v1568
        %v1570 = vpop.f32.mrb[0].mxu0
        %v1571 = vpop.f32.mrb[0].mxu0
        %v1572 = vadd.f32 %v1411, %v1571
        %v1573 = vpop.f32.mrb[0].mxu0
        %1574 = vmatprep.mubr.bf16.mxu0 0
        %1575 = vmatmul.mubr.bf16.gmra.mrb[0].mxu0 %v1103
        %v1576 = vpop.f32.mrb[0].mxu0
        %v1577 = vadd.f32 %v1416, %v1576
        %v1578 = vpop.f32.mrb[0].mxu0
        %v1579 = vpop.f32.mrb[0].mxu0
        %v1580 = vadd.f32 %v1419, %v1579
        %v1581 = vpop.f32.mrb[0].mxu0
        %1582 = vmatprep.mubr.bf16.mxu0 0
        %1583 = vmatmul.mubr.bf16.gmra.mrb[0].mxu0 %v1106
        %v1584 = vpop.f32.mrb[0].mxu0
        %v1585 = vadd.f32 %v1424, %v1584
        %v1586 = vpop.f32.mrb[0].mxu0
        %v1587 = vpop.f32.mrb[0].mxu0
        %v1588 = vadd.f32 %v1427, %v1587
        %v1589 = vpop.f32.mrb[0].mxu0
        %1590 = vdwg.mxu0
        %v1591 = vmax.f32 %v1465, 0.0
        %v1592 = vmax.f32 %v1468, 0.0
        %v1593 = vmax.f32 %v1473, 0.0
        %v1594 = vmax.f32 %v1476, 0.0
        %v1595 = vmax.f32 %v1481, 0.0
        %v1596 = vmax.f32 %v1484, 0.0
        %v1597 = vmax.f32 %v1489, 0.0
        %v1598 = vmax.f32 %v1492, 0.0
        %v1599 = vmax.f32 %v1497, 0.0
        %v1600 = vmax.f32 %v1500, 0.0
        %v1601 = vmax.f32 %v1505, 0.0
        %v1602 = vmax.f32 %v1508, 0.0
        %v1603 = vmax.f32 %v1513, 0.0
        %v1604 = vmax.f32 %v1516, 0.0
        %v1605 = vmax.f32 %v1521, 0.0
        %v1606 = vmax.f32 %v1524, 0.0
        %v1607 = vmax.f32 %v1529, 0.0
        %v1608 = vmax.f32 %v1532, 0.0
        %v1609 = vmax.f32 %v1537, 0.0
        %v1610 = vmax.f32 %v1540, 0.0
        %v1611 = vmax.f32 %v1545, 0.0
        %v1612 = vmax.f32 %v1548, 0.0
        %v1613 = vmax.f32 %v1553, 0.0
        %v1614 = vmax.f32 %v1556, 0.0
        %v1615 = vmax.f32 %v1561, 0.0
        %v1616 = vmax.f32 %v1564, 0.0
        %v1617 = vmax.f32 %v1569, 0.0
        %v1618 = vmax.f32 %v1572, 0.0
        %v1619 = vmax.f32 %v1577, 0.0
        %v1620 = vmax.f32 %v1580, 0.0
        %v1621 = vmax.f32 %v1585, 0.0
        %v1622 = vmax.f32 %v1588, 0.0
        %v1623 = vpack.c.bf16 %v1592, %v1591
        %v1624 = vpack.c.bf16 %v1594, %v1593
        %v1625 = vpack.c.bf16 %v1596, %v1595
        %v1626 = vpack.c.bf16 %v1598, %v1597
        %v1627 = vpack.c.bf16 %v1600, %v1599
        %v1628 = vpack.c.bf16 %v1602, %v1601
        %v1629 = vpack.c.bf16 %v1604, %v1603
        %v1630 = vpack.c.bf16 %v1606, %v1605
        %v1631 = vpack.c.bf16 %v1608, %v1607
        %v1632 = vpack.c.bf16 %v1610, %v1609
        %v1633 = vpack.c.bf16 %v1612, %v1611
        %v1634 = vpack.c.bf16 %v1614, %v1613
        %v1635 = vpack.c.bf16 %v1616, %v1615
        %v1636 = vpack.c.bf16 %v1618, %v1617
        %v1637 = vpack.c.bf16 %v1620, %v1619
        %v1638 = vpack.c.bf16 %v1622, %v1621
        %v1655 = vunpack.c.l.b16 %v1623
        %v1656 = vunpack.c.h.b16 %v1623
        %v1657 = vunpack.c.l.b16 %v1624
        %v1658 = vunpack.c.h.b16 %v1624
        %v1659 = vunpack.c.l.b16 %v1625
        %v1660 = vunpack.c.h.b16 %v1625
        %v1661 = vunpack.c.l.b16 %v1626
        %v1662 = vunpack.c.h.b16 %v1626
        %v1663 = vunpack.c.l.b16 %v1627
        %v1664 = vunpack.c.h.b16 %v1627
        %v1665 = vunpack.c.l.b16 %v1628
        %v1666 = vunpack.c.h.b16 %v1628
        %v1667 = vunpack.c.l.b16 %v1629
        %v1668 = vunpack.c.h.b16 %v1629
        %v1669 = vunpack.c.l.b16 %v1630
        %v1670 = vunpack.c.h.b16 %v1630
        %v1671 = vunpack.c.l.b16 %v1631
        %v1672 = vunpack.c.h.b16 %v1631
        %v1673 = vunpack.c.l.b16 %v1632
        %v1674 = vunpack.c.h.b16 %v1632
        %v1675 = vunpack.c.l.b16 %v1633
        %v1676 = vunpack.c.h.b16 %v1633
        %v1677 = vunpack.c.l.b16 %v1634
        %v1678 = vunpack.c.h.b16 %v1634
        %v1679 = vunpack.c.l.b16 %v1635
        %v1680 = vunpack.c.h.b16 %v1635
        %v1681 = vunpack.c.l.b16 %v1636
        %v1682 = vunpack.c.h.b16 %v1636
        %v1683 = vunpack.c.l.b16 %v1637
        %v1684 = vunpack.c.h.b16 %v1637
        %v1685 = vunpack.c.l.b16 %v1638
        %v1686 = vunpack.c.h.b16 %v1638
        %v1687 = vpack.c.b16 %v1655, %v1655
        %v1688 = vpack.c.b16 %v1656, %v1656
        %v1689 = vpack.c.b16 %v1657, %v1657
        %v1690 = vpack.c.b16 %v1658, %v1658
        %v1691 = vpack.c.b16 %v1659, %v1659
        %v1692 = vpack.c.b16 %v1660, %v1660
        %v1693 = vpack.c.b16 %v1661, %v1661
        %v1694 = vpack.c.b16 %v1662, %v1662
        %v1695 = vpack.c.b16 %v1663, %v1663
        %v1696 = vpack.c.b16 %v1664, %v1664
        %v1697 = vpack.c.b16 %v1665, %v1665
        %v1698 = vpack.c.b16 %v1666, %v1666
        %v1699 = vpack.c.b16 %v1667, %v1667
        %v1700 = vpack.c.b16 %v1668, %v1668
        %v1701 = vpack.c.b16 %v1669, %v1669
        %v1702 = vpack.c.b16 %v1670, %v1670
        %v1703 = vpack.c.b16 %v1671, %v1671
        %v1704 = vpack.c.b16 %v1672, %v1672
        %v1705 = vpack.c.b16 %v1673, %v1673
        %v1706 = vpack.c.b16 %v1674, %v1674
        %v1707 = vpack.c.b16 %v1675, %v1675
        %v1708 = vpack.c.b16 %v1676, %v1676
        %v1709 = vpack.c.b16 %v1677, %v1677
        %v1710 = vpack.c.b16 %v1678, %v1678
        %v1711 = vpack.c.b16 %v1679, %v1679
        %v1712 = vpack.c.b16 %v1680, %v1680
        %v1713 = vpack.c.b16 %v1681, %v1681
        %v1714 = vpack.c.b16 %v1682, %v1682
        %v1715 = vpack.c.b16 %v1683, %v1683
        %v1716 = vpack.c.b16 %v1684, %v1684
        %v1717 = vpack.c.b16 %v1685, %v1685
        %v1718 = vpack.c.b16 %v1686, %v1686
        %1751 = vst [vmem:[%s265] sm:$0xf] %v1687
        %1752 = vst [vmem:[%s265 + $0x4] sm:$0xf] %v1688
        %1753 = vst [vmem:[%s265 + $0x8] sm:$0xf] %v1689
        %1754 = vst [vmem:[%s265 + $0xc] sm:$0xf] %v1690
        %1755 = vst [vmem:[%s265 + $0x10] sm:$0xf] %v1691
        %1756 = vst [vmem:[%s265 + $0x14] sm:$0xf] %v1692
        %1757 = vst [vmem:[%s265 + $0x18] sm:$0xf] %v1693
        %1758 = vst [vmem:[%s265 + $0x1c] sm:$0xf] %v1694
        %1759 = vst [vmem:[%s265 + $0x20] sm:$0xf] %v1695
        %1760 = vst [vmem:[%s265 + $0x24] sm:$0xf] %v1696
        %1761 = vst [vmem:[%s265 + $0x28] sm:$0xf] %v1697
        %1762 = vst [vmem:[%s265 + $0x2c] sm:$0xf] %v1698
        %1763 = vst [vmem:[%s265 + $0x30] sm:$0xf] %v1699
        %1764 = vst [vmem:[%s265 + $0x34] sm:$0xf] %v1700
        %1765 = vst [vmem:[%s265 + $0x38] sm:$0xf] %v1701
        %1766 = vst [vmem:[%s265 + $0x3c] sm:$0xf] %v1702
        %1767 = vst [vmem:[%s265 + $0x40] sm:$0xf] %v1703
        %1768 = vst [vmem:[%s265 + $0x44] sm:$0xf] %v1704
        %1769 = vst [vmem:[%s265 + $0x48] sm:$0xf] %v1705
        %1770 = vst [vmem:[%s265 + $0x4c] sm:$0xf] %v1706
        %1771 = vst [vmem:[%s265 + $0x50] sm:$0xf] %v1707
        %1772 = vst [vmem:[%s265 + $0x54] sm:$0xf] %v1708
        %1773 = vst [vmem:[%s265 + $0x58] sm:$0xf] %v1709
        %1774 = vst [vmem:[%s265 + $0x5c] sm:$0xf] %v1710
        %1775 = vst [vmem:[%s265 + $0x60] sm:$0xf] %v1711
        %1776 = vst [vmem:[%s265 + $0x64] sm:$0xf] %v1712
        %1777 = vst [vmem:[%s265 + $0x68] sm:$0xf] %v1713
        %1778 = vst [vmem:[%s265 + $0x6c] sm:$0xf] %v1714
        %1779 = vst [vmem:[%s265 + $0x70] sm:$0xf] %v1715
        %1780 = vst [vmem:[%s265 + $0x74] sm:$0xf] %v1716
        %1781 = vst [vmem:[%s265 + $0x78] sm:$0xf] %v1717
        %1782 = vst [vmem:[%s265 + $0x7c] sm:$0xf] %v1718
        %s1783 = smul.u32 32, %s21
        %p1784 = scmp.lt.s32.totalorder %s1783, 63
        %s1785 = scalar_select %p1784, %s1783, 63
        %p1786 = scmp.lt.s32.totalorder %s22, 0
        %s1787 = scalar_select %p1786, %s22, 0
        %s1788 = sadd.s32 %s1787, %s1785
        %s1789 = smul.addr %s1788, 4
        %s1790 = scalar_lea.vmem %s3, %s1789
        // Predicated region
        $region41: #{cnn_forward.10} parent=31 // pred_check
          %p1791 = pneg %p137
        $region42: #{cnn_forward.10} parent=31 // pred_check_branch
          %1793 = sbr.rel (%p1791) target = $region44
        $region43: #{cnn_forward.10} parent=31 // pred_region
          %s1794 = smul.u32 32, %s21
        $region44: #{cnn_forward.10} parent=31 // pred_fallthru
          _
      $region32: #{cnn_forward.10} parent=5 // pred_fallthru
        _
      %p1795 = scmp.le.s32.totalorder 2, %s11
      // Predicated region
      $region45: #{cnn_forward.10} parent=5 // pred_check
        %p1796 = pneg %p1795
      $region46: #{cnn_forward.10} parent=5 // pred_check_branch
        %1798 = sbr.rel (%p1796) target = $region48
      $region47: #{cnn_forward.10} parent=5 // pred_region
        %s1799 = ssub.s32 %s11, 2
        // Predicated region
        $region49: #{cnn_forward.10} parent=47 // pred_check
          %p1800 = pneg %p143
        $region50: #{cnn_forward.10} parent=47 // pred_check_branch
          %1802 = sbr.rel (%p1800) target = $region52
        $region51: #{cnn_forward.10} parent=47 // pred_region
          %s1803 = smul.u32 32, %s24
          %p1804 = scmp.lt.s32.totalorder %s1803, 63
          %s1805 = scalar_select %p1804, %s1803, 63
          %p1806 = scmp.lt.s32.totalorder %s25, 0
          %s1807 = scalar_select %p1806, %s25, 0
          %s1808 = sadd.s32 %s1807, %s1805
          %s1809 = smul.addr %s1808, 4
          %s1810 = scalar_lea.vmem %s3, %s1809
        $region52: #{cnn_forward.10} parent=47 // pred_fallthru
          _
      $region48: #{cnn_forward.10} parent=5 // pred_fallthru
        _
    $region6: #{cnn_forward.10} parent=1 // loop_footer
      %s15 = sadd.s32 1, %s11
    $region7: #{cnn_forward.10} parent=1 // loop_footer_branch
      %10 = sbr.rel target = $region3
    $region8: #{cnn_forward.10} parent=1 // loop_exit
      _
    %1811 = vsyncpa [#allocation3], 1
    %s1812 = scalar_lea.sflag [#allocation3], 1
    %1813 = vsyncpa %s1812, 1
    %1814 = vsyncpa [#allocation5], 1

// kernel: cnn_forward.11
$region0: #{cnn_forward.11}
  #allocation0 [shape = 'u32[]', space=smem, size = 0x4, offset = 0x4, fixed_abs, tag = 'smem constant byte address 0x4 - core index']
  #allocation1 [shape = 'u32[144,128]{1,0:T(1,128)}', space=vmem, size = 0x12000, scoped, tag = 'internal scratch']
  %s0 = inlined_call_operand.vmem [shape: bf16[2,16,8,256], index: 0, kind: input, shape index: {}]
  %s1 = inlined_call_operand.vmem [shape: bf16[2,8,8,128], index: 1, kind: output, shape index: {}]
  %s2 = sld [smem:[#allocation0]]
  $region37: #{cnn_forward.11} parent=0
    _
  %s4 = ssub.s32 1, %s2
  %s5 = scalar_select 0, %s4, %s2
  loop: start=0, step=1, limit=4
  $region2: #{cnn_forward.11} parent=0 // loop_pre_header
    _
  $region3: #{cnn_forward.11} parent=0 // loop_header
    %s7 = sphi 0, %s11
    %p8 = scmp.ge.s32.totalorder %s7, 4
    %s17 = sphi 0, %s19
    %s20 = sphi 0, %s17
    %s21 = sphi 0, %s20
    %s37 = sphi 0, %s21
    %s43 = sphi 0, %s45
    %s46 = sphi 0, %s43
    %s47 = sphi 0, %s46
    %s63 = sphi 0, %s47
  $region4: #{cnn_forward.11} parent=0 // loop_header_branch
    %10 = sbr.rel (%p8) target = $region8
  $region5: #{cnn_forward.11} parent=0 // loop_body
    %s12 = ssub.s32 %s7, 1
    %s13 = ssub.s32 %s7, 2
    %s14 = sadd.s32 %s7, 1
    %s15 = ssub.s32 %s7, %s14
    %p16 = scmp.eq.s32.totalorder %s15, 0
    %s18 = sadd.s32 %s17, 1
    %s19 = scalar_select %p16, %s17, %s18
    %p22 = pneg %p16
    %p23 = scmp.eq.s32.totalorder %s7, 1
    %p24 = por %p22, %p23
    %p25 = scmp.ne.s32.totalorder %s17, %s20
    %p26 = scmp.eq.s32.totalorder %s7, 0
    %p27 = por %p25, %p26
    %p28 = scmp.ne.s32.totalorder %s17, %s20
    %p29 = scmp.eq.s32.totalorder %s12, 1
    %p30 = por %p28, %p29
    %p31 = scmp.ne.s32.totalorder %s20, %s21
    %p32 = scmp.eq.s32.totalorder %s12, 0
    %p33 = por %p31, %p32
    %p34 = scmp.ne.s32.totalorder %s20, %s21
    %p35 = scmp.eq.s32.totalorder %s13, 1
    %p36 = por %p34, %p35
    %p38 = scmp.ne.s32.totalorder %s21, %s37
    %p39 = scmp.eq.s32.totalorder %s13, 0
    %p40 = por %p38, %p39
    %s41 = ssub.s32 %s7, %s14
    %p42 = scmp.eq.s32.totalorder %s41, 0
    %s44 = sadd.s32 %s43, 1
    %s45 = scalar_select %p42, %s43, %s44
    %p48 = pneg %p42
    %p49 = scmp.eq.s32.totalorder %s7, 1
    %p50 = por %p48, %p49
    %p51 = scmp.ne.s32.totalorder %s43, %s46
    %p52 = scmp.eq.s32.totalorder %s7, 0
    %p53 = por %p51, %p52
    %p54 = scmp.ne.s32.totalorder %s43, %s46
    %p55 = scmp.eq.s32.totalorder %s12, 1
    %p56 = por %p54, %p55
    %p57 = scmp.ne.s32.totalorder %s46, %s47
    %p58 = scmp.eq.s32.totalorder %s12, 0
    %p59 = por %p57, %p58
    %p60 = scmp.ne.s32.totalorder %s46, %s47
    %p61 = scmp.eq.s32.totalorder %s13, 1
    %p62 = por %p60, %p61
    %p64 = scmp.ne.s32.totalorder %s47, %s63
    %p65 = scmp.eq.s32.totalorder %s13, 0
    %p66 = por %p64, %p65
    %p67 = scmp.le.s32.totalorder 1, %s7
    %p68 = scmp.lt.s32.totalorder %s7, 3
    %p69 = pnand %p67, %p68
    %p70 = pneg %p69
    // Predicated region
    $region9: #{cnn_forward.11} parent=5 // pred_check
      _
    $region10: #{cnn_forward.11} parent=5 // pred_check_branch
      %72 = sbr.rel (%p69) target = $region12
    $region11: #{cnn_forward.11} parent=5 // pred_region
      %s73 = ssub.s32 %s7, 1
    $region12: #{cnn_forward.11} parent=5 // pred_fallthru
      _
    %p74 = scmp.lt.s32.totalorder %s7, 2
    // Predicated region
    $region13: #{cnn_forward.11} parent=5 // pred_check
      %p75 = pneg %p74
    $region14: #{cnn_forward.11} parent=5 // pred_check_branch
      %77 = sbr.rel (%p75) target = $region16
    $region15: #{cnn_forward.11} parent=5 // pred_region
      // Predicated region
      $region17: #{cnn_forward.11} parent=15 // pred_check
        %p78 = pneg %p27
      $region18: #{cnn_forward.11} parent=15 // pred_check_branch
        %80 = sbr.rel (%p78) target = $region20
      $region19: #{cnn_forward.11} parent=15 // pred_region
        %p81 = scmp.lt.s32.totalorder %s7, 1
        %s82 = scalar_select %p81, %s7, 1
        %s83 = smul.addr %s82, 32
        %s84 = smul.addr %s83, 4
        %s85 = scalar_lea.vmem %s0, %s84
      $region20: #{cnn_forward.11} parent=15 // pred_fallthru
        _
    $region16: #{cnn_forward.11} parent=5 // pred_fallthru
      _
    %p86 = scmp.le.s32.totalorder 1, %s7
    %p87 = scmp.lt.s32.totalorder %s7, 3
    %p88 = pnand %p86, %p87
    %p89 = pneg %p88
    // Predicated region
    $region21: #{cnn_forward.11} parent=5 // pred_check
      _
    $region22: #{cnn_forward.11} parent=5 // pred_check_branch
      %91 = sbr.rel (%p88) target = $region24
    $region23: #{cnn_forward.11} parent=5 // pred_region
      %s92 = ssub.s32 %s7, 1
      %p93 = scmp.lt.s32.totalorder %s12, 1
      %s94 = scalar_select %p93, %s12, 1
      %s95 = smul.addr %s94, 32
      %s96 = smul.addr %s95, 4
      %s97 = scalar_lea.vmem %s0, %s96
      %p98 = pneg %p33
      %p99 = pneg %p30
      %p100 = pneg %p59
      %p101 = pneg %p56
      %p102 = scmp.lt.s32.totalorder %s12, 1
      %s103 = scalar_select %p102, %s12, 1
      %s104 = smul.addr %s103, 8
      %s105 = smul.addr %s104, 4
      %s106 = scalar_lea.vmem %s1, %s105
      %p107 = scmp.lt.s32.totalorder %s12, 1
      %s108 = scalar_select %p107, %s12, 1
      %s109 = smul.addr %s108, 32
      %s110 = smul.addr %s109, 4
      %s111 = scalar_lea.vmem %s0, %s110
      %p112 = scmp.lt.s32.totalorder %s12, 1
      %s113 = scalar_select %p112, %s12, 1
      %s114 = smul.addr %s113, 8
      %s115 = smul.addr %s114, 4
      %s116 = scalar_lea.vmem %s1, %s115
      %v117 = vld [vmem:[%s111] sm:$0xff]
      %s118 = scalar_lea.vmem %s111, 8
      %v119 = vld [vmem:[%s118] sm:$0xff]
      %v120 = vmax.bf16 %v117, %v119
      %v122 = vrot.slane %v120, 4
      %v124 = vmax.bf16 %v120, %v122
      %125 = vst [vmem:[%s116] sm:$0xf] %v124
      %s126 = scalar_lea.vmem %s111, 16
      %v127 = vld [vmem:[%s126] sm:$0xff]
      %s128 = scalar_lea.vmem %s111, 24
      %v129 = vld [vmem:[%s128] sm:$0xff]
      %v130 = vmax.bf16 %v127, %v129
      %v132 = vrot.slane %v130, 4
      %v134 = vmax.bf16 %v130, %v132
      %s135 = scalar_lea.vmem %s116, 4
      %136 = vst [vmem:[%s135] sm:$0xf] %v134
      %s137 = scalar_lea.vmem %s111, 32
      %v138 = vld [vmem:[%s137] sm:$0xff]
      %s139 = scalar_lea.vmem %s111, 40
      %v140 = vld [vmem:[%s139] sm:$0xff]
      %v141 = vmax.bf16 %v138, %v140
      %v143 = vrot.slane %v141, 4
      %v145 = vmax.bf16 %v141, %v143
      %s146 = scalar_lea.vmem %s116, 8
      %147 = vst [vmem:[%s146] sm:$0xf] %v145
      %s148 = scalar_lea.vmem %s111, 48
      %v149 = vld [vmem:[%s148] sm:$0xff]
      %s150 = scalar_lea.vmem %s111, 56
      %v151 = vld [vmem:[%s150] sm:$0xff]
      %v152 = vmax.bf16 %v149, %v151
      %v154 = vrot.slane %v152, 4
      %v156 = vmax.bf16 %v152, %v154
      %s157 = scalar_lea.vmem %s116, 12
      %158 = vst [vmem:[%s157] sm:$0xf] %v156
      %s159 = scalar_lea.vmem %s111, 64
      %v160 = vld [vmem:[%s159] sm:$0xff]
      %s161 = scalar_lea.vmem %s111, 72
      %v162 = vld [vmem:[%s161] sm:$0xff]
      %v163 = vmax.bf16 %v160, %v162
      %v165 = vrot.slane %v163, 4
      %v167 = vmax.bf16 %v163, %v165
      %s168 = scalar_lea.vmem %s116, 16
      %169 = vst [vmem:[%s168] sm:$0xf] %v167
      %s170 = scalar_lea.vmem %s111, 80
      %v171 = vld [vmem:[%s170] sm:$0xff]
      %s172 = scalar_lea.vmem %s111, 88
      %v173 = vld [vmem:[%s172] sm:$0xff]
      %v174 = vmax.bf16 %v171, %v173
      %v176 = vrot.slane %v174, 4
      %v178 = vmax.bf16 %v174, %v176
      %s179 = scalar_lea.vmem %s116, 20
      %180 = vst [vmem:[%s179] sm:$0xf] %v178
      %s181 = scalar_lea.vmem %s111, 96
      %v182 = vld [vmem:[%s181] sm:$0xff]
      %s183 = scalar_lea.vmem %s111, 104
      %v184 = vld [vmem:[%s183] sm:$0xff]
      %v185 = vmax.bf16 %v182, %v184
      %v187 = vrot.slane %v185, 4
      %v189 = vmax.bf16 %v185, %v187
      %s190 = scalar_lea.vmem %s116, 24
      %191 = vst [vmem:[%s190] sm:$0xf] %v189
      %s192 = scalar_lea.vmem %s111, 112
      %v193 = vld [vmem:[%s192] sm:$0xff]
      %s194 = scalar_lea.vmem %s111, 120
      %v195 = vld [vmem:[%s194] sm:$0xff]
      %v196 = vmax.bf16 %v193, %v195
      %v198 = vrot.slane %v196, 4
      %v200 = vmax.bf16 %v196, %v198
      %s201 = scalar_lea.vmem %s116, 28
      %202 = vst [vmem:[%s201] sm:$0xf] %v200
      %p203 = scmp.lt.s32.totalorder %s12, 1
      %s204 = scalar_select %p203, %s12, 1
      %s205 = smul.addr %s204, 8
      %s206 = smul.addr %s205, 4
      %s207 = scalar_lea.vmem %s1, %s206
      // Predicated region
      $region25: #{cnn_forward.11} parent=23 // pred_check
        %p208 = pneg %p56
      $region26: #{cnn_forward.11} parent=23 // pred_check_branch
        %210 = sbr.rel (%p208) target = $region28
      $region27: #{cnn_forward.11} parent=23 // pred_region
        _
      $region28: #{cnn_forward.11} parent=23 // pred_fallthru
        _
    $region24: #{cnn_forward.11} parent=5 // pred_fallthru
      _
    %p211 = scmp.le.s32.totalorder 2, %s7
    // Predicated region
    $region29: #{cnn_forward.11} parent=5 // pred_check
      %p212 = pneg %p211
    $region30: #{cnn_forward.11} parent=5 // pred_check_branch
      %214 = sbr.rel (%p212) target = $region32
    $region31: #{cnn_forward.11} parent=5 // pred_region
      %s215 = ssub.s32 %s7, 2
      // Predicated region
      $region33: #{cnn_forward.11} parent=31 // pred_check
        %p216 = pneg %p62
      $region34: #{cnn_forward.11} parent=31 // pred_check_branch
        %218 = sbr.rel (%p216) target = $region36
      $region35: #{cnn_forward.11} parent=31 // pred_region
        %p219 = scmp.lt.s32.totalorder %s13, 1
        %s220 = scalar_select %p219, %s13, 1
        %s221 = smul.addr %s220, 8
        %s222 = smul.addr %s221, 4
        %s223 = scalar_lea.vmem %s1, %s222
      $region36: #{cnn_forward.11} parent=31 // pred_fallthru
        _
    $region32: #{cnn_forward.11} parent=5 // pred_fallthru
      _
  $region6: #{cnn_forward.11} parent=0 // loop_footer
    %s11 = sadd.s32 1, %s7
  $region7: #{cnn_forward.11} parent=0 // loop_footer_branch
    %6 = sbr.rel target = $region3
  $region8: #{cnn_forward.11} parent=0 // loop_exit
    _

// kernel: cnn_forward.13
$region0: #{cnn_forward.13}
  #allocation0 [shape = 'u32[]', space=smem, size = 0x4, offset = 0x4, fixed_abs, tag = 'smem constant byte address 0x4 - core index']
  #allocation1 [shape = 'u32[144,128]{1,0:T(1,128)}', space=vmem, size = 0x12000, scoped, tag = 'internal scratch']
  %s0 = inlined_call_operand.vmem [shape: bf16[2,8,4,512], index: 0, kind: input, shape index: {}]
  %s1 = inlined_call_operand.vmem [shape: bf16[2,4,4,256], index: 1, kind: output, shape index: {}]
  %s2 = sld [smem:[#allocation0]]
  $region37: #{cnn_forward.13} parent=0
    _
  %s4 = ssub.s32 1, %s2
  %s5 = scalar_select 0, %s4, %s2
  loop: start=0, step=1, limit=4
  $region2: #{cnn_forward.13} parent=0 // loop_pre_header
    _
  $region3: #{cnn_forward.13} parent=0 // loop_header
    %s7 = sphi 0, %s11
    %p8 = scmp.ge.s32.totalorder %s7, 4
    %s17 = sphi 0, %s19
    %s20 = sphi 0, %s17
    %s21 = sphi 0, %s20
    %s37 = sphi 0, %s21
    %s43 = sphi 0, %s45
    %s46 = sphi 0, %s43
    %s47 = sphi 0, %s46
    %s63 = sphi 0, %s47
  $region4: #{cnn_forward.13} parent=0 // loop_header_branch
    %10 = sbr.rel (%p8) target = $region8
  $region5: #{cnn_forward.13} parent=0 // loop_body
    %s12 = ssub.s32 %s7, 1
    %s13 = ssub.s32 %s7, 2
    %s14 = sadd.s32 %s7, 1
    %s15 = ssub.s32 %s7, %s14
    %p16 = scmp.eq.s32.totalorder %s15, 0
    %s18 = sadd.s32 %s17, 1
    %s19 = scalar_select %p16, %s17, %s18
    %p22 = pneg %p16
    %p23 = scmp.eq.s32.totalorder %s7, 1
    %p24 = por %p22, %p23
    %p25 = scmp.ne.s32.totalorder %s17, %s20
    %p26 = scmp.eq.s32.totalorder %s7, 0
    %p27 = por %p25, %p26
    %p28 = scmp.ne.s32.totalorder %s17, %s20
    %p29 = scmp.eq.s32.totalorder %s12, 1
    %p30 = por %p28, %p29
    %p31 = scmp.ne.s32.totalorder %s20, %s21
    %p32 = scmp.eq.s32.totalorder %s12, 0
    %p33 = por %p31, %p32
    %p34 = scmp.ne.s32.totalorder %s20, %s21
    %p35 = scmp.eq.s32.totalorder %s13, 1
    %p36 = por %p34, %p35
    %p38 = scmp.ne.s32.totalorder %s21, %s37
    %p39 = scmp.eq.s32.totalorder %s13, 0
    %p40 = por %p38, %p39
    %s41 = ssub.s32 %s7, %s14
    %p42 = scmp.eq.s32.totalorder %s41, 0
    %s44 = sadd.s32 %s43, 1
    %s45 = scalar_select %p42, %s43, %s44
    %p48 = pneg %p42
    %p49 = scmp.eq.s32.totalorder %s7, 1
    %p50 = por %p48, %p49
    %p51 = scmp.ne.s32.totalorder %s43, %s46
    %p52 = scmp.eq.s32.totalorder %s7, 0
    %p53 = por %p51, %p52
    %p54 = scmp.ne.s32.totalorder %s43, %s46
    %p55 = scmp.eq.s32.totalorder %s12, 1
    %p56 = por %p54, %p55
    %p57 = scmp.ne.s32.totalorder %s46, %s47
    %p58 = scmp.eq.s32.totalorder %s12, 0
    %p59 = por %p57, %p58
    %p60 = scmp.ne.s32.totalorder %s46, %s47
    %p61 = scmp.eq.s32.totalorder %s13, 1
    %p62 = por %p60, %p61
    %p64 = scmp.ne.s32.totalorder %s47, %s63
    %p65 = scmp.eq.s32.totalorder %s13, 0
    %p66 = por %p64, %p65
    %p67 = scmp.le.s32.totalorder 1, %s7
    %p68 = scmp.lt.s32.totalorder %s7, 3
    %p69 = pnand %p67, %p68
    %p70 = pneg %p69
    // Predicated region
    $region9: #{cnn_forward.13} parent=5 // pred_check
      _
    $region10: #{cnn_forward.13} parent=5 // pred_check_branch
      %72 = sbr.rel (%p69) target = $region12
    $region11: #{cnn_forward.13} parent=5 // pred_region
      %s73 = ssub.s32 %s7, 1
    $region12: #{cnn_forward.13} parent=5 // pred_fallthru
      _
    %p74 = scmp.lt.s32.totalorder %s7, 2
    // Predicated region
    $region13: #{cnn_forward.13} parent=5 // pred_check
      %p75 = pneg %p74
    $region14: #{cnn_forward.13} parent=5 // pred_check_branch
      %77 = sbr.rel (%p75) target = $region16
    $region15: #{cnn_forward.13} parent=5 // pred_region
      // Predicated region
      $region17: #{cnn_forward.13} parent=15 // pred_check
        %p78 = pneg %p27
      $region18: #{cnn_forward.13} parent=15 // pred_check_branch
        %80 = sbr.rel (%p78) target = $region20
      $region19: #{cnn_forward.13} parent=15 // pred_region
        %p81 = scmp.lt.s32.totalorder %s7, 1
        %s82 = scalar_select %p81, %s7, 1
        %s83 = smul.addr %s82, 32
        %s84 = smul.addr %s83, 2
        %s85 = scalar_lea.vmem %s0, %s84
      $region20: #{cnn_forward.13} parent=15 // pred_fallthru
        _
    $region16: #{cnn_forward.13} parent=5 // pred_fallthru
      _
    %p86 = scmp.le.s32.totalorder 1, %s7
    %p87 = scmp.lt.s32.totalorder %s7, 3
    %p88 = pnand %p86, %p87
    %p89 = pneg %p88
    // Predicated region
    $region21: #{cnn_forward.13} parent=5 // pred_check
      _
    $region22: #{cnn_forward.13} parent=5 // pred_check_branch
      %91 = sbr.rel (%p88) target = $region24
    $region23: #{cnn_forward.13} parent=5 // pred_region
      %s92 = ssub.s32 %s7, 1
      %p93 = scmp.lt.s32.totalorder %s12, 1
      %s94 = scalar_select %p93, %s12, 1
      %s95 = smul.addr %s94, 32
      %s96 = smul.addr %s95, 2
      %s97 = scalar_lea.vmem %s0, %s96
      %p98 = pneg %p33
      %p99 = pneg %p30
      %p100 = pneg %p59
      %p101 = pneg %p56
      %p102 = scmp.lt.s32.totalorder %s12, 1
      %s103 = scalar_select %p102, %s12, 1
      %s104 = smul.addr %s103, 8
      %s105 = smul.addr %s104, 2
      %s106 = scalar_lea.vmem %s1, %s105
      %p107 = scmp.lt.s32.totalorder %s12, 1
      %s108 = scalar_select %p107, %s12, 1
      %s109 = smul.addr %s108, 32
      %s110 = smul.addr %s109, 2
      %s111 = scalar_lea.vmem %s0, %s110
      %p112 = scmp.lt.s32.totalorder %s12, 1
      %s113 = scalar_select %p112, %s12, 1
      %s114 = smul.addr %s113, 8
      %s115 = smul.addr %s114, 2
      %s116 = scalar_lea.vmem %s1, %s115
      %v117 = vld [vmem:[%s111] sm:$0xff]
      %s118 = scalar_lea.vmem %s111, 8
      %v119 = vld [vmem:[%s118] sm:$0xff]
      %v120 = vmax.bf16 %v117, %v119
      %v122 = vrot.slane %v120, 4
      %v124 = vmax.bf16 %v120, %v122
      %125 = vst [vmem:[%s116] sm:$0xf] %v124
      %s126 = scalar_lea.vmem %s111, 16
      %v127 = vld [vmem:[%s126] sm:$0xff]
      %s128 = scalar_lea.vmem %s111, 24
      %v129 = vld [vmem:[%s128] sm:$0xff]
      %v130 = vmax.bf16 %v127, %v129
      %v132 = vrot.slane %v130, 4
      %v134 = vmax.bf16 %v130, %v132
      %s135 = scalar_lea.vmem %s116, 4
      %136 = vst [vmem:[%s135] sm:$0xf] %v134
      %s137 = scalar_lea.vmem %s111, 32
      %v138 = vld [vmem:[%s137] sm:$0xff]
      %s139 = scalar_lea.vmem %s111, 40
      %v140 = vld [vmem:[%s139] sm:$0xff]
      %v141 = vmax.bf16 %v138, %v140
      %v143 = vrot.slane %v141, 4
      %v145 = vmax.bf16 %v141, %v143
      %s146 = scalar_lea.vmem %s116, 8
      %147 = vst [vmem:[%s146] sm:$0xf] %v145
      %s148 = scalar_lea.vmem %s111, 48
      %v149 = vld [vmem:[%s148] sm:$0xff]
      %s150 = scalar_lea.vmem %s111, 56
      %v151 = vld [vmem:[%s150] sm:$0xff]
      %v152 = vmax.bf16 %v149, %v151
      %v154 = vrot.slane %v152, 4
      %v156 = vmax.bf16 %v152, %v154
      %s157 = scalar_lea.vmem %s116, 12
      %158 = vst [vmem:[%s157] sm:$0xf] %v156
      %p159 = scmp.lt.s32.totalorder %s12, 1
      %s160 = scalar_select %p159, %s12, 1
      %s161 = smul.addr %s160, 8
      %s162 = smul.addr %s161, 2
      %s163 = scalar_lea.vmem %s1, %s162
      // Predicated region
      $region25: #{cnn_forward.13} parent=23 // pred_check
        %p164 = pneg %p56
      $region26: #{cnn_forward.13} parent=23 // pred_check_branch
        %166 = sbr.rel (%p164) target = $region28
      $region27: #{cnn_forward.13} parent=23 // pred_region
        _
      $region28: #{cnn_forward.13} parent=23 // pred_fallthru
        _
    $region24: #{cnn_forward.13} parent=5 // pred_fallthru
      _
    %p167 = scmp.le.s32.totalorder 2, %s7
    // Predicated region
    $region29: #{cnn_forward.13} parent=5 // pred_check
      %p168 = pneg %p167
    $region30: #{cnn_forward.13} parent=5 // pred_check_branch
      %170 = sbr.rel (%p168) target = $region32
    $region31: #{cnn_forward.13} parent=5 // pred_region
      %s171 = ssub.s32 %s7, 2
      // Predicated region
      $region33: #{cnn_forward.13} parent=31 // pred_check
        %p172 = pneg %p62
      $region34: #{cnn_forward.13} parent=31 // pred_check_branch
        %174 = sbr.rel (%p172) target = $region36
      $region35: #{cnn_forward.13} parent=31 // pred_region
        %p175 = scmp.lt.s32.totalorder %s13, 1
        %s176 = scalar_select %p175, %s13, 1
        %s177 = smul.addr %s176, 8
        %s178 = smul.addr %s177, 2
        %s179 = scalar_lea.vmem %s1, %s178
      $region36: #{cnn_forward.13} parent=31 // pred_fallthru
        _
    $region32: #{cnn_forward.13} parent=5 // pred_fallthru
      _
  $region6: #{cnn_forward.13} parent=0 // loop_footer
    %s11 = sadd.s32 1, %s7
  $region7: #{cnn_forward.13} parent=0 // loop_footer_branch
    %6 = sbr.rel target = $region3
  $region8: #{cnn_forward.13} parent=0 // loop_exit
    _

// kernel: cnn_forward.12
$region0: #{cnn_forward.12}
  #allocation0 [shape = 'u32[]', space=smem, size = 0x4, offset = 0x4, fixed_abs, tag = 'smem constant byte address 0x4 - core index']
  #allocation1 [shape = 'u32[144,128]{1,0:T(1,128)}', space=vmem, size = 0x12000, scoped, tag = 'internal scratch']
  %s0 = inlined_call_operand.vmem [shape: bf16[128,1152], index: 0, kind: input, shape index: {}]
  %s1 = inlined_call_operand.hbm [shape: bf16[1152,256], index: 1, kind: input, shape index: {}]
  %s2 = inlined_call_operand.hbm [shape: f32[1,256], index: 2, kind: input, shape index: {}]
  %s3 = inlined_call_operand.vmem [shape: bf16[128,256], index: 3, kind: output, shape index: {}]
  %s4 = sld [smem:[#allocation0]]
  $region90: #{cnn_forward.12} parent=0
    _
  %s6 = ssub.s32 1, %s4
  %s7 = scalar_select 0, %s6, %s4
  $region1: #{cnn_forward.12} parent=0
    #allocation2 [shape = 'u8[589824]{0}', space=vmem, size = 0x90000, scoped, tag = 'input window, operand 1']
    #allocation3 [shape = 's32[2]{0}', space=sflag, size = 0x8, scoped, tag = 'scoped memory for cnn_forward.12']
    #allocation4 [shape = 'u8[1024]{0}', space=vmem, size = 0x400, scoped, tag = 'input window, operand 2']
    #allocation5 [shape = 's32[2]{0}', space=sflag, size = 0x8, scoped, tag = 'scoped memory for cnn_forward.12']
    #allocation6 [shape = 'u8[65536]{0}', space=vmem, size = 0x10000, scoped, tag = 'output window, operand 0']
    %8 = vsyncpa [#allocation3], 0
    %s9 = scalar_lea.sflag [#allocation3], 1
    %10 = vsyncpa %s9, 0
    %11 = vsyncpa [#allocation5], 0
    %s12 = scalar_lea.sflag [#allocation5], 1
    %13 = vsyncpa %s12, 0
    loop: start=0, step=1, limit=4
    $region2: #{cnn_forward.12} parent=1 // loop_pre_header
      _
    $region3: #{cnn_forward.12} parent=1 // loop_header
      %s15 = sphi 0, %s19
      %p16 = scmp.ge.s32.totalorder %s15, 4
      %s22 = sphi 0, %s41
      %s23 = sphi 0, %s37
      %s24 = sphi 0, %s33
      %s25 = sphi 0, %s22
      %s26 = sphi 0, %s23
      %s27 = sphi 0, %s24
      %s28 = sphi 0, %s25
      %s29 = sphi 0, %s26
      %s30 = sphi 0, %s27
      %s46 = sphi 0, %s48
      %s49 = sphi 0, %s46
      %s50 = sphi 0, %s49
      %s66 = sphi 0, %s50
      %s74 = sphi 0, %s76
      %s77 = sphi 0, %s74
      %s78 = sphi 0, %s77
      %s94 = sphi 0, %s78
      %s100 = sphi 0, %s102
      %s103 = sphi 0, %s100
      %s104 = sphi 0, %s103
      %s120 = sphi 0, %s104
      %s128 = sphi 0, %s130
      %s131 = sphi 0, %s128
      %s132 = sphi 0, %s131
      %s148 = sphi 0, %s132
    $region4: #{cnn_forward.12} parent=1 // loop_header_branch
      %18 = sbr.rel (%p16) target = $region8
    $region5: #{cnn_forward.12} parent=1 // loop_body
      %s20 = ssub.s32 %s15, 1
      %s21 = ssub.s32 %s15, 2
      %s31 = sadd.s32 1, %s24
      %p32 = scmp.ge.s32.totalorder %s31, 1
      %s33 = scalar_select %p32, 0, %s31
      %s34 = sadd.s32 1, %s23
      %s35 = scalar_select %p32, %s34, %s23
      %p36 = scmp.ge.s32.totalorder %s35, 2
      %s37 = scalar_select %p36, 0, %s35
      %s38 = sadd.s32 1, %s22
      %s39 = scalar_select %p36, %s38, %s22
      %p40 = scmp.ge.s32.totalorder %s39, 1
      %s41 = scalar_select %p40, 0, %s39
      %s42 = ssub.s32 %s22, %s41
      %s43 = ssub.s32 %s24, %s33
      %s44 = sor.u32 %s42, %s43
      %p45 = scmp.eq.s32.totalorder %s44, 0
      %s47 = sadd.s32 %s46, 1
      %s48 = scalar_select %p45, %s46, %s47
      %p51 = pneg %p45
      %p52 = scmp.eq.s32.totalorder %s15, 1
      %p53 = por %p51, %p52
      %p54 = scmp.ne.s32.totalorder %s46, %s49
      %p55 = scmp.eq.s32.totalorder %s15, 0
      %p56 = por %p54, %p55
      %p57 = scmp.ne.s32.totalorder %s46, %s49
      %p58 = scmp.eq.s32.totalorder %s20, 1
      %p59 = por %p57, %p58
      %p60 = scmp.ne.s32.totalorder %s49, %s50
      %p61 = scmp.eq.s32.totalorder %s20, 0
      %p62 = por %p60, %p61
      %p63 = scmp.ne.s32.totalorder %s49, %s50
      %p64 = scmp.eq.s32.totalorder %s21, 1
      %p65 = por %p63, %p64
      %p67 = scmp.ne.s32.totalorder %s50, %s66
      %p68 = scmp.eq.s32.totalorder %s21, 0
      %p69 = por %p67, %p68
      %s70 = ssub.s32 %s24, %s33
      %s71 = ssub.s32 %s23, %s37
      %s72 = sor.u32 %s70, %s71
      %p73 = scmp.eq.s32.totalorder %s72, 0
      %s75 = sadd.s32 %s74, 1
      %s76 = scalar_select %p73, %s74, %s75
      %p79 = pneg %p73
      %p80 = scmp.eq.s32.totalorder %s15, 1
      %p81 = por %p79, %p80
      %p82 = scmp.ne.s32.totalorder %s74, %s77
      %p83 = scmp.eq.s32.totalorder %s15, 0
      %p84 = por %p82, %p83
      %p85 = scmp.ne.s32.totalorder %s74, %s77
      %p86 = scmp.eq.s32.totalorder %s20, 1
      %p87 = por %p85, %p86
      %p88 = scmp.ne.s32.totalorder %s77, %s78
      %p89 = scmp.eq.s32.totalorder %s20, 0
      %p90 = por %p88, %p89
      %p91 = scmp.ne.s32.totalorder %s77, %s78
      %p92 = scmp.eq.s32.totalorder %s21, 1
      %p93 = por %p91, %p92
      %p95 = scmp.ne.s32.totalorder %s78, %s94
      %p96 = scmp.eq.s32.totalorder %s21, 0
      %p97 = por %p95, %p96
      %s98 = ssub.s32 %s23, %s37
      %p99 = scmp.eq.s32.totalorder %s98, 0
      %s101 = sadd.s32 %s100, 1
      %s102 = scalar_select %p99, %s100, %s101
      %p105 = pneg %p99
      %p106 = scmp.eq.s32.totalorder %s15, 1
      %p107 = por %p105, %p106
      %p108 = scmp.ne.s32.totalorder %s100, %s103
      %p109 = scmp.eq.s32.totalorder %s15, 0
      %p110 = por %p108, %p109
      %p111 = scmp.ne.s32.totalorder %s100, %s103
      %p112 = scmp.eq.s32.totalorder %s20, 1
      %p113 = por %p111, %p112
      %p114 = scmp.ne.s32.totalorder %s103, %s104
      %p115 = scmp.eq.s32.totalorder %s20, 0
      %p116 = por %p114, %p115
      %p117 = scmp.ne.s32.totalorder %s103, %s104
      %p118 = scmp.eq.s32.totalorder %s21, 1
      %p119 = por %p117, %p118
      %p121 = scmp.ne.s32.totalorder %s104, %s120
      %p122 = scmp.eq.s32.totalorder %s21, 0
      %p123 = por %p121, %p122
      %s124 = ssub.s32 %s22, %s41
      %s125 = ssub.s32 %s23, %s37
      %s126 = sor.u32 %s124, %s125
      %p127 = scmp.eq.s32.totalorder %s126, 0
      %s129 = sadd.s32 %s128, 1
      %s130 = scalar_select %p127, %s128, %s129
      %p133 = pneg %p127
      %p134 = scmp.eq.s32.totalorder %s15, 1
      %p135 = por %p133, %p134
      %p136 = scmp.ne.s32.totalorder %s128, %s131
      %p137 = scmp.eq.s32.totalorder %s15, 0
      %p138 = por %p136, %p137
      %p139 = scmp.ne.s32.totalorder %s128, %s131
      %p140 = scmp.eq.s32.totalorder %s20, 1
      %p141 = por %p139, %p140
      %p142 = scmp.ne.s32.totalorder %s131, %s132
      %p143 = scmp.eq.s32.totalorder %s20, 0
      %p144 = por %p142, %p143
      %p145 = scmp.ne.s32.totalorder %s131, %s132
      %p146 = scmp.eq.s32.totalorder %s21, 1
      %p147 = por %p145, %p146
      %p149 = scmp.ne.s32.totalorder %s132, %s148
      %p150 = scmp.eq.s32.totalorder %s21, 0
      %p151 = por %p149, %p150
      %p152 = scmp.le.s32.totalorder 1, %s15
      %p153 = scmp.lt.s32.totalorder %s15, 3
      %p154 = pnand %p152, %p153
      %p155 = pneg %p154
      // Predicated region
      $region9: #{cnn_forward.12} parent=5 // pred_check
        _
      $region10: #{cnn_forward.12} parent=5 // pred_check_branch
        %157 = sbr.rel (%p154) target = $region12
      $region11: #{cnn_forward.12} parent=5 // pred_region
        %s158 = ssub.s32 %s15, 1
        // Predicated region
        $region13: #{cnn_forward.12} parent=11 // pred_check
          %p159 = pneg %p62
        $region14: #{cnn_forward.12} parent=11 // pred_check_branch
          %161 = sbr.rel (%p159) target = $region16
        $region15: #{cnn_forward.12} parent=11 // pred_region
          %s162 = smul.u32 16, %s25
          %s163 = smul.u32 9, %s27
          %p164 = scmp.lt.s32.totalorder %s162, 15
          %s165 = scalar_select %p164, %s162, 15
          %p166 = scmp.lt.s32.totalorder %s163, 8
          %s167 = scalar_select %p166, %s163, 8
          %s168 = smul.addr %s165, 9
          %s169 = sadd.s32 %s167, %s168
          %s170 = smul.addr %s169, 4
          %s171 = scalar_lea.vmem %s0, %s170
          %s172 = smul.u32 16, %s25
          %s173 = smul.u32 9, %s27
        $region16: #{cnn_forward.12} parent=11 // pred_fallthru
          _
      $region12: #{cnn_forward.12} parent=5 // pred_fallthru
        _
      %p174 = scmp.lt.s32.totalorder %s15, 2
      // Predicated region
      $region17: #{cnn_forward.12} parent=5 // pred_check
        %p175 = pneg %p174
      $region18: #{cnn_forward.12} parent=5 // pred_check_branch
        %177 = sbr.rel (%p175) target = $region20
      $region19: #{cnn_forward.12} parent=5 // pred_region
        // Predicated region
        $region21: #{cnn_forward.12} parent=19 // pred_check
          %p178 = pneg %p84
        $region22: #{cnn_forward.12} parent=19 // pred_check_branch
          %180 = sbr.rel (%p178) target = $region24
        $region23: #{cnn_forward.12} parent=19 // pred_region
          %s181 = sand.u32 %s74, 1
          %s182 = scalar_lea.sflag [#allocation3], %s181
          %s183 = sand.u32 %s74, 1
          %s184 = smul.addr %s183, 576
          %s185 = scalar_lea.vmem [#allocation2], %s184
          %s186 = smul.u32 144, %s24
          %s188 = ssub.s32 9216, 9216
          %189 = vsyncadd %s182, %s188
          %s190 = smul.addr %s186, 2
          %s191 = sadd.s32 %s23, %s190
          %s192 = smul.addr %s191, 64
          %s193 = scalar_lea.hbm %s1, %s192
          %s194 = sshll.u32 %s185, 4
          %s195 = int_to_ptr.vmem [resolvable:$true] %s194
          %200 = dma.hbm_to_vmem [thread:$0]  %s193, 9216, %s195, %s182, 128, 64, 4
        $region24: #{cnn_forward.12} parent=19 // pred_fallthru
          _
        // Predicated region
        $region25: #{cnn_forward.12} parent=19 // pred_check
          %p201 = pneg %p110
        $region26: #{cnn_forward.12} parent=19 // pred_check_branch
          %203 = sbr.rel (%p201) target = $region28
        $region27: #{cnn_forward.12} parent=19 // pred_region
          %s204 = sand.u32 %s100, 1
          %s205 = scalar_lea.sflag [#allocation5], %s204
          %s206 = sand.u32 %s100, 1
          %s207 = scalar_lea.vmem [#allocation4], %s206
          %s209 = ssub.s32 16, 16
          %210 = vsyncadd %s205, %s209
          %s211 = smul.addr %s23, 16
          %s212 = scalar_lea.hbm %s2, %s211
          %s214 = sshll.u32 %s207, 4
          %s215 = int_to_ptr.vmem [resolvable:$true] %s214
          %217 = dma.hbm_to_vmem [thread:$0]  %s212, 16, %s215, %s205
        $region28: #{cnn_forward.12} parent=19 // pred_fallthru
          _
      $region20: #{cnn_forward.12} parent=5 // pred_fallthru
        _
      %p218 = scmp.le.s32.totalorder 1, %s15
      %p219 = scmp.lt.s32.totalorder %s15, 3
      %p220 = pnand %p218, %p219
      %p221 = pneg %p220
      // Predicated region
      $region29: #{cnn_forward.12} parent=5 // pred_check
        _
      $region30: #{cnn_forward.12} parent=5 // pred_check_branch
        %223 = sbr.rel (%p220) target = $region32
      $region31: #{cnn_forward.12} parent=5 // pred_region
        %s224 = ssub.s32 %s15, 1
        %s225 = sand.u32 %s77, 1
        %s226 = scalar_lea.sflag [#allocation3], %s225
        %s227 = sand.u32 %s77, 1
        %s228 = smul.addr %s227, 576
        %s229 = scalar_lea.vmem [#allocation2], %s228
        // Predicated region
        $region33: #{cnn_forward.12} parent=31 // pred_check
          %p230 = pneg %p90
        $region34: #{cnn_forward.12} parent=31 // pred_check_branch
          %232 = sbr.rel (%p230) target = $region36
        $region35: #{cnn_forward.12} parent=31 // pred_region
          %233 = dma.done %s226, 9216
        $region36: #{cnn_forward.12} parent=31 // pred_fallthru
          _
        %s234 = sand.u32 %s103, 1
        %s235 = scalar_lea.sflag [#allocation5], %s234
        %s236 = sand.u32 %s103, 1
        %s237 = scalar_lea.vmem [#allocation4], %s236
        // Predicated region
        $region37: #{cnn_forward.12} parent=31 // pred_check
          %p238 = pneg %p116
        $region38: #{cnn_forward.12} parent=31 // pred_check_branch
          %240 = sbr.rel (%p238) target = $region40
        $region39: #{cnn_forward.12} parent=31 // pred_region
          %241 = dma.done %s235, 16
        $region40: #{cnn_forward.12} parent=31 // pred_fallthru
          _
        %s242 = smul.u32 16, %s25
        %s243 = smul.u32 9, %s27
        %p244 = scmp.lt.s32.totalorder %s242, 15
        %s245 = scalar_select %p244, %s242, 15
        %p246 = scmp.lt.s32.totalorder %s243, 8
        %s247 = scalar_select %p246, %s243, 8
        %s248 = smul.addr %s245, 9
        %s249 = sadd.s32 %s247, %s248
        %s250 = smul.addr %s249, 4
        %s251 = scalar_lea.vmem %s0, %s250
        %p252 = pneg %p62
        %p253 = pneg %p59
        %s254 = sand.u32 %s77, 1
        %s255 = scalar_lea.sflag [#allocation3], %s254
        %s256 = sand.u32 %s77, 1
        %s257 = smul.addr %s256, 576
        %s258 = scalar_lea.vmem [#allocation2], %s257
        %p259 = pneg %p90
        %p260 = pneg %p87
        %s261 = sand.u32 %s103, 1
        %s262 = scalar_lea.sflag [#allocation5], %s261
        %s263 = sand.u32 %s103, 1
        %s264 = scalar_lea.vmem [#allocation4], %s263
        %p265 = pneg %p116
        %p266 = pneg %p113
        %p267 = pneg %p144
        %p268 = pneg %p141
        %s269 = sand.u32 %s131, 1
        %s270 = sand.u32 %s131, 1
        %s271 = smul.addr %s270, 64
        %s272 = scalar_lea.vmem [#allocation6], %s271
        %s273 = smul.u32 16, %s25
        %s274 = smul.u32 9, %s27
        %p275 = scmp.lt.s32.totalorder %s273, 15
        %s276 = scalar_select %p275, %s273, 15
        %p277 = scmp.lt.s32.totalorder %s274, 8
        %s278 = scalar_select %p277, %s274, 8
        %s279 = smul.addr %s276, 9
        %s280 = sadd.s32 %s278, %s279
        %s281 = smul.addr %s280, 4
        %s282 = scalar_lea.vmem %s0, %s281
        %s283 = smul.u32 16, %s25
        %s284 = smul.u32 9, %s27
        %s285 = smul.u32 144, %s27
        %s286 = smul.u32 16, %s25
        %v288 = vld [vmem:[%s282] sm:$0xff]
        %v289 = vld [vmem:[%s282 + $0x8] sm:$0xff]
        %v290 = vld [vmem:[%s282 + $0x10] sm:$0xff]
        %v291 = vld [vmem:[%s282 + $0x18] sm:$0xff]
        %v292 = vld [vmem:[%s282 + $0x20] sm:$0xf]
        %v293 = vld [vmem:[%s282 + $0x24] sm:$0xff]
        %v294 = vld [vmem:[%s282 + $0x2c] sm:$0xff]
        %v295 = vld [vmem:[%s282 + $0x34] sm:$0xff]
        %v296 = vld [vmem:[%s282 + $0x3c] sm:$0xff]
        %v297 = vld [vmem:[%s282 + $0x44] sm:$0xf]
        %v298 = vld [vmem:[%s282 + $0x48] sm:$0xff]
        %v299 = vld [vmem:[%s282 + $0x50] sm:$0xff]
        %v300 = vld [vmem:[%s282 + $0x58] sm:$0xff]
        %v301 = vld [vmem:[%s282 + $0x60] sm:$0xff]
        %v302 = vld [vmem:[%s282 + $0x68] sm:$0xf]
        %v303 = vld [vmem:[%s282 + $0x6c] sm:$0xff]
        %v304 = vld [vmem:[%s282 + $0x74] sm:$0xff]
        %v305 = vld [vmem:[%s282 + $0x7c] sm:$0xff]
        %v306 = vld [vmem:[%s282 + $0x84] sm:$0xff]
        %v307 = vld [vmem:[%s282 + $0x8c] sm:$0xf]
        %v308 = vld [vmem:[%s282 + $0x90] sm:$0xff]
        %v309 = vld [vmem:[%s282 + $0x98] sm:$0xff]
        %v310 = vld [vmem:[%s282 + $0xa0] sm:$0xff]
        %v311 = vld [vmem:[%s282 + $0xa8] sm:$0xff]
        %v312 = vld [vmem:[%s282 + $0xb0] sm:$0xf]
        %v313 = vld [vmem:[%s282 + $0xb4] sm:$0xff]
        %v314 = vld [vmem:[%s282 + $0xbc] sm:$0xff]
        %v315 = vld [vmem:[%s282 + $0xc4] sm:$0xff]
        %v316 = vld [vmem:[%s282 + $0xcc] sm:$0xff]
        %v317 = vld [vmem:[%s282 + $0xd4] sm:$0xf]
        %v318 = vld [vmem:[%s282 + $0xd8] sm:$0xff]
        %v319 = vld [vmem:[%s282 + $0xe0] sm:$0xff]
        %v320 = vld [vmem:[%s282 + $0xe8] sm:$0xff]
        %v321 = vld [vmem:[%s282 + $0xf0] sm:$0xff]
        %v322 = vld [vmem:[%s282 + $0xf8] sm:$0xf]
        %v323 = vld [vmem:[%s282 + $0xfc] sm:$0xff]
        %v324 = vld [vmem:[%s282 + $0x104] sm:$0xff]
        %v325 = vld [vmem:[%s282 + $0x10c] sm:$0xff]
        %v326 = vld [vmem:[%s282 + $0x114] sm:$0xff]
        %v327 = vld [vmem:[%s282 + $0x11c] sm:$0xf]
        %v328 = vld [vmem:[%s282 + $0x120] sm:$0xff]
        %v329 = vld [vmem:[%s282 + $0x128] sm:$0xff]
        %v330 = vld [vmem:[%s282 + $0x130] sm:$0xff]
        %v331 = vld [vmem:[%s282 + $0x138] sm:$0xff]
        %v332 = vld [vmem:[%s282 + $0x140] sm:$0xf]
        %v333 = vld [vmem:[%s282 + $0x144] sm:$0xff]
        %v334 = vld [vmem:[%s282 + $0x14c] sm:$0xff]
        %v335 = vld [vmem:[%s282 + $0x154] sm:$0xff]
        %v336 = vld [vmem:[%s282 + $0x15c] sm:$0xff]
        %v337 = vld [vmem:[%s282 + $0x164] sm:$0xf]
        %v338 = vld [vmem:[%s282 + $0x168] sm:$0xff]
        %v339 = vld [vmem:[%s282 + $0x170] sm:$0xff]
        %v340 = vld [vmem:[%s282 + $0x178] sm:$0xff]
        %v341 = vld [vmem:[%s282 + $0x180] sm:$0xff]
        %v342 = vld [vmem:[%s282 + $0x188] sm:$0xf]
        %v343 = vld [vmem:[%s282 + $0x18c] sm:$0xff]
        %v344 = vld [vmem:[%s282 + $0x194] sm:$0xff]
        %v345 = vld [vmem:[%s282 + $0x19c] sm:$0xff]
        %v346 = vld [vmem:[%s282 + $0x1a4] sm:$0xff]
        %v347 = vld [vmem:[%s282 + $0x1ac] sm:$0xf]
        %v348 = vld [vmem:[%s282 + $0x1b0] sm:$0xff]
        %v349 = vld [vmem:[%s282 + $0x1b8] sm:$0xff]
        %v350 = vld [vmem:[%s282 + $0x1c0] sm:$0xff]
        %v351 = vld [vmem:[%s282 + $0x1c8] sm:$0xff]
        %v352 = vld [vmem:[%s282 + $0x1d0] sm:$0xf]
        %v353 = vld [vmem:[%s282 + $0x1d4] sm:$0xff]
        %v354 = vld [vmem:[%s282 + $0x1dc] sm:$0xff]
        %v355 = vld [vmem:[%s282 + $0x1e4] sm:$0xff]
        %v356 = vld [vmem:[%s282 + $0x1ec] sm:$0xff]
        %v357 = vld [vmem:[%s282 + $0x1f4] sm:$0xf]
        %v358 = vld [vmem:[%s282 + $0x1f8] sm:$0xff]
        %v359 = vld [vmem:[%s282 + $0x200] sm:$0xff]
        %v360 = vld [vmem:[%s282 + $0x208] sm:$0xff]
        %v361 = vld [vmem:[%s282 + $0x210] sm:$0xff]
        %v362 = vld [vmem:[%s282 + $0x218] sm:$0xf]
        %v363 = vld [vmem:[%s282 + $0x21c] sm:$0xff]
        %v364 = vld [vmem:[%s282 + $0x224] sm:$0xff]
        %v365 = vld [vmem:[%s282 + $0x22c] sm:$0xff]
        %v366 = vld [vmem:[%s282 + $0x234] sm:$0xff]
        %v367 = vld [vmem:[%s282 + $0x23c] sm:$0xf]
        %v368 = vld [vmem:[%s229] sm:$0xf]
        %v369 = vld [vmem:[%s229 + $0x4] sm:$0xf]
        %v370 = vld [vmem:[%s229 + $0x8] sm:$0xf]
        %v371 = vld [vmem:[%s229 + $0xc] sm:$0xf]
        %v372 = vld [vmem:[%s229 + $0x10] sm:$0xf]
        %v373 = vld [vmem:[%s229 + $0x14] sm:$0xf]
        %v374 = vld [vmem:[%s229 + $0x18] sm:$0xf]
        %v375 = vld [vmem:[%s229 + $0x1c] sm:$0xf]
        %v376 = vld [vmem:[%s229 + $0x20] sm:$0xf]
        %v377 = vld [vmem:[%s229 + $0x24] sm:$0xf]
        %v378 = vld [vmem:[%s229 + $0x28] sm:$0xf]
        %v379 = vld [vmem:[%s229 + $0x2c] sm:$0xf]
        %v380 = vld [vmem:[%s229 + $0x30] sm:$0xf]
        %v381 = vld [vmem:[%s229 + $0x34] sm:$0xf]
        %v382 = vld [vmem:[%s229 + $0x38] sm:$0xf]
        %v383 = vld [vmem:[%s229 + $0x3c] sm:$0xf]
        %v384 = vld [vmem:[%s229 + $0x40] sm:$0xf]
        %v385 = vld [vmem:[%s229 + $0x44] sm:$0xf]
        %v386 = vld [vmem:[%s229 + $0x48] sm:$0xf]
        %v387 = vld [vmem:[%s229 + $0x4c] sm:$0xf]
        %v388 = vld [vmem:[%s229 + $0x50] sm:$0xf]
        %v389 = vld [vmem:[%s229 + $0x54] sm:$0xf]
        %v390 = vld [vmem:[%s229 + $0x58] sm:$0xf]
        %v391 = vld [vmem:[%s229 + $0x5c] sm:$0xf]
        %v392 = vld [vmem:[%s229 + $0x60] sm:$0xf]
        %v393 = vld [vmem:[%s229 + $0x64] sm:$0xf]
        %v394 = vld [vmem:[%s229 + $0x68] sm:$0xf]
        %v395 = vld [vmem:[%s229 + $0x6c] sm:$0xf]
        %v396 = vld [vmem:[%s229 + $0x70] sm:$0xf]
        %v397 = vld [vmem:[%s229 + $0x74] sm:$0xf]
        %v398 = vld [vmem:[%s229 + $0x78] sm:$0xf]
        %v399 = vld [vmem:[%s229 + $0x7c] sm:$0xf]
        %v400 = vld [vmem:[%s229 + $0x80] sm:$0xf]
        %v401 = vld [vmem:[%s229 + $0x84] sm:$0xf]
        %v402 = vld [vmem:[%s229 + $0x88] sm:$0xf]
        %v403 = vld [vmem:[%s229 + $0x8c] sm:$0xf]
        %v404 = vld [vmem:[%s229 + $0x90] sm:$0xf]
        %v405 = vld [vmem:[%s229 + $0x94] sm:$0xf]
        %v406 = vld [vmem:[%s229 + $0x98] sm:$0xf]
        %v407 = vld [vmem:[%s229 + $0x9c] sm:$0xf]
        %v408 = vld [vmem:[%s229 + $0xa0] sm:$0xf]
        %v409 = vld [vmem:[%s229 + $0xa4] sm:$0xf]
        %v410 = vld [vmem:[%s229 + $0xa8] sm:$0xf]
        %v411 = vld [vmem:[%s229 + $0xac] sm:$0xf]
        %v412 = vld [vmem:[%s229 + $0xb0] sm:$0xf]
        %v413 = vld [vmem:[%s229 + $0xb4] sm:$0xf]
        %v414 = vld [vmem:[%s229 + $0xb8] sm:$0xf]
        %v415 = vld [vmem:[%s229 + $0xbc] sm:$0xf]
        %v416 = vld [vmem:[%s229 + $0xc0] sm:$0xf]
        %v417 = vld [vmem:[%s229 + $0xc4] sm:$0xf]
        %v418 = vld [vmem:[%s229 + $0xc8] sm:$0xf]
        %v419 = vld [vmem:[%s229 + $0xcc] sm:$0xf]
        %v420 = vld [vmem:[%s229 + $0xd0] sm:$0xf]
        %v421 = vld [vmem:[%s229 + $0xd4] sm:$0xf]
        %v422 = vld [vmem:[%s229 + $0xd8] sm:$0xf]
        %v423 = vld [vmem:[%s229 + $0xdc] sm:$0xf]
        %v424 = vld [vmem:[%s229 + $0xe0] sm:$0xf]
        %v425 = vld [vmem:[%s229 + $0xe4] sm:$0xf]
        %v426 = vld [vmem:[%s229 + $0xe8] sm:$0xf]
        %v427 = vld [vmem:[%s229 + $0xec] sm:$0xf]
        %v428 = vld [vmem:[%s229 + $0xf0] sm:$0xf]
        %v429 = vld [vmem:[%s229 + $0xf4] sm:$0xf]
        %v430 = vld [vmem:[%s229 + $0xf8] sm:$0xf]
        %v431 = vld [vmem:[%s229 + $0xfc] sm:$0xf]
        %v432 = vld [vmem:[%s229 + $0x100] sm:$0xf]
        %v433 = vld [vmem:[%s229 + $0x104] sm:$0xf]
        %v434 = vld [vmem:[%s229 + $0x108] sm:$0xf]
        %v435 = vld [vmem:[%s229 + $0x10c] sm:$0xf]
        %v436 = vld [vmem:[%s229 + $0x110] sm:$0xf]
        %v437 = vld [vmem:[%s229 + $0x114] sm:$0xf]
        %v438 = vld [vmem:[%s229 + $0x118] sm:$0xf]
        %v439 = vld [vmem:[%s229 + $0x11c] sm:$0xf]
        %v440 = vld [vmem:[%s229 + $0x120] sm:$0xf]
        %v441 = vld [vmem:[%s229 + $0x124] sm:$0xf]
        %v442 = vld [vmem:[%s229 + $0x128] sm:$0xf]
        %v443 = vld [vmem:[%s229 + $0x12c] sm:$0xf]
        %v444 = vld [vmem:[%s229 + $0x130] sm:$0xf]
        %v445 = vld [vmem:[%s229 + $0x134] sm:$0xf]
        %v446 = vld [vmem:[%s229 + $0x138] sm:$0xf]
        %v447 = vld [vmem:[%s229 + $0x13c] sm:$0xf]
        %v448 = vld [vmem:[%s229 + $0x140] sm:$0xf]
        %v449 = vld [vmem:[%s229 + $0x144] sm:$0xf]
        %v450 = vld [vmem:[%s229 + $0x148] sm:$0xf]
        %v451 = vld [vmem:[%s229 + $0x14c] sm:$0xf]
        %v452 = vld [vmem:[%s229 + $0x150] sm:$0xf]
        %v453 = vld [vmem:[%s229 + $0x154] sm:$0xf]
        %v454 = vld [vmem:[%s229 + $0x158] sm:$0xf]
        %v455 = vld [vmem:[%s229 + $0x15c] sm:$0xf]
        %v456 = vld [vmem:[%s229 + $0x160] sm:$0xf]
        %v457 = vld [vmem:[%s229 + $0x164] sm:$0xf]
        %v458 = vld [vmem:[%s229 + $0x168] sm:$0xf]
        %v459 = vld [vmem:[%s229 + $0x16c] sm:$0xf]
        %v460 = vld [vmem:[%s229 + $0x170] sm:$0xf]
        %v461 = vld [vmem:[%s229 + $0x174] sm:$0xf]
        %v462 = vld [vmem:[%s229 + $0x178] sm:$0xf]
        %v463 = vld [vmem:[%s229 + $0x17c] sm:$0xf]
        %v464 = vld [vmem:[%s229 + $0x180] sm:$0xf]
        %v465 = vld [vmem:[%s229 + $0x184] sm:$0xf]
        %v466 = vld [vmem:[%s229 + $0x188] sm:$0xf]
        %v467 = vld [vmem:[%s229 + $0x18c] sm:$0xf]
        %v468 = vld [vmem:[%s229 + $0x190] sm:$0xf]
        %v469 = vld [vmem:[%s229 + $0x194] sm:$0xf]
        %v470 = vld [vmem:[%s229 + $0x198] sm:$0xf]
        %v471 = vld [vmem:[%s229 + $0x19c] sm:$0xf]
        %v472 = vld [vmem:[%s229 + $0x1a0] sm:$0xf]
        %v473 = vld [vmem:[%s229 + $0x1a4] sm:$0xf]
        %v474 = vld [vmem:[%s229 + $0x1a8] sm:$0xf]
        %v475 = vld [vmem:[%s229 + $0x1ac] sm:$0xf]
        %v476 = vld [vmem:[%s229 + $0x1b0] sm:$0xf]
        %v477 = vld [vmem:[%s229 + $0x1b4] sm:$0xf]
        %v478 = vld [vmem:[%s229 + $0x1b8] sm:$0xf]
        %v479 = vld [vmem:[%s229 + $0x1bc] sm:$0xf]
        %v480 = vld [vmem:[%s229 + $0x1c0] sm:$0xf]
        %v481 = vld [vmem:[%s229 + $0x1c4] sm:$0xf]
        %v482 = vld [vmem:[%s229 + $0x1c8] sm:$0xf]
        %v483 = vld [vmem:[%s229 + $0x1cc] sm:$0xf]
        %v484 = vld [vmem:[%s229 + $0x1d0] sm:$0xf]
        %v485 = vld [vmem:[%s229 + $0x1d4] sm:$0xf]
        %v486 = vld [vmem:[%s229 + $0x1d8] sm:$0xf]
        %v487 = vld [vmem:[%s229 + $0x1dc] sm:$0xf]
        %v488 = vld [vmem:[%s229 + $0x1e0] sm:$0xf]
        %v489 = vld [vmem:[%s229 + $0x1e4] sm:$0xf]
        %v490 = vld [vmem:[%s229 + $0x1e8] sm:$0xf]
        %v491 = vld [vmem:[%s229 + $0x1ec] sm:$0xf]
        %v492 = vld [vmem:[%s229 + $0x1f0] sm:$0xf]
        %v493 = vld [vmem:[%s229 + $0x1f4] sm:$0xf]
        %v494 = vld [vmem:[%s229 + $0x1f8] sm:$0xf]
        %v495 = vld [vmem:[%s229 + $0x1fc] sm:$0xf]
        %v496 = vld [vmem:[%s229 + $0x200] sm:$0xf]
        %v497 = vld [vmem:[%s229 + $0x204] sm:$0xf]
        %v498 = vld [vmem:[%s229 + $0x208] sm:$0xf]
        %v499 = vld [vmem:[%s229 + $0x20c] sm:$0xf]
        %v500 = vld [vmem:[%s229 + $0x210] sm:$0xf]
        %v501 = vld [vmem:[%s229 + $0x214] sm:$0xf]
        %v502 = vld [vmem:[%s229 + $0x218] sm:$0xf]
        %v503 = vld [vmem:[%s229 + $0x21c] sm:$0xf]
        %v504 = vld [vmem:[%s229 + $0x220] sm:$0xf]
        %v505 = vld [vmem:[%s229 + $0x224] sm:$0xf]
        %v506 = vld [vmem:[%s229 + $0x228] sm:$0xf]
        %v507 = vld [vmem:[%s229 + $0x22c] sm:$0xf]
        %v508 = vld [vmem:[%s229 + $0x230] sm:$0xf]
        %v509 = vld [vmem:[%s229 + $0x234] sm:$0xf]
        %v510 = vld [vmem:[%s229 + $0x238] sm:$0xf]
        %v511 = vld [vmem:[%s229 + $0x23c] sm:$0xf]
        %v512 = vld [vmem:[%s237] sm:$0x1]
        %v514 = vlaneseq
        %v515 = vshrl.u32 %v514, 7
        %v516 = vsub.s32 0, %v515
        %v517 = vrot.slane %v512, %v516
        %v599 = vunpack.c.l.b16 %v288
        %v600 = vunpack.c.h.b16 %v288
        %v601 = vunpack.c.l.b16 %v289
        %v602 = vunpack.c.h.b16 %v289
        %v603 = vunpack.c.l.b16 %v290
        %v604 = vunpack.c.h.b16 %v290
        %v605 = vunpack.c.l.b16 %v291
        %v606 = vunpack.c.h.b16 %v291
        %v607 = vunpack.c.l.b16 %v292
        %v608 = vunpack.c.l.b16 %v293
        %v609 = vunpack.c.h.b16 %v293
        %v610 = vunpack.c.l.b16 %v294
        %v611 = vunpack.c.h.b16 %v294
        %v612 = vunpack.c.l.b16 %v295
        %v613 = vunpack.c.h.b16 %v295
        %v614 = vunpack.c.l.b16 %v296
        %v615 = vunpack.c.h.b16 %v296
        %v616 = vunpack.c.l.b16 %v297
        %v617 = vunpack.c.l.b16 %v298
        %v618 = vunpack.c.h.b16 %v298
        %v619 = vunpack.c.l.b16 %v299
        %v620 = vunpack.c.h.b16 %v299
        %v621 = vunpack.c.l.b16 %v300
        %v622 = vunpack.c.h.b16 %v300
        %v623 = vunpack.c.l.b16 %v301
        %v624 = vunpack.c.h.b16 %v301
        %v625 = vunpack.c.l.b16 %v302
        %v626 = vunpack.c.l.b16 %v303
        %v627 = vunpack.c.h.b16 %v303
        %v628 = vunpack.c.l.b16 %v304
        %v629 = vunpack.c.h.b16 %v304
        %v630 = vunpack.c.l.b16 %v305
        %v631 = vunpack.c.h.b16 %v305
        %v632 = vunpack.c.l.b16 %v306
        %v633 = vunpack.c.h.b16 %v306
        %v634 = vunpack.c.l.b16 %v307
        %v635 = vunpack.c.l.b16 %v308
        %v636 = vunpack.c.h.b16 %v308
        %v637 = vunpack.c.l.b16 %v309
        %v638 = vunpack.c.h.b16 %v309
        %v639 = vunpack.c.l.b16 %v310
        %v640 = vunpack.c.h.b16 %v310
        %v641 = vunpack.c.l.b16 %v311
        %v642 = vunpack.c.h.b16 %v311
        %v643 = vunpack.c.l.b16 %v312
        %v644 = vunpack.c.l.b16 %v313
        %v645 = vunpack.c.h.b16 %v313
        %v646 = vunpack.c.l.b16 %v314
        %v647 = vunpack.c.h.b16 %v314
        %v648 = vunpack.c.l.b16 %v315
        %v649 = vunpack.c.h.b16 %v315
        %v650 = vunpack.c.l.b16 %v316
        %v651 = vunpack.c.h.b16 %v316
        %v652 = vunpack.c.l.b16 %v317
        %v653 = vunpack.c.l.b16 %v318
        %v654 = vunpack.c.h.b16 %v318
        %v655 = vunpack.c.l.b16 %v319
        %v656 = vunpack.c.h.b16 %v319
        %v657 = vunpack.c.l.b16 %v320
        %v658 = vunpack.c.h.b16 %v320
        %v659 = vunpack.c.l.b16 %v321
        %v660 = vunpack.c.h.b16 %v321
        %v661 = vunpack.c.l.b16 %v322
        %v662 = vunpack.c.l.b16 %v323
        %v663 = vunpack.c.h.b16 %v323
        %v664 = vunpack.c.l.b16 %v324
        %v665 = vunpack.c.h.b16 %v324
        %v666 = vunpack.c.l.b16 %v325
        %v667 = vunpack.c.h.b16 %v325
        %v668 = vunpack.c.l.b16 %v326
        %v669 = vunpack.c.h.b16 %v326
        %v670 = vunpack.c.l.b16 %v327
        %v671 = vunpack.c.l.b16 %v328
        %v672 = vunpack.c.h.b16 %v328
        %v673 = vunpack.c.l.b16 %v329
        %v674 = vunpack.c.h.b16 %v329
        %v675 = vunpack.c.l.b16 %v330
        %v676 = vunpack.c.h.b16 %v330
        %v677 = vunpack.c.l.b16 %v331
        %v678 = vunpack.c.h.b16 %v331
        %v679 = vunpack.c.l.b16 %v332
        %v680 = vunpack.c.l.b16 %v333
        %v681 = vunpack.c.h.b16 %v333
        %v682 = vunpack.c.l.b16 %v334
        %v683 = vunpack.c.h.b16 %v334
        %v684 = vunpack.c.l.b16 %v335
        %v685 = vunpack.c.h.b16 %v335
        %v686 = vunpack.c.l.b16 %v336
        %v687 = vunpack.c.h.b16 %v336
        %v688 = vunpack.c.l.b16 %v337
        %v689 = vunpack.c.l.b16 %v338
        %v690 = vunpack.c.h.b16 %v338
        %v691 = vunpack.c.l.b16 %v339
        %v692 = vunpack.c.h.b16 %v339
        %v693 = vunpack.c.l.b16 %v340
        %v694 = vunpack.c.h.b16 %v340
        %v695 = vunpack.c.l.b16 %v341
        %v696 = vunpack.c.h.b16 %v341
        %v697 = vunpack.c.l.b16 %v342
        %v698 = vunpack.c.l.b16 %v343
        %v699 = vunpack.c.h.b16 %v343
        %v700 = vunpack.c.l.b16 %v344
        %v701 = vunpack.c.h.b16 %v344
        %v702 = vunpack.c.l.b16 %v345
        %v703 = vunpack.c.h.b16 %v345
        %v704 = vunpack.c.l.b16 %v346
        %v705 = vunpack.c.h.b16 %v346
        %v706 = vunpack.c.l.b16 %v347
        %v707 = vunpack.c.l.b16 %v348
        %v708 = vunpack.c.h.b16 %v348
        %v709 = vunpack.c.l.b16 %v349
        %v710 = vunpack.c.h.b16 %v349
        %v711 = vunpack.c.l.b16 %v350
        %v712 = vunpack.c.h.b16 %v350
        %v713 = vunpack.c.l.b16 %v351
        %v714 = vunpack.c.h.b16 %v351
        %v715 = vunpack.c.l.b16 %v352
        %v716 = vunpack.c.l.b16 %v353
        %v717 = vunpack.c.h.b16 %v353
        %v718 = vunpack.c.l.b16 %v354
        %v719 = vunpack.c.h.b16 %v354
        %v720 = vunpack.c.l.b16 %v355
        %v721 = vunpack.c.h.b16 %v355
        %v722 = vunpack.c.l.b16 %v356
        %v723 = vunpack.c.h.b16 %v356
        %v724 = vunpack.c.l.b16 %v357
        %v725 = vunpack.c.l.b16 %v358
        %v726 = vunpack.c.h.b16 %v358
        %v727 = vunpack.c.l.b16 %v359
        %v728 = vunpack.c.h.b16 %v359
        %v729 = vunpack.c.l.b16 %v360
        %v730 = vunpack.c.h.b16 %v360
        %v731 = vunpack.c.l.b16 %v361
        %v732 = vunpack.c.h.b16 %v361
        %v733 = vunpack.c.l.b16 %v362
        %v734 = vunpack.c.l.b16 %v363
        %v735 = vunpack.c.h.b16 %v363
        %v736 = vunpack.c.l.b16 %v364
        %v737 = vunpack.c.h.b16 %v364
        %v738 = vunpack.c.l.b16 %v365
        %v739 = vunpack.c.h.b16 %v365
        %v740 = vunpack.c.l.b16 %v366
        %v741 = vunpack.c.h.b16 %v366
        %v742 = vunpack.c.l.b16 %v367
        %v743 = vpack.c.b16 %v608, %v599
        %v744 = vpack.c.b16 %v609, %v600
        %v745 = vpack.c.b16 %v610, %v601
        %v746 = vpack.c.b16 %v611, %v602
        %v747 = vpack.c.b16 %v612, %v603
        %v748 = vpack.c.b16 %v613, %v604
        %v749 = vpack.c.b16 %v614, %v605
        %v750 = vpack.c.b16 %v615, %v606
        %v751 = vpack.c.b16 %v616, %v607
        %v752 = vpack.c.b16 %v626, %v617
        %v753 = vpack.c.b16 %v627, %v618
        %v754 = vpack.c.b16 %v628, %v619
        %v755 = vpack.c.b16 %v629, %v620
        %v756 = vpack.c.b16 %v630, %v621
        %v757 = vpack.c.b16 %v631, %v622
        %v758 = vpack.c.b16 %v632, %v623
        %v759 = vpack.c.b16 %v633, %v624
        %v760 = vpack.c.b16 %v634, %v625
        %v761 = vpack.c.b16 %v644, %v635
        %v762 = vpack.c.b16 %v645, %v636
        %v763 = vpack.c.b16 %v646, %v637
        %v764 = vpack.c.b16 %v647, %v638
        %v765 = vpack.c.b16 %v648, %v639
        %v766 = vpack.c.b16 %v649, %v640
        %v767 = vpack.c.b16 %v650, %v641
        %v768 = vpack.c.b16 %v651, %v642
        %v769 = vpack.c.b16 %v652, %v643
        %v770 = vpack.c.b16 %v662, %v653
        %v771 = vpack.c.b16 %v663, %v654
        %v772 = vpack.c.b16 %v664, %v655
        %v773 = vpack.c.b16 %v665, %v656
        %v774 = vpack.c.b16 %v666, %v657
        %v775 = vpack.c.b16 %v667, %v658
        %v776 = vpack.c.b16 %v668, %v659
        %v777 = vpack.c.b16 %v669, %v660
        %v778 = vpack.c.b16 %v670, %v661
        %v779 = vpack.c.b16 %v680, %v671
        %v780 = vpack.c.b16 %v681, %v672
        %v781 = vpack.c.b16 %v682, %v673
        %v782 = vpack.c.b16 %v683, %v674
        %v783 = vpack.c.b16 %v684, %v675
        %v784 = vpack.c.b16 %v685, %v676
        %v785 = vpack.c.b16 %v686, %v677
        %v786 = vpack.c.b16 %v687, %v678
        %v787 = vpack.c.b16 %v688, %v679
        %v788 = vpack.c.b16 %v698, %v689
        %v789 = vpack.c.b16 %v699, %v690
        %v790 = vpack.c.b16 %v700, %v691
        %v791 = vpack.c.b16 %v701, %v692
        %v792 = vpack.c.b16 %v702, %v693
        %v793 = vpack.c.b16 %v703, %v694
        %v794 = vpack.c.b16 %v704, %v695
        %v795 = vpack.c.b16 %v705, %v696
        %v796 = vpack.c.b16 %v706, %v697
        %v797 = vpack.c.b16 %v716, %v707
        %v798 = vpack.c.b16 %v717, %v708
        %v799 = vpack.c.b16 %v718, %v709
        %v800 = vpack.c.b16 %v719, %v710
        %v801 = vpack.c.b16 %v720, %v711
        %v802 = vpack.c.b16 %v721, %v712
        %v803 = vpack.c.b16 %v722, %v713
        %v804 = vpack.c.b16 %v723, %v714
        %v805 = vpack.c.b16 %v724, %v715
        %v806 = vpack.c.b16 %v734, %v725
        %v807 = vpack.c.b16 %v735, %v726
        %v808 = vpack.c.b16 %v736, %v727
        %v809 = vpack.c.b16 %v737, %v728
        %v810 = vpack.c.b16 %v738, %v729
        %v811 = vpack.c.b16 %v739, %v730
        %v812 = vpack.c.b16 %v740, %v731
        %v813 = vpack.c.b16 %v741, %v732
        %v814 = vpack.c.b16 %v742, %v733
        %v1031 = vunpack.c.l.b16 %v368
        %v1032 = vunpack.c.l.b16 %v369
        %v1033 = vunpack.c.l.b16 %v370
        %v1034 = vunpack.c.l.b16 %v371
        %v1035 = vunpack.c.l.b16 %v372
        %v1036 = vunpack.c.l.b16 %v373
        %v1037 = vunpack.c.l.b16 %v374
        %v1038 = vunpack.c.l.b16 %v375
        %v1039 = vunpack.c.l.b16 %v376
        %v1040 = vunpack.c.l.b16 %v377
        %v1041 = vunpack.c.l.b16 %v378
        %v1042 = vunpack.c.l.b16 %v379
        %v1043 = vunpack.c.l.b16 %v380
        %v1044 = vunpack.c.l.b16 %v381
        %v1045 = vunpack.c.l.b16 %v382
        %v1046 = vunpack.c.l.b16 %v383
        %v1047 = vunpack.c.l.b16 %v384
        %v1048 = vunpack.c.l.b16 %v385
        %v1049 = vunpack.c.l.b16 %v386
        %v1050 = vunpack.c.l.b16 %v387
        %v1051 = vunpack.c.l.b16 %v388
        %v1052 = vunpack.c.l.b16 %v389
        %v1053 = vunpack.c.l.b16 %v390
        %v1054 = vunpack.c.l.b16 %v391
        %v1055 = vunpack.c.l.b16 %v392
        %v1056 = vunpack.c.l.b16 %v393
        %v1057 = vunpack.c.l.b16 %v394
        %v1058 = vunpack.c.l.b16 %v395
        %v1059 = vunpack.c.l.b16 %v396
        %v1060 = vunpack.c.l.b16 %v397
        %v1061 = vunpack.c.l.b16 %v398
        %v1062 = vunpack.c.l.b16 %v399
        %v1063 = vunpack.c.l.b16 %v400
        %v1064 = vunpack.c.l.b16 %v401
        %v1065 = vunpack.c.l.b16 %v402
        %v1066 = vunpack.c.l.b16 %v403
        %v1067 = vunpack.c.l.b16 %v404
        %v1068 = vunpack.c.l.b16 %v405
        %v1069 = vunpack.c.l.b16 %v406
        %v1070 = vunpack.c.l.b16 %v407
        %v1071 = vunpack.c.l.b16 %v408
        %v1072 = vunpack.c.l.b16 %v409
        %v1073 = vunpack.c.l.b16 %v410
        %v1074 = vunpack.c.l.b16 %v411
        %v1075 = vunpack.c.l.b16 %v412
        %v1076 = vunpack.c.l.b16 %v413
        %v1077 = vunpack.c.l.b16 %v414
        %v1078 = vunpack.c.l.b16 %v415
        %v1079 = vunpack.c.l.b16 %v416
        %v1080 = vunpack.c.l.b16 %v417
        %v1081 = vunpack.c.l.b16 %v418
        %v1082 = vunpack.c.l.b16 %v419
        %v1083 = vunpack.c.l.b16 %v420
        %v1084 = vunpack.c.l.b16 %v421
        %v1085 = vunpack.c.l.b16 %v422
        %v1086 = vunpack.c.l.b16 %v423
        %v1087 = vunpack.c.l.b16 %v424
        %v1088 = vunpack.c.l.b16 %v425
        %v1089 = vunpack.c.l.b16 %v426
        %v1090 = vunpack.c.l.b16 %v427
        %v1091 = vunpack.c.l.b16 %v428
        %v1092 = vunpack.c.l.b16 %v429
        %v1093 = vunpack.c.l.b16 %v430
        %v1094 = vunpack.c.l.b16 %v431
        %v1095 = vunpack.c.l.b16 %v432
        %v1096 = vunpack.c.l.b16 %v433
        %v1097 = vunpack.c.l.b16 %v434
        %v1098 = vunpack.c.l.b16 %v435
        %v1099 = vunpack.c.l.b16 %v436
        %v1100 = vunpack.c.l.b16 %v437
        %v1101 = vunpack.c.l.b16 %v438
        %v1102 = vunpack.c.l.b16 %v439
        %v1103 = vunpack.c.l.b16 %v440
        %v1104 = vunpack.c.l.b16 %v441
        %v1105 = vunpack.c.l.b16 %v442
        %v1106 = vunpack.c.l.b16 %v443
        %v1107 = vunpack.c.l.b16 %v444
        %v1108 = vunpack.c.l.b16 %v445
        %v1109 = vunpack.c.l.b16 %v446
        %v1110 = vunpack.c.l.b16 %v447
        %v1111 = vunpack.c.l.b16 %v448
        %v1112 = vunpack.c.l.b16 %v449
        %v1113 = vunpack.c.l.b16 %v450
        %v1114 = vunpack.c.l.b16 %v451
        %v1115 = vunpack.c.l.b16 %v452
        %v1116 = vunpack.c.l.b16 %v453
        %v1117 = vunpack.c.l.b16 %v454
        %v1118 = vunpack.c.l.b16 %v455
        %v1119 = vunpack.c.l.b16 %v456
        %v1120 = vunpack.c.l.b16 %v457
        %v1121 = vunpack.c.l.b16 %v458
        %v1122 = vunpack.c.l.b16 %v459
        %v1123 = vunpack.c.l.b16 %v460
        %v1124 = vunpack.c.l.b16 %v461
        %v1125 = vunpack.c.l.b16 %v462
        %v1126 = vunpack.c.l.b16 %v463
        %v1127 = vunpack.c.l.b16 %v464
        %v1128 = vunpack.c.l.b16 %v465
        %v1129 = vunpack.c.l.b16 %v466
        %v1130 = vunpack.c.l.b16 %v467
        %v1131 = vunpack.c.l.b16 %v468
        %v1132 = vunpack.c.l.b16 %v469
        %v1133 = vunpack.c.l.b16 %v470
        %v1134 = vunpack.c.l.b16 %v471
        %v1135 = vunpack.c.l.b16 %v472
        %v1136 = vunpack.c.l.b16 %v473
        %v1137 = vunpack.c.l.b16 %v474
        %v1138 = vunpack.c.l.b16 %v475
        %v1139 = vunpack.c.l.b16 %v476
        %v1140 = vunpack.c.l.b16 %v477
        %v1141 = vunpack.c.l.b16 %v478
        %v1142 = vunpack.c.l.b16 %v479
        %v1143 = vunpack.c.l.b16 %v480
        %v1144 = vunpack.c.l.b16 %v481
        %v1145 = vunpack.c.l.b16 %v482
        %v1146 = vunpack.c.l.b16 %v483
        %v1147 = vunpack.c.l.b16 %v484
        %v1148 = vunpack.c.l.b16 %v485
        %v1149 = vunpack.c.l.b16 %v486
        %v1150 = vunpack.c.l.b16 %v487
        %v1151 = vunpack.c.l.b16 %v488
        %v1152 = vunpack.c.l.b16 %v489
        %v1153 = vunpack.c.l.b16 %v490
        %v1154 = vunpack.c.l.b16 %v491
        %v1155 = vunpack.c.l.b16 %v492
        %v1156 = vunpack.c.l.b16 %v493
        %v1157 = vunpack.c.l.b16 %v494
        %v1158 = vunpack.c.l.b16 %v495
        %v1159 = vunpack.c.l.b16 %v496
        %v1160 = vunpack.c.l.b16 %v497
        %v1161 = vunpack.c.l.b16 %v498
        %v1162 = vunpack.c.l.b16 %v499
        %v1163 = vunpack.c.l.b16 %v500
        %v1164 = vunpack.c.l.b16 %v501
        %v1165 = vunpack.c.l.b16 %v502
        %v1166 = vunpack.c.l.b16 %v503
        %v1167 = vunpack.c.l.b16 %v504
        %v1168 = vunpack.c.l.b16 %v505
        %v1169 = vunpack.c.l.b16 %v506
        %v1170 = vunpack.c.l.b16 %v507
        %v1171 = vunpack.c.l.b16 %v508
        %v1172 = vunpack.c.l.b16 %v509
        %v1173 = vunpack.c.l.b16 %v510
        %v1174 = vunpack.c.l.b16 %v511
        %v1175 = vpack.c.b16 %v1032, %v1031
        %v1176 = vpack.c.b16 %v1034, %v1033
        %v1177 = vpack.c.b16 %v1036, %v1035
        %v1178 = vpack.c.b16 %v1038, %v1037
        %v1179 = vpack.c.b16 %v1040, %v1039
        %v1180 = vpack.c.b16 %v1042, %v1041
        %v1181 = vpack.c.b16 %v1044, %v1043
        %v1182 = vpack.c.b16 %v1046, %v1045
        %v1183 = vpack.c.b16 %v1048, %v1047
        %v1184 = vpack.c.b16 %v1050, %v1049
        %v1185 = vpack.c.b16 %v1052, %v1051
        %v1186 = vpack.c.b16 %v1054, %v1053
        %v1187 = vpack.c.b16 %v1056, %v1055
        %v1188 = vpack.c.b16 %v1058, %v1057
        %v1189 = vpack.c.b16 %v1060, %v1059
        %v1190 = vpack.c.b16 %v1062, %v1061
        %v1191 = vpack.c.b16 %v1064, %v1063
        %v1192 = vpack.c.b16 %v1066, %v1065
        %v1193 = vpack.c.b16 %v1068, %v1067
        %v1194 = vpack.c.b16 %v1070, %v1069
        %v1195 = vpack.c.b16 %v1072, %v1071
        %v1196 = vpack.c.b16 %v1074, %v1073
        %v1197 = vpack.c.b16 %v1076, %v1075
        %v1198 = vpack.c.b16 %v1078, %v1077
        %v1199 = vpack.c.b16 %v1080, %v1079
        %v1200 = vpack.c.b16 %v1082, %v1081
        %v1201 = vpack.c.b16 %v1084, %v1083
        %v1202 = vpack.c.b16 %v1086, %v1085
        %v1203 = vpack.c.b16 %v1088, %v1087
        %v1204 = vpack.c.b16 %v1090, %v1089
        %v1205 = vpack.c.b16 %v1092, %v1091
        %v1206 = vpack.c.b16 %v1094, %v1093
        %v1207 = vpack.c.b16 %v1096, %v1095
        %v1208 = vpack.c.b16 %v1098, %v1097
        %v1209 = vpack.c.b16 %v1100, %v1099
        %v1210 = vpack.c.b16 %v1102, %v1101
        %v1211 = vpack.c.b16 %v1104, %v1103
        %v1212 = vpack.c.b16 %v1106, %v1105
        %v1213 = vpack.c.b16 %v1108, %v1107
        %v1214 = vpack.c.b16 %v1110, %v1109
        %v1215 = vpack.c.b16 %v1112, %v1111
        %v1216 = vpack.c.b16 %v1114, %v1113
        %v1217 = vpack.c.b16 %v1116, %v1115
        %v1218 = vpack.c.b16 %v1118, %v1117
        %v1219 = vpack.c.b16 %v1120, %v1119
        %v1220 = vpack.c.b16 %v1122, %v1121
        %v1221 = vpack.c.b16 %v1124, %v1123
        %v1222 = vpack.c.b16 %v1126, %v1125
        %v1223 = vpack.c.b16 %v1128, %v1127
        %v1224 = vpack.c.b16 %v1130, %v1129
        %v1225 = vpack.c.b16 %v1132, %v1131
        %v1226 = vpack.c.b16 %v1134, %v1133
        %v1227 = vpack.c.b16 %v1136, %v1135
        %v1228 = vpack.c.b16 %v1138, %v1137
        %v1229 = vpack.c.b16 %v1140, %v1139
        %v1230 = vpack.c.b16 %v1142, %v1141
        %v1231 = vpack.c.b16 %v1144, %v1143
        %v1232 = vpack.c.b16 %v1146, %v1145
        %v1233 = vpack.c.b16 %v1148, %v1147
        %v1234 = vpack.c.b16 %v1150, %v1149
        %v1235 = vpack.c.b16 %v1152, %v1151
        %v1236 = vpack.c.b16 %v1154, %v1153
        %v1237 = vpack.c.b16 %v1156, %v1155
        %v1238 = vpack.c.b16 %v1158, %v1157
        %v1239 = vpack.c.b16 %v1160, %v1159
        %v1240 = vpack.c.b16 %v1162, %v1161
        %v1241 = vpack.c.b16 %v1164, %v1163
        %v1242 = vpack.c.b16 %v1166, %v1165
        %v1243 = vpack.c.b16 %v1168, %v1167
        %v1244 = vpack.c.b16 %v1170, %v1169
        %v1245 = vpack.c.b16 %v1172, %v1171
        %v1246 = vpack.c.b16 %v1174, %v1173
        %1319 = vmatprep.subr.bf16.mxu0 0
        %1320 = vmatpush1.bf16.msra.mxu0 %v1175
        %1321 = vmatprep.subr.bf16.mxu0 0
        %1322 = vmatpush1.bf16.msra.mxu0 %v1176
        %1323 = vmatprep.subr.bf16.mxu0 0
        %1324 = vmatpush1.bf16.msra.mxu0 %v1177
        %1325 = vmatprep.subr.bf16.mxu0 0
        %1326 = vmatpush1.bf16.msra.mxu0 %v1178
        %1327 = vmatprep.subr.bf16.mxu0 0
        %1328 = vmatpush1.bf16.msra.mxu0 %v1179
        %1329 = vmatprep.subr.bf16.mxu0 0
        %1330 = vmatpush1.bf16.msra.mxu0 %v1180
        %1331 = vmatprep.subr.bf16.mxu0 0
        %1332 = vmatpush1.bf16.msra.mxu0 %v1181
        %1333 = vmatprep.subr.bf16.mxu0 0
        %1334 = vmatpush1.bf16.msra.mxu0 %v1182
        %1335 = vmatprep.subr.bf16.mxu0 0
        %1336 = vmatpush1.bf16.msra.mxu0 %v1183
        %1337 = vmatprep.subr.bf16.mxu0 0
        %1338 = vmatpush1.bf16.msra.mxu0 %v1184
        %1339 = vmatprep.subr.bf16.mxu0 0
        %1340 = vmatpush1.bf16.msra.mxu0 %v1185
        %1341 = vmatprep.subr.bf16.mxu0 0
        %1342 = vmatpush1.bf16.msra.mxu0 %v1186
        %1343 = vmatprep.subr.bf16.mxu0 0
        %1344 = vmatpush1.bf16.msra.mxu0 %v1187
        %1345 = vmatprep.subr.bf16.mxu0 0
        %1346 = vmatpush1.bf16.msra.mxu0 %v1188
        %1347 = vmatprep.subr.bf16.mxu0 0
        %1348 = vmatpush1.bf16.msra.mxu0 %v1189
        %1349 = vmatprep.subr.bf16.mxu0 0
        %1350 = vmatpush1.bf16.msra.mxu0 %v1190
        %1351 = vmatprep.mubr.bf16.mxu0 %v744
        %1352 = vmatmul.mubr.bf16.gmra.mrb[0].mxu0 %v743
        %v1353 = vpop.f32.mrb[0].mxu0
        %v1354 = vadd.f32 %v517, %v1353
        %v1355 = vpop.f32.mrb[0].mxu0
        %v1356 = vpop.f32.mrb[0].mxu0
        %v1357 = vadd.f32 %v517, %v1356
        %v1358 = vpop.f32.mrb[0].mxu0
        %1359 = vmatprep.mubr.bf16.mxu0 %v753
        %1360 = vmatmul.mubr.bf16.gmra.mrb[0].mxu0 %v752
        %v1361 = vpop.f32.mrb[0].mxu0
        %v1362 = vadd.f32 %v517, %v1361
        %v1363 = vpop.f32.mrb[0].mxu0
        %v1364 = vpop.f32.mrb[0].mxu0
        %v1365 = vadd.f32 %v517, %v1364
        %v1366 = vpop.f32.mrb[0].mxu0
        %1367 = vmatprep.mubr.bf16.mxu0 %v762
        %1368 = vmatmul.mubr.bf16.gmra.mrb[0].mxu0 %v761
        %v1369 = vpop.f32.mrb[0].mxu0
        %v1370 = vadd.f32 %v517, %v1369
        %v1371 = vpop.f32.mrb[0].mxu0
        %v1372 = vpop.f32.mrb[0].mxu0
        %v1373 = vadd.f32 %v517, %v1372
        %v1374 = vpop.f32.mrb[0].mxu0
        %1375 = vmatprep.mubr.bf16.mxu0 %v771
        %1376 = vmatmul.mubr.bf16.gmra.mrb[0].mxu0 %v770
        %v1377 = vpop.f32.mrb[0].mxu0
        %v1378 = vadd.f32 %v517, %v1377
        %v1379 = vpop.f32.mrb[0].mxu0
        %v1380 = vpop.f32.mrb[0].mxu0
        %v1381 = vadd.f32 %v517, %v1380
        %v1382 = vpop.f32.mrb[0].mxu0
        %1383 = vmatprep.mubr.bf16.mxu0 %v780
        %1384 = vmatmul.mubr.bf16.gmra.mrb[0].mxu0 %v779
        %v1385 = vpop.f32.mrb[0].mxu0
        %v1386 = vadd.f32 %v517, %v1385
        %v1387 = vpop.f32.mrb[0].mxu0
        %v1388 = vpop.f32.mrb[0].mxu0
        %v1389 = vadd.f32 %v517, %v1388
        %v1390 = vpop.f32.mrb[0].mxu0
        %1391 = vmatprep.mubr.bf16.mxu0 %v789
        %1392 = vmatmul.mubr.bf16.gmra.mrb[0].mxu0 %v788
        %v1393 = vpop.f32.mrb[0].mxu0
        %v1394 = vadd.f32 %v517, %v1393
        %v1395 = vpop.f32.mrb[0].mxu0
        %v1396 = vpop.f32.mrb[0].mxu0
        %v1397 = vadd.f32 %v517, %v1396
        %v1398 = vpop.f32.mrb[0].mxu0
        %1399 = vmatprep.mubr.bf16.mxu0 %v798
        %1400 = vmatmul.mubr.bf16.gmra.mrb[0].mxu0 %v797
        %v1401 = vpop.f32.mrb[0].mxu0
        %v1402 = vadd.f32 %v517, %v1401
        %v1403 = vpop.f32.mrb[0].mxu0
        %v1404 = vpop.f32.mrb[0].mxu0
        %v1405 = vadd.f32 %v517, %v1404
        %v1406 = vpop.f32.mrb[0].mxu0
        %1407 = vmatprep.mubr.bf16.mxu0 %v807
        %1408 = vmatmul.mubr.bf16.gmra.mrb[0].mxu0 %v806
        %v1409 = vpop.f32.mrb[0].mxu0
        %v1410 = vadd.f32 %v517, %v1409
        %v1411 = vpop.f32.mrb[0].mxu0
        %v1412 = vpop.f32.mrb[0].mxu0
        %v1413 = vadd.f32 %v517, %v1412
        %v1414 = vpop.f32.mrb[0].mxu0
        %1415 = vdwg.mxu0
        %1416 = vmatprep.subr.bf16.mxu0 0
        %1417 = vmatpush1.bf16.msra.mxu0 %v1191
        %1418 = vmatprep.subr.bf16.mxu0 0
        %1419 = vmatpush1.bf16.msra.mxu0 %v1192
        %1420 = vmatprep.subr.bf16.mxu0 0
        %1421 = vmatpush1.bf16.msra.mxu0 %v1193
        %1422 = vmatprep.subr.bf16.mxu0 0
        %1423 = vmatpush1.bf16.msra.mxu0 %v1194
        %1424 = vmatprep.subr.bf16.mxu0 0
        %1425 = vmatpush1.bf16.msra.mxu0 %v1195
        %1426 = vmatprep.subr.bf16.mxu0 0
        %1427 = vmatpush1.bf16.msra.mxu0 %v1196
        %1428 = vmatprep.subr.bf16.mxu0 0
        %1429 = vmatpush1.bf16.msra.mxu0 %v1197
        %1430 = vmatprep.subr.bf16.mxu0 0
        %1431 = vmatpush1.bf16.msra.mxu0 %v1198
        %1432 = vmatprep.subr.bf16.mxu0 0
        %1433 = vmatpush1.bf16.msra.mxu0 %v1199
        %1434 = vmatprep.subr.bf16.mxu0 0
        %1435 = vmatpush1.bf16.msra.mxu0 %v1200
        %1436 = vmatprep.subr.bf16.mxu0 0
        %1437 = vmatpush1.bf16.msra.mxu0 %v1201
        %1438 = vmatprep.subr.bf16.mxu0 0
        %1439 = vmatpush1.bf16.msra.mxu0 %v1202
        %1440 = vmatprep.subr.bf16.mxu0 0
        %1441 = vmatpush1.bf16.msra.mxu0 %v1203
        %1442 = vmatprep.subr.bf16.mxu0 0
        %1443 = vmatpush1.bf16.msra.mxu0 %v1204
        %1444 = vmatprep.subr.bf16.mxu0 0
        %1445 = vmatpush1.bf16.msra.mxu0 %v1205
        %1446 = vmatprep.subr.bf16.mxu0 0
        %1447 = vmatpush1.bf16.msra.mxu0 %v1206
        %1448 = vmatprep.mubr.bf16.mxu0 %v746
        %1449 = vmatmul.mubr.bf16.gmra.mrb[0].mxu0 %v745
        %v1450 = vpop.f32.mrb[0].mxu0
        %v1451 = vadd.f32 %v1354, %v1450
        %v1452 = vpop.f32.mrb[0].mxu0
        %v1453 = vpop.f32.mrb[0].mxu0
        %v1454 = vadd.f32 %v1357, %v1453
        %v1455 = vpop.f32.mrb[0].mxu0
        %1456 = vmatprep.mubr.bf16.mxu0 %v755
        %1457 = vmatmul.mubr.bf16.gmra.mrb[0].mxu0 %v754
        %v1458 = vpop.f32.mrb[0].mxu0
        %v1459 = vadd.f32 %v1362, %v1458
        %v1460 = vpop.f32.mrb[0].mxu0
        %v1461 = vpop.f32.mrb[0].mxu0
        %v1462 = vadd.f32 %v1365, %v1461
        %v1463 = vpop.f32.mrb[0].mxu0
        %1464 = vmatprep.mubr.bf16.mxu0 %v764
        %1465 = vmatmul.mubr.bf16.gmra.mrb[0].mxu0 %v763
        %v1466 = vpop.f32.mrb[0].mxu0
        %v1467 = vadd.f32 %v1370, %v1466
        %v1468 = vpop.f32.mrb[0].mxu0
        %v1469 = vpop.f32.mrb[0].mxu0
        %v1470 = vadd.f32 %v1373, %v1469
        %v1471 = vpop.f32.mrb[0].mxu0
        %1472 = vmatprep.mubr.bf16.mxu0 %v773
        %1473 = vmatmul.mubr.bf16.gmra.mrb[0].mxu0 %v772
        %v1474 = vpop.f32.mrb[0].mxu0
        %v1475 = vadd.f32 %v1378, %v1474
        %v1476 = vpop.f32.mrb[0].mxu0
        %v1477 = vpop.f32.mrb[0].mxu0
        %v1478 = vadd.f32 %v1381, %v1477
        %v1479 = vpop.f32.mrb[0].mxu0
        %1480 = vmatprep.mubr.bf16.mxu0 %v782
        %1481 = vmatmul.mubr.bf16.gmra.mrb[0].mxu0 %v781
        %v1482 = vpop.f32.mrb[0].mxu0
        %v1483 = vadd.f32 %v1386, %v1482
        %v1484 = vpop.f32.mrb[0].mxu0
        %v1485 = vpop.f32.mrb[0].mxu0
        %v1486 = vadd.f32 %v1389, %v1485
        %v1487 = vpop.f32.mrb[0].mxu0
        %1488 = vmatprep.mubr.bf16.mxu0 %v791
        %1489 = vmatmul.mubr.bf16.gmra.mrb[0].mxu0 %v790
        %v1490 = vpop.f32.mrb[0].mxu0
        %v1491 = vadd.f32 %v1394, %v1490
        %v1492 = vpop.f32.mrb[0].mxu0
        %v1493 = vpop.f32.mrb[0].mxu0
        %v1494 = vadd.f32 %v1397, %v1493
        %v1495 = vpop.f32.mrb[0].mxu0
        %1496 = vmatprep.mubr.bf16.mxu0 %v800
        %1497 = vmatmul.mubr.bf16.gmra.mrb[0].mxu0 %v799
        %v1498 = vpop.f32.mrb[0].mxu0
        %v1499 = vadd.f32 %v1402, %v1498
        %v1500 = vpop.f32.mrb[0].mxu0
        %v1501 = vpop.f32.mrb[0].mxu0
        %v1502 = vadd.f32 %v1405, %v1501
        %v1503 = vpop.f32.mrb[0].mxu0
        %1504 = vmatprep.mubr.bf16.mxu0 %v809
        %1505 = vmatmul.mubr.bf16.gmra.mrb[0].mxu0 %v808
        %v1506 = vpop.f32.mrb[0].mxu0
        %v1507 = vadd.f32 %v1410, %v1506
        %v1508 = vpop.f32.mrb[0].mxu0
        %v1509 = vpop.f32.mrb[0].mxu0
        %v1510 = vadd.f32 %v1413, %v1509
        %v1511 = vpop.f32.mrb[0].mxu0
        %1512 = vdwg.mxu0
        %1513 = vmatprep.subr.bf16.mxu0 0
        %1514 = vmatpush1.bf16.msra.mxu0 %v1207
        %1515 = vmatprep.subr.bf16.mxu0 0
        %1516 = vmatpush1.bf16.msra.mxu0 %v1208
        %1517 = vmatprep.subr.bf16.mxu0 0
        %1518 = vmatpush1.bf16.msra.mxu0 %v1209
        %1519 = vmatprep.subr.bf16.mxu0 0
        %1520 = vmatpush1.bf16.msra.mxu0 %v1210
        %1521 = vmatprep.subr.bf16.mxu0 0
        %1522 = vmatpush1.bf16.msra.mxu0 %v1211
        %1523 = vmatprep.subr.bf16.mxu0 0
        %1524 = vmatpush1.bf16.msra.mxu0 %v1212
        %1525 = vmatprep.subr.bf16.mxu0 0
        %1526 = vmatpush1.bf16.msra.mxu0 %v1213
        %1527 = vmatprep.subr.bf16.mxu0 0
        %1528 = vmatpush1.bf16.msra.mxu0 %v1214
        %1529 = vmatprep.subr.bf16.mxu0 0
        %1530 = vmatpush1.bf16.msra.mxu0 %v1215
        %1531 = vmatprep.subr.bf16.mxu0 0
        %1532 = vmatpush1.bf16.msra.mxu0 %v1216
        %1533 = vmatprep.subr.bf16.mxu0 0
        %1534 = vmatpush1.bf16.msra.mxu0 %v1217
        %1535 = vmatprep.subr.bf16.mxu0 0
        %1536 = vmatpush1.bf16.msra.mxu0 %v1218
        %1537 = vmatprep.subr.bf16.mxu0 0
        %1538 = vmatpush1.bf16.msra.mxu0 %v1219
        %1539 = vmatprep.subr.bf16.mxu0 0
        %1540 = vmatpush1.bf16.msra.mxu0 %v1220
        %1541 = vmatprep.subr.bf16.mxu0 0
        %1542 = vmatpush1.bf16.msra.mxu0 %v1221
        %1543 = vmatprep.subr.bf16.mxu0 0
        %1544 = vmatpush1.bf16.msra.mxu0 %v1222
        %1545 = vmatprep.mubr.bf16.mxu0 %v748
        %1546 = vmatmul.mubr.bf16.gmra.mrb[0].mxu0 %v747
        %v1547 = vpop.f32.mrb[0].mxu0
        %v1548 = vadd.f32 %v1451, %v1547
        %v1549 = vpop.f32.mrb[0].mxu0
        %v1550 = vpop.f32.mrb[0].mxu0
        %v1551 = vadd.f32 %v1454, %v1550
        %v1552 = vpop.f32.mrb[0].mxu0
        %1553 = vmatprep.mubr.bf16.mxu0 %v757
        %1554 = vmatmul.mubr.bf16.gmra.mrb[0].mxu0 %v756
        %v1555 = vpop.f32.mrb[0].mxu0
        %v1556 = vadd.f32 %v1459, %v1555
        %v1557 = vpop.f32.mrb[0].mxu0
        %v1558 = vpop.f32.mrb[0].mxu0
        %v1559 = vadd.f32 %v1462, %v1558
        %v1560 = vpop.f32.mrb[0].mxu0
        %1561 = vmatprep.mubr.bf16.mxu0 %v766
        %1562 = vmatmul.mubr.bf16.gmra.mrb[0].mxu0 %v765
        %v1563 = vpop.f32.mrb[0].mxu0
        %v1564 = vadd.f32 %v1467, %v1563
        %v1565 = vpop.f32.mrb[0].mxu0
        %v1566 = vpop.f32.mrb[0].mxu0
        %v1567 = vadd.f32 %v1470, %v1566
        %v1568 = vpop.f32.mrb[0].mxu0
        %1569 = vmatprep.mubr.bf16.mxu0 %v775
        %1570 = vmatmul.mubr.bf16.gmra.mrb[0].mxu0 %v774
        %v1571 = vpop.f32.mrb[0].mxu0
        %v1572 = vadd.f32 %v1475, %v1571
        %v1573 = vpop.f32.mrb[0].mxu0
        %v1574 = vpop.f32.mrb[0].mxu0
        %v1575 = vadd.f32 %v1478, %v1574
        %v1576 = vpop.f32.mrb[0].mxu0
        %1577 = vmatprep.mubr.bf16.mxu0 %v784
        %1578 = vmatmul.mubr.bf16.gmra.mrb[0].mxu0 %v783
        %v1579 = vpop.f32.mrb[0].mxu0
        %v1580 = vadd.f32 %v1483, %v1579
        %v1581 = vpop.f32.mrb[0].mxu0
        %v1582 = vpop.f32.mrb[0].mxu0
        %v1583 = vadd.f32 %v1486, %v1582
        %v1584 = vpop.f32.mrb[0].mxu0
        %1585 = vmatprep.mubr.bf16.mxu0 %v793
        %1586 = vmatmul.mubr.bf16.gmra.mrb[0].mxu0 %v792
        %v1587 = vpop.f32.mrb[0].mxu0
        %v1588 = vadd.f32 %v1491, %v1587
        %v1589 = vpop.f32.mrb[0].mxu0
        %v1590 = vpop.f32.mrb[0].mxu0
        %v1591 = vadd.f32 %v1494, %v1590
        %v1592 = vpop.f32.mrb[0].mxu0
        %1593 = vmatprep.mubr.bf16.mxu0 %v802
        %1594 = vmatmul.mubr.bf16.gmra.mrb[0].mxu0 %v801
        %v1595 = vpop.f32.mrb[0].mxu0
        %v1596 = vadd.f32 %v1499, %v1595
        %v1597 = vpop.f32.mrb[0].mxu0
        %v1598 = vpop.f32.mrb[0].mxu0
        %v1599 = vadd.f32 %v1502, %v1598
        %v1600 = vpop.f32.mrb[0].mxu0
        %1601 = vmatprep.mubr.bf16.mxu0 %v811
        %1602 = vmatmul.mubr.bf16.gmra.mrb[0].mxu0 %v810
        %v1603 = vpop.f32.mrb[0].mxu0
        %v1604 = vadd.f32 %v1507, %v1603
        %v1605 = vpop.f32.mrb[0].mxu0
        %v1606 = vpop.f32.mrb[0].mxu0
        %v1607 = vadd.f32 %v1510, %v1606
        %v1608 = vpop.f32.mrb[0].mxu0
        %1609 = vdwg.mxu0
        %1610 = vmatprep.subr.bf16.mxu0 0
        %1611 = vmatpush1.bf16.msra.mxu0 %v1223
        %1612 = vmatprep.subr.bf16.mxu0 0
        %1613 = vmatpush1.bf16.msra.mxu0 %v1224
        %1614 = vmatprep.subr.bf16.mxu0 0
        %1615 = vmatpush1.bf16.msra.mxu0 %v1225
        %1616 = vmatprep.subr.bf16.mxu0 0
        %1617 = vmatpush1.bf16.msra.mxu0 %v1226
        %1618 = vmatprep.subr.bf16.mxu0 0
        %1619 = vmatpush1.bf16.msra.mxu0 %v1227
        %1620 = vmatprep.subr.bf16.mxu0 0
        %1621 = vmatpush1.bf16.msra.mxu0 %v1228
        %1622 = vmatprep.subr.bf16.mxu0 0
        %1623 = vmatpush1.bf16.msra.mxu0 %v1229
        %1624 = vmatprep.subr.bf16.mxu0 0
        %1625 = vmatpush1.bf16.msra.mxu0 %v1230
        %1626 = vmatprep.subr.bf16.mxu0 0
        %1627 = vmatpush1.bf16.msra.mxu0 %v1231
        %1628 = vmatprep.subr.bf16.mxu0 0
        %1629 = vmatpush1.bf16.msra.mxu0 %v1232
        %1630 = vmatprep.subr.bf16.mxu0 0
        %1631 = vmatpush1.bf16.msra.mxu0 %v1233
        %1632 = vmatprep.subr.bf16.mxu0 0
        %1633 = vmatpush1.bf16.msra.mxu0 %v1234
        %1634 = vmatprep.subr.bf16.mxu0 0
        %1635 = vmatpush1.bf16.msra.mxu0 %v1235
        %1636 = vmatprep.subr.bf16.mxu0 0
        %1637 = vmatpush1.bf16.msra.mxu0 %v1236
        %1638 = vmatprep.subr.bf16.mxu0 0
        %1639 = vmatpush1.bf16.msra.mxu0 %v1237
        %1640 = vmatprep.subr.bf16.mxu0 0
        %1641 = vmatpush1.bf16.msra.mxu0 %v1238
        %1642 = vmatprep.mubr.bf16.mxu0 %v750
        %1643 = vmatmul.mubr.bf16.gmra.mrb[0].mxu0 %v749
        %v1644 = vpop.f32.mrb[0].mxu0
        %v1645 = vadd.f32 %v1548, %v1644
        %v1646 = vpop.f32.mrb[0].mxu0
        %v1647 = vpop.f32.mrb[0].mxu0
        %v1648 = vadd.f32 %v1551, %v1647
        %v1649 = vpop.f32.mrb[0].mxu0
        %1650 = vmatprep.mubr.bf16.mxu0 %v759
        %1651 = vmatmul.mubr.bf16.gmra.mrb[0].mxu0 %v758
        %v1652 = vpop.f32.mrb[0].mxu0
        %v1653 = vadd.f32 %v1556, %v1652
        %v1654 = vpop.f32.mrb[0].mxu0
        %v1655 = vpop.f32.mrb[0].mxu0
        %v1656 = vadd.f32 %v1559, %v1655
        %v1657 = vpop.f32.mrb[0].mxu0
        %1658 = vmatprep.mubr.bf16.mxu0 %v768
        %1659 = vmatmul.mubr.bf16.gmra.mrb[0].mxu0 %v767
        %v1660 = vpop.f32.mrb[0].mxu0
        %v1661 = vadd.f32 %v1564, %v1660
        %v1662 = vpop.f32.mrb[0].mxu0
        %v1663 = vpop.f32.mrb[0].mxu0
        %v1664 = vadd.f32 %v1567, %v1663
        %v1665 = vpop.f32.mrb[0].mxu0
        %1666 = vmatprep.mubr.bf16.mxu0 %v777
        %1667 = vmatmul.mubr.bf16.gmra.mrb[0].mxu0 %v776
        %v1668 = vpop.f32.mrb[0].mxu0
        %v1669 = vadd.f32 %v1572, %v1668
        %v1670 = vpop.f32.mrb[0].mxu0
        %v1671 = vpop.f32.mrb[0].mxu0
        %v1672 = vadd.f32 %v1575, %v1671
        %v1673 = vpop.f32.mrb[0].mxu0
        %1674 = vmatprep.mubr.bf16.mxu0 %v786
        %1675 = vmatmul.mubr.bf16.gmra.mrb[0].mxu0 %v785
        %v1676 = vpop.f32.mrb[0].mxu0
        %v1677 = vadd.f32 %v1580, %v1676
        %v1678 = vpop.f32.mrb[0].mxu0
        %v1679 = vpop.f32.mrb[0].mxu0
        %v1680 = vadd.f32 %v1583, %v1679
        %v1681 = vpop.f32.mrb[0].mxu0
        %1682 = vmatprep.mubr.bf16.mxu0 %v795
        %1683 = vmatmul.mubr.bf16.gmra.mrb[0].mxu0 %v794
        %v1684 = vpop.f32.mrb[0].mxu0
        %v1685 = vadd.f32 %v1588, %v1684
        %v1686 = vpop.f32.mrb[0].mxu0
        %v1687 = vpop.f32.mrb[0].mxu0
        %v1688 = vadd.f32 %v1591, %v1687
        %v1689 = vpop.f32.mrb[0].mxu0
        %1690 = vmatprep.mubr.bf16.mxu0 %v804
        %1691 = vmatmul.mubr.bf16.gmra.mrb[0].mxu0 %v803
        %v1692 = vpop.f32.mrb[0].mxu0
        %v1693 = vadd.f32 %v1596, %v1692
        %v1694 = vpop.f32.mrb[0].mxu0
        %v1695 = vpop.f32.mrb[0].mxu0
        %v1696 = vadd.f32 %v1599, %v1695
        %v1697 = vpop.f32.mrb[0].mxu0
        %1698 = vmatprep.mubr.bf16.mxu0 %v813
        %1699 = vmatmul.mubr.bf16.gmra.mrb[0].mxu0 %v812
        %v1700 = vpop.f32.mrb[0].mxu0
        %v1701 = vadd.f32 %v1604, %v1700
        %v1702 = vpop.f32.mrb[0].mxu0
        %v1703 = vpop.f32.mrb[0].mxu0
        %v1704 = vadd.f32 %v1607, %v1703
        %v1705 = vpop.f32.mrb[0].mxu0
        %1706 = vdwg.mxu0
        %1707 = vmatprep.subr.bf16.mxu0 0
        %1708 = vmatpush1.bf16.msra.mxu0 %v1239
        %1709 = vmatprep.subr.bf16.mxu0 0
        %1710 = vmatpush1.bf16.msra.mxu0 %v1240
        %1711 = vmatprep.subr.bf16.mxu0 0
        %1712 = vmatpush1.bf16.msra.mxu0 %v1241
        %1713 = vmatprep.subr.bf16.mxu0 0
        %1714 = vmatpush1.bf16.msra.mxu0 %v1242
        %1715 = vmatprep.subr.bf16.mxu0 0
        %1716 = vmatpush1.bf16.msra.mxu0 %v1243
        %1717 = vmatprep.subr.bf16.mxu0 0
        %1718 = vmatpush1.bf16.msra.mxu0 %v1244
        %1719 = vmatprep.subr.bf16.mxu0 0
        %1720 = vmatpush1.bf16.msra.mxu0 %v1245
        %1721 = vmatprep.subr.bf16.mxu0 0
        %1722 = vmatpush1.bf16.msra.mxu0 %v1246
        %1723 = vmatprep.subr.bf16.mxu0 0
        %1724 = vmatpush1.bf16.msra.mxu0 0
        %1725 = vmatprep.subr.bf16.mxu0 0
        %1726 = vmatpush1.bf16.msra.mxu0 0
        %1727 = vmatprep.subr.bf16.mxu0 0
        %1728 = vmatpush1.bf16.msra.mxu0 0
        %1729 = vmatprep.subr.bf16.mxu0 0
        %1730 = vmatpush1.bf16.msra.mxu0 0
        %1731 = vmatprep.subr.bf16.mxu0 0
        %1732 = vmatpush1.bf16.msra.mxu0 0
        %1733 = vmatprep.subr.bf16.mxu0 0
        %1734 = vmatpush1.bf16.msra.mxu0 0
        %1735 = vmatprep.subr.bf16.mxu0 0
        %1736 = vmatpush1.bf16.msra.mxu0 0
        %1737 = vmatprep.subr.bf16.mxu0 0
        %1738 = vmatpush1.bf16.msra.mxu0 0
        %1739 = vmatprep.mubr.bf16.mxu0 0
        %1740 = vmatmul.mubr.bf16.gmra.mrb[0].mxu0 %v751
        %v1741 = vpop.f32.mrb[0].mxu0
        %v1742 = vadd.f32 %v1645, %v1741
        %v1743 = vpop.f32.mrb[0].mxu0
        %v1744 = vpop.f32.mrb[0].mxu0
        %v1745 = vadd.f32 %v1648, %v1744
        %v1746 = vpop.f32.mrb[0].mxu0
        %1747 = vmatprep.mubr.bf16.mxu0 0
        %1748 = vmatmul.mubr.bf16.gmra.mrb[0].mxu0 %v760
        %v1749 = vpop.f32.mrb[0].mxu0
        %v1750 = vadd.f32 %v1653, %v1749
        %v1751 = vpop.f32.mrb[0].mxu0
        %v1752 = vpop.f32.mrb[0].mxu0
        %v1753 = vadd.f32 %v1656, %v1752
        %v1754 = vpop.f32.mrb[0].mxu0
        %1755 = vmatprep.mubr.bf16.mxu0 0
        %1756 = vmatmul.mubr.bf16.gmra.mrb[0].mxu0 %v769
        %v1757 = vpop.f32.mrb[0].mxu0
        %v1758 = vadd.f32 %v1661, %v1757
        %v1759 = vpop.f32.mrb[0].mxu0
        %v1760 = vpop.f32.mrb[0].mxu0
        %v1761 = vadd.f32 %v1664, %v1760
        %v1762 = vpop.f32.mrb[0].mxu0
        %1763 = vmatprep.mubr.bf16.mxu0 0
        %1764 = vmatmul.mubr.bf16.gmra.mrb[0].mxu0 %v778
        %v1765 = vpop.f32.mrb[0].mxu0
        %v1766 = vadd.f32 %v1669, %v1765
        %v1767 = vpop.f32.mrb[0].mxu0
        %v1768 = vpop.f32.mrb[0].mxu0
        %v1769 = vadd.f32 %v1672, %v1768
        %v1770 = vpop.f32.mrb[0].mxu0
        %1771 = vmatprep.mubr.bf16.mxu0 0
        %1772 = vmatmul.mubr.bf16.gmra.mrb[0].mxu0 %v787
        %v1773 = vpop.f32.mrb[0].mxu0
        %v1774 = vadd.f32 %v1677, %v1773
        %v1775 = vpop.f32.mrb[0].mxu0
        %v1776 = vpop.f32.mrb[0].mxu0
        %v1777 = vadd.f32 %v1680, %v1776
        %v1778 = vpop.f32.mrb[0].mxu0
        %1779 = vmatprep.mubr.bf16.mxu0 0
        %1780 = vmatmul.mubr.bf16.gmra.mrb[0].mxu0 %v796
        %v1781 = vpop.f32.mrb[0].mxu0
        %v1782 = vadd.f32 %v1685, %v1781
        %v1783 = vpop.f32.mrb[0].mxu0
        %v1784 = vpop.f32.mrb[0].mxu0
        %v1785 = vadd.f32 %v1688, %v1784
        %v1786 = vpop.f32.mrb[0].mxu0
        %1787 = vmatprep.mubr.bf16.mxu0 0
        %1788 = vmatmul.mubr.bf16.gmra.mrb[0].mxu0 %v805
        %v1789 = vpop.f32.mrb[0].mxu0
        %v1790 = vadd.f32 %v1693, %v1789
        %v1791 = vpop.f32.mrb[0].mxu0
        %v1792 = vpop.f32.mrb[0].mxu0
        %v1793 = vadd.f32 %v1696, %v1792
        %v1794 = vpop.f32.mrb[0].mxu0
        %1795 = vmatprep.mubr.bf16.mxu0 0
        %1796 = vmatmul.mubr.bf16.gmra.mrb[0].mxu0 %v814
        %v1797 = vpop.f32.mrb[0].mxu0
        %v1798 = vadd.f32 %v1701, %v1797
        %v1799 = vpop.f32.mrb[0].mxu0
        %v1800 = vpop.f32.mrb[0].mxu0
        %v1801 = vadd.f32 %v1704, %v1800
        %v1802 = vpop.f32.mrb[0].mxu0
        %1803 = vdwg.mxu0
        %v1804 = vmax.f32 %v1742, 0.0
        %v1805 = vmax.f32 %v1745, 0.0
        %v1806 = vmax.f32 %v1750, 0.0
        %v1807 = vmax.f32 %v1753, 0.0
        %v1808 = vmax.f32 %v1758, 0.0
        %v1809 = vmax.f32 %v1761, 0.0
        %v1810 = vmax.f32 %v1766, 0.0
        %v1811 = vmax.f32 %v1769, 0.0
        %v1812 = vmax.f32 %v1774, 0.0
        %v1813 = vmax.f32 %v1777, 0.0
        %v1814 = vmax.f32 %v1782, 0.0
        %v1815 = vmax.f32 %v1785, 0.0
        %v1816 = vmax.f32 %v1790, 0.0
        %v1817 = vmax.f32 %v1793, 0.0
        %v1818 = vmax.f32 %v1798, 0.0
        %v1819 = vmax.f32 %v1801, 0.0
        %v1820 = vpack.c.bf16 %v1805, %v1804
        %v1821 = vpack.c.bf16 %v1807, %v1806
        %v1822 = vpack.c.bf16 %v1809, %v1808
        %v1823 = vpack.c.bf16 %v1811, %v1810
        %v1824 = vpack.c.bf16 %v1813, %v1812
        %v1825 = vpack.c.bf16 %v1815, %v1814
        %v1826 = vpack.c.bf16 %v1817, %v1816
        %v1827 = vpack.c.bf16 %v1819, %v1818
        %v1836 = vunpack.c.l.b16 %v1820
        %v1837 = vunpack.c.h.b16 %v1820
        %v1838 = vunpack.c.l.b16 %v1821
        %v1839 = vunpack.c.h.b16 %v1821
        %v1840 = vunpack.c.l.b16 %v1822
        %v1841 = vunpack.c.h.b16 %v1822
        %v1842 = vunpack.c.l.b16 %v1823
        %v1843 = vunpack.c.h.b16 %v1823
        %v1844 = vunpack.c.l.b16 %v1824
        %v1845 = vunpack.c.h.b16 %v1824
        %v1846 = vunpack.c.l.b16 %v1825
        %v1847 = vunpack.c.h.b16 %v1825
        %v1848 = vunpack.c.l.b16 %v1826
        %v1849 = vunpack.c.h.b16 %v1826
        %v1850 = vunpack.c.l.b16 %v1827
        %v1851 = vunpack.c.h.b16 %v1827
        %v1852 = vpack.c.b16 %v1836, %v1836
        %v1853 = vpack.c.b16 %v1837, %v1837
        %v1854 = vpack.c.b16 %v1838, %v1838
        %v1855 = vpack.c.b16 %v1839, %v1839
        %v1856 = vpack.c.b16 %v1840, %v1840
        %v1857 = vpack.c.b16 %v1841, %v1841
        %v1858 = vpack.c.b16 %v1842, %v1842
        %v1859 = vpack.c.b16 %v1843, %v1843
        %v1860 = vpack.c.b16 %v1844, %v1844
        %v1861 = vpack.c.b16 %v1845, %v1845
        %v1862 = vpack.c.b16 %v1846, %v1846
        %v1863 = vpack.c.b16 %v1847, %v1847
        %v1864 = vpack.c.b16 %v1848, %v1848
        %v1865 = vpack.c.b16 %v1849, %v1849
        %v1866 = vpack.c.b16 %v1850, %v1850
        %v1867 = vpack.c.b16 %v1851, %v1851
        %1884 = vst [vmem:[%s272] sm:$0xf] %v1852
        %1885 = vst [vmem:[%s272 + $0x4] sm:$0xf] %v1853
        %1886 = vst [vmem:[%s272 + $0x8] sm:$0xf] %v1854
        %1887 = vst [vmem:[%s272 + $0xc] sm:$0xf] %v1855
        %1888 = vst [vmem:[%s272 + $0x10] sm:$0xf] %v1856
        %1889 = vst [vmem:[%s272 + $0x14] sm:$0xf] %v1857
        %1890 = vst [vmem:[%s272 + $0x18] sm:$0xf] %v1858
        %1891 = vst [vmem:[%s272 + $0x1c] sm:$0xf] %v1859
        %1892 = vst [vmem:[%s272 + $0x20] sm:$0xf] %v1860
        %1893 = vst [vmem:[%s272 + $0x24] sm:$0xf] %v1861
        %1894 = vst [vmem:[%s272 + $0x28] sm:$0xf] %v1862
        %1895 = vst [vmem:[%s272 + $0x2c] sm:$0xf] %v1863
        %1896 = vst [vmem:[%s272 + $0x30] sm:$0xf] %v1864
        %1897 = vst [vmem:[%s272 + $0x34] sm:$0xf] %v1865
        %1898 = vst [vmem:[%s272 + $0x38] sm:$0xf] %v1866
        %1899 = vst [vmem:[%s272 + $0x3c] sm:$0xf] %v1867
        %s1900 = sand.u32 %s131, 1
        %s1901 = sand.u32 %s131, 1
        %s1902 = smul.addr %s1901, 64
        %s1903 = scalar_lea.vmem [#allocation6], %s1902
        // Predicated region
        $region41: #{cnn_forward.12} parent=31 // pred_check
          %p1904 = pneg %p141
        $region42: #{cnn_forward.12} parent=31 // pred_check_branch
          %1906 = sbr.rel (%p1904) target = $region44
        $region43: #{cnn_forward.12} parent=31 // pred_region
          %s1907 = smul.u32 16, %s25
          %s1908 = smul.addr %s1907, 2
          %s1909 = sadd.s32 %s26, %s1908
          %s1910 = smul.addr %s1909, 4
          %s1911 = scalar_lea.vmem %s3, %s1910
          // Predicated region
          $region45: #{cnn_forward.12} parent=43 // pred_check
            _
          $region46: #{cnn_forward.12} parent=43 // pred_check_branch
            %1913 = sbr.rel (0) target = $region48
          $region47: #{cnn_forward.12} parent=43 // pred_region
            // Predicated region
            $region49: #{cnn_forward.12} parent=47 // pred_check
              _
            $region50: #{cnn_forward.12} parent=47 // pred_check_branch
              %1915 = sbr.rel target = $region52
            $region51: #{cnn_forward.12} parent=47 // pred_region
              // Predicated region
              $region64: #{cnn_forward.12} parent=51 // pred_check
                _
              $region65: #{cnn_forward.12} parent=51 // pred_check_branch
                %1960 = sbr.rel (0) target = $region67
              $region66: #{cnn_forward.12} parent=51 // pred_region
                loop: start=0, step=1, limit=1
                $region68: #{cnn_forward.12} parent=66 // loop_pre_header
                  _
                $region69: #{cnn_forward.12} parent=66 // loop_header
                  %s1962 = sphi 0, %s1966
                  %p1963 = scmp.ge.s32.totalorder %s1962, 1
                  %s1967 = sphi %s1903, %s1903
                  %s1968 = sphi %s1911, %s1911
                $region70: #{cnn_forward.12} parent=66 // loop_header_branch
                  %1965 = sbr.rel (%p1963) target = $region74
                $region71: #{cnn_forward.12} parent=66 // loop_body
                  _
                $region72: #{cnn_forward.12} parent=66 // loop_footer
                  %s1966 = sadd.s32 1, %s1962
                $region73: #{cnn_forward.12} parent=66 // loop_footer_branch
                  %1961 = sbr.rel target = $region69
                $region74: #{cnn_forward.12} parent=66 // loop_exit
                  _
                loop: start=0, step=1, limit=1
                $region75: #{cnn_forward.12} parent=66 // loop_pre_header
                  _
                $region76: #{cnn_forward.12} parent=66 // loop_header
                  %s1971 = sphi 0, %s1975
                  %p1972 = scmp.ge.s32.totalorder %s1971, 1
                  %s1976 = sphi %s1903, %s1903
                  %s1977 = sphi %s1911, %s1911
                $region77: #{cnn_forward.12} parent=66 // loop_header_branch
                  %1974 = sbr.rel (%p1972) target = $region81
                $region78: #{cnn_forward.12} parent=66 // loop_body
                  %v1978 = vld [vmem:[%s1976] sm:$0xf]
                  %1979 = vst [vmem:[%s1977] sm:$0xf] %v1978
                  %v1980 = vld [vmem:[%s1976 + $0x4] sm:$0xf]
                  %1981 = vst [vmem:[%s1977 + $0x8] sm:$0xf] %v1980
                  %v1982 = vld [vmem:[%s1976 + $0x8] sm:$0xf]
                  %1983 = vst [vmem:[%s1977 + $0x10] sm:$0xf] %v1982
                  %v1984 = vld [vmem:[%s1976 + $0xc] sm:$0xf]
                  %1985 = vst [vmem:[%s1977 + $0x18] sm:$0xf] %v1984
                  %v1986 = vld [vmem:[%s1976 + $0x10] sm:$0xf]
                  %1987 = vst [vmem:[%s1977 + $0x20] sm:$0xf] %v1986
                  %v1988 = vld [vmem:[%s1976 + $0x14] sm:$0xf]
                  %1989 = vst [vmem:[%s1977 + $0x28] sm:$0xf] %v1988
                  %v1990 = vld [vmem:[%s1976 + $0x18] sm:$0xf]
                  %1991 = vst [vmem:[%s1977 + $0x30] sm:$0xf] %v1990
                  %v1992 = vld [vmem:[%s1976 + $0x1c] sm:$0xf]
                  %1993 = vst [vmem:[%s1977 + $0x38] sm:$0xf] %v1992
                  %v1994 = vld [vmem:[%s1976 + $0x20] sm:$0xf]
                  %1995 = vst [vmem:[%s1977 + $0x40] sm:$0xf] %v1994
                  %v1996 = vld [vmem:[%s1976 + $0x24] sm:$0xf]
                  %1997 = vst [vmem:[%s1977 + $0x48] sm:$0xf] %v1996
                  %v1998 = vld [vmem:[%s1976 + $0x28] sm:$0xf]
                  %1999 = vst [vmem:[%s1977 + $0x50] sm:$0xf] %v1998
                  %v2000 = vld [vmem:[%s1976 + $0x2c] sm:$0xf]
                  %2001 = vst [vmem:[%s1977 + $0x58] sm:$0xf] %v2000
                  %v2002 = vld [vmem:[%s1976 + $0x30] sm:$0xf]
                  %2003 = vst [vmem:[%s1977 + $0x60] sm:$0xf] %v2002
                  %v2004 = vld [vmem:[%s1976 + $0x34] sm:$0xf]
                  %2005 = vst [vmem:[%s1977 + $0x68] sm:$0xf] %v2004
                  %v2006 = vld [vmem:[%s1976 + $0x38] sm:$0xf]
                  %2007 = vst [vmem:[%s1977 + $0x70] sm:$0xf] %v2006
                  %v2008 = vld [vmem:[%s1976 + $0x3c] sm:$0xf]
                  %2009 = vst [vmem:[%s1977 + $0x78] sm:$0xf] %v2008
                $region79: #{cnn_forward.12} parent=66 // loop_footer
                  %s1975 = sadd.s32 1, %s1971
                $region80: #{cnn_forward.12} parent=66 // loop_footer_branch
                  %1970 = sbr.rel target = $region76
                $region81: #{cnn_forward.12} parent=66 // loop_exit
                  _
              $region67: #{cnn_forward.12} parent=51 // pred_fallthru
                _
            $region52: #{cnn_forward.12} parent=47 // pred_fallthru
              _
            // Predicated region
            $region53: #{cnn_forward.12} parent=47 // pred_check
              _
            $region54: #{cnn_forward.12} parent=47 // pred_check_branch
              %1917 = sbr.rel (0) target = $region56
            $region55: #{cnn_forward.12} parent=47 // pred_region
              loop: start=0, step=1, limit=1
              $region57: #{cnn_forward.12} parent=55 // loop_pre_header
                _
              $region58: #{cnn_forward.12} parent=55 // loop_header
                %s1920 = sphi 0, %s1924
                %p1921 = scmp.ge.s32.totalorder %s1920, 1
                %s1925 = sphi %s1903, %s1903
                %s1926 = sphi %s1911, %s1911
              $region59: #{cnn_forward.12} parent=55 // loop_header_branch
                %1923 = sbr.rel (%p1921) target = $region63
              $region60: #{cnn_forward.12} parent=55 // loop_body
                %v1927 = vld [vmem:[%s1925] sm:$0xf]
                %1928 = vst [vmem:[%s1926] sm:$0xf] %v1927
                %v1929 = vld [vmem:[%s1925 + $0x4] sm:$0xf]
                %1930 = vst [vmem:[%s1926 + $0x8] sm:$0xf] %v1929
                %v1931 = vld [vmem:[%s1925 + $0x8] sm:$0xf]
                %1932 = vst [vmem:[%s1926 + $0x10] sm:$0xf] %v1931
                %v1933 = vld [vmem:[%s1925 + $0xc] sm:$0xf]
                %1934 = vst [vmem:[%s1926 + $0x18] sm:$0xf] %v1933
                %v1935 = vld [vmem:[%s1925 + $0x10] sm:$0xf]
                %1936 = vst [vmem:[%s1926 + $0x20] sm:$0xf] %v1935
                %v1937 = vld [vmem:[%s1925 + $0x14] sm:$0xf]
                %1938 = vst [vmem:[%s1926 + $0x28] sm:$0xf] %v1937
                %v1939 = vld [vmem:[%s1925 + $0x18] sm:$0xf]
                %1940 = vst [vmem:[%s1926 + $0x30] sm:$0xf] %v1939
                %v1941 = vld [vmem:[%s1925 + $0x1c] sm:$0xf]
                %1942 = vst [vmem:[%s1926 + $0x38] sm:$0xf] %v1941
                %v1943 = vld [vmem:[%s1925 + $0x20] sm:$0xf]
                %1944 = vst [vmem:[%s1926 + $0x40] sm:$0xf] %v1943
                %v1945 = vld [vmem:[%s1925 + $0x24] sm:$0xf]
                %1946 = vst [vmem:[%s1926 + $0x48] sm:$0xf] %v1945
                %v1947 = vld [vmem:[%s1925 + $0x28] sm:$0xf]
                %1948 = vst [vmem:[%s1926 + $0x50] sm:$0xf] %v1947
                %v1949 = vld [vmem:[%s1925 + $0x2c] sm:$0xf]
                %1950 = vst [vmem:[%s1926 + $0x58] sm:$0xf] %v1949
                %v1951 = vld [vmem:[%s1925 + $0x30] sm:$0xf]
                %1952 = vst [vmem:[%s1926 + $0x60] sm:$0xf] %v1951
                %v1953 = vld [vmem:[%s1925 + $0x34] sm:$0xf]
                %1954 = vst [vmem:[%s1926 + $0x68] sm:$0xf] %v1953
                %v1955 = vld [vmem:[%s1925 + $0x38] sm:$0xf]
                %1956 = vst [vmem:[%s1926 + $0x70] sm:$0xf] %v1955
                %v1957 = vld [vmem:[%s1925 + $0x3c] sm:$0xf]
                %1958 = vst [vmem:[%s1926 + $0x78] sm:$0xf] %v1957
              $region61: #{cnn_forward.12} parent=55 // loop_footer
                %s1924 = sadd.s32 1, %s1920
              $region62: #{cnn_forward.12} parent=55 // loop_footer_branch
                %1919 = sbr.rel target = $region58
              $region63: #{cnn_forward.12} parent=55 // loop_exit
                _
            $region56: #{cnn_forward.12} parent=47 // pred_fallthru
              _
          $region48: #{cnn_forward.12} parent=43 // pred_fallthru
            _
          %2010 = vnop
        $region44: #{cnn_forward.12} parent=31 // pred_fallthru
          _
      $region32: #{cnn_forward.12} parent=5 // pred_fallthru
        _
      %p2011 = scmp.le.s32.totalorder 2, %s15
      // Predicated region
      $region82: #{cnn_forward.12} parent=5 // pred_check
        %p2012 = pneg %p2011
      $region83: #{cnn_forward.12} parent=5 // pred_check_branch
        %2014 = sbr.rel (%p2012) target = $region85
      $region84: #{cnn_forward.12} parent=5 // pred_region
        %s2015 = ssub.s32 %s15, 2
        // Predicated region
        $region86: #{cnn_forward.12} parent=84 // pred_check
          %p2016 = pneg %p147
        $region87: #{cnn_forward.12} parent=84 // pred_check_branch
          %2018 = sbr.rel (%p2016) target = $region89
        $region88: #{cnn_forward.12} parent=84 // pred_region
          %s2019 = sand.u32 %s132, 1
          %s2020 = sand.u32 %s132, 1
          %s2021 = smul.addr %s2020, 64
          %s2022 = scalar_lea.vmem [#allocation6], %s2021
        $region89: #{cnn_forward.12} parent=84 // pred_fallthru
          _
      $region85: #{cnn_forward.12} parent=5 // pred_fallthru
        _
    $region6: #{cnn_forward.12} parent=1 // loop_footer
      %s19 = sadd.s32 1, %s15
    $region7: #{cnn_forward.12} parent=1 // loop_footer_branch
      %14 = sbr.rel target = $region3
    $region8: #{cnn_forward.12} parent=1 // loop_exit
      _
    %2023 = vsyncpa [#allocation3], 1
    %s2024 = scalar_lea.sflag [#allocation3], 1
    %2025 = vsyncpa %s2024, 1
    %2026 = vsyncpa [#allocation5], 1
    %s2027 = scalar_lea.sflag [#allocation5], 1
    %2028 = vsyncpa %s2027, 1

// kernel: cnn_forward.15
$region0: #{cnn_forward.15}
  #allocation0 [shape = 'u32[]', space=smem, size = 0x4, offset = 0x4, fixed_abs, tag = 'smem constant byte address 0x4 - core index']
  #allocation1 [shape = 'u32[144,128]{1,0:T(1,128)}', space=vmem, size = 0x12000, scoped, tag = 'internal scratch']
  %s0 = inlined_call_operand.vmem [shape: bf16[2,2048], index: 0, kind: input, shape index: {}]
  %s1 = inlined_call_operand.vmem [shape: bf16[2048,128], index: 1, kind: input, shape index: {}]
  %s2 = inlined_call_operand.vmem [shape: f32[1,128], index: 2, kind: input, shape index: {}]
  %s3 = inlined_call_operand.vmem [shape: f32[2,128], index: 3, kind: output, shape index: {}]
  %s4 = sld [smem:[#allocation0]]
  $region22: #{cnn_forward.15} parent=0
    _
  %s6 = ssub.s32 1, %s4
  %s7 = scalar_select 0, %s6, %s4
  // Predicated region
  $region2: #{cnn_forward.15} parent=0 // pred_check
    _
  $region3: #{cnn_forward.15} parent=0 // pred_check_branch
    %9 = sbr.rel (0) target = $region5
  $region4: #{cnn_forward.15} parent=0 // pred_region
    _
  $region5: #{cnn_forward.15} parent=0 // pred_fallthru
    _
  // Predicated region
  $region6: #{cnn_forward.15} parent=0 // pred_check
    _
  $region7: #{cnn_forward.15} parent=0 // pred_check_branch
    %11 = sbr.rel (0) target = $region9
  $region8: #{cnn_forward.15} parent=0 // pred_region
    _
  $region9: #{cnn_forward.15} parent=0 // pred_fallthru
    _
  // Predicated region
  $region10: #{cnn_forward.15} parent=0 // pred_check
    _
  $region11: #{cnn_forward.15} parent=0 // pred_check_branch
    %13 = sbr.rel (0) target = $region13
  $region12: #{cnn_forward.15} parent=0 // pred_region
    _
  $region13: #{cnn_forward.15} parent=0 // pred_fallthru
    _
  %v15 = vld [vmem:[%s0] sm:$0xff]
  %v16 = vld [vmem:[%s0 + $0x8] sm:$0xff]
  %v17 = vld [vmem:[%s1] sm:$0xf]
  %v18 = vld [vmem:[%s1 + $0x4] sm:$0xf]
  %v19 = vld [vmem:[%s1 + $0x8] sm:$0xf]
  %v20 = vld [vmem:[%s1 + $0xc] sm:$0xf]
  %v21 = vld [vmem:[%s1 + $0x10] sm:$0xf]
  %v22 = vld [vmem:[%s1 + $0x14] sm:$0xf]
  %v23 = vld [vmem:[%s1 + $0x18] sm:$0xf]
  %v24 = vld [vmem:[%s1 + $0x1c] sm:$0xf]
  %v25 = vld [vmem:[%s1 + $0x20] sm:$0xf]
  %v26 = vld [vmem:[%s1 + $0x24] sm:$0xf]
  %v27 = vld [vmem:[%s1 + $0x28] sm:$0xf]
  %v28 = vld [vmem:[%s1 + $0x2c] sm:$0xf]
  %v29 = vld [vmem:[%s1 + $0x30] sm:$0xf]
  %v30 = vld [vmem:[%s1 + $0x34] sm:$0xf]
  %v31 = vld [vmem:[%s1 + $0x38] sm:$0xf]
  %v32 = vld [vmem:[%s1 + $0x3c] sm:$0xf]
  %v33 = vld [vmem:[%s1 + $0x40] sm:$0xf]
  %v34 = vld [vmem:[%s1 + $0x44] sm:$0xf]
  %v35 = vld [vmem:[%s1 + $0x48] sm:$0xf]
  %v36 = vld [vmem:[%s1 + $0x4c] sm:$0xf]
  %v37 = vld [vmem:[%s1 + $0x50] sm:$0xf]
  %v38 = vld [vmem:[%s1 + $0x54] sm:$0xf]
  %v39 = vld [vmem:[%s1 + $0x58] sm:$0xf]
  %v40 = vld [vmem:[%s1 + $0x5c] sm:$0xf]
  %v41 = vld [vmem:[%s1 + $0x60] sm:$0xf]
  %v42 = vld [vmem:[%s1 + $0x64] sm:$0xf]
  %v43 = vld [vmem:[%s1 + $0x68] sm:$0xf]
  %v44 = vld [vmem:[%s1 + $0x6c] sm:$0xf]
  %v45 = vld [vmem:[%s1 + $0x70] sm:$0xf]
  %v46 = vld [vmem:[%s1 + $0x74] sm:$0xf]
  %v47 = vld [vmem:[%s1 + $0x78] sm:$0xf]
  %v48 = vld [vmem:[%s1 + $0x7c] sm:$0xf]
  %v49 = vld [vmem:[%s1 + $0x80] sm:$0xf]
  %v50 = vld [vmem:[%s1 + $0x84] sm:$0xf]
  %v51 = vld [vmem:[%s1 + $0x88] sm:$0xf]
  %v52 = vld [vmem:[%s1 + $0x8c] sm:$0xf]
  %v53 = vld [vmem:[%s1 + $0x90] sm:$0xf]
  %v54 = vld [vmem:[%s1 + $0x94] sm:$0xf]
  %v55 = vld [vmem:[%s1 + $0x98] sm:$0xf]
  %v56 = vld [vmem:[%s1 + $0x9c] sm:$0xf]
  %v57 = vld [vmem:[%s1 + $0xa0] sm:$0xf]
  %v58 = vld [vmem:[%s1 + $0xa4] sm:$0xf]
  %v59 = vld [vmem:[%s1 + $0xa8] sm:$0xf]
  %v60 = vld [vmem:[%s1 + $0xac] sm:$0xf]
  %v61 = vld [vmem:[%s1 + $0xb0] sm:$0xf]
  %v62 = vld [vmem:[%s1 + $0xb4] sm:$0xf]
  %v63 = vld [vmem:[%s1 + $0xb8] sm:$0xf]
  %v64 = vld [vmem:[%s1 + $0xbc] sm:$0xf]
  %v65 = vld [vmem:[%s1 + $0xc0] sm:$0xf]
  %v66 = vld [vmem:[%s1 + $0xc4] sm:$0xf]
  %v67 = vld [vmem:[%s1 + $0xc8] sm:$0xf]
  %v68 = vld [vmem:[%s1 + $0xcc] sm:$0xf]
  %v69 = vld [vmem:[%s1 + $0xd0] sm:$0xf]
  %v70 = vld [vmem:[%s1 + $0xd4] sm:$0xf]
  %v71 = vld [vmem:[%s1 + $0xd8] sm:$0xf]
  %v72 = vld [vmem:[%s1 + $0xdc] sm:$0xf]
  %v73 = vld [vmem:[%s1 + $0xe0] sm:$0xf]
  %v74 = vld [vmem:[%s1 + $0xe4] sm:$0xf]
  %v75 = vld [vmem:[%s1 + $0xe8] sm:$0xf]
  %v76 = vld [vmem:[%s1 + $0xec] sm:$0xf]
  %v77 = vld [vmem:[%s1 + $0xf0] sm:$0xf]
  %v78 = vld [vmem:[%s1 + $0xf4] sm:$0xf]
  %v79 = vld [vmem:[%s1 + $0xf8] sm:$0xf]
  %v80 = vld [vmem:[%s1 + $0xfc] sm:$0xf]
  %v81 = vld [vmem:[%s1 + $0x100] sm:$0xf]
  %v82 = vld [vmem:[%s1 + $0x104] sm:$0xf]
  %v83 = vld [vmem:[%s1 + $0x108] sm:$0xf]
  %v84 = vld [vmem:[%s1 + $0x10c] sm:$0xf]
  %v85 = vld [vmem:[%s1 + $0x110] sm:$0xf]
  %v86 = vld [vmem:[%s1 + $0x114] sm:$0xf]
  %v87 = vld [vmem:[%s1 + $0x118] sm:$0xf]
  %v88 = vld [vmem:[%s1 + $0x11c] sm:$0xf]
  %v89 = vld [vmem:[%s1 + $0x120] sm:$0xf]
  %v90 = vld [vmem:[%s1 + $0x124] sm:$0xf]
  %v91 = vld [vmem:[%s1 + $0x128] sm:$0xf]
  %v92 = vld [vmem:[%s1 + $0x12c] sm:$0xf]
  %v93 = vld [vmem:[%s1 + $0x130] sm:$0xf]
  %v94 = vld [vmem:[%s1 + $0x134] sm:$0xf]
  %v95 = vld [vmem:[%s1 + $0x138] sm:$0xf]
  %v96 = vld [vmem:[%s1 + $0x13c] sm:$0xf]
  %v97 = vld [vmem:[%s1 + $0x140] sm:$0xf]
  %v98 = vld [vmem:[%s1 + $0x144] sm:$0xf]
  %v99 = vld [vmem:[%s1 + $0x148] sm:$0xf]
  %v100 = vld [vmem:[%s1 + $0x14c] sm:$0xf]
  %v101 = vld [vmem:[%s1 + $0x150] sm:$0xf]
  %v102 = vld [vmem:[%s1 + $0x154] sm:$0xf]
  %v103 = vld [vmem:[%s1 + $0x158] sm:$0xf]
  %v104 = vld [vmem:[%s1 + $0x15c] sm:$0xf]
  %v105 = vld [vmem:[%s1 + $0x160] sm:$0xf]
  %v106 = vld [vmem:[%s1 + $0x164] sm:$0xf]
  %v107 = vld [vmem:[%s1 + $0x168] sm:$0xf]
  %v108 = vld [vmem:[%s1 + $0x16c] sm:$0xf]
  %v109 = vld [vmem:[%s1 + $0x170] sm:$0xf]
  %v110 = vld [vmem:[%s1 + $0x174] sm:$0xf]
  %v111 = vld [vmem:[%s1 + $0x178] sm:$0xf]
  %v112 = vld [vmem:[%s1 + $0x17c] sm:$0xf]
  %v113 = vld [vmem:[%s1 + $0x180] sm:$0xf]
  %v114 = vld [vmem:[%s1 + $0x184] sm:$0xf]
  %v115 = vld [vmem:[%s1 + $0x188] sm:$0xf]
  %v116 = vld [vmem:[%s1 + $0x18c] sm:$0xf]
  %v117 = vld [vmem:[%s1 + $0x190] sm:$0xf]
  %v118 = vld [vmem:[%s1 + $0x194] sm:$0xf]
  %v119 = vld [vmem:[%s1 + $0x198] sm:$0xf]
  %v120 = vld [vmem:[%s1 + $0x19c] sm:$0xf]
  %v121 = vld [vmem:[%s1 + $0x1a0] sm:$0xf]
  %v122 = vld [vmem:[%s1 + $0x1a4] sm:$0xf]
  %v123 = vld [vmem:[%s1 + $0x1a8] sm:$0xf]
  %v124 = vld [vmem:[%s1 + $0x1ac] sm:$0xf]
  %v125 = vld [vmem:[%s1 + $0x1b0] sm:$0xf]
  %v126 = vld [vmem:[%s1 + $0x1b4] sm:$0xf]
  %v127 = vld [vmem:[%s1 + $0x1b8] sm:$0xf]
  %v128 = vld [vmem:[%s1 + $0x1bc] sm:$0xf]
  %v129 = vld [vmem:[%s1 + $0x1c0] sm:$0xf]
  %v130 = vld [vmem:[%s1 + $0x1c4] sm:$0xf]
  %v131 = vld [vmem:[%s1 + $0x1c8] sm:$0xf]
  %v132 = vld [vmem:[%s1 + $0x1cc] sm:$0xf]
  %v133 = vld [vmem:[%s1 + $0x1d0] sm:$0xf]
  %v134 = vld [vmem:[%s1 + $0x1d4] sm:$0xf]
  %v135 = vld [vmem:[%s1 + $0x1d8] sm:$0xf]
  %v136 = vld [vmem:[%s1 + $0x1dc] sm:$0xf]
  %v137 = vld [vmem:[%s1 + $0x1e0] sm:$0xf]
  %v138 = vld [vmem:[%s1 + $0x1e4] sm:$0xf]
  %v139 = vld [vmem:[%s1 + $0x1e8] sm:$0xf]
  %v140 = vld [vmem:[%s1 + $0x1ec] sm:$0xf]
  %v141 = vld [vmem:[%s1 + $0x1f0] sm:$0xf]
  %v142 = vld [vmem:[%s1 + $0x1f4] sm:$0xf]
  %v143 = vld [vmem:[%s1 + $0x1f8] sm:$0xf]
  %v144 = vld [vmem:[%s1 + $0x1fc] sm:$0xf]
  %v145 = vld [vmem:[%s1 + $0x200] sm:$0xf]
  %v146 = vld [vmem:[%s1 + $0x204] sm:$0xf]
  %v147 = vld [vmem:[%s1 + $0x208] sm:$0xf]
  %v148 = vld [vmem:[%s1 + $0x20c] sm:$0xf]
  %v149 = vld [vmem:[%s1 + $0x210] sm:$0xf]
  %v150 = vld [vmem:[%s1 + $0x214] sm:$0xf]
  %v151 = vld [vmem:[%s1 + $0x218] sm:$0xf]
  %v152 = vld [vmem:[%s1 + $0x21c] sm:$0xf]
  %v153 = vld [vmem:[%s1 + $0x220] sm:$0xf]
  %v154 = vld [vmem:[%s1 + $0x224] sm:$0xf]
  %v155 = vld [vmem:[%s1 + $0x228] sm:$0xf]
  %v156 = vld [vmem:[%s1 + $0x22c] sm:$0xf]
  %v157 = vld [vmem:[%s1 + $0x230] sm:$0xf]
  %v158 = vld [vmem:[%s1 + $0x234] sm:$0xf]
  %v159 = vld [vmem:[%s1 + $0x238] sm:$0xf]
  %v160 = vld [vmem:[%s1 + $0x23c] sm:$0xf]
  %v161 = vld [vmem:[%s1 + $0x240] sm:$0xf]
  %v162 = vld [vmem:[%s1 + $0x244] sm:$0xf]
  %v163 = vld [vmem:[%s1 + $0x248] sm:$0xf]
  %v164 = vld [vmem:[%s1 + $0x24c] sm:$0xf]
  %v165 = vld [vmem:[%s1 + $0x250] sm:$0xf]
  %v166 = vld [vmem:[%s1 + $0x254] sm:$0xf]
  %v167 = vld [vmem:[%s1 + $0x258] sm:$0xf]
  %v168 = vld [vmem:[%s1 + $0x25c] sm:$0xf]
  %v169 = vld [vmem:[%s1 + $0x260] sm:$0xf]
  %v170 = vld [vmem:[%s1 + $0x264] sm:$0xf]
  %v171 = vld [vmem:[%s1 + $0x268] sm:$0xf]
  %v172 = vld [vmem:[%s1 + $0x26c] sm:$0xf]
  %v173 = vld [vmem:[%s1 + $0x270] sm:$0xf]
  %v174 = vld [vmem:[%s1 + $0x274] sm:$0xf]
  %v175 = vld [vmem:[%s1 + $0x278] sm:$0xf]
  %v176 = vld [vmem:[%s1 + $0x27c] sm:$0xf]
  %v177 = vld [vmem:[%s1 + $0x280] sm:$0xf]
  %v178 = vld [vmem:[%s1 + $0x284] sm:$0xf]
  %v179 = vld [vmem:[%s1 + $0x288] sm:$0xf]
  %v180 = vld [vmem:[%s1 + $0x28c] sm:$0xf]
  %v181 = vld [vmem:[%s1 + $0x290] sm:$0xf]
  %v182 = vld [vmem:[%s1 + $0x294] sm:$0xf]
  %v183 = vld [vmem:[%s1 + $0x298] sm:$0xf]
  %v184 = vld [vmem:[%s1 + $0x29c] sm:$0xf]
  %v185 = vld [vmem:[%s1 + $0x2a0] sm:$0xf]
  %v186 = vld [vmem:[%s1 + $0x2a4] sm:$0xf]
  %v187 = vld [vmem:[%s1 + $0x2a8] sm:$0xf]
  %v188 = vld [vmem:[%s1 + $0x2ac] sm:$0xf]
  %v189 = vld [vmem:[%s1 + $0x2b0] sm:$0xf]
  %v190 = vld [vmem:[%s1 + $0x2b4] sm:$0xf]
  %v191 = vld [vmem:[%s1 + $0x2b8] sm:$0xf]
  %v192 = vld [vmem:[%s1 + $0x2bc] sm:$0xf]
  %v193 = vld [vmem:[%s1 + $0x2c0] sm:$0xf]
  %v194 = vld [vmem:[%s1 + $0x2c4] sm:$0xf]
  %v195 = vld [vmem:[%s1 + $0x2c8] sm:$0xf]
  %v196 = vld [vmem:[%s1 + $0x2cc] sm:$0xf]
  %v197 = vld [vmem:[%s1 + $0x2d0] sm:$0xf]
  %v198 = vld [vmem:[%s1 + $0x2d4] sm:$0xf]
  %v199 = vld [vmem:[%s1 + $0x2d8] sm:$0xf]
  %v200 = vld [vmem:[%s1 + $0x2dc] sm:$0xf]
  %v201 = vld [vmem:[%s1 + $0x2e0] sm:$0xf]
  %v202 = vld [vmem:[%s1 + $0x2e4] sm:$0xf]
  %v203 = vld [vmem:[%s1 + $0x2e8] sm:$0xf]
  %v204 = vld [vmem:[%s1 + $0x2ec] sm:$0xf]
  %v205 = vld [vmem:[%s1 + $0x2f0] sm:$0xf]
  %v206 = vld [vmem:[%s1 + $0x2f4] sm:$0xf]
  %v207 = vld [vmem:[%s1 + $0x2f8] sm:$0xf]
  %v208 = vld [vmem:[%s1 + $0x2fc] sm:$0xf]
  %v209 = vld [vmem:[%s1 + $0x300] sm:$0xf]
  %v210 = vld [vmem:[%s1 + $0x304] sm:$0xf]
  %v211 = vld [vmem:[%s1 + $0x308] sm:$0xf]
  %v212 = vld [vmem:[%s1 + $0x30c] sm:$0xf]
  %v213 = vld [vmem:[%s1 + $0x310] sm:$0xf]
  %v214 = vld [vmem:[%s1 + $0x314] sm:$0xf]
  %v215 = vld [vmem:[%s1 + $0x318] sm:$0xf]
  %v216 = vld [vmem:[%s1 + $0x31c] sm:$0xf]
  %v217 = vld [vmem:[%s1 + $0x320] sm:$0xf]
  %v218 = vld [vmem:[%s1 + $0x324] sm:$0xf]
  %v219 = vld [vmem:[%s1 + $0x328] sm:$0xf]
  %v220 = vld [vmem:[%s1 + $0x32c] sm:$0xf]
  %v221 = vld [vmem:[%s1 + $0x330] sm:$0xf]
  %v222 = vld [vmem:[%s1 + $0x334] sm:$0xf]
  %v223 = vld [vmem:[%s1 + $0x338] sm:$0xf]
  %v224 = vld [vmem:[%s1 + $0x33c] sm:$0xf]
  %v225 = vld [vmem:[%s1 + $0x340] sm:$0xf]
  %v226 = vld [vmem:[%s1 + $0x344] sm:$0xf]
  %v227 = vld [vmem:[%s1 + $0x348] sm:$0xf]
  %v228 = vld [vmem:[%s1 + $0x34c] sm:$0xf]
  %v229 = vld [vmem:[%s1 + $0x350] sm:$0xf]
  %v230 = vld [vmem:[%s1 + $0x354] sm:$0xf]
  %v231 = vld [vmem:[%s1 + $0x358] sm:$0xf]
  %v232 = vld [vmem:[%s1 + $0x35c] sm:$0xf]
  %v233 = vld [vmem:[%s1 + $0x360] sm:$0xf]
  %v234 = vld [vmem:[%s1 + $0x364] sm:$0xf]
  %v235 = vld [vmem:[%s1 + $0x368] sm:$0xf]
  %v236 = vld [vmem:[%s1 + $0x36c] sm:$0xf]
  %v237 = vld [vmem:[%s1 + $0x370] sm:$0xf]
  %v238 = vld [vmem:[%s1 + $0x374] sm:$0xf]
  %v239 = vld [vmem:[%s1 + $0x378] sm:$0xf]
  %v240 = vld [vmem:[%s1 + $0x37c] sm:$0xf]
  %v241 = vld [vmem:[%s1 + $0x380] sm:$0xf]
  %v242 = vld [vmem:[%s1 + $0x384] sm:$0xf]
  %v243 = vld [vmem:[%s1 + $0x388] sm:$0xf]
  %v244 = vld [vmem:[%s1 + $0x38c] sm:$0xf]
  %v245 = vld [vmem:[%s1 + $0x390] sm:$0xf]
  %v246 = vld [vmem:[%s1 + $0x394] sm:$0xf]
  %v247 = vld [vmem:[%s1 + $0x398] sm:$0xf]
  %v248 = vld [vmem:[%s1 + $0x39c] sm:$0xf]
  %v249 = vld [vmem:[%s1 + $0x3a0] sm:$0xf]
  %v250 = vld [vmem:[%s1 + $0x3a4] sm:$0xf]
  %v251 = vld [vmem:[%s1 + $0x3a8] sm:$0xf]
  %v252 = vld [vmem:[%s1 + $0x3ac] sm:$0xf]
  %v253 = vld [vmem:[%s1 + $0x3b0] sm:$0xf]
  %v254 = vld [vmem:[%s1 + $0x3b4] sm:$0xf]
  %v255 = vld [vmem:[%s1 + $0x3b8] sm:$0xf]
  %v256 = vld [vmem:[%s1 + $0x3bc] sm:$0xf]
  %v257 = vld [vmem:[%s1 + $0x3c0] sm:$0xf]
  %v258 = vld [vmem:[%s1 + $0x3c4] sm:$0xf]
  %v259 = vld [vmem:[%s1 + $0x3c8] sm:$0xf]
  %v260 = vld [vmem:[%s1 + $0x3cc] sm:$0xf]
  %v261 = vld [vmem:[%s1 + $0x3d0] sm:$0xf]
  %v262 = vld [vmem:[%s1 + $0x3d4] sm:$0xf]
  %v263 = vld [vmem:[%s1 + $0x3d8] sm:$0xf]
  %v264 = vld [vmem:[%s1 + $0x3dc] sm:$0xf]
  %v265 = vld [vmem:[%s1 + $0x3e0] sm:$0xf]
  %v266 = vld [vmem:[%s1 + $0x3e4] sm:$0xf]
  %v267 = vld [vmem:[%s1 + $0x3e8] sm:$0xf]
  %v268 = vld [vmem:[%s1 + $0x3ec] sm:$0xf]
  %v269 = vld [vmem:[%s1 + $0x3f0] sm:$0xf]
  %v270 = vld [vmem:[%s1 + $0x3f4] sm:$0xf]
  %v271 = vld [vmem:[%s1 + $0x3f8] sm:$0xf]
  %v272 = vld [vmem:[%s1 + $0x3fc] sm:$0xf]
  %v273 = vld [vmem:[%s2] sm:$0x1]
  %v275 = vlaneseq
  %v276 = vshrl.u32 %v275, 7
  %v277 = vsub.s32 0, %v276
  %v278 = vrot.slane %v273, %v277
  %v282 = vcombine.high %v15, %v15
  %v284 = vunpack.c.l.s4 1966171168
  %v285 = vunpack.c.0.s8 %v284
  %v286 = vlaneseq
  %v287 = vshrl.u32 %v286, 7
  %v288 = vsub.s32 %v285, %v287
  %v289 = vrot.slane %v15, %v288
  %v291 = vunpack.c.l.s4 1966171168
  %v292 = vunpack.c.0.s8 %v291
  %v293 = vlaneseq
  %v294 = vshrl.u32 %v293, 7
  %v295 = vsub.s32 %v292, %v294
  %v296 = vrot.slane %v282, %v295
  %v297 = vcombine.high %v289, %v289
  %v298 = vcombine.high %v296, %v296
  %v300 = vunpack.c.l.s4 1966171168
  %v301 = vunpack.c.0.s8 %v300
  %v302 = vlaneseq
  %v303 = vshrl.u32 %v302, 7
  %v304 = vsub.s32 %v301, %v303
  %v305 = vrot.slane %v289, %v304
  %v307 = vunpack.c.l.s4 1966171168
  %v308 = vunpack.c.0.s8 %v307
  %v309 = vlaneseq
  %v310 = vshrl.u32 %v309, 7
  %v311 = vsub.s32 %v308, %v310
  %v312 = vrot.slane %v296, %v311
  %v314 = vunpack.c.l.s4 1966171168
  %v315 = vunpack.c.0.s8 %v314
  %v316 = vlaneseq
  %v317 = vshrl.u32 %v316, 7
  %v318 = vsub.s32 %v315, %v317
  %v319 = vrot.slane %v297, %v318
  %v321 = vunpack.c.l.s4 1966171168
  %v322 = vunpack.c.0.s8 %v321
  %v323 = vlaneseq
  %v324 = vshrl.u32 %v323, 7
  %v325 = vsub.s32 %v322, %v324
  %v326 = vrot.slane %v298, %v325
  %v327 = vcombine.high %v305, %v305
  %v328 = vcombine.high %v312, %v312
  %v329 = vcombine.high %v319, %v319
  %v330 = vcombine.high %v326, %v326
  %v331 = vcombine.high %v16, %v16
  %v333 = vunpack.c.l.s4 1966171168
  %v334 = vunpack.c.0.s8 %v333
  %v335 = vlaneseq
  %v336 = vshrl.u32 %v335, 7
  %v337 = vsub.s32 %v334, %v336
  %v338 = vrot.slane %v16, %v337
  %v340 = vunpack.c.l.s4 1966171168
  %v341 = vunpack.c.0.s8 %v340
  %v342 = vlaneseq
  %v343 = vshrl.u32 %v342, 7
  %v344 = vsub.s32 %v341, %v343
  %v345 = vrot.slane %v331, %v344
  %v346 = vcombine.high %v338, %v338
  %v347 = vcombine.high %v345, %v345
  %v349 = vunpack.c.l.s4 1966171168
  %v350 = vunpack.c.0.s8 %v349
  %v351 = vlaneseq
  %v352 = vshrl.u32 %v351, 7
  %v353 = vsub.s32 %v350, %v352
  %v354 = vrot.slane %v338, %v353
  %v356 = vunpack.c.l.s4 1966171168
  %v357 = vunpack.c.0.s8 %v356
  %v358 = vlaneseq
  %v359 = vshrl.u32 %v358, 7
  %v360 = vsub.s32 %v357, %v359
  %v361 = vrot.slane %v345, %v360
  %v363 = vunpack.c.l.s4 1966171168
  %v364 = vunpack.c.0.s8 %v363
  %v365 = vlaneseq
  %v366 = vshrl.u32 %v365, 7
  %v367 = vsub.s32 %v364, %v366
  %v368 = vrot.slane %v346, %v367
  %v370 = vunpack.c.l.s4 1966171168
  %v371 = vunpack.c.0.s8 %v370
  %v372 = vlaneseq
  %v373 = vshrl.u32 %v372, 7
  %v374 = vsub.s32 %v371, %v373
  %v375 = vrot.slane %v347, %v374
  %v376 = vcombine.high %v354, %v354
  %v377 = vcombine.high %v361, %v361
  %v378 = vcombine.high %v368, %v368
  %v379 = vcombine.high %v375, %v375
  %v652 = vunpack.c.l.b16 %v17
  %v653 = vunpack.c.l.b16 %v18
  %v654 = vunpack.c.l.b16 %v19
  %v655 = vunpack.c.l.b16 %v20
  %v656 = vunpack.c.l.b16 %v21
  %v657 = vunpack.c.l.b16 %v22
  %v658 = vunpack.c.l.b16 %v23
  %v659 = vunpack.c.l.b16 %v24
  %v660 = vunpack.c.l.b16 %v25
  %v661 = vunpack.c.l.b16 %v26
  %v662 = vunpack.c.l.b16 %v27
  %v663 = vunpack.c.l.b16 %v28
  %v664 = vunpack.c.l.b16 %v29
  %v665 = vunpack.c.l.b16 %v30
  %v666 = vunpack.c.l.b16 %v31
  %v667 = vunpack.c.l.b16 %v32
  %v668 = vunpack.c.l.b16 %v33
  %v669 = vunpack.c.l.b16 %v34
  %v670 = vunpack.c.l.b16 %v35
  %v671 = vunpack.c.l.b16 %v36
  %v672 = vunpack.c.l.b16 %v37
  %v673 = vunpack.c.l.b16 %v38
  %v674 = vunpack.c.l.b16 %v39
  %v675 = vunpack.c.l.b16 %v40
  %v676 = vunpack.c.l.b16 %v41
  %v677 = vunpack.c.l.b16 %v42
  %v678 = vunpack.c.l.b16 %v43
  %v679 = vunpack.c.l.b16 %v44
  %v680 = vunpack.c.l.b16 %v45
  %v681 = vunpack.c.l.b16 %v46
  %v682 = vunpack.c.l.b16 %v47
  %v683 = vunpack.c.l.b16 %v48
  %v684 = vunpack.c.l.b16 %v49
  %v685 = vunpack.c.l.b16 %v50
  %v686 = vunpack.c.l.b16 %v51
  %v687 = vunpack.c.l.b16 %v52
  %v688 = vunpack.c.l.b16 %v53
  %v689 = vunpack.c.l.b16 %v54
  %v690 = vunpack.c.l.b16 %v55
  %v691 = vunpack.c.l.b16 %v56
  %v692 = vunpack.c.l.b16 %v57
  %v693 = vunpack.c.l.b16 %v58
  %v694 = vunpack.c.l.b16 %v59
  %v695 = vunpack.c.l.b16 %v60
  %v696 = vunpack.c.l.b16 %v61
  %v697 = vunpack.c.l.b16 %v62
  %v698 = vunpack.c.l.b16 %v63
  %v699 = vunpack.c.l.b16 %v64
  %v700 = vunpack.c.l.b16 %v65
  %v701 = vunpack.c.l.b16 %v66
  %v702 = vunpack.c.l.b16 %v67
  %v703 = vunpack.c.l.b16 %v68
  %v704 = vunpack.c.l.b16 %v69
  %v705 = vunpack.c.l.b16 %v70
  %v706 = vunpack.c.l.b16 %v71
  %v707 = vunpack.c.l.b16 %v72
  %v708 = vunpack.c.l.b16 %v73
  %v709 = vunpack.c.l.b16 %v74
  %v710 = vunpack.c.l.b16 %v75
  %v711 = vunpack.c.l.b16 %v76
  %v712 = vunpack.c.l.b16 %v77
  %v713 = vunpack.c.l.b16 %v78
  %v714 = vunpack.c.l.b16 %v79
  %v715 = vunpack.c.l.b16 %v80
  %v716 = vunpack.c.l.b16 %v81
  %v717 = vunpack.c.l.b16 %v82
  %v718 = vunpack.c.l.b16 %v83
  %v719 = vunpack.c.l.b16 %v84
  %v720 = vunpack.c.l.b16 %v85
  %v721 = vunpack.c.l.b16 %v86
  %v722 = vunpack.c.l.b16 %v87
  %v723 = vunpack.c.l.b16 %v88
  %v724 = vunpack.c.l.b16 %v89
  %v725 = vunpack.c.l.b16 %v90
  %v726 = vunpack.c.l.b16 %v91
  %v727 = vunpack.c.l.b16 %v92
  %v728 = vunpack.c.l.b16 %v93
  %v729 = vunpack.c.l.b16 %v94
  %v730 = vunpack.c.l.b16 %v95
  %v731 = vunpack.c.l.b16 %v96
  %v732 = vunpack.c.l.b16 %v97
  %v733 = vunpack.c.l.b16 %v98
  %v734 = vunpack.c.l.b16 %v99
  %v735 = vunpack.c.l.b16 %v100
  %v736 = vunpack.c.l.b16 %v101
  %v737 = vunpack.c.l.b16 %v102
  %v738 = vunpack.c.l.b16 %v103
  %v739 = vunpack.c.l.b16 %v104
  %v740 = vunpack.c.l.b16 %v105
  %v741 = vunpack.c.l.b16 %v106
  %v742 = vunpack.c.l.b16 %v107
  %v743 = vunpack.c.l.b16 %v108
  %v744 = vunpack.c.l.b16 %v109
  %v745 = vunpack.c.l.b16 %v110
  %v746 = vunpack.c.l.b16 %v111
  %v747 = vunpack.c.l.b16 %v112
  %v748 = vunpack.c.l.b16 %v113
  %v749 = vunpack.c.l.b16 %v114
  %v750 = vunpack.c.l.b16 %v115
  %v751 = vunpack.c.l.b16 %v116
  %v752 = vunpack.c.l.b16 %v117
  %v753 = vunpack.c.l.b16 %v118
  %v754 = vunpack.c.l.b16 %v119
  %v755 = vunpack.c.l.b16 %v120
  %v756 = vunpack.c.l.b16 %v121
  %v757 = vunpack.c.l.b16 %v122
  %v758 = vunpack.c.l.b16 %v123
  %v759 = vunpack.c.l.b16 %v124
  %v760 = vunpack.c.l.b16 %v125
  %v761 = vunpack.c.l.b16 %v126
  %v762 = vunpack.c.l.b16 %v127
  %v763 = vunpack.c.l.b16 %v128
  %v764 = vunpack.c.l.b16 %v129
  %v765 = vunpack.c.l.b16 %v130
  %v766 = vunpack.c.l.b16 %v131
  %v767 = vunpack.c.l.b16 %v132
  %v768 = vunpack.c.l.b16 %v133
  %v769 = vunpack.c.l.b16 %v134
  %v770 = vunpack.c.l.b16 %v135
  %v771 = vunpack.c.l.b16 %v136
  %v772 = vunpack.c.l.b16 %v137
  %v773 = vunpack.c.l.b16 %v138
  %v774 = vunpack.c.l.b16 %v139
  %v775 = vunpack.c.l.b16 %v140
  %v776 = vunpack.c.l.b16 %v141
  %v777 = vunpack.c.l.b16 %v142
  %v778 = vunpack.c.l.b16 %v143
  %v779 = vunpack.c.l.b16 %v144
  %v780 = vunpack.c.l.b16 %v145
  %v781 = vunpack.c.l.b16 %v146
  %v782 = vunpack.c.l.b16 %v147
  %v783 = vunpack.c.l.b16 %v148
  %v784 = vunpack.c.l.b16 %v149
  %v785 = vunpack.c.l.b16 %v150
  %v786 = vunpack.c.l.b16 %v151
  %v787 = vunpack.c.l.b16 %v152
  %v788 = vunpack.c.l.b16 %v153
  %v789 = vunpack.c.l.b16 %v154
  %v790 = vunpack.c.l.b16 %v155
  %v791 = vunpack.c.l.b16 %v156
  %v792 = vunpack.c.l.b16 %v157
  %v793 = vunpack.c.l.b16 %v158
  %v794 = vunpack.c.l.b16 %v159
  %v795 = vunpack.c.l.b16 %v160
  %v796 = vunpack.c.l.b16 %v161
  %v797 = vunpack.c.l.b16 %v162
  %v798 = vunpack.c.l.b16 %v163
  %v799 = vunpack.c.l.b16 %v164
  %v800 = vunpack.c.l.b16 %v165
  %v801 = vunpack.c.l.b16 %v166
  %v802 = vunpack.c.l.b16 %v167
  %v803 = vunpack.c.l.b16 %v168
  %v804 = vunpack.c.l.b16 %v169
  %v805 = vunpack.c.l.b16 %v170
  %v806 = vunpack.c.l.b16 %v171
  %v807 = vunpack.c.l.b16 %v172
  %v808 = vunpack.c.l.b16 %v173
  %v809 = vunpack.c.l.b16 %v174
  %v810 = vunpack.c.l.b16 %v175
  %v811 = vunpack.c.l.b16 %v176
  %v812 = vunpack.c.l.b16 %v177
  %v813 = vunpack.c.l.b16 %v178
  %v814 = vunpack.c.l.b16 %v179
  %v815 = vunpack.c.l.b16 %v180
  %v816 = vunpack.c.l.b16 %v181
  %v817 = vunpack.c.l.b16 %v182
  %v818 = vunpack.c.l.b16 %v183
  %v819 = vunpack.c.l.b16 %v184
  %v820 = vunpack.c.l.b16 %v185
  %v821 = vunpack.c.l.b16 %v186
  %v822 = vunpack.c.l.b16 %v187
  %v823 = vunpack.c.l.b16 %v188
  %v824 = vunpack.c.l.b16 %v189
  %v825 = vunpack.c.l.b16 %v190
  %v826 = vunpack.c.l.b16 %v191
  %v827 = vunpack.c.l.b16 %v192
  %v828 = vunpack.c.l.b16 %v193
  %v829 = vunpack.c.l.b16 %v194
  %v830 = vunpack.c.l.b16 %v195
  %v831 = vunpack.c.l.b16 %v196
  %v832 = vunpack.c.l.b16 %v197
  %v833 = vunpack.c.l.b16 %v198
  %v834 = vunpack.c.l.b16 %v199
  %v835 = vunpack.c.l.b16 %v200
  %v836 = vunpack.c.l.b16 %v201
  %v837 = vunpack.c.l.b16 %v202
  %v838 = vunpack.c.l.b16 %v203
  %v839 = vunpack.c.l.b16 %v204
  %v840 = vunpack.c.l.b16 %v205
  %v841 = vunpack.c.l.b16 %v206
  %v842 = vunpack.c.l.b16 %v207
  %v843 = vunpack.c.l.b16 %v208
  %v844 = vunpack.c.l.b16 %v209
  %v845 = vunpack.c.l.b16 %v210
  %v846 = vunpack.c.l.b16 %v211
  %v847 = vunpack.c.l.b16 %v212
  %v848 = vunpack.c.l.b16 %v213
  %v849 = vunpack.c.l.b16 %v214
  %v850 = vunpack.c.l.b16 %v215
  %v851 = vunpack.c.l.b16 %v216
  %v852 = vunpack.c.l.b16 %v217
  %v853 = vunpack.c.l.b16 %v218
  %v854 = vunpack.c.l.b16 %v219
  %v855 = vunpack.c.l.b16 %v220
  %v856 = vunpack.c.l.b16 %v221
  %v857 = vunpack.c.l.b16 %v222
  %v858 = vunpack.c.l.b16 %v223
  %v859 = vunpack.c.l.b16 %v224
  %v860 = vunpack.c.l.b16 %v225
  %v861 = vunpack.c.l.b16 %v226
  %v862 = vunpack.c.l.b16 %v227
  %v863 = vunpack.c.l.b16 %v228
  %v864 = vunpack.c.l.b16 %v229
  %v865 = vunpack.c.l.b16 %v230
  %v866 = vunpack.c.l.b16 %v231
  %v867 = vunpack.c.l.b16 %v232
  %v868 = vunpack.c.l.b16 %v233
  %v869 = vunpack.c.l.b16 %v234
  %v870 = vunpack.c.l.b16 %v235
  %v871 = vunpack.c.l.b16 %v236
  %v872 = vunpack.c.l.b16 %v237
  %v873 = vunpack.c.l.b16 %v238
  %v874 = vunpack.c.l.b16 %v239
  %v875 = vunpack.c.l.b16 %v240
  %v876 = vunpack.c.l.b16 %v241
  %v877 = vunpack.c.l.b16 %v242
  %v878 = vunpack.c.l.b16 %v243
  %v879 = vunpack.c.l.b16 %v244
  %v880 = vunpack.c.l.b16 %v245
  %v881 = vunpack.c.l.b16 %v246
  %v882 = vunpack.c.l.b16 %v247
  %v883 = vunpack.c.l.b16 %v248
  %v884 = vunpack.c.l.b16 %v249
  %v885 = vunpack.c.l.b16 %v250
  %v886 = vunpack.c.l.b16 %v251
  %v887 = vunpack.c.l.b16 %v252
  %v888 = vunpack.c.l.b16 %v253
  %v889 = vunpack.c.l.b16 %v254
  %v890 = vunpack.c.l.b16 %v255
  %v891 = vunpack.c.l.b16 %v256
  %v892 = vunpack.c.l.b16 %v257
  %v893 = vunpack.c.l.b16 %v258
  %v894 = vunpack.c.l.b16 %v259
  %v895 = vunpack.c.l.b16 %v260
  %v896 = vunpack.c.l.b16 %v261
  %v897 = vunpack.c.l.b16 %v262
  %v898 = vunpack.c.l.b16 %v263
  %v899 = vunpack.c.l.b16 %v264
  %v900 = vunpack.c.l.b16 %v265
  %v901 = vunpack.c.l.b16 %v266
  %v902 = vunpack.c.l.b16 %v267
  %v903 = vunpack.c.l.b16 %v268
  %v904 = vunpack.c.l.b16 %v269
  %v905 = vunpack.c.l.b16 %v270
  %v906 = vunpack.c.l.b16 %v271
  %v907 = vunpack.c.l.b16 %v272
  %v908 = vpack.c.b16 %v653, %v652
  %v909 = vpack.c.b16 %v655, %v654
  %v910 = vpack.c.b16 %v657, %v656
  %v911 = vpack.c.b16 %v659, %v658
  %v912 = vpack.c.b16 %v661, %v660
  %v913 = vpack.c.b16 %v663, %v662
  %v914 = vpack.c.b16 %v665, %v664
  %v915 = vpack.c.b16 %v667, %v666
  %v916 = vpack.c.b16 %v669, %v668
  %v917 = vpack.c.b16 %v671, %v670
  %v918 = vpack.c.b16 %v673, %v672
  %v919 = vpack.c.b16 %v675, %v674
  %v920 = vpack.c.b16 %v677, %v676
  %v921 = vpack.c.b16 %v679, %v678
  %v922 = vpack.c.b16 %v681, %v680
  %v923 = vpack.c.b16 %v683, %v682
  %v924 = vpack.c.b16 %v685, %v684
  %v925 = vpack.c.b16 %v687, %v686
  %v926 = vpack.c.b16 %v689, %v688
  %v927 = vpack.c.b16 %v691, %v690
  %v928 = vpack.c.b16 %v693, %v692
  %v929 = vpack.c.b16 %v695, %v694
  %v930 = vpack.c.b16 %v697, %v696
  %v931 = vpack.c.b16 %v699, %v698
  %v932 = vpack.c.b16 %v701, %v700
  %v933 = vpack.c.b16 %v703, %v702
  %v934 = vpack.c.b16 %v705, %v704
  %v935 = vpack.c.b16 %v707, %v706
  %v936 = vpack.c.b16 %v709, %v708
  %v937 = vpack.c.b16 %v711, %v710
  %v938 = vpack.c.b16 %v713, %v712
  %v939 = vpack.c.b16 %v715, %v714
  %v940 = vpack.c.b16 %v717, %v716
  %v941 = vpack.c.b16 %v719, %v718
  %v942 = vpack.c.b16 %v721, %v720
  %v943 = vpack.c.b16 %v723, %v722
  %v944 = vpack.c.b16 %v725, %v724
  %v945 = vpack.c.b16 %v727, %v726
  %v946 = vpack.c.b16 %v729, %v728
  %v947 = vpack.c.b16 %v731, %v730
  %v948 = vpack.c.b16 %v733, %v732
  %v949 = vpack.c.b16 %v735, %v734
  %v950 = vpack.c.b16 %v737, %v736
  %v951 = vpack.c.b16 %v739, %v738
  %v952 = vpack.c.b16 %v741, %v740
  %v953 = vpack.c.b16 %v743, %v742
  %v954 = vpack.c.b16 %v745, %v744
  %v955 = vpack.c.b16 %v747, %v746
  %v956 = vpack.c.b16 %v749, %v748
  %v957 = vpack.c.b16 %v751, %v750
  %v958 = vpack.c.b16 %v753, %v752
  %v959 = vpack.c.b16 %v755, %v754
  %v960 = vpack.c.b16 %v757, %v756
  %v961 = vpack.c.b16 %v759, %v758
  %v962 = vpack.c.b16 %v761, %v760
  %v963 = vpack.c.b16 %v763, %v762
  %v964 = vpack.c.b16 %v765, %v764
  %v965 = vpack.c.b16 %v767, %v766
  %v966 = vpack.c.b16 %v769, %v768
  %v967 = vpack.c.b16 %v771, %v770
  %v968 = vpack.c.b16 %v773, %v772
  %v969 = vpack.c.b16 %v775, %v774
  %v970 = vpack.c.b16 %v777, %v776
  %v971 = vpack.c.b16 %v779, %v778
  %v972 = vpack.c.b16 %v781, %v780
  %v973 = vpack.c.b16 %v783, %v782
  %v974 = vpack.c.b16 %v785, %v784
  %v975 = vpack.c.b16 %v787, %v786
  %v976 = vpack.c.b16 %v789, %v788
  %v977 = vpack.c.b16 %v791, %v790
  %v978 = vpack.c.b16 %v793, %v792
  %v979 = vpack.c.b16 %v795, %v794
  %v980 = vpack.c.b16 %v797, %v796
  %v981 = vpack.c.b16 %v799, %v798
  %v982 = vpack.c.b16 %v801, %v800
  %v983 = vpack.c.b16 %v803, %v802
  %v984 = vpack.c.b16 %v805, %v804
  %v985 = vpack.c.b16 %v807, %v806
  %v986 = vpack.c.b16 %v809, %v808
  %v987 = vpack.c.b16 %v811, %v810
  %v988 = vpack.c.b16 %v813, %v812
  %v989 = vpack.c.b16 %v815, %v814
  %v990 = vpack.c.b16 %v817, %v816
  %v991 = vpack.c.b16 %v819, %v818
  %v992 = vpack.c.b16 %v821, %v820
  %v993 = vpack.c.b16 %v823, %v822
  %v994 = vpack.c.b16 %v825, %v824
  %v995 = vpack.c.b16 %v827, %v826
  %v996 = vpack.c.b16 %v829, %v828
  %v997 = vpack.c.b16 %v831, %v830
  %v998 = vpack.c.b16 %v833, %v832
  %v999 = vpack.c.b16 %v835, %v834
  %v1000 = vpack.c.b16 %v837, %v836
  %v1001 = vpack.c.b16 %v839, %v838
  %v1002 = vpack.c.b16 %v841, %v840
  %v1003 = vpack.c.b16 %v843, %v842
  %v1004 = vpack.c.b16 %v845, %v844
  %v1005 = vpack.c.b16 %v847, %v846
  %v1006 = vpack.c.b16 %v849, %v848
  %v1007 = vpack.c.b16 %v851, %v850
  %v1008 = vpack.c.b16 %v853, %v852
  %v1009 = vpack.c.b16 %v855, %v854
  %v1010 = vpack.c.b16 %v857, %v856
  %v1011 = vpack.c.b16 %v859, %v858
  %v1012 = vpack.c.b16 %v861, %v860
  %v1013 = vpack.c.b16 %v863, %v862
  %v1014 = vpack.c.b16 %v865, %v864
  %v1015 = vpack.c.b16 %v867, %v866
  %v1016 = vpack.c.b16 %v869, %v868
  %v1017 = vpack.c.b16 %v871, %v870
  %v1018 = vpack.c.b16 %v873, %v872
  %v1019 = vpack.c.b16 %v875, %v874
  %v1020 = vpack.c.b16 %v877, %v876
  %v1021 = vpack.c.b16 %v879, %v878
  %v1022 = vpack.c.b16 %v881, %v880
  %v1023 = vpack.c.b16 %v883, %v882
  %v1024 = vpack.c.b16 %v885, %v884
  %v1025 = vpack.c.b16 %v887, %v886
  %v1026 = vpack.c.b16 %v889, %v888
  %v1027 = vpack.c.b16 %v891, %v890
  %v1028 = vpack.c.b16 %v893, %v892
  %v1029 = vpack.c.b16 %v895, %v894
  %v1030 = vpack.c.b16 %v897, %v896
  %v1031 = vpack.c.b16 %v899, %v898
  %v1032 = vpack.c.b16 %v901, %v900
  %v1033 = vpack.c.b16 %v903, %v902
  %v1034 = vpack.c.b16 %v905, %v904
  %v1035 = vpack.c.b16 %v907, %v906
  %1164 = vmatprep.subr.bf16.mxu0 0
  %1165 = vmatpush1.bf16.msra.mxu0 %v908
  %1166 = vmatprep.subr.bf16.mxu0 0
  %1167 = vmatpush1.bf16.msra.mxu0 %v909
  %1168 = vmatprep.subr.bf16.mxu0 0
  %1169 = vmatpush1.bf16.msra.mxu0 %v910
  %1170 = vmatprep.subr.bf16.mxu0 0
  %1171 = vmatpush1.bf16.msra.mxu0 %v911
  %1172 = vmatprep.subr.bf16.mxu0 0
  %1173 = vmatpush1.bf16.msra.mxu0 %v912
  %1174 = vmatprep.subr.bf16.mxu0 0
  %1175 = vmatpush1.bf16.msra.mxu0 %v913
  %1176 = vmatprep.subr.bf16.mxu0 0
  %1177 = vmatpush1.bf16.msra.mxu0 %v914
  %1178 = vmatprep.subr.bf16.mxu0 0
  %1179 = vmatpush1.bf16.msra.mxu0 %v915
  %1180 = vmatprep.subr.bf16.mxu0 0
  %1181 = vmatpush1.bf16.msra.mxu0 %v916
  %1182 = vmatprep.subr.bf16.mxu0 0
  %1183 = vmatpush1.bf16.msra.mxu0 %v917
  %1184 = vmatprep.subr.bf16.mxu0 0
  %1185 = vmatpush1.bf16.msra.mxu0 %v918
  %1186 = vmatprep.subr.bf16.mxu0 0
  %1187 = vmatpush1.bf16.msra.mxu0 %v919
  %1188 = vmatprep.subr.bf16.mxu0 0
  %1189 = vmatpush1.bf16.msra.mxu0 %v920
  %1190 = vmatprep.subr.bf16.mxu0 0
  %1191 = vmatpush1.bf16.msra.mxu0 %v921
  %1192 = vmatprep.subr.bf16.mxu0 0
  %1193 = vmatpush1.bf16.msra.mxu0 %v922
  %1194 = vmatprep.subr.bf16.mxu0 0
  %1195 = vmatpush1.bf16.msra.mxu0 %v923
  %1196 = vmatprep.mubr.bf16.mxu0 %v319
  %1197 = vmatmul.mubr.bf16.gmra.mrb[0].mxu0 %v305
  %v1198 = vpop.f32.mrb[0].mxu0
  %v1199 = vadd.f32 %v278, %v1198
  %v1200 = vpop.f32.mrb[0].mxu0
  %v1201 = vpop.f32.mrb[0].mxu0
  %v1202 = vpop.f32.mrb[0].mxu0
  %1203 = vdwg.mxu0
  %1204 = vmatprep.subr.bf16.mxu0 0
  %1205 = vmatpush1.bf16.msra.mxu0 %v924
  %1206 = vmatprep.subr.bf16.mxu0 0
  %1207 = vmatpush1.bf16.msra.mxu0 %v925
  %1208 = vmatprep.subr.bf16.mxu0 0
  %1209 = vmatpush1.bf16.msra.mxu0 %v926
  %1210 = vmatprep.subr.bf16.mxu0 0
  %1211 = vmatpush1.bf16.msra.mxu0 %v927
  %1212 = vmatprep.subr.bf16.mxu0 0
  %1213 = vmatpush1.bf16.msra.mxu0 %v928
  %1214 = vmatprep.subr.bf16.mxu0 0
  %1215 = vmatpush1.bf16.msra.mxu0 %v929
  %1216 = vmatprep.subr.bf16.mxu0 0
  %1217 = vmatpush1.bf16.msra.mxu0 %v930
  %1218 = vmatprep.subr.bf16.mxu0 0
  %1219 = vmatpush1.bf16.msra.mxu0 %v931
  %1220 = vmatprep.subr.bf16.mxu0 0
  %1221 = vmatpush1.bf16.msra.mxu0 %v932
  %1222 = vmatprep.subr.bf16.mxu0 0
  %1223 = vmatpush1.bf16.msra.mxu0 %v933
  %1224 = vmatprep.subr.bf16.mxu0 0
  %1225 = vmatpush1.bf16.msra.mxu0 %v934
  %1226 = vmatprep.subr.bf16.mxu0 0
  %1227 = vmatpush1.bf16.msra.mxu0 %v935
  %1228 = vmatprep.subr.bf16.mxu0 0
  %1229 = vmatpush1.bf16.msra.mxu0 %v936
  %1230 = vmatprep.subr.bf16.mxu0 0
  %1231 = vmatpush1.bf16.msra.mxu0 %v937
  %1232 = vmatprep.subr.bf16.mxu0 0
  %1233 = vmatpush1.bf16.msra.mxu0 %v938
  %1234 = vmatprep.subr.bf16.mxu0 0
  %1235 = vmatpush1.bf16.msra.mxu0 %v939
  %1236 = vmatprep.mubr.bf16.mxu0 %v329
  %1237 = vmatmul.mubr.bf16.gmra.mrb[0].mxu0 %v327
  %v1238 = vpop.f32.mrb[0].mxu0
  %v1239 = vadd.f32 %v1199, %v1238
  %v1240 = vpop.f32.mrb[0].mxu0
  %v1241 = vpop.f32.mrb[0].mxu0
  %v1242 = vpop.f32.mrb[0].mxu0
  %1243 = vdwg.mxu0
  %1244 = vmatprep.subr.bf16.mxu0 0
  %1245 = vmatpush1.bf16.msra.mxu0 %v940
  %1246 = vmatprep.subr.bf16.mxu0 0
  %1247 = vmatpush1.bf16.msra.mxu0 %v941
  %1248 = vmatprep.subr.bf16.mxu0 0
  %1249 = vmatpush1.bf16.msra.mxu0 %v942
  %1250 = vmatprep.subr.bf16.mxu0 0
  %1251 = vmatpush1.bf16.msra.mxu0 %v943
  %1252 = vmatprep.subr.bf16.mxu0 0
  %1253 = vmatpush1.bf16.msra.mxu0 %v944
  %1254 = vmatprep.subr.bf16.mxu0 0
  %1255 = vmatpush1.bf16.msra.mxu0 %v945
  %1256 = vmatprep.subr.bf16.mxu0 0
  %1257 = vmatpush1.bf16.msra.mxu0 %v946
  %1258 = vmatprep.subr.bf16.mxu0 0
  %1259 = vmatpush1.bf16.msra.mxu0 %v947
  %1260 = vmatprep.subr.bf16.mxu0 0
  %1261 = vmatpush1.bf16.msra.mxu0 %v948
  %1262 = vmatprep.subr.bf16.mxu0 0
  %1263 = vmatpush1.bf16.msra.mxu0 %v949
  %1264 = vmatprep.subr.bf16.mxu0 0
  %1265 = vmatpush1.bf16.msra.mxu0 %v950
  %1266 = vmatprep.subr.bf16.mxu0 0
  %1267 = vmatpush1.bf16.msra.mxu0 %v951
  %1268 = vmatprep.subr.bf16.mxu0 0
  %1269 = vmatpush1.bf16.msra.mxu0 %v952
  %1270 = vmatprep.subr.bf16.mxu0 0
  %1271 = vmatpush1.bf16.msra.mxu0 %v953
  %1272 = vmatprep.subr.bf16.mxu0 0
  %1273 = vmatpush1.bf16.msra.mxu0 %v954
  %1274 = vmatprep.subr.bf16.mxu0 0
  %1275 = vmatpush1.bf16.msra.mxu0 %v955
  %1276 = vmatprep.mubr.bf16.mxu0 %v326
  %1277 = vmatmul.mubr.bf16.gmra.mrb[0].mxu0 %v312
  %v1278 = vpop.f32.mrb[0].mxu0
  %v1279 = vadd.f32 %v1239, %v1278
  %v1280 = vpop.f32.mrb[0].mxu0
  %v1281 = vpop.f32.mrb[0].mxu0
  %v1282 = vpop.f32.mrb[0].mxu0
  %1283 = vdwg.mxu0
  %1284 = vmatprep.subr.bf16.mxu0 0
  %1285 = vmatpush1.bf16.msra.mxu0 %v956
  %1286 = vmatprep.subr.bf16.mxu0 0
  %1287 = vmatpush1.bf16.msra.mxu0 %v957
  %1288 = vmatprep.subr.bf16.mxu0 0
  %1289 = vmatpush1.bf16.msra.mxu0 %v958
  %1290 = vmatprep.subr.bf16.mxu0 0
  %1291 = vmatpush1.bf16.msra.mxu0 %v959
  %1292 = vmatprep.subr.bf16.mxu0 0
  %1293 = vmatpush1.bf16.msra.mxu0 %v960
  %1294 = vmatprep.subr.bf16.mxu0 0
  %1295 = vmatpush1.bf16.msra.mxu0 %v961
  %1296 = vmatprep.subr.bf16.mxu0 0
  %1297 = vmatpush1.bf16.msra.mxu0 %v962
  %1298 = vmatprep.subr.bf16.mxu0 0
  %1299 = vmatpush1.bf16.msra.mxu0 %v963
  %1300 = vmatprep.subr.bf16.mxu0 0
  %1301 = vmatpush1.bf16.msra.mxu0 %v964
  %1302 = vmatprep.subr.bf16.mxu0 0
  %1303 = vmatpush1.bf16.msra.mxu0 %v965
  %1304 = vmatprep.subr.bf16.mxu0 0
  %1305 = vmatpush1.bf16.msra.mxu0 %v966
  %1306 = vmatprep.subr.bf16.mxu0 0
  %1307 = vmatpush1.bf16.msra.mxu0 %v967
  %1308 = vmatprep.subr.bf16.mxu0 0
  %1309 = vmatpush1.bf16.msra.mxu0 %v968
  %1310 = vmatprep.subr.bf16.mxu0 0
  %1311 = vmatpush1.bf16.msra.mxu0 %v969
  %1312 = vmatprep.subr.bf16.mxu0 0
  %1313 = vmatpush1.bf16.msra.mxu0 %v970
  %1314 = vmatprep.subr.bf16.mxu0 0
  %1315 = vmatpush1.bf16.msra.mxu0 %v971
  %1316 = vmatprep.mubr.bf16.mxu0 %v330
  %1317 = vmatmul.mubr.bf16.gmra.mrb[0].mxu0 %v328
  %v1318 = vpop.f32.mrb[0].mxu0
  %v1319 = vadd.f32 %v1279, %v1318
  %v1320 = vpop.f32.mrb[0].mxu0
  %v1321 = vpop.f32.mrb[0].mxu0
  %v1322 = vpop.f32.mrb[0].mxu0
  %1323 = vdwg.mxu0
  %1324 = vmatprep.subr.bf16.mxu0 0
  %1325 = vmatpush1.bf16.msra.mxu0 %v972
  %1326 = vmatprep.subr.bf16.mxu0 0
  %1327 = vmatpush1.bf16.msra.mxu0 %v973
  %1328 = vmatprep.subr.bf16.mxu0 0
  %1329 = vmatpush1.bf16.msra.mxu0 %v974
  %1330 = vmatprep.subr.bf16.mxu0 0
  %1331 = vmatpush1.bf16.msra.mxu0 %v975
  %1332 = vmatprep.subr.bf16.mxu0 0
  %1333 = vmatpush1.bf16.msra.mxu0 %v976
  %1334 = vmatprep.subr.bf16.mxu0 0
  %1335 = vmatpush1.bf16.msra.mxu0 %v977
  %1336 = vmatprep.subr.bf16.mxu0 0
  %1337 = vmatpush1.bf16.msra.mxu0 %v978
  %1338 = vmatprep.subr.bf16.mxu0 0
  %1339 = vmatpush1.bf16.msra.mxu0 %v979
  %1340 = vmatprep.subr.bf16.mxu0 0
  %1341 = vmatpush1.bf16.msra.mxu0 %v980
  %1342 = vmatprep.subr.bf16.mxu0 0
  %1343 = vmatpush1.bf16.msra.mxu0 %v981
  %1344 = vmatprep.subr.bf16.mxu0 0
  %1345 = vmatpush1.bf16.msra.mxu0 %v982
  %1346 = vmatprep.subr.bf16.mxu0 0
  %1347 = vmatpush1.bf16.msra.mxu0 %v983
  %1348 = vmatprep.subr.bf16.mxu0 0
  %1349 = vmatpush1.bf16.msra.mxu0 %v984
  %1350 = vmatprep.subr.bf16.mxu0 0
  %1351 = vmatpush1.bf16.msra.mxu0 %v985
  %1352 = vmatprep.subr.bf16.mxu0 0
  %1353 = vmatpush1.bf16.msra.mxu0 %v986
  %1354 = vmatprep.subr.bf16.mxu0 0
  %1355 = vmatpush1.bf16.msra.mxu0 %v987
  %1356 = vmatprep.mubr.bf16.mxu0 %v368
  %1357 = vmatmul.mubr.bf16.gmra.mrb[0].mxu0 %v354
  %v1358 = vpop.f32.mrb[0].mxu0
  %v1359 = vadd.f32 %v1319, %v1358
  %v1360 = vpop.f32.mrb[0].mxu0
  %v1361 = vpop.f32.mrb[0].mxu0
  %v1362 = vpop.f32.mrb[0].mxu0
  %1363 = vdwg.mxu0
  %1364 = vmatprep.subr.bf16.mxu0 0
  %1365 = vmatpush1.bf16.msra.mxu0 %v988
  %1366 = vmatprep.subr.bf16.mxu0 0
  %1367 = vmatpush1.bf16.msra.mxu0 %v989
  %1368 = vmatprep.subr.bf16.mxu0 0
  %1369 = vmatpush1.bf16.msra.mxu0 %v990
  %1370 = vmatprep.subr.bf16.mxu0 0
  %1371 = vmatpush1.bf16.msra.mxu0 %v991
  %1372 = vmatprep.subr.bf16.mxu0 0
  %1373 = vmatpush1.bf16.msra.mxu0 %v992
  %1374 = vmatprep.subr.bf16.mxu0 0
  %1375 = vmatpush1.bf16.msra.mxu0 %v993
  %1376 = vmatprep.subr.bf16.mxu0 0
  %1377 = vmatpush1.bf16.msra.mxu0 %v994
  %1378 = vmatprep.subr.bf16.mxu0 0
  %1379 = vmatpush1.bf16.msra.mxu0 %v995
  %1380 = vmatprep.subr.bf16.mxu0 0
  %1381 = vmatpush1.bf16.msra.mxu0 %v996
  %1382 = vmatprep.subr.bf16.mxu0 0
  %1383 = vmatpush1.bf16.msra.mxu0 %v997
  %1384 = vmatprep.subr.bf16.mxu0 0
  %1385 = vmatpush1.bf16.msra.mxu0 %v998
  %1386 = vmatprep.subr.bf16.mxu0 0
  %1387 = vmatpush1.bf16.msra.mxu0 %v999
  %1388 = vmatprep.subr.bf16.mxu0 0
  %1389 = vmatpush1.bf16.msra.mxu0 %v1000
  %1390 = vmatprep.subr.bf16.mxu0 0
  %1391 = vmatpush1.bf16.msra.mxu0 %v1001
  %1392 = vmatprep.subr.bf16.mxu0 0
  %1393 = vmatpush1.bf16.msra.mxu0 %v1002
  %1394 = vmatprep.subr.bf16.mxu0 0
  %1395 = vmatpush1.bf16.msra.mxu0 %v1003
  %1396 = vmatprep.mubr.bf16.mxu0 %v378
  %1397 = vmatmul.mubr.bf16.gmra.mrb[0].mxu0 %v376
  %v1398 = vpop.f32.mrb[0].mxu0
  %v1399 = vadd.f32 %v1359, %v1398
  %v1400 = vpop.f32.mrb[0].mxu0
  %v1401 = vpop.f32.mrb[0].mxu0
  %v1402 = vpop.f32.mrb[0].mxu0
  %1403 = vdwg.mxu0
  %1404 = vmatprep.subr.bf16.mxu0 0
  %1405 = vmatpush1.bf16.msra.mxu0 %v1004
  %1406 = vmatprep.subr.bf16.mxu0 0
  %1407 = vmatpush1.bf16.msra.mxu0 %v1005
  %1408 = vmatprep.subr.bf16.mxu0 0
  %1409 = vmatpush1.bf16.msra.mxu0 %v1006
  %1410 = vmatprep.subr.bf16.mxu0 0
  %1411 = vmatpush1.bf16.msra.mxu0 %v1007
  %1412 = vmatprep.subr.bf16.mxu0 0
  %1413 = vmatpush1.bf16.msra.mxu0 %v1008
  %1414 = vmatprep.subr.bf16.mxu0 0
  %1415 = vmatpush1.bf16.msra.mxu0 %v1009
  %1416 = vmatprep.subr.bf16.mxu0 0
  %1417 = vmatpush1.bf16.msra.mxu0 %v1010
  %1418 = vmatprep.subr.bf16.mxu0 0
  %1419 = vmatpush1.bf16.msra.mxu0 %v1011
  %1420 = vmatprep.subr.bf16.mxu0 0
  %1421 = vmatpush1.bf16.msra.mxu0 %v1012
  %1422 = vmatprep.subr.bf16.mxu0 0
  %1423 = vmatpush1.bf16.msra.mxu0 %v1013
  %1424 = vmatprep.subr.bf16.mxu0 0
  %1425 = vmatpush1.bf16.msra.mxu0 %v1014
  %1426 = vmatprep.subr.bf16.mxu0 0
  %1427 = vmatpush1.bf16.msra.mxu0 %v1015
  %1428 = vmatprep.subr.bf16.mxu0 0
  %1429 = vmatpush1.bf16.msra.mxu0 %v1016
  %1430 = vmatprep.subr.bf16.mxu0 0
  %1431 = vmatpush1.bf16.msra.mxu0 %v1017
  %1432 = vmatprep.subr.bf16.mxu0 0
  %1433 = vmatpush1.bf16.msra.mxu0 %v1018
  %1434 = vmatprep.subr.bf16.mxu0 0
  %1435 = vmatpush1.bf16.msra.mxu0 %v1019
  %1436 = vmatprep.mubr.bf16.mxu0 %v375
  %1437 = vmatmul.mubr.bf16.gmra.mrb[0].mxu0 %v361
  %v1438 = vpop.f32.mrb[0].mxu0
  %v1439 = vadd.f32 %v1399, %v1438
  %v1440 = vpop.f32.mrb[0].mxu0
  %v1441 = vpop.f32.mrb[0].mxu0
  %v1442 = vpop.f32.mrb[0].mxu0
  %1443 = vdwg.mxu0
  %1444 = vmatprep.subr.bf16.mxu0 0
  %1445 = vmatpush1.bf16.msra.mxu0 %v1020
  %1446 = vmatprep.subr.bf16.mxu0 0
  %1447 = vmatpush1.bf16.msra.mxu0 %v1021
  %1448 = vmatprep.subr.bf16.mxu0 0
  %1449 = vmatpush1.bf16.msra.mxu0 %v1022
  %1450 = vmatprep.subr.bf16.mxu0 0
  %1451 = vmatpush1.bf16.msra.mxu0 %v1023
  %1452 = vmatprep.subr.bf16.mxu0 0
  %1453 = vmatpush1.bf16.msra.mxu0 %v1024
  %1454 = vmatprep.subr.bf16.mxu0 0
  %1455 = vmatpush1.bf16.msra.mxu0 %v1025
  %1456 = vmatprep.subr.bf16.mxu0 0
  %1457 = vmatpush1.bf16.msra.mxu0 %v1026
  %1458 = vmatprep.subr.bf16.mxu0 0
  %1459 = vmatpush1.bf16.msra.mxu0 %v1027
  %1460 = vmatprep.subr.bf16.mxu0 0
  %1461 = vmatpush1.bf16.msra.mxu0 %v1028
  %1462 = vmatprep.subr.bf16.mxu0 0
  %1463 = vmatpush1.bf16.msra.mxu0 %v1029
  %1464 = vmatprep.subr.bf16.mxu0 0
  %1465 = vmatpush1.bf16.msra.mxu0 %v1030
  %1466 = vmatprep.subr.bf16.mxu0 0
  %1467 = vmatpush1.bf16.msra.mxu0 %v1031
  %1468 = vmatprep.subr.bf16.mxu0 0
  %1469 = vmatpush1.bf16.msra.mxu0 %v1032
  %1470 = vmatprep.subr.bf16.mxu0 0
  %1471 = vmatpush1.bf16.msra.mxu0 %v1033
  %1472 = vmatprep.subr.bf16.mxu0 0
  %1473 = vmatpush1.bf16.msra.mxu0 %v1034
  %1474 = vmatprep.subr.bf16.mxu0 0
  %1475 = vmatpush1.bf16.msra.mxu0 %v1035
  %1476 = vmatprep.mubr.bf16.mxu0 %v379
  %1477 = vmatmul.mubr.bf16.gmra.mrb[0].mxu0 %v377
  %v1478 = vpop.f32.mrb[0].mxu0
  %v1479 = vadd.f32 %v1439, %v1478
  %v1480 = vpop.f32.mrb[0].mxu0
  %v1481 = vpop.f32.mrb[0].mxu0
  %v1482 = vpop.f32.mrb[0].mxu0
  %1483 = vdwg.mxu0
  %v1484 = vlaneseq
  %v1485 = vand.u32 %v1484, 127
  %vm1486 = vcmp.ge.s32.totalorder %v1485, 1
  %vm1487 = vcmp.le.s32.totalorder %v1485, 10
  %vm1488 = vmand %vm1486, %vm1487
  %v1489 = vsel %vm1488, %v1479, -inf
  %vm1490 = vcmask 1041408
  %v1491 = vsel %vm1490, %v1489, -inf
  %1492 = vmax.xlane.f32.xlu0 %v1491
  %v1493 = vpop.xlane.xlu0 %1492
  %v1494 = vsub.f32 %v1489, %v1493
  %v1495 = vmul.f32 %v1494, 1.442695
  %v1496 = vpow.pop %v1495
  %v1497 = vsel %vm1490, %v1496, 0.0
  %1498 = vadd.xlane.f32.xlu0 %v1497
  %v1499 = vpop.xlane.xlu0 %1498
  %v1500 = vrcp.pop %v1499
  %v1501 = vmul.f32 %v1496, %v1500
  %vm1502 = vcmp.eq.s32.totalorder %v1485, 0
  %v1503 = vsel %vm1502, %v1479, %v1501
  %1504 = vst [vmem:[%s3] sm:$0x3] %v1503
  // Predicated region
  $region14: #{cnn_forward.15} parent=0 // pred_check
    _
  $region15: #{cnn_forward.15} parent=0 // pred_check_branch
    %1506 = sbr.rel (0) target = $region17
  $region16: #{cnn_forward.15} parent=0 // pred_region
    _
  $region17: #{cnn_forward.15} parent=0 // pred_fallthru
    _
  // Predicated region
  $region18: #{cnn_forward.15} parent=0 // pred_check
    _
  $region19: #{cnn_forward.15} parent=0 // pred_check_branch
    %1508 = sbr.rel (0) target = $region21
  $region20: #{cnn_forward.15} parent=0 // pred_region
    _
  $region21: #{cnn_forward.15} parent=0 // pred_fallthru
    _

// kernel: cnn_forward.14
$region0: #{cnn_forward.14}
  #allocation0 [shape = 'u32[]', space=smem, size = 0x4, offset = 0x4, fixed_abs, tag = 'smem constant byte address 0x4 - core index']
  #allocation1 [shape = 'u32[144,128]{1,0:T(1,128)}', space=vmem, size = 0x12000, scoped, tag = 'internal scratch']
  #allocation2 [shape = 'f32[2,512]{1,0:T(2,128)}', space=vmem, size = 0x1000, scoped, tag = 'scratch operand']
  %s0 = inlined_call_operand.vmem [shape: bf16[2,4096], index: 0, kind: input, shape index: {}]
  %s1 = inlined_call_operand.hbm [shape: bf16[4096,2048], index: 1, kind: input, shape index: {}]
  %s2 = inlined_call_operand.hbm [shape: f32[1,2048], index: 2, kind: input, shape index: {}]
  %s3 = inlined_call_operand.vmem [shape: bf16[2,2048], index: 3, kind: output, shape index: {}]
  %s4 = sld [smem:[#allocation0]]
  $region61: #{cnn_forward.14} parent=0
    _
  %s6 = ssub.s32 1, %s4
  %s7 = scalar_select 0, %s6, %s4
  $region1: #{cnn_forward.14} parent=0
    #allocation3 [shape = 'u8[2097152]{0}', space=vmem, size = 0x200000, scoped, tag = 'input window, operand 1']
    #allocation4 [shape = 's32[2]{0}', space=sflag, size = 0x8, scoped, tag = 'scoped memory for cnn_forward.14']
    #allocation5 [shape = 'u8[4096]{0}', space=vmem, size = 0x1000, scoped, tag = 'input window, operand 2']
    #allocation6 [shape = 's32[2]{0}', space=sflag, size = 0x8, scoped, tag = 'scoped memory for cnn_forward.14']
    %8 = vsyncpa [#allocation4], 0
    %s9 = scalar_lea.sflag [#allocation4], 1
    %10 = vsyncpa %s9, 0
    %11 = vsyncpa [#allocation6], 0
    %s12 = scalar_lea.sflag [#allocation6], 1
    %13 = vsyncpa %s12, 0
    loop: start=0, step=1, limit=18
    $region2: #{cnn_forward.14} parent=1 // loop_pre_header
      _
    $region3: #{cnn_forward.14} parent=1 // loop_header
      %s15 = sphi 0, %s19
      %p16 = scmp.ge.s32.totalorder %s15, 18
      %s22 = sphi 0, %s41
      %s23 = sphi 0, %s37
      %s24 = sphi 0, %s33
      %s25 = sphi 0, %s22
      %s26 = sphi 0, %s23
      %s27 = sphi 0, %s24
      %s28 = sphi 0, %s25
      %s29 = sphi 0, %s26
      %s30 = sphi 0, %s27
      %s46 = sphi 0, %s48
      %s49 = sphi 0, %s46
      %s50 = sphi 0, %s49
      %s66 = sphi 0, %s50
      %s74 = sphi 0, %s76
      %s77 = sphi 0, %s74
      %s78 = sphi 0, %s77
      %s94 = sphi 0, %s78
      %s100 = sphi 0, %s102
      %s103 = sphi 0, %s100
      %s104 = sphi 0, %s103
      %s120 = sphi 0, %s104
      %s128 = sphi 0, %s130
      %s131 = sphi 0, %s128
      %s132 = sphi 0, %s131
      %s148 = sphi 0, %s132
    $region4: #{cnn_forward.14} parent=1 // loop_header_branch
      %18 = sbr.rel (%p16) target = $region8
    $region5: #{cnn_forward.14} parent=1 // loop_body
      %s20 = ssub.s32 %s15, 1
      %s21 = ssub.s32 %s15, 2
      %s31 = sadd.s32 1, %s24
      %p32 = scmp.ge.s32.totalorder %s31, 4
      %s33 = scalar_select %p32, 0, %s31
      %s34 = sadd.s32 1, %s23
      %s35 = scalar_select %p32, %s34, %s23
      %p36 = scmp.ge.s32.totalorder %s35, 4
      %s37 = scalar_select %p36, 0, %s35
      %s38 = sadd.s32 1, %s22
      %s39 = scalar_select %p36, %s38, %s22
      %p40 = scmp.ge.s32.totalorder %s39, 1
      %s41 = scalar_select %p40, 0, %s39
      %s42 = ssub.s32 %s22, %s41
      %s43 = ssub.s32 %s24, %s33
      %s44 = sor.u32 %s42, %s43
      %p45 = scmp.eq.s32.totalorder %s44, 0
      %s47 = sadd.s32 %s46, 1
      %s48 = scalar_select %p45, %s46, %s47
      %p51 = pneg %p45
      %p52 = scmp.eq.s32.totalorder %s15, 15
      %p53 = por %p51, %p52
      %p54 = scmp.ne.s32.totalorder %s46, %s49
      %p55 = scmp.eq.s32.totalorder %s15, 0
      %p56 = por %p54, %p55
      %p57 = scmp.ne.s32.totalorder %s46, %s49
      %p58 = scmp.eq.s32.totalorder %s20, 15
      %p59 = por %p57, %p58
      %p60 = scmp.ne.s32.totalorder %s49, %s50
      %p61 = scmp.eq.s32.totalorder %s20, 0
      %p62 = por %p60, %p61
      %p63 = scmp.ne.s32.totalorder %s49, %s50
      %p64 = scmp.eq.s32.totalorder %s21, 15
      %p65 = por %p63, %p64
      %p67 = scmp.ne.s32.totalorder %s50, %s66
      %p68 = scmp.eq.s32.totalorder %s21, 0
      %p69 = por %p67, %p68
      %s70 = ssub.s32 %s24, %s33
      %s71 = ssub.s32 %s23, %s37
      %s72 = sor.u32 %s70, %s71
      %p73 = scmp.eq.s32.totalorder %s72, 0
      %s75 = sadd.s32 %s74, 1
      %s76 = scalar_select %p73, %s74, %s75
      %p79 = pneg %p73
      %p80 = scmp.eq.s32.totalorder %s15, 15
      %p81 = por %p79, %p80
      %p82 = scmp.ne.s32.totalorder %s74, %s77
      %p83 = scmp.eq.s32.totalorder %s15, 0
      %p84 = por %p82, %p83
      %p85 = scmp.ne.s32.totalorder %s74, %s77
      %p86 = scmp.eq.s32.totalorder %s20, 15
      %p87 = por %p85, %p86
      %p88 = scmp.ne.s32.totalorder %s77, %s78
      %p89 = scmp.eq.s32.totalorder %s20, 0
      %p90 = por %p88, %p89
      %p91 = scmp.ne.s32.totalorder %s77, %s78
      %p92 = scmp.eq.s32.totalorder %s21, 15
      %p93 = por %p91, %p92
      %p95 = scmp.ne.s32.totalorder %s78, %s94
      %p96 = scmp.eq.s32.totalorder %s21, 0
      %p97 = por %p95, %p96
      %s98 = ssub.s32 %s23, %s37
      %p99 = scmp.eq.s32.totalorder %s98, 0
      %s101 = sadd.s32 %s100, 1
      %s102 = scalar_select %p99, %s100, %s101
      %p105 = pneg %p99
      %p106 = scmp.eq.s32.totalorder %s15, 15
      %p107 = por %p105, %p106
      %p108 = scmp.ne.s32.totalorder %s100, %s103
      %p109 = scmp.eq.s32.totalorder %s15, 0
      %p110 = por %p108, %p109
      %p111 = scmp.ne.s32.totalorder %s100, %s103
      %p112 = scmp.eq.s32.totalorder %s20, 15
      %p113 = por %p111, %p112
      %p114 = scmp.ne.s32.totalorder %s103, %s104
      %p115 = scmp.eq.s32.totalorder %s20, 0
      %p116 = por %p114, %p115
      %p117 = scmp.ne.s32.totalorder %s103, %s104
      %p118 = scmp.eq.s32.totalorder %s21, 15
      %p119 = por %p117, %p118
      %p121 = scmp.ne.s32.totalorder %s104, %s120
      %p122 = scmp.eq.s32.totalorder %s21, 0
      %p123 = por %p121, %p122
      %s124 = ssub.s32 %s22, %s41
      %s125 = ssub.s32 %s23, %s37
      %s126 = sor.u32 %s124, %s125
      %p127 = scmp.eq.s32.totalorder %s126, 0
      %s129 = sadd.s32 %s128, 1
      %s130 = scalar_select %p127, %s128, %s129
      %p133 = pneg %p127
      %p134 = scmp.eq.s32.totalorder %s15, 15
      %p135 = por %p133, %p134
      %p136 = scmp.ne.s32.totalorder %s128, %s131
      %p137 = scmp.eq.s32.totalorder %s15, 0
      %p138 = por %p136, %p137
      %p139 = scmp.ne.s32.totalorder %s128, %s131
      %p140 = scmp.eq.s32.totalorder %s20, 15
      %p141 = por %p139, %p140
      %p142 = scmp.ne.s32.totalorder %s131, %s132
      %p143 = scmp.eq.s32.totalorder %s20, 0
      %p144 = por %p142, %p143
      %p145 = scmp.ne.s32.totalorder %s131, %s132
      %p146 = scmp.eq.s32.totalorder %s21, 15
      %p147 = por %p145, %p146
      %p149 = scmp.ne.s32.totalorder %s132, %s148
      %p150 = scmp.eq.s32.totalorder %s21, 0
      %p151 = por %p149, %p150
      %p152 = scmp.le.s32.totalorder 1, %s15
      %p153 = scmp.lt.s32.totalorder %s15, 17
      %p154 = pnand %p152, %p153
      %p155 = pneg %p154
      // Predicated region
      $region9: #{cnn_forward.14} parent=5 // pred_check
        _
      $region10: #{cnn_forward.14} parent=5 // pred_check_branch
        %157 = sbr.rel (%p154) target = $region12
      $region11: #{cnn_forward.14} parent=5 // pred_region
        %s158 = ssub.s32 %s15, 1
      $region12: #{cnn_forward.14} parent=5 // pred_fallthru
        _
      %p159 = scmp.lt.s32.totalorder %s15, 16
      // Predicated region
      $region13: #{cnn_forward.14} parent=5 // pred_check
        %p160 = pneg %p159
      $region14: #{cnn_forward.14} parent=5 // pred_check_branch
        %162 = sbr.rel (%p160) target = $region16
      $region15: #{cnn_forward.14} parent=5 // pred_region
        // Predicated region
        $region17: #{cnn_forward.14} parent=15 // pred_check
          %p163 = pneg %p56
        $region18: #{cnn_forward.14} parent=15 // pred_check_branch
          %165 = sbr.rel (%p163) target = $region20
        $region19: #{cnn_forward.14} parent=15 // pred_region
          %s166 = smul.u32 8, %s24
          %p167 = scmp.lt.s32.totalorder %s22, 0
          %s168 = scalar_select %p167, %s22, 0
          %p169 = scmp.lt.s32.totalorder %s166, 31
          %s170 = scalar_select %p169, %s166, 31
          %s171 = smul.addr %s168, 32
          %s172 = sadd.s32 %s170, %s171
          %s173 = scalar_lea.vmem %s0, %s172
          %s174 = smul.u32 8, %s24
        $region20: #{cnn_forward.14} parent=15 // pred_fallthru
          _
        // Predicated region
        $region21: #{cnn_forward.14} parent=15 // pred_check
          %p175 = pneg %p84
        $region22: #{cnn_forward.14} parent=15 // pred_check_branch
          %177 = sbr.rel (%p175) target = $region24
        $region23: #{cnn_forward.14} parent=15 // pred_region
          %s178 = sand.u32 %s74, 1
          %s179 = scalar_lea.sflag [#allocation4], %s178
          %s180 = sand.u32 %s74, 1
          %s181 = smul.addr %s180, 2048
          %s182 = scalar_lea.vmem [#allocation3], %s181
          %s183 = smul.u32 128, %s24
          %s184 = smul.u32 4, %s23
          %s186 = ssub.s32 32768, 32768
          %187 = vsyncadd %s179, %s186
          %s188 = smul.addr %s183, 16
          %s189 = sadd.s32 %s184, %s188
          %s190 = smul.addr %s189, 64
          %s191 = scalar_lea.hbm %s1, %s190
          %s192 = sshll.u32 %s182, 4
          %s193 = int_to_ptr.vmem [resolvable:$true] %s192
          %198 = dma.hbm_to_vmem [thread:$0]  %s191, 32768, %s193, %s179, 1024, 256, 16
        $region24: #{cnn_forward.14} parent=15 // pred_fallthru
          _
        // Predicated region
        $region25: #{cnn_forward.14} parent=15 // pred_check
          %p199 = pneg %p110
        $region26: #{cnn_forward.14} parent=15 // pred_check_branch
          %201 = sbr.rel (%p199) target = $region28
        $region27: #{cnn_forward.14} parent=15 // pred_region
          %s202 = sand.u32 %s100, 1
          %s203 = scalar_lea.sflag [#allocation6], %s202
          %s204 = sand.u32 %s100, 1
          %s205 = smul.addr %s204, 4
          %s206 = scalar_lea.vmem [#allocation5], %s205
          %s207 = smul.u32 4, %s23
          %s209 = ssub.s32 64, 64
          %210 = vsyncadd %s203, %s209
          %s211 = smul.addr %s207, 16
          %s212 = scalar_lea.hbm %s2, %s211
          %s214 = sshll.u32 %s206, 4
          %s215 = int_to_ptr.vmem [resolvable:$true] %s214
          %217 = dma.hbm_to_vmem [thread:$0]  %s212, 64, %s215, %s203
        $region28: #{cnn_forward.14} parent=15 // pred_fallthru
          _
      $region16: #{cnn_forward.14} parent=5 // pred_fallthru
        _
      %p218 = scmp.le.s32.totalorder 1, %s15
      %p219 = scmp.lt.s32.totalorder %s15, 17
      %p220 = pnand %p218, %p219
      %p221 = pneg %p220
      // Predicated region
      $region29: #{cnn_forward.14} parent=5 // pred_check
        _
      $region30: #{cnn_forward.14} parent=5 // pred_check_branch
        %223 = sbr.rel (%p220) target = $region32
      $region31: #{cnn_forward.14} parent=5 // pred_region
        %s224 = ssub.s32 %s15, 1
        %s225 = sand.u32 %s77, 1
        %s226 = scalar_lea.sflag [#allocation4], %s225
        %s227 = sand.u32 %s77, 1
        %s228 = smul.addr %s227, 2048
        %s229 = scalar_lea.vmem [#allocation3], %s228
        // Predicated region
        $region33: #{cnn_forward.14} parent=31 // pred_check
          %p230 = pneg %p90
        $region34: #{cnn_forward.14} parent=31 // pred_check_branch
          %232 = sbr.rel (%p230) target = $region36
        $region35: #{cnn_forward.14} parent=31 // pred_region
          %233 = dma.done %s226, 32768
        $region36: #{cnn_forward.14} parent=31 // pred_fallthru
          _
        %s234 = sand.u32 %s103, 1
        %s235 = scalar_lea.sflag [#allocation6], %s234
        %s236 = sand.u32 %s103, 1
        %s237 = smul.addr %s236, 4
        %s238 = scalar_lea.vmem [#allocation5], %s237
        // Predicated region
        $region37: #{cnn_forward.14} parent=31 // pred_check
          %p239 = pneg %p116
        $region38: #{cnn_forward.14} parent=31 // pred_check_branch
          %241 = sbr.rel (%p239) target = $region40
        $region39: #{cnn_forward.14} parent=31 // pred_region
          %242 = dma.done %s235, 64
        $region40: #{cnn_forward.14} parent=31 // pred_fallthru
          _
        %s243 = smul.u32 8, %s27
        %p244 = scmp.lt.s32.totalorder %s25, 0
        %s245 = scalar_select %p244, %s25, 0
        %p246 = scmp.lt.s32.totalorder %s243, 31
        %s247 = scalar_select %p246, %s243, 31
        %s248 = smul.addr %s245, 32
        %s249 = sadd.s32 %s247, %s248
        %s250 = scalar_lea.vmem %s0, %s249
        %p251 = pneg %p62
        %p252 = pneg %p59
        %s253 = sand.u32 %s77, 1
        %s254 = scalar_lea.sflag [#allocation4], %s253
        %s255 = sand.u32 %s77, 1
        %s256 = smul.addr %s255, 2048
        %s257 = scalar_lea.vmem [#allocation3], %s256
        %p258 = pneg %p90
        %p259 = pneg %p87
        %s260 = sand.u32 %s103, 1
        %s261 = scalar_lea.sflag [#allocation6], %s260
        %s262 = sand.u32 %s103, 1
        %s263 = smul.addr %s262, 4
        %s264 = scalar_lea.vmem [#allocation5], %s263
        %p265 = pneg %p116
        %p266 = pneg %p113
        %p267 = pneg %p144
        %p268 = pneg %p141
        %s269 = smul.u32 4, %s26
        %p270 = scmp.lt.s32.totalorder %s25, 0
        %s271 = scalar_select %p270, %s25, 0
        %p272 = scmp.lt.s32.totalorder %s269, 15
        %s273 = scalar_select %p272, %s269, 15
        %s274 = smul.addr %s271, 16
        %s275 = sadd.s32 %s273, %s274
        %s276 = scalar_lea.vmem %s3, %s275
        %s277 = smul.u32 8, %s27
        %p278 = scmp.lt.s32.totalorder %s25, 0
        %s279 = scalar_select %p278, %s25, 0
        %p280 = scmp.lt.s32.totalorder %s277, 31
        %s281 = scalar_select %p280, %s277, 31
        %s282 = smul.addr %s279, 32
        %s283 = sadd.s32 %s281, %s282
        %s284 = scalar_lea.vmem %s0, %s283
        %s285 = smul.u32 8, %s27
        %s286 = smul.u32 128, %s27
        %s287 = smul.u32 4, %s26
        %s288 = smul.u32 4, %s26
        %s289 = smul.u32 4, %s26
        %p290 = scmp.lt.s32.totalorder %s25, 0
        %s291 = scalar_select %p290, %s25, 0
        %p292 = scmp.lt.s32.totalorder %s289, 15
        %s293 = scalar_select %p292, %s289, 15
        %s294 = smul.addr %s291, 16
        %s295 = sadd.s32 %s293, %s294
        %s296 = scalar_lea.vmem %s3, %s295
        %s297 = smul.u32 4, %s26
        %p298 = scmp.eq.s32.totalorder %s27, 0
        // Predicated region
        $region41: #{cnn_forward.14} parent=31 // pred_check
          %p299 = pneg %p298
        $region42: #{cnn_forward.14} parent=31 // pred_check_branch
          %301 = sbr.rel (%p299) target = $region44
        $region43: #{cnn_forward.14} parent=31 // pred_region
          %302 = vst [vmem:[#allocation2] sm:$0xff] 0.0
        $region44: #{cnn_forward.14} parent=31 // pred_fallthru
          _
        %v303 = vld [vmem:[#allocation2] sm:$0xff]
        %v304 = vld [vmem:[%s284] sm:$0xff]
        %v305 = vld [vmem:[%s229] sm:$0xff]
        %v306 = vld [vmem:[%s229 + $0x8] sm:$0xff]
        %v307 = vld [vmem:[%s229 + $0x10] sm:$0xff]
        %v308 = vld [vmem:[%s229 + $0x18] sm:$0xff]
        %v309 = vld [vmem:[%s229 + $0x20] sm:$0xff]
        %v310 = vld [vmem:[%s229 + $0x28] sm:$0xff]
        %v311 = vld [vmem:[%s229 + $0x30] sm:$0xff]
        %v312 = vld [vmem:[%s229 + $0x38] sm:$0xff]
        %v313 = vld [vmem:[%s229 + $0x40] sm:$0xff]
        %v314 = vld [vmem:[%s229 + $0x48] sm:$0xff]
        %v315 = vld [vmem:[%s229 + $0x50] sm:$0xff]
        %v316 = vld [vmem:[%s229 + $0x58] sm:$0xff]
        %v317 = vld [vmem:[%s229 + $0x60] sm:$0xff]
        %v318 = vld [vmem:[%s229 + $0x68] sm:$0xff]
        %v319 = vld [vmem:[%s229 + $0x70] sm:$0xff]
        %v320 = vld [vmem:[%s229 + $0x78] sm:$0xff]
        %v321 = vld [vmem:[%s229 + $0x80] sm:$0xff]
        %v322 = vld [vmem:[%s229 + $0x88] sm:$0xff]
        %v323 = vld [vmem:[%s229 + $0x90] sm:$0xff]
        %v324 = vld [vmem:[%s229 + $0x98] sm:$0xff]
        %v325 = vld [vmem:[%s229 + $0xa0] sm:$0xff]
        %v326 = vld [vmem:[%s229 + $0xa8] sm:$0xff]
        %v327 = vld [vmem:[%s229 + $0xb0] sm:$0xff]
        %v328 = vld [vmem:[%s229 + $0xb8] sm:$0xff]
        %v329 = vld [vmem:[%s229 + $0xc0] sm:$0xff]
        %v330 = vld [vmem:[%s229 + $0xc8] sm:$0xff]
        %v331 = vld [vmem:[%s229 + $0xd0] sm:$0xff]
        %v332 = vld [vmem:[%s229 + $0xd8] sm:$0xff]
        %v333 = vld [vmem:[%s229 + $0xe0] sm:$0xff]
        %v334 = vld [vmem:[%s229 + $0xe8] sm:$0xff]
        %v335 = vld [vmem:[%s229 + $0xf0] sm:$0xff]
        %v336 = vld [vmem:[%s229 + $0xf8] sm:$0xff]
        %v337 = vld [vmem:[%s229 + $0x100] sm:$0xff]
        %v338 = vld [vmem:[%s229 + $0x108] sm:$0xff]
        %v339 = vld [vmem:[%s229 + $0x110] sm:$0xff]
        %v340 = vld [vmem:[%s229 + $0x118] sm:$0xff]
        %v341 = vld [vmem:[%s229 + $0x120] sm:$0xff]
        %v342 = vld [vmem:[%s229 + $0x128] sm:$0xff]
        %v343 = vld [vmem:[%s229 + $0x130] sm:$0xff]
        %v344 = vld [vmem:[%s229 + $0x138] sm:$0xff]
        %v345 = vld [vmem:[%s229 + $0x140] sm:$0xff]
        %v346 = vld [vmem:[%s229 + $0x148] sm:$0xff]
        %v347 = vld [vmem:[%s229 + $0x150] sm:$0xff]
        %v348 = vld [vmem:[%s229 + $0x158] sm:$0xff]
        %v349 = vld [vmem:[%s229 + $0x160] sm:$0xff]
        %v350 = vld [vmem:[%s229 + $0x168] sm:$0xff]
        %v351 = vld [vmem:[%s229 + $0x170] sm:$0xff]
        %v352 = vld [vmem:[%s229 + $0x178] sm:$0xff]
        %v353 = vld [vmem:[%s229 + $0x180] sm:$0xff]
        %v354 = vld [vmem:[%s229 + $0x188] sm:$0xff]
        %v355 = vld [vmem:[%s229 + $0x190] sm:$0xff]
        %v356 = vld [vmem:[%s229 + $0x198] sm:$0xff]
        %v357 = vld [vmem:[%s229 + $0x1a0] sm:$0xff]
        %v358 = vld [vmem:[%s229 + $0x1a8] sm:$0xff]
        %v359 = vld [vmem:[%s229 + $0x1b0] sm:$0xff]
        %v360 = vld [vmem:[%s229 + $0x1b8] sm:$0xff]
        %v361 = vld [vmem:[%s229 + $0x1c0] sm:$0xff]
        %v362 = vld [vmem:[%s229 + $0x1c8] sm:$0xff]
        %v363 = vld [vmem:[%s229 + $0x1d0] sm:$0xff]
        %v364 = vld [vmem:[%s229 + $0x1d8] sm:$0xff]
        %v365 = vld [vmem:[%s229 + $0x1e0] sm:$0xff]
        %v366 = vld [vmem:[%s229 + $0x1e8] sm:$0xff]
        %v367 = vld [vmem:[%s229 + $0x1f0] sm:$0xff]
        %v368 = vld [vmem:[%s229 + $0x1f8] sm:$0xff]
        %v369 = vld [vmem:[%s229 + $0x200] sm:$0xff]
        %v370 = vld [vmem:[%s229 + $0x208] sm:$0xff]
        %v371 = vld [vmem:[%s229 + $0x210] sm:$0xff]
        %v372 = vld [vmem:[%s229 + $0x218] sm:$0xff]
        %v373 = vld [vmem:[%s229 + $0x220] sm:$0xff]
        %v374 = vld [vmem:[%s229 + $0x228] sm:$0xff]
        %v375 = vld [vmem:[%s229 + $0x230] sm:$0xff]
        %v376 = vld [vmem:[%s229 + $0x238] sm:$0xff]
        %v377 = vld [vmem:[%s229 + $0x240] sm:$0xff]
        %v378 = vld [vmem:[%s229 + $0x248] sm:$0xff]
        %v379 = vld [vmem:[%s229 + $0x250] sm:$0xff]
        %v380 = vld [vmem:[%s229 + $0x258] sm:$0xff]
        %v381 = vld [vmem:[%s229 + $0x260] sm:$0xff]
        %v382 = vld [vmem:[%s229 + $0x268] sm:$0xff]
        %v383 = vld [vmem:[%s229 + $0x270] sm:$0xff]
        %v384 = vld [vmem:[%s229 + $0x278] sm:$0xff]
        %v385 = vld [vmem:[%s229 + $0x280] sm:$0xff]
        %v386 = vld [vmem:[%s229 + $0x288] sm:$0xff]
        %v387 = vld [vmem:[%s229 + $0x290] sm:$0xff]
        %v388 = vld [vmem:[%s229 + $0x298] sm:$0xff]
        %v389 = vld [vmem:[%s229 + $0x2a0] sm:$0xff]
        %v390 = vld [vmem:[%s229 + $0x2a8] sm:$0xff]
        %v391 = vld [vmem:[%s229 + $0x2b0] sm:$0xff]
        %v392 = vld [vmem:[%s229 + $0x2b8] sm:$0xff]
        %v393 = vld [vmem:[%s229 + $0x2c0] sm:$0xff]
        %v394 = vld [vmem:[%s229 + $0x2c8] sm:$0xff]
        %v395 = vld [vmem:[%s229 + $0x2d0] sm:$0xff]
        %v396 = vld [vmem:[%s229 + $0x2d8] sm:$0xff]
        %v397 = vld [vmem:[%s229 + $0x2e0] sm:$0xff]
        %v398 = vld [vmem:[%s229 + $0x2e8] sm:$0xff]
        %v399 = vld [vmem:[%s229 + $0x2f0] sm:$0xff]
        %v400 = vld [vmem:[%s229 + $0x2f8] sm:$0xff]
        %v401 = vld [vmem:[%s229 + $0x300] sm:$0xff]
        %v402 = vld [vmem:[%s229 + $0x308] sm:$0xff]
        %v403 = vld [vmem:[%s229 + $0x310] sm:$0xff]
        %v404 = vld [vmem:[%s229 + $0x318] sm:$0xff]
        %v405 = vld [vmem:[%s229 + $0x320] sm:$0xff]
        %v406 = vld [vmem:[%s229 + $0x328] sm:$0xff]
        %v407 = vld [vmem:[%s229 + $0x330] sm:$0xff]
        %v408 = vld [vmem:[%s229 + $0x338] sm:$0xff]
        %v409 = vld [vmem:[%s229 + $0x340] sm:$0xff]
        %v410 = vld [vmem:[%s229 + $0x348] sm:$0xff]
        %v411 = vld [vmem:[%s229 + $0x350] sm:$0xff]
        %v412 = vld [vmem:[%s229 + $0x358] sm:$0xff]
        %v413 = vld [vmem:[%s229 + $0x360] sm:$0xff]
        %v414 = vld [vmem:[%s229 + $0x368] sm:$0xff]
        %v415 = vld [vmem:[%s229 + $0x370] sm:$0xff]
        %v416 = vld [vmem:[%s229 + $0x378] sm:$0xff]
        %v417 = vld [vmem:[%s229 + $0x380] sm:$0xff]
        %v418 = vld [vmem:[%s229 + $0x388] sm:$0xff]
        %v419 = vld [vmem:[%s229 + $0x390] sm:$0xff]
        %v420 = vld [vmem:[%s229 + $0x398] sm:$0xff]
        %v421 = vld [vmem:[%s229 + $0x3a0] sm:$0xff]
        %v422 = vld [vmem:[%s229 + $0x3a8] sm:$0xff]
        %v423 = vld [vmem:[%s229 + $0x3b0] sm:$0xff]
        %v424 = vld [vmem:[%s229 + $0x3b8] sm:$0xff]
        %v425 = vld [vmem:[%s229 + $0x3c0] sm:$0xff]
        %v426 = vld [vmem:[%s229 + $0x3c8] sm:$0xff]
        %v427 = vld [vmem:[%s229 + $0x3d0] sm:$0xff]
        %v428 = vld [vmem:[%s229 + $0x3d8] sm:$0xff]
        %v429 = vld [vmem:[%s229 + $0x3e0] sm:$0xff]
        %v430 = vld [vmem:[%s229 + $0x3e8] sm:$0xff]
        %v431 = vld [vmem:[%s229 + $0x3f0] sm:$0xff]
        %v432 = vld [vmem:[%s229 + $0x3f8] sm:$0xff]
        %v433 = vld [vmem:[%s229 + $0x400] sm:$0xff]
        %v434 = vld [vmem:[%s229 + $0x408] sm:$0xff]
        %v435 = vld [vmem:[%s229 + $0x410] sm:$0xff]
        %v436 = vld [vmem:[%s229 + $0x418] sm:$0xff]
        %v437 = vld [vmem:[%s229 + $0x420] sm:$0xff]
        %v438 = vld [vmem:[%s229 + $0x428] sm:$0xff]
        %v439 = vld [vmem:[%s229 + $0x430] sm:$0xff]
        %v440 = vld [vmem:[%s229 + $0x438] sm:$0xff]
        %v441 = vld [vmem:[%s229 + $0x440] sm:$0xff]
        %v442 = vld [vmem:[%s229 + $0x448] sm:$0xff]
        %v443 = vld [vmem:[%s229 + $0x450] sm:$0xff]
        %v444 = vld [vmem:[%s229 + $0x458] sm:$0xff]
        %v445 = vld [vmem:[%s229 + $0x460] sm:$0xff]
        %v446 = vld [vmem:[%s229 + $0x468] sm:$0xff]
        %v447 = vld [vmem:[%s229 + $0x470] sm:$0xff]
        %v448 = vld [vmem:[%s229 + $0x478] sm:$0xff]
        %v449 = vld [vmem:[%s229 + $0x480] sm:$0xff]
        %v450 = vld [vmem:[%s229 + $0x488] sm:$0xff]
        %v451 = vld [vmem:[%s229 + $0x490] sm:$0xff]
        %v452 = vld [vmem:[%s229 + $0x498] sm:$0xff]
        %v453 = vld [vmem:[%s229 + $0x4a0] sm:$0xff]
        %v454 = vld [vmem:[%s229 + $0x4a8] sm:$0xff]
        %v455 = vld [vmem:[%s229 + $0x4b0] sm:$0xff]
        %v456 = vld [vmem:[%s229 + $0x4b8] sm:$0xff]
        %v457 = vld [vmem:[%s229 + $0x4c0] sm:$0xff]
        %v458 = vld [vmem:[%s229 + $0x4c8] sm:$0xff]
        %v459 = vld [vmem:[%s229 + $0x4d0] sm:$0xff]
        %v460 = vld [vmem:[%s229 + $0x4d8] sm:$0xff]
        %v461 = vld [vmem:[%s229 + $0x4e0] sm:$0xff]
        %v462 = vld [vmem:[%s229 + $0x4e8] sm:$0xff]
        %v463 = vld [vmem:[%s229 + $0x4f0] sm:$0xff]
        %v464 = vld [vmem:[%s229 + $0x4f8] sm:$0xff]
        %v465 = vld [vmem:[%s229 + $0x500] sm:$0xff]
        %v466 = vld [vmem:[%s229 + $0x508] sm:$0xff]
        %v467 = vld [vmem:[%s229 + $0x510] sm:$0xff]
        %v468 = vld [vmem:[%s229 + $0x518] sm:$0xff]
        %v469 = vld [vmem:[%s229 + $0x520] sm:$0xff]
        %v470 = vld [vmem:[%s229 + $0x528] sm:$0xff]
        %v471 = vld [vmem:[%s229 + $0x530] sm:$0xff]
        %v472 = vld [vmem:[%s229 + $0x538] sm:$0xff]
        %v473 = vld [vmem:[%s229 + $0x540] sm:$0xff]
        %v474 = vld [vmem:[%s229 + $0x548] sm:$0xff]
        %v475 = vld [vmem:[%s229 + $0x550] sm:$0xff]
        %v476 = vld [vmem:[%s229 + $0x558] sm:$0xff]
        %v477 = vld [vmem:[%s229 + $0x560] sm:$0xff]
        %v478 = vld [vmem:[%s229 + $0x568] sm:$0xff]
        %v479 = vld [vmem:[%s229 + $0x570] sm:$0xff]
        %v480 = vld [vmem:[%s229 + $0x578] sm:$0xff]
        %v481 = vld [vmem:[%s229 + $0x580] sm:$0xff]
        %v482 = vld [vmem:[%s229 + $0x588] sm:$0xff]
        %v483 = vld [vmem:[%s229 + $0x590] sm:$0xff]
        %v484 = vld [vmem:[%s229 + $0x598] sm:$0xff]
        %v485 = vld [vmem:[%s229 + $0x5a0] sm:$0xff]
        %v486 = vld [vmem:[%s229 + $0x5a8] sm:$0xff]
        %v487 = vld [vmem:[%s229 + $0x5b0] sm:$0xff]
        %v488 = vld [vmem:[%s229 + $0x5b8] sm:$0xff]
        %v489 = vld [vmem:[%s229 + $0x5c0] sm:$0xff]
        %v490 = vld [vmem:[%s229 + $0x5c8] sm:$0xff]
        %v491 = vld [vmem:[%s229 + $0x5d0] sm:$0xff]
        %v492 = vld [vmem:[%s229 + $0x5d8] sm:$0xff]
        %v493 = vld [vmem:[%s229 + $0x5e0] sm:$0xff]
        %v494 = vld [vmem:[%s229 + $0x5e8] sm:$0xff]
        %v495 = vld [vmem:[%s229 + $0x5f0] sm:$0xff]
        %v496 = vld [vmem:[%s229 + $0x5f8] sm:$0xff]
        %v497 = vld [vmem:[%s229 + $0x600] sm:$0xff]
        %v498 = vld [vmem:[%s229 + $0x608] sm:$0xff]
        %v499 = vld [vmem:[%s229 + $0x610] sm:$0xff]
        %v500 = vld [vmem:[%s229 + $0x618] sm:$0xff]
        %v501 = vld [vmem:[%s229 + $0x620] sm:$0xff]
        %v502 = vld [vmem:[%s229 + $0x628] sm:$0xff]
        %v503 = vld [vmem:[%s229 + $0x630] sm:$0xff]
        %v504 = vld [vmem:[%s229 + $0x638] sm:$0xff]
        %v505 = vld [vmem:[%s229 + $0x640] sm:$0xff]
        %v506 = vld [vmem:[%s229 + $0x648] sm:$0xff]
        %v507 = vld [vmem:[%s229 + $0x650] sm:$0xff]
        %v508 = vld [vmem:[%s229 + $0x658] sm:$0xff]
        %v509 = vld [vmem:[%s229 + $0x660] sm:$0xff]
        %v510 = vld [vmem:[%s229 + $0x668] sm:$0xff]
        %v511 = vld [vmem:[%s229 + $0x670] sm:$0xff]
        %v512 = vld [vmem:[%s229 + $0x678] sm:$0xff]
        %v513 = vld [vmem:[%s229 + $0x680] sm:$0xff]
        %v514 = vld [vmem:[%s229 + $0x688] sm:$0xff]
        %v515 = vld [vmem:[%s229 + $0x690] sm:$0xff]
        %v516 = vld [vmem:[%s229 + $0x698] sm:$0xff]
        %v517 = vld [vmem:[%s229 + $0x6a0] sm:$0xff]
        %v518 = vld [vmem:[%s229 + $0x6a8] sm:$0xff]
        %v519 = vld [vmem:[%s229 + $0x6b0] sm:$0xff]
        %v520 = vld [vmem:[%s229 + $0x6b8] sm:$0xff]
        %v521 = vld [vmem:[%s229 + $0x6c0] sm:$0xff]
        %v522 = vld [vmem:[%s229 + $0x6c8] sm:$0xff]
        %v523 = vld [vmem:[%s229 + $0x6d0] sm:$0xff]
        %v524 = vld [vmem:[%s229 + $0x6d8] sm:$0xff]
        %v525 = vld [vmem:[%s229 + $0x6e0] sm:$0xff]
        %v526 = vld [vmem:[%s229 + $0x6e8] sm:$0xff]
        %v527 = vld [vmem:[%s229 + $0x6f0] sm:$0xff]
        %v528 = vld [vmem:[%s229 + $0x6f8] sm:$0xff]
        %v529 = vld [vmem:[%s229 + $0x700] sm:$0xff]
        %v530 = vld [vmem:[%s229 + $0x708] sm:$0xff]
        %v531 = vld [vmem:[%s229 + $0x710] sm:$0xff]
        %v532 = vld [vmem:[%s229 + $0x718] sm:$0xff]
        %v533 = vld [vmem:[%s229 + $0x720] sm:$0xff]
        %v534 = vld [vmem:[%s229 + $0x728] sm:$0xff]
        %v535 = vld [vmem:[%s229 + $0x730] sm:$0xff]
        %v536 = vld [vmem:[%s229 + $0x738] sm:$0xff]
        %v537 = vld [vmem:[%s229 + $0x740] sm:$0xff]
        %v538 = vld [vmem:[%s229 + $0x748] sm:$0xff]
        %v539 = vld [vmem:[%s229 + $0x750] sm:$0xff]
        %v540 = vld [vmem:[%s229 + $0x758] sm:$0xff]
        %v541 = vld [vmem:[%s229 + $0x760] sm:$0xff]
        %v542 = vld [vmem:[%s229 + $0x768] sm:$0xff]
        %v543 = vld [vmem:[%s229 + $0x770] sm:$0xff]
        %v544 = vld [vmem:[%s229 + $0x778] sm:$0xff]
        %v545 = vld [vmem:[%s229 + $0x780] sm:$0xff]
        %v546 = vld [vmem:[%s229 + $0x788] sm:$0xff]
        %v547 = vld [vmem:[%s229 + $0x790] sm:$0xff]
        %v548 = vld [vmem:[%s229 + $0x798] sm:$0xff]
        %v549 = vld [vmem:[%s229 + $0x7a0] sm:$0xff]
        %v550 = vld [vmem:[%s229 + $0x7a8] sm:$0xff]
        %v551 = vld [vmem:[%s229 + $0x7b0] sm:$0xff]
        %v552 = vld [vmem:[%s229 + $0x7b8] sm:$0xff]
        %v553 = vld [vmem:[%s229 + $0x7c0] sm:$0xff]
        %v554 = vld [vmem:[%s229 + $0x7c8] sm:$0xff]
        %v555 = vld [vmem:[%s229 + $0x7d0] sm:$0xff]
        %v556 = vld [vmem:[%s229 + $0x7d8] sm:$0xff]
        %v557 = vld [vmem:[%s229 + $0x7e0] sm:$0xff]
        %v558 = vld [vmem:[%s229 + $0x7e8] sm:$0xff]
        %v559 = vld [vmem:[%s229 + $0x7f0] sm:$0xff]
        %v560 = vld [vmem:[%s229 + $0x7f8] sm:$0xff]
        %v562 = vcombine.high %v304, %v304
        %v564 = vunpack.c.l.s4 1966171168
        %v565 = vunpack.c.0.s8 %v564
        %v566 = vlaneseq
        %v567 = vshrl.u32 %v566, 7
        %v568 = vsub.s32 %v565, %v567
        %v569 = vrot.slane %v304, %v568
        %v571 = vunpack.c.l.s4 1966171168
        %v572 = vunpack.c.0.s8 %v571
        %v573 = vlaneseq
        %v574 = vshrl.u32 %v573, 7
        %v575 = vsub.s32 %v572, %v574
        %v576 = vrot.slane %v562, %v575
        %v577 = vcombine.high %v569, %v569
        %v578 = vcombine.high %v576, %v576
        %v580 = vunpack.c.l.s4 1966171168
        %v581 = vunpack.c.0.s8 %v580
        %v582 = vlaneseq
        %v583 = vshrl.u32 %v582, 7
        %v584 = vsub.s32 %v581, %v583
        %v585 = vrot.slane %v569, %v584
        %v587 = vunpack.c.l.s4 1966171168
        %v588 = vunpack.c.0.s8 %v587
        %v589 = vlaneseq
        %v590 = vshrl.u32 %v589, 7
        %v591 = vsub.s32 %v588, %v590
        %v592 = vrot.slane %v576, %v591
        %v594 = vunpack.c.l.s4 1966171168
        %v595 = vunpack.c.0.s8 %v594
        %v596 = vlaneseq
        %v597 = vshrl.u32 %v596, 7
        %v598 = vsub.s32 %v595, %v597
        %v599 = vrot.slane %v577, %v598
        %v601 = vunpack.c.l.s4 1966171168
        %v602 = vunpack.c.0.s8 %v601
        %v603 = vlaneseq
        %v604 = vshrl.u32 %v603, 7
        %v605 = vsub.s32 %v602, %v604
        %v606 = vrot.slane %v578, %v605
        %v607 = vcombine.high %v585, %v585
        %v608 = vcombine.high %v592, %v592
        %v609 = vcombine.high %v599, %v599
        %v610 = vcombine.high %v606, %v606
        %v875 = vunpack.c.l.b16 %v305
        %v876 = vunpack.c.h.b16 %v305
        %v877 = vunpack.c.l.b16 %v306
        %v878 = vunpack.c.h.b16 %v306
        %v879 = vunpack.c.l.b16 %v307
        %v880 = vunpack.c.h.b16 %v307
        %v881 = vunpack.c.l.b16 %v308
        %v882 = vunpack.c.h.b16 %v308
        %v883 = vunpack.c.l.b16 %v309
        %v884 = vunpack.c.h.b16 %v309
        %v885 = vunpack.c.l.b16 %v310
        %v886 = vunpack.c.h.b16 %v310
        %v887 = vunpack.c.l.b16 %v311
        %v888 = vunpack.c.h.b16 %v311
        %v889 = vunpack.c.l.b16 %v312
        %v890 = vunpack.c.h.b16 %v312
        %v891 = vunpack.c.l.b16 %v313
        %v892 = vunpack.c.h.b16 %v313
        %v893 = vunpack.c.l.b16 %v314
        %v894 = vunpack.c.h.b16 %v314
        %v895 = vunpack.c.l.b16 %v315
        %v896 = vunpack.c.h.b16 %v315
        %v897 = vunpack.c.l.b16 %v316
        %v898 = vunpack.c.h.b16 %v316
        %v899 = vunpack.c.l.b16 %v317
        %v900 = vunpack.c.h.b16 %v317
        %v901 = vunpack.c.l.b16 %v318
        %v902 = vunpack.c.h.b16 %v318
        %v903 = vunpack.c.l.b16 %v319
        %v904 = vunpack.c.h.b16 %v319
        %v905 = vunpack.c.l.b16 %v320
        %v906 = vunpack.c.h.b16 %v320
        %v907 = vunpack.c.l.b16 %v321
        %v908 = vunpack.c.h.b16 %v321
        %v909 = vunpack.c.l.b16 %v322
        %v910 = vunpack.c.h.b16 %v322
        %v911 = vunpack.c.l.b16 %v323
        %v912 = vunpack.c.h.b16 %v323
        %v913 = vunpack.c.l.b16 %v324
        %v914 = vunpack.c.h.b16 %v324
        %v915 = vunpack.c.l.b16 %v325
        %v916 = vunpack.c.h.b16 %v325
        %v917 = vunpack.c.l.b16 %v326
        %v918 = vunpack.c.h.b16 %v326
        %v919 = vunpack.c.l.b16 %v327
        %v920 = vunpack.c.h.b16 %v327
        %v921 = vunpack.c.l.b16 %v328
        %v922 = vunpack.c.h.b16 %v328
        %v923 = vunpack.c.l.b16 %v329
        %v924 = vunpack.c.h.b16 %v329
        %v925 = vunpack.c.l.b16 %v330
        %v926 = vunpack.c.h.b16 %v330
        %v927 = vunpack.c.l.b16 %v331
        %v928 = vunpack.c.h.b16 %v331
        %v929 = vunpack.c.l.b16 %v332
        %v930 = vunpack.c.h.b16 %v332
        %v931 = vunpack.c.l.b16 %v333
        %v932 = vunpack.c.h.b16 %v333
        %v933 = vunpack.c.l.b16 %v334
        %v934 = vunpack.c.h.b16 %v334
        %v935 = vunpack.c.l.b16 %v335
        %v936 = vunpack.c.h.b16 %v335
        %v937 = vunpack.c.l.b16 %v336
        %v938 = vunpack.c.h.b16 %v336
        %v939 = vunpack.c.l.b16 %v337
        %v940 = vunpack.c.h.b16 %v337
        %v941 = vunpack.c.l.b16 %v338
        %v942 = vunpack.c.h.b16 %v338
        %v943 = vunpack.c.l.b16 %v339
        %v944 = vunpack.c.h.b16 %v339
        %v945 = vunpack.c.l.b16 %v340
        %v946 = vunpack.c.h.b16 %v340
        %v947 = vunpack.c.l.b16 %v341
        %v948 = vunpack.c.h.b16 %v341
        %v949 = vunpack.c.l.b16 %v342
        %v950 = vunpack.c.h.b16 %v342
        %v951 = vunpack.c.l.b16 %v343
        %v952 = vunpack.c.h.b16 %v343
        %v953 = vunpack.c.l.b16 %v344
        %v954 = vunpack.c.h.b16 %v344
        %v955 = vunpack.c.l.b16 %v345
        %v956 = vunpack.c.h.b16 %v345
        %v957 = vunpack.c.l.b16 %v346
        %v958 = vunpack.c.h.b16 %v346
        %v959 = vunpack.c.l.b16 %v347
        %v960 = vunpack.c.h.b16 %v347
        %v961 = vunpack.c.l.b16 %v348
        %v962 = vunpack.c.h.b16 %v348
        %v963 = vunpack.c.l.b16 %v349
        %v964 = vunpack.c.h.b16 %v349
        %v965 = vunpack.c.l.b16 %v350
        %v966 = vunpack.c.h.b16 %v350
        %v967 = vunpack.c.l.b16 %v351
        %v968 = vunpack.c.h.b16 %v351
        %v969 = vunpack.c.l.b16 %v352
        %v970 = vunpack.c.h.b16 %v352
        %v971 = vunpack.c.l.b16 %v353
        %v972 = vunpack.c.h.b16 %v353
        %v973 = vunpack.c.l.b16 %v354
        %v974 = vunpack.c.h.b16 %v354
        %v975 = vunpack.c.l.b16 %v355
        %v976 = vunpack.c.h.b16 %v355
        %v977 = vunpack.c.l.b16 %v356
        %v978 = vunpack.c.h.b16 %v356
        %v979 = vunpack.c.l.b16 %v357
        %v980 = vunpack.c.h.b16 %v357
        %v981 = vunpack.c.l.b16 %v358
        %v982 = vunpack.c.h.b16 %v358
        %v983 = vunpack.c.l.b16 %v359
        %v984 = vunpack.c.h.b16 %v359
        %v985 = vunpack.c.l.b16 %v360
        %v986 = vunpack.c.h.b16 %v360
        %v987 = vunpack.c.l.b16 %v361
        %v988 = vunpack.c.h.b16 %v361
        %v989 = vunpack.c.l.b16 %v362
        %v990 = vunpack.c.h.b16 %v362
        %v991 = vunpack.c.l.b16 %v363
        %v992 = vunpack.c.h.b16 %v363
        %v993 = vunpack.c.l.b16 %v364
        %v994 = vunpack.c.h.b16 %v364
        %v995 = vunpack.c.l.b16 %v365
        %v996 = vunpack.c.h.b16 %v365
        %v997 = vunpack.c.l.b16 %v366
        %v998 = vunpack.c.h.b16 %v366
        %v999 = vunpack.c.l.b16 %v367
        %v1000 = vunpack.c.h.b16 %v367
        %v1001 = vunpack.c.l.b16 %v368
        %v1002 = vunpack.c.h.b16 %v368
        %v1003 = vunpack.c.l.b16 %v369
        %v1004 = vunpack.c.h.b16 %v369
        %v1005 = vunpack.c.l.b16 %v370
        %v1006 = vunpack.c.h.b16 %v370
        %v1007 = vunpack.c.l.b16 %v371
        %v1008 = vunpack.c.h.b16 %v371
        %v1009 = vunpack.c.l.b16 %v372
        %v1010 = vunpack.c.h.b16 %v372
        %v1011 = vunpack.c.l.b16 %v373
        %v1012 = vunpack.c.h.b16 %v373
        %v1013 = vunpack.c.l.b16 %v374
        %v1014 = vunpack.c.h.b16 %v374
        %v1015 = vunpack.c.l.b16 %v375
        %v1016 = vunpack.c.h.b16 %v375
        %v1017 = vunpack.c.l.b16 %v376
        %v1018 = vunpack.c.h.b16 %v376
        %v1019 = vunpack.c.l.b16 %v377
        %v1020 = vunpack.c.h.b16 %v377
        %v1021 = vunpack.c.l.b16 %v378
        %v1022 = vunpack.c.h.b16 %v378
        %v1023 = vunpack.c.l.b16 %v379
        %v1024 = vunpack.c.h.b16 %v379
        %v1025 = vunpack.c.l.b16 %v380
        %v1026 = vunpack.c.h.b16 %v380
        %v1027 = vunpack.c.l.b16 %v381
        %v1028 = vunpack.c.h.b16 %v381
        %v1029 = vunpack.c.l.b16 %v382
        %v1030 = vunpack.c.h.b16 %v382
        %v1031 = vunpack.c.l.b16 %v383
        %v1032 = vunpack.c.h.b16 %v383
        %v1033 = vunpack.c.l.b16 %v384
        %v1034 = vunpack.c.h.b16 %v384
        %v1035 = vunpack.c.l.b16 %v385
        %v1036 = vunpack.c.h.b16 %v385
        %v1037 = vunpack.c.l.b16 %v386
        %v1038 = vunpack.c.h.b16 %v386
        %v1039 = vunpack.c.l.b16 %v387
        %v1040 = vunpack.c.h.b16 %v387
        %v1041 = vunpack.c.l.b16 %v388
        %v1042 = vunpack.c.h.b16 %v388
        %v1043 = vunpack.c.l.b16 %v389
        %v1044 = vunpack.c.h.b16 %v389
        %v1045 = vunpack.c.l.b16 %v390
        %v1046 = vunpack.c.h.b16 %v390
        %v1047 = vunpack.c.l.b16 %v391
        %v1048 = vunpack.c.h.b16 %v391
        %v1049 = vunpack.c.l.b16 %v392
        %v1050 = vunpack.c.h.b16 %v392
        %v1051 = vunpack.c.l.b16 %v393
        %v1052 = vunpack.c.h.b16 %v393
        %v1053 = vunpack.c.l.b16 %v394
        %v1054 = vunpack.c.h.b16 %v394
        %v1055 = vunpack.c.l.b16 %v395
        %v1056 = vunpack.c.h.b16 %v395
        %v1057 = vunpack.c.l.b16 %v396
        %v1058 = vunpack.c.h.b16 %v396
        %v1059 = vunpack.c.l.b16 %v397
        %v1060 = vunpack.c.h.b16 %v397
        %v1061 = vunpack.c.l.b16 %v398
        %v1062 = vunpack.c.h.b16 %v398
        %v1063 = vunpack.c.l.b16 %v399
        %v1064 = vunpack.c.h.b16 %v399
        %v1065 = vunpack.c.l.b16 %v400
        %v1066 = vunpack.c.h.b16 %v400
        %v1067 = vunpack.c.l.b16 %v401
        %v1068 = vunpack.c.h.b16 %v401
        %v1069 = vunpack.c.l.b16 %v402
        %v1070 = vunpack.c.h.b16 %v402
        %v1071 = vunpack.c.l.b16 %v403
        %v1072 = vunpack.c.h.b16 %v403
        %v1073 = vunpack.c.l.b16 %v404
        %v1074 = vunpack.c.h.b16 %v404
        %v1075 = vunpack.c.l.b16 %v405
        %v1076 = vunpack.c.h.b16 %v405
        %v1077 = vunpack.c.l.b16 %v406
        %v1078 = vunpack.c.h.b16 %v406
        %v1079 = vunpack.c.l.b16 %v407
        %v1080 = vunpack.c.h.b16 %v407
        %v1081 = vunpack.c.l.b16 %v408
        %v1082 = vunpack.c.h.b16 %v408
        %v1083 = vunpack.c.l.b16 %v409
        %v1084 = vunpack.c.h.b16 %v409
        %v1085 = vunpack.c.l.b16 %v410
        %v1086 = vunpack.c.h.b16 %v410
        %v1087 = vunpack.c.l.b16 %v411
        %v1088 = vunpack.c.h.b16 %v411
        %v1089 = vunpack.c.l.b16 %v412
        %v1090 = vunpack.c.h.b16 %v412
        %v1091 = vunpack.c.l.b16 %v413
        %v1092 = vunpack.c.h.b16 %v413
        %v1093 = vunpack.c.l.b16 %v414
        %v1094 = vunpack.c.h.b16 %v414
        %v1095 = vunpack.c.l.b16 %v415
        %v1096 = vunpack.c.h.b16 %v415
        %v1097 = vunpack.c.l.b16 %v416
        %v1098 = vunpack.c.h.b16 %v416
        %v1099 = vunpack.c.l.b16 %v417
        %v1100 = vunpack.c.h.b16 %v417
        %v1101 = vunpack.c.l.b16 %v418
        %v1102 = vunpack.c.h.b16 %v418
        %v1103 = vunpack.c.l.b16 %v419
        %v1104 = vunpack.c.h.b16 %v419
        %v1105 = vunpack.c.l.b16 %v420
        %v1106 = vunpack.c.h.b16 %v420
        %v1107 = vunpack.c.l.b16 %v421
        %v1108 = vunpack.c.h.b16 %v421
        %v1109 = vunpack.c.l.b16 %v422
        %v1110 = vunpack.c.h.b16 %v422
        %v1111 = vunpack.c.l.b16 %v423
        %v1112 = vunpack.c.h.b16 %v423
        %v1113 = vunpack.c.l.b16 %v424
        %v1114 = vunpack.c.h.b16 %v424
        %v1115 = vunpack.c.l.b16 %v425
        %v1116 = vunpack.c.h.b16 %v425
        %v1117 = vunpack.c.l.b16 %v426
        %v1118 = vunpack.c.h.b16 %v426
        %v1119 = vunpack.c.l.b16 %v427
        %v1120 = vunpack.c.h.b16 %v427
        %v1121 = vunpack.c.l.b16 %v428
        %v1122 = vunpack.c.h.b16 %v428
        %v1123 = vunpack.c.l.b16 %v429
        %v1124 = vunpack.c.h.b16 %v429
        %v1125 = vunpack.c.l.b16 %v430
        %v1126 = vunpack.c.h.b16 %v430
        %v1127 = vunpack.c.l.b16 %v431
        %v1128 = vunpack.c.h.b16 %v431
        %v1129 = vunpack.c.l.b16 %v432
        %v1130 = vunpack.c.h.b16 %v432
        %v1131 = vunpack.c.l.b16 %v433
        %v1132 = vunpack.c.h.b16 %v433
        %v1133 = vunpack.c.l.b16 %v434
        %v1134 = vunpack.c.h.b16 %v434
        %v1135 = vunpack.c.l.b16 %v435
        %v1136 = vunpack.c.h.b16 %v435
        %v1137 = vunpack.c.l.b16 %v436
        %v1138 = vunpack.c.h.b16 %v436
        %v1139 = vunpack.c.l.b16 %v437
        %v1140 = vunpack.c.h.b16 %v437
        %v1141 = vunpack.c.l.b16 %v438
        %v1142 = vunpack.c.h.b16 %v438
        %v1143 = vunpack.c.l.b16 %v439
        %v1144 = vunpack.c.h.b16 %v439
        %v1145 = vunpack.c.l.b16 %v440
        %v1146 = vunpack.c.h.b16 %v440
        %v1147 = vunpack.c.l.b16 %v441
        %v1148 = vunpack.c.h.b16 %v441
        %v1149 = vunpack.c.l.b16 %v442
        %v1150 = vunpack.c.h.b16 %v442
        %v1151 = vunpack.c.l.b16 %v443
        %v1152 = vunpack.c.h.b16 %v443
        %v1153 = vunpack.c.l.b16 %v444
        %v1154 = vunpack.c.h.b16 %v444
        %v1155 = vunpack.c.l.b16 %v445
        %v1156 = vunpack.c.h.b16 %v445
        %v1157 = vunpack.c.l.b16 %v446
        %v1158 = vunpack.c.h.b16 %v446
        %v1159 = vunpack.c.l.b16 %v447
        %v1160 = vunpack.c.h.b16 %v447
        %v1161 = vunpack.c.l.b16 %v448
        %v1162 = vunpack.c.h.b16 %v448
        %v1163 = vunpack.c.l.b16 %v449
        %v1164 = vunpack.c.h.b16 %v449
        %v1165 = vunpack.c.l.b16 %v450
        %v1166 = vunpack.c.h.b16 %v450
        %v1167 = vunpack.c.l.b16 %v451
        %v1168 = vunpack.c.h.b16 %v451
        %v1169 = vunpack.c.l.b16 %v452
        %v1170 = vunpack.c.h.b16 %v452
        %v1171 = vunpack.c.l.b16 %v453
        %v1172 = vunpack.c.h.b16 %v453
        %v1173 = vunpack.c.l.b16 %v454
        %v1174 = vunpack.c.h.b16 %v454
        %v1175 = vunpack.c.l.b16 %v455
        %v1176 = vunpack.c.h.b16 %v455
        %v1177 = vunpack.c.l.b16 %v456
        %v1178 = vunpack.c.h.b16 %v456
        %v1179 = vunpack.c.l.b16 %v457
        %v1180 = vunpack.c.h.b16 %v457
        %v1181 = vunpack.c.l.b16 %v458
        %v1182 = vunpack.c.h.b16 %v458
        %v1183 = vunpack.c.l.b16 %v459
        %v1184 = vunpack.c.h.b16 %v459
        %v1185 = vunpack.c.l.b16 %v460
        %v1186 = vunpack.c.h.b16 %v460
        %v1187 = vunpack.c.l.b16 %v461
        %v1188 = vunpack.c.h.b16 %v461
        %v1189 = vunpack.c.l.b16 %v462
        %v1190 = vunpack.c.h.b16 %v462
        %v1191 = vunpack.c.l.b16 %v463
        %v1192 = vunpack.c.h.b16 %v463
        %v1193 = vunpack.c.l.b16 %v464
        %v1194 = vunpack.c.h.b16 %v464
        %v1195 = vunpack.c.l.b16 %v465
        %v1196 = vunpack.c.h.b16 %v465
        %v1197 = vunpack.c.l.b16 %v466
        %v1198 = vunpack.c.h.b16 %v466
        %v1199 = vunpack.c.l.b16 %v467
        %v1200 = vunpack.c.h.b16 %v467
        %v1201 = vunpack.c.l.b16 %v468
        %v1202 = vunpack.c.h.b16 %v468
        %v1203 = vunpack.c.l.b16 %v469
        %v1204 = vunpack.c.h.b16 %v469
        %v1205 = vunpack.c.l.b16 %v470
        %v1206 = vunpack.c.h.b16 %v470
        %v1207 = vunpack.c.l.b16 %v471
        %v1208 = vunpack.c.h.b16 %v471
        %v1209 = vunpack.c.l.b16 %v472
        %v1210 = vunpack.c.h.b16 %v472
        %v1211 = vunpack.c.l.b16 %v473
        %v1212 = vunpack.c.h.b16 %v473
        %v1213 = vunpack.c.l.b16 %v474
        %v1214 = vunpack.c.h.b16 %v474
        %v1215 = vunpack.c.l.b16 %v475
        %v1216 = vunpack.c.h.b16 %v475
        %v1217 = vunpack.c.l.b16 %v476
        %v1218 = vunpack.c.h.b16 %v476
        %v1219 = vunpack.c.l.b16 %v477
        %v1220 = vunpack.c.h.b16 %v477
        %v1221 = vunpack.c.l.b16 %v478
        %v1222 = vunpack.c.h.b16 %v478
        %v1223 = vunpack.c.l.b16 %v479
        %v1224 = vunpack.c.h.b16 %v479
        %v1225 = vunpack.c.l.b16 %v480
        %v1226 = vunpack.c.h.b16 %v480
        %v1227 = vunpack.c.l.b16 %v481
        %v1228 = vunpack.c.h.b16 %v481
        %v1229 = vunpack.c.l.b16 %v482
        %v1230 = vunpack.c.h.b16 %v482
        %v1231 = vunpack.c.l.b16 %v483
        %v1232 = vunpack.c.h.b16 %v483
        %v1233 = vunpack.c.l.b16 %v484
        %v1234 = vunpack.c.h.b16 %v484
        %v1235 = vunpack.c.l.b16 %v485
        %v1236 = vunpack.c.h.b16 %v485
        %v1237 = vunpack.c.l.b16 %v486
        %v1238 = vunpack.c.h.b16 %v486
        %v1239 = vunpack.c.l.b16 %v487
        %v1240 = vunpack.c.h.b16 %v487
        %v1241 = vunpack.c.l.b16 %v488
        %v1242 = vunpack.c.h.b16 %v488
        %v1243 = vunpack.c.l.b16 %v489
        %v1244 = vunpack.c.h.b16 %v489
        %v1245 = vunpack.c.l.b16 %v490
        %v1246 = vunpack.c.h.b16 %v490
        %v1247 = vunpack.c.l.b16 %v491
        %v1248 = vunpack.c.h.b16 %v491
        %v1249 = vunpack.c.l.b16 %v492
        %v1250 = vunpack.c.h.b16 %v492
        %v1251 = vunpack.c.l.b16 %v493
        %v1252 = vunpack.c.h.b16 %v493
        %v1253 = vunpack.c.l.b16 %v494
        %v1254 = vunpack.c.h.b16 %v494
        %v1255 = vunpack.c.l.b16 %v495
        %v1256 = vunpack.c.h.b16 %v495
        %v1257 = vunpack.c.l.b16 %v496
        %v1258 = vunpack.c.h.b16 %v496
        %v1259 = vunpack.c.l.b16 %v497
        %v1260 = vunpack.c.h.b16 %v497
        %v1261 = vunpack.c.l.b16 %v498
        %v1262 = vunpack.c.h.b16 %v498
        %v1263 = vunpack.c.l.b16 %v499
        %v1264 = vunpack.c.h.b16 %v499
        %v1265 = vunpack.c.l.b16 %v500
        %v1266 = vunpack.c.h.b16 %v500
        %v1267 = vunpack.c.l.b16 %v501
        %v1268 = vunpack.c.h.b16 %v501
        %v1269 = vunpack.c.l.b16 %v502
        %v1270 = vunpack.c.h.b16 %v502
        %v1271 = vunpack.c.l.b16 %v503
        %v1272 = vunpack.c.h.b16 %v503
        %v1273 = vunpack.c.l.b16 %v504
        %v1274 = vunpack.c.h.b16 %v504
        %v1275 = vunpack.c.l.b16 %v505
        %v1276 = vunpack.c.h.b16 %v505
        %v1277 = vunpack.c.l.b16 %v506
        %v1278 = vunpack.c.h.b16 %v506
        %v1279 = vunpack.c.l.b16 %v507
        %v1280 = vunpack.c.h.b16 %v507
        %v1281 = vunpack.c.l.b16 %v508
        %v1282 = vunpack.c.h.b16 %v508
        %v1283 = vunpack.c.l.b16 %v509
        %v1284 = vunpack.c.h.b16 %v509
        %v1285 = vunpack.c.l.b16 %v510
        %v1286 = vunpack.c.h.b16 %v510
        %v1287 = vunpack.c.l.b16 %v511
        %v1288 = vunpack.c.h.b16 %v511
        %v1289 = vunpack.c.l.b16 %v512
        %v1290 = vunpack.c.h.b16 %v512
        %v1291 = vunpack.c.l.b16 %v513
        %v1292 = vunpack.c.h.b16 %v513
        %v1293 = vunpack.c.l.b16 %v514
        %v1294 = vunpack.c.h.b16 %v514
        %v1295 = vunpack.c.l.b16 %v515
        %v1296 = vunpack.c.h.b16 %v515
        %v1297 = vunpack.c.l.b16 %v516
        %v1298 = vunpack.c.h.b16 %v516
        %v1299 = vunpack.c.l.b16 %v517
        %v1300 = vunpack.c.h.b16 %v517
        %v1301 = vunpack.c.l.b16 %v518
        %v1302 = vunpack.c.h.b16 %v518
        %v1303 = vunpack.c.l.b16 %v519
        %v1304 = vunpack.c.h.b16 %v519
        %v1305 = vunpack.c.l.b16 %v520
        %v1306 = vunpack.c.h.b16 %v520
        %v1307 = vunpack.c.l.b16 %v521
        %v1308 = vunpack.c.h.b16 %v521
        %v1309 = vunpack.c.l.b16 %v522
        %v1310 = vunpack.c.h.b16 %v522
        %v1311 = vunpack.c.l.b16 %v523
        %v1312 = vunpack.c.h.b16 %v523
        %v1313 = vunpack.c.l.b16 %v524
        %v1314 = vunpack.c.h.b16 %v524
        %v1315 = vunpack.c.l.b16 %v525
        %v1316 = vunpack.c.h.b16 %v525
        %v1317 = vunpack.c.l.b16 %v526
        %v1318 = vunpack.c.h.b16 %v526
        %v1319 = vunpack.c.l.b16 %v527
        %v1320 = vunpack.c.h.b16 %v527
        %v1321 = vunpack.c.l.b16 %v528
        %v1322 = vunpack.c.h.b16 %v528
        %v1323 = vunpack.c.l.b16 %v529
        %v1324 = vunpack.c.h.b16 %v529
        %v1325 = vunpack.c.l.b16 %v530
        %v1326 = vunpack.c.h.b16 %v530
        %v1327 = vunpack.c.l.b16 %v531
        %v1328 = vunpack.c.h.b16 %v531
        %v1329 = vunpack.c.l.b16 %v532
        %v1330 = vunpack.c.h.b16 %v532
        %v1331 = vunpack.c.l.b16 %v533
        %v1332 = vunpack.c.h.b16 %v533
        %v1333 = vunpack.c.l.b16 %v534
        %v1334 = vunpack.c.h.b16 %v534
        %v1335 = vunpack.c.l.b16 %v535
        %v1336 = vunpack.c.h.b16 %v535
        %v1337 = vunpack.c.l.b16 %v536
        %v1338 = vunpack.c.h.b16 %v536
        %v1339 = vunpack.c.l.b16 %v537
        %v1340 = vunpack.c.h.b16 %v537
        %v1341 = vunpack.c.l.b16 %v538
        %v1342 = vunpack.c.h.b16 %v538
        %v1343 = vunpack.c.l.b16 %v539
        %v1344 = vunpack.c.h.b16 %v539
        %v1345 = vunpack.c.l.b16 %v540
        %v1346 = vunpack.c.h.b16 %v540
        %v1347 = vunpack.c.l.b16 %v541
        %v1348 = vunpack.c.h.b16 %v541
        %v1349 = vunpack.c.l.b16 %v542
        %v1350 = vunpack.c.h.b16 %v542
        %v1351 = vunpack.c.l.b16 %v543
        %v1352 = vunpack.c.h.b16 %v543
        %v1353 = vunpack.c.l.b16 %v544
        %v1354 = vunpack.c.h.b16 %v544
        %v1355 = vunpack.c.l.b16 %v545
        %v1356 = vunpack.c.h.b16 %v545
        %v1357 = vunpack.c.l.b16 %v546
        %v1358 = vunpack.c.h.b16 %v546
        %v1359 = vunpack.c.l.b16 %v547
        %v1360 = vunpack.c.h.b16 %v547
        %v1361 = vunpack.c.l.b16 %v548
        %v1362 = vunpack.c.h.b16 %v548
        %v1363 = vunpack.c.l.b16 %v549
        %v1364 = vunpack.c.h.b16 %v549
        %v1365 = vunpack.c.l.b16 %v550
        %v1366 = vunpack.c.h.b16 %v550
        %v1367 = vunpack.c.l.b16 %v551
        %v1368 = vunpack.c.h.b16 %v551
        %v1369 = vunpack.c.l.b16 %v552
        %v1370 = vunpack.c.h.b16 %v552
        %v1371 = vunpack.c.l.b16 %v553
        %v1372 = vunpack.c.h.b16 %v553
        %v1373 = vunpack.c.l.b16 %v554
        %v1374 = vunpack.c.h.b16 %v554
        %v1375 = vunpack.c.l.b16 %v555
        %v1376 = vunpack.c.h.b16 %v555
        %v1377 = vunpack.c.l.b16 %v556
        %v1378 = vunpack.c.h.b16 %v556
        %v1379 = vunpack.c.l.b16 %v557
        %v1380 = vunpack.c.h.b16 %v557
        %v1381 = vunpack.c.l.b16 %v558
        %v1382 = vunpack.c.h.b16 %v558
        %v1383 = vunpack.c.l.b16 %v559
        %v1384 = vunpack.c.h.b16 %v559
        %v1385 = vunpack.c.l.b16 %v560
        %v1386 = vunpack.c.h.b16 %v560
        %v1387 = vpack.c.b16 %v879, %v875
        %v1388 = vpack.c.b16 %v880, %v876
        %v1389 = vpack.c.b16 %v881, %v877
        %v1390 = vpack.c.b16 %v882, %v878
        %v1391 = vpack.c.b16 %v887, %v883
        %v1392 = vpack.c.b16 %v888, %v884
        %v1393 = vpack.c.b16 %v889, %v885
        %v1394 = vpack.c.b16 %v890, %v886
        %v1395 = vpack.c.b16 %v895, %v891
        %v1396 = vpack.c.b16 %v896, %v892
        %v1397 = vpack.c.b16 %v897, %v893
        %v1398 = vpack.c.b16 %v898, %v894
        %v1399 = vpack.c.b16 %v903, %v899
        %v1400 = vpack.c.b16 %v904, %v900
        %v1401 = vpack.c.b16 %v905, %v901
        %v1402 = vpack.c.b16 %v906, %v902
        %v1403 = vpack.c.b16 %v911, %v907
        %v1404 = vpack.c.b16 %v912, %v908
        %v1405 = vpack.c.b16 %v913, %v909
        %v1406 = vpack.c.b16 %v914, %v910
        %v1407 = vpack.c.b16 %v919, %v915
        %v1408 = vpack.c.b16 %v920, %v916
        %v1409 = vpack.c.b16 %v921, %v917
        %v1410 = vpack.c.b16 %v922, %v918
        %v1411 = vpack.c.b16 %v927, %v923
        %v1412 = vpack.c.b16 %v928, %v924
        %v1413 = vpack.c.b16 %v929, %v925
        %v1414 = vpack.c.b16 %v930, %v926
        %v1415 = vpack.c.b16 %v935, %v931
        %v1416 = vpack.c.b16 %v936, %v932
        %v1417 = vpack.c.b16 %v937, %v933
        %v1418 = vpack.c.b16 %v938, %v934
        %v1419 = vpack.c.b16 %v943, %v939
        %v1420 = vpack.c.b16 %v944, %v940
        %v1421 = vpack.c.b16 %v945, %v941
        %v1422 = vpack.c.b16 %v946, %v942
        %v1423 = vpack.c.b16 %v951, %v947
        %v1424 = vpack.c.b16 %v952, %v948
        %v1425 = vpack.c.b16 %v953, %v949
        %v1426 = vpack.c.b16 %v954, %v950
        %v1427 = vpack.c.b16 %v959, %v955
        %v1428 = vpack.c.b16 %v960, %v956
        %v1429 = vpack.c.b16 %v961, %v957
        %v1430 = vpack.c.b16 %v962, %v958
        %v1431 = vpack.c.b16 %v967, %v963
        %v1432 = vpack.c.b16 %v968, %v964
        %v1433 = vpack.c.b16 %v969, %v965
        %v1434 = vpack.c.b16 %v970, %v966
        %v1435 = vpack.c.b16 %v975, %v971
        %v1436 = vpack.c.b16 %v976, %v972
        %v1437 = vpack.c.b16 %v977, %v973
        %v1438 = vpack.c.b16 %v978, %v974
        %v1439 = vpack.c.b16 %v983, %v979
        %v1440 = vpack.c.b16 %v984, %v980
        %v1441 = vpack.c.b16 %v985, %v981
        %v1442 = vpack.c.b16 %v986, %v982
        %v1443 = vpack.c.b16 %v991, %v987
        %v1444 = vpack.c.b16 %v992, %v988
        %v1445 = vpack.c.b16 %v993, %v989
        %v1446 = vpack.c.b16 %v994, %v990
        %v1447 = vpack.c.b16 %v999, %v995
        %v1448 = vpack.c.b16 %v1000, %v996
        %v1449 = vpack.c.b16 %v1001, %v997
        %v1450 = vpack.c.b16 %v1002, %v998
        %v1451 = vpack.c.b16 %v1007, %v1003
        %v1452 = vpack.c.b16 %v1008, %v1004
        %v1453 = vpack.c.b16 %v1009, %v1005
        %v1454 = vpack.c.b16 %v1010, %v1006
        %v1455 = vpack.c.b16 %v1015, %v1011
        %v1456 = vpack.c.b16 %v1016, %v1012
        %v1457 = vpack.c.b16 %v1017, %v1013
        %v1458 = vpack.c.b16 %v1018, %v1014
        %v1459 = vpack.c.b16 %v1023, %v1019
        %v1460 = vpack.c.b16 %v1024, %v1020
        %v1461 = vpack.c.b16 %v1025, %v1021
        %v1462 = vpack.c.b16 %v1026, %v1022
        %v1463 = vpack.c.b16 %v1031, %v1027
        %v1464 = vpack.c.b16 %v1032, %v1028
        %v1465 = vpack.c.b16 %v1033, %v1029
        %v1466 = vpack.c.b16 %v1034, %v1030
        %v1467 = vpack.c.b16 %v1039, %v1035
        %v1468 = vpack.c.b16 %v1040, %v1036
        %v1469 = vpack.c.b16 %v1041, %v1037
        %v1470 = vpack.c.b16 %v1042, %v1038
        %v1471 = vpack.c.b16 %v1047, %v1043
        %v1472 = vpack.c.b16 %v1048, %v1044
        %v1473 = vpack.c.b16 %v1049, %v1045
        %v1474 = vpack.c.b16 %v1050, %v1046
        %v1475 = vpack.c.b16 %v1055, %v1051
        %v1476 = vpack.c.b16 %v1056, %v1052
        %v1477 = vpack.c.b16 %v1057, %v1053
        %v1478 = vpack.c.b16 %v1058, %v1054
        %v1479 = vpack.c.b16 %v1063, %v1059
        %v1480 = vpack.c.b16 %v1064, %v1060
        %v1481 = vpack.c.b16 %v1065, %v1061
        %v1482 = vpack.c.b16 %v1066, %v1062
        %v1483 = vpack.c.b16 %v1071, %v1067
        %v1484 = vpack.c.b16 %v1072, %v1068
        %v1485 = vpack.c.b16 %v1073, %v1069
        %v1486 = vpack.c.b16 %v1074, %v1070
        %v1487 = vpack.c.b16 %v1079, %v1075
        %v1488 = vpack.c.b16 %v1080, %v1076
        %v1489 = vpack.c.b16 %v1081, %v1077
        %v1490 = vpack.c.b16 %v1082, %v1078
        %v1491 = vpack.c.b16 %v1087, %v1083
        %v1492 = vpack.c.b16 %v1088, %v1084
        %v1493 = vpack.c.b16 %v1089, %v1085
        %v1494 = vpack.c.b16 %v1090, %v1086
        %v1495 = vpack.c.b16 %v1095, %v1091
        %v1496 = vpack.c.b16 %v1096, %v1092
        %v1497 = vpack.c.b16 %v1097, %v1093
        %v1498 = vpack.c.b16 %v1098, %v1094
        %v1499 = vpack.c.b16 %v1103, %v1099
        %v1500 = vpack.c.b16 %v1104, %v1100
        %v1501 = vpack.c.b16 %v1105, %v1101
        %v1502 = vpack.c.b16 %v1106, %v1102
        %v1503 = vpack.c.b16 %v1111, %v1107
        %v1504 = vpack.c.b16 %v1112, %v1108
        %v1505 = vpack.c.b16 %v1113, %v1109
        %v1506 = vpack.c.b16 %v1114, %v1110
        %v1507 = vpack.c.b16 %v1119, %v1115
        %v1508 = vpack.c.b16 %v1120, %v1116
        %v1509 = vpack.c.b16 %v1121, %v1117
        %v1510 = vpack.c.b16 %v1122, %v1118
        %v1511 = vpack.c.b16 %v1127, %v1123
        %v1512 = vpack.c.b16 %v1128, %v1124
        %v1513 = vpack.c.b16 %v1129, %v1125
        %v1514 = vpack.c.b16 %v1130, %v1126
        %v1515 = vpack.c.b16 %v1135, %v1131
        %v1516 = vpack.c.b16 %v1136, %v1132
        %v1517 = vpack.c.b16 %v1137, %v1133
        %v1518 = vpack.c.b16 %v1138, %v1134
        %v1519 = vpack.c.b16 %v1143, %v1139
        %v1520 = vpack.c.b16 %v1144, %v1140
        %v1521 = vpack.c.b16 %v1145, %v1141
        %v1522 = vpack.c.b16 %v1146, %v1142
        %v1523 = vpack.c.b16 %v1151, %v1147
        %v1524 = vpack.c.b16 %v1152, %v1148
        %v1525 = vpack.c.b16 %v1153, %v1149
        %v1526 = vpack.c.b16 %v1154, %v1150
        %v1527 = vpack.c.b16 %v1159, %v1155
        %v1528 = vpack.c.b16 %v1160, %v1156
        %v1529 = vpack.c.b16 %v1161, %v1157
        %v1530 = vpack.c.b16 %v1162, %v1158
        %v1531 = vpack.c.b16 %v1167, %v1163
        %v1532 = vpack.c.b16 %v1168, %v1164
        %v1533 = vpack.c.b16 %v1169, %v1165
        %v1534 = vpack.c.b16 %v1170, %v1166
        %v1535 = vpack.c.b16 %v1175, %v1171
        %v1536 = vpack.c.b16 %v1176, %v1172
        %v1537 = vpack.c.b16 %v1177, %v1173
        %v1538 = vpack.c.b16 %v1178, %v1174
        %v1539 = vpack.c.b16 %v1183, %v1179
        %v1540 = vpack.c.b16 %v1184, %v1180
        %v1541 = vpack.c.b16 %v1185, %v1181
        %v1542 = vpack.c.b16 %v1186, %v1182
        %v1543 = vpack.c.b16 %v1191, %v1187
        %v1544 = vpack.c.b16 %v1192, %v1188
        %v1545 = vpack.c.b16 %v1193, %v1189
        %v1546 = vpack.c.b16 %v1194, %v1190
        %v1547 = vpack.c.b16 %v1199, %v1195
        %v1548 = vpack.c.b16 %v1200, %v1196
        %v1549 = vpack.c.b16 %v1201, %v1197
        %v1550 = vpack.c.b16 %v1202, %v1198
        %v1551 = vpack.c.b16 %v1207, %v1203
        %v1552 = vpack.c.b16 %v1208, %v1204
        %v1553 = vpack.c.b16 %v1209, %v1205
        %v1554 = vpack.c.b16 %v1210, %v1206
        %v1555 = vpack.c.b16 %v1215, %v1211
        %v1556 = vpack.c.b16 %v1216, %v1212
        %v1557 = vpack.c.b16 %v1217, %v1213
        %v1558 = vpack.c.b16 %v1218, %v1214
        %v1559 = vpack.c.b16 %v1223, %v1219
        %v1560 = vpack.c.b16 %v1224, %v1220
        %v1561 = vpack.c.b16 %v1225, %v1221
        %v1562 = vpack.c.b16 %v1226, %v1222
        %v1563 = vpack.c.b16 %v1231, %v1227
        %v1564 = vpack.c.b16 %v1232, %v1228
        %v1565 = vpack.c.b16 %v1233, %v1229
        %v1566 = vpack.c.b16 %v1234, %v1230
        %v1567 = vpack.c.b16 %v1239, %v1235
        %v1568 = vpack.c.b16 %v1240, %v1236
        %v1569 = vpack.c.b16 %v1241, %v1237
        %v1570 = vpack.c.b16 %v1242, %v1238
        %v1571 = vpack.c.b16 %v1247, %v1243
        %v1572 = vpack.c.b16 %v1248, %v1244
        %v1573 = vpack.c.b16 %v1249, %v1245
        %v1574 = vpack.c.b16 %v1250, %v1246
        %v1575 = vpack.c.b16 %v1255, %v1251
        %v1576 = vpack.c.b16 %v1256, %v1252
        %v1577 = vpack.c.b16 %v1257, %v1253
        %v1578 = vpack.c.b16 %v1258, %v1254
        %v1579 = vpack.c.b16 %v1263, %v1259
        %v1580 = vpack.c.b16 %v1264, %v1260
        %v1581 = vpack.c.b16 %v1265, %v1261
        %v1582 = vpack.c.b16 %v1266, %v1262
        %v1583 = vpack.c.b16 %v1271, %v1267
        %v1584 = vpack.c.b16 %v1272, %v1268
        %v1585 = vpack.c.b16 %v1273, %v1269
        %v1586 = vpack.c.b16 %v1274, %v1270
        %v1587 = vpack.c.b16 %v1279, %v1275
        %v1588 = vpack.c.b16 %v1280, %v1276
        %v1589 = vpack.c.b16 %v1281, %v1277
        %v1590 = vpack.c.b16 %v1282, %v1278
        %v1591 = vpack.c.b16 %v1287, %v1283
        %v1592 = vpack.c.b16 %v1288, %v1284
        %v1593 = vpack.c.b16 %v1289, %v1285
        %v1594 = vpack.c.b16 %v1290, %v1286
        %v1595 = vpack.c.b16 %v1295, %v1291
        %v1596 = vpack.c.b16 %v1296, %v1292
        %v1597 = vpack.c.b16 %v1297, %v1293
        %v1598 = vpack.c.b16 %v1298, %v1294
        %v1599 = vpack.c.b16 %v1303, %v1299
        %v1600 = vpack.c.b16 %v1304, %v1300
        %v1601 = vpack.c.b16 %v1305, %v1301
        %v1602 = vpack.c.b16 %v1306, %v1302
        %v1603 = vpack.c.b16 %v1311, %v1307
        %v1604 = vpack.c.b16 %v1312, %v1308
        %v1605 = vpack.c.b16 %v1313, %v1309
        %v1606 = vpack.c.b16 %v1314, %v1310
        %v1607 = vpack.c.b16 %v1319, %v1315
        %v1608 = vpack.c.b16 %v1320, %v1316
        %v1609 = vpack.c.b16 %v1321, %v1317
        %v1610 = vpack.c.b16 %v1322, %v1318
        %v1611 = vpack.c.b16 %v1327, %v1323
        %v1612 = vpack.c.b16 %v1328, %v1324
        %v1613 = vpack.c.b16 %v1329, %v1325
        %v1614 = vpack.c.b16 %v1330, %v1326
        %v1615 = vpack.c.b16 %v1335, %v1331
        %v1616 = vpack.c.b16 %v1336, %v1332
        %v1617 = vpack.c.b16 %v1337, %v1333
        %v1618 = vpack.c.b16 %v1338, %v1334
        %v1619 = vpack.c.b16 %v1343, %v1339
        %v1620 = vpack.c.b16 %v1344, %v1340
        %v1621 = vpack.c.b16 %v1345, %v1341
        %v1622 = vpack.c.b16 %v1346, %v1342
        %v1623 = vpack.c.b16 %v1351, %v1347
        %v1624 = vpack.c.b16 %v1352, %v1348
        %v1625 = vpack.c.b16 %v1353, %v1349
        %v1626 = vpack.c.b16 %v1354, %v1350
        %v1627 = vpack.c.b16 %v1359, %v1355
        %v1628 = vpack.c.b16 %v1360, %v1356
        %v1629 = vpack.c.b16 %v1361, %v1357
        %v1630 = vpack.c.b16 %v1362, %v1358
        %v1631 = vpack.c.b16 %v1367, %v1363
        %v1632 = vpack.c.b16 %v1368, %v1364
        %v1633 = vpack.c.b16 %v1369, %v1365
        %v1634 = vpack.c.b16 %v1370, %v1366
        %v1635 = vpack.c.b16 %v1375, %v1371
        %v1636 = vpack.c.b16 %v1376, %v1372
        %v1637 = vpack.c.b16 %v1377, %v1373
        %v1638 = vpack.c.b16 %v1378, %v1374
        %v1639 = vpack.c.b16 %v1383, %v1379
        %v1640 = vpack.c.b16 %v1384, %v1380
        %v1641 = vpack.c.b16 %v1385, %v1381
        %v1642 = vpack.c.b16 %v1386, %v1382
        %1899 = vmatprep.subr.bf16.mxu0 %v1388
        %1900 = vmatpush1.bf16.msra.mxu0 %v1387
        %1901 = vmatprep.subr.bf16.mxu0 %v1392
        %1902 = vmatpush1.bf16.msra.mxu0 %v1391
        %1903 = vmatprep.subr.bf16.mxu0 %v1396
        %1904 = vmatpush1.bf16.msra.mxu0 %v1395
        %1905 = vmatprep.subr.bf16.mxu0 %v1400
        %1906 = vmatpush1.bf16.msra.mxu0 %v1399
        %1907 = vmatprep.subr.bf16.mxu0 %v1404
        %1908 = vmatpush1.bf16.msra.mxu0 %v1403
        %1909 = vmatprep.subr.bf16.mxu0 %v1408
        %1910 = vmatpush1.bf16.msra.mxu0 %v1407
        %1911 = vmatprep.subr.bf16.mxu0 %v1412
        %1912 = vmatpush1.bf16.msra.mxu0 %v1411
        %1913 = vmatprep.subr.bf16.mxu0 %v1416
        %1914 = vmatpush1.bf16.msra.mxu0 %v1415
        %1915 = vmatprep.subr.bf16.mxu0 %v1420
        %1916 = vmatpush1.bf16.msra.mxu0 %v1419
        %1917 = vmatprep.subr.bf16.mxu0 %v1424
        %1918 = vmatpush1.bf16.msra.mxu0 %v1423
        %1919 = vmatprep.subr.bf16.mxu0 %v1428
        %1920 = vmatpush1.bf16.msra.mxu0 %v1427
        %1921 = vmatprep.subr.bf16.mxu0 %v1432
        %1922 = vmatpush1.bf16.msra.mxu0 %v1431
        %1923 = vmatprep.subr.bf16.mxu0 %v1436
        %1924 = vmatpush1.bf16.msra.mxu0 %v1435
        %1925 = vmatprep.subr.bf16.mxu0 %v1440
        %1926 = vmatpush1.bf16.msra.mxu0 %v1439
        %1927 = vmatprep.subr.bf16.mxu0 %v1444
        %1928 = vmatpush1.bf16.msra.mxu0 %v1443
        %1929 = vmatprep.subr.bf16.mxu0 %v1448
        %1930 = vmatpush1.bf16.msra.mxu0 %v1447
        %1931 = vmatprep.mubr.bf16.mxu0 %v599
        %1932 = vmatmul.mubr.bf16.gmra.mrb[0].mxu0 %v585
        %v1933 = vpop.f32.mrb[0].mxu0
        %v1934 = vadd.f32 0.0, %v1933
        %v1935 = vpop.f32.mrb[0].mxu0
        %v1936 = vadd.f32 0.0, %v1935
        %v1937 = vpop.f32.mrb[0].mxu0
        %v1938 = vpop.f32.mrb[0].mxu0
        %1939 = vdwg.mxu0
        %1940 = vmatprep.subr.bf16.mxu0 %v1452
        %1941 = vmatpush1.bf16.msra.mxu0 %v1451
        %1942 = vmatprep.subr.bf16.mxu0 %v1456
        %1943 = vmatpush1.bf16.msra.mxu0 %v1455
        %1944 = vmatprep.subr.bf16.mxu0 %v1460
        %1945 = vmatpush1.bf16.msra.mxu0 %v1459
        %1946 = vmatprep.subr.bf16.mxu0 %v1464
        %1947 = vmatpush1.bf16.msra.mxu0 %v1463
        %1948 = vmatprep.subr.bf16.mxu0 %v1468
        %1949 = vmatpush1.bf16.msra.mxu0 %v1467
        %1950 = vmatprep.subr.bf16.mxu0 %v1472
        %1951 = vmatpush1.bf16.msra.mxu0 %v1471
        %1952 = vmatprep.subr.bf16.mxu0 %v1476
        %1953 = vmatpush1.bf16.msra.mxu0 %v1475
        %1954 = vmatprep.subr.bf16.mxu0 %v1480
        %1955 = vmatpush1.bf16.msra.mxu0 %v1479
        %1956 = vmatprep.subr.bf16.mxu0 %v1484
        %1957 = vmatpush1.bf16.msra.mxu0 %v1483
        %1958 = vmatprep.subr.bf16.mxu0 %v1488
        %1959 = vmatpush1.bf16.msra.mxu0 %v1487
        %1960 = vmatprep.subr.bf16.mxu0 %v1492
        %1961 = vmatpush1.bf16.msra.mxu0 %v1491
        %1962 = vmatprep.subr.bf16.mxu0 %v1496
        %1963 = vmatpush1.bf16.msra.mxu0 %v1495
        %1964 = vmatprep.subr.bf16.mxu0 %v1500
        %1965 = vmatpush1.bf16.msra.mxu0 %v1499
        %1966 = vmatprep.subr.bf16.mxu0 %v1504
        %1967 = vmatpush1.bf16.msra.mxu0 %v1503
        %1968 = vmatprep.subr.bf16.mxu0 %v1508
        %1969 = vmatpush1.bf16.msra.mxu0 %v1507
        %1970 = vmatprep.subr.bf16.mxu0 %v1512
        %1971 = vmatpush1.bf16.msra.mxu0 %v1511
        %1972 = vmatprep.mubr.bf16.mxu0 %v609
        %1973 = vmatmul.mubr.bf16.gmra.mrb[0].mxu0 %v607
        %v1974 = vpop.f32.mrb[0].mxu0
        %v1975 = vadd.f32 %v1934, %v1974
        %v1976 = vpop.f32.mrb[0].mxu0
        %v1977 = vadd.f32 %v1936, %v1976
        %v1978 = vpop.f32.mrb[0].mxu0
        %v1979 = vpop.f32.mrb[0].mxu0
        %1980 = vdwg.mxu0
        %1981 = vmatprep.subr.bf16.mxu0 %v1516
        %1982 = vmatpush1.bf16.msra.mxu0 %v1515
        %1983 = vmatprep.subr.bf16.mxu0 %v1520
        %1984 = vmatpush1.bf16.msra.mxu0 %v1519
        %1985 = vmatprep.subr.bf16.mxu0 %v1524
        %1986 = vmatpush1.bf16.msra.mxu0 %v1523
        %1987 = vmatprep.subr.bf16.mxu0 %v1528
        %1988 = vmatpush1.bf16.msra.mxu0 %v1527
        %1989 = vmatprep.subr.bf16.mxu0 %v1532
        %1990 = vmatpush1.bf16.msra.mxu0 %v1531
        %1991 = vmatprep.subr.bf16.mxu0 %v1536
        %1992 = vmatpush1.bf16.msra.mxu0 %v1535
        %1993 = vmatprep.subr.bf16.mxu0 %v1540
        %1994 = vmatpush1.bf16.msra.mxu0 %v1539
        %1995 = vmatprep.subr.bf16.mxu0 %v1544
        %1996 = vmatpush1.bf16.msra.mxu0 %v1543
        %1997 = vmatprep.subr.bf16.mxu0 %v1548
        %1998 = vmatpush1.bf16.msra.mxu0 %v1547
        %1999 = vmatprep.subr.bf16.mxu0 %v1552
        %2000 = vmatpush1.bf16.msra.mxu0 %v1551
        %2001 = vmatprep.subr.bf16.mxu0 %v1556
        %2002 = vmatpush1.bf16.msra.mxu0 %v1555
        %2003 = vmatprep.subr.bf16.mxu0 %v1560
        %2004 = vmatpush1.bf16.msra.mxu0 %v1559
        %2005 = vmatprep.subr.bf16.mxu0 %v1564
        %2006 = vmatpush1.bf16.msra.mxu0 %v1563
        %2007 = vmatprep.subr.bf16.mxu0 %v1568
        %2008 = vmatpush1.bf16.msra.mxu0 %v1567
        %2009 = vmatprep.subr.bf16.mxu0 %v1572
        %2010 = vmatpush1.bf16.msra.mxu0 %v1571
        %2011 = vmatprep.subr.bf16.mxu0 %v1576
        %2012 = vmatpush1.bf16.msra.mxu0 %v1575
        %2013 = vmatprep.mubr.bf16.mxu0 %v606
        %2014 = vmatmul.mubr.bf16.gmra.mrb[0].mxu0 %v592
        %v2015 = vpop.f32.mrb[0].mxu0
        %v2016 = vadd.f32 %v1975, %v2015
        %v2017 = vpop.f32.mrb[0].mxu0
        %v2018 = vadd.f32 %v1977, %v2017
        %v2019 = vpop.f32.mrb[0].mxu0
        %v2020 = vpop.f32.mrb[0].mxu0
        %2021 = vdwg.mxu0
        %2022 = vmatprep.subr.bf16.mxu0 %v1580
        %2023 = vmatpush1.bf16.msra.mxu0 %v1579
        %2024 = vmatprep.subr.bf16.mxu0 %v1584
        %2025 = vmatpush1.bf16.msra.mxu0 %v1583
        %2026 = vmatprep.subr.bf16.mxu0 %v1588
        %2027 = vmatpush1.bf16.msra.mxu0 %v1587
        %2028 = vmatprep.subr.bf16.mxu0 %v1592
        %2029 = vmatpush1.bf16.msra.mxu0 %v1591
        %2030 = vmatprep.subr.bf16.mxu0 %v1596
        %2031 = vmatpush1.bf16.msra.mxu0 %v1595
        %2032 = vmatprep.subr.bf16.mxu0 %v1600
        %2033 = vmatpush1.bf16.msra.mxu0 %v1599
        %2034 = vmatprep.subr.bf16.mxu0 %v1604
        %2035 = vmatpush1.bf16.msra.mxu0 %v1603
        %2036 = vmatprep.subr.bf16.mxu0 %v1608
        %2037 = vmatpush1.bf16.msra.mxu0 %v1607
        %2038 = vmatprep.subr.bf16.mxu0 %v1612
        %2039 = vmatpush1.bf16.msra.mxu0 %v1611
        %2040 = vmatprep.subr.bf16.mxu0 %v1616
        %2041 = vmatpush1.bf16.msra.mxu0 %v1615
        %2042 = vmatprep.subr.bf16.mxu0 %v1620
        %2043 = vmatpush1.bf16.msra.mxu0 %v1619
        %2044 = vmatprep.subr.bf16.mxu0 %v1624
        %2045 = vmatpush1.bf16.msra.mxu0 %v1623
        %2046 = vmatprep.subr.bf16.mxu0 %v1628
        %2047 = vmatpush1.bf16.msra.mxu0 %v1627
        %2048 = vmatprep.subr.bf16.mxu0 %v1632
        %2049 = vmatpush1.bf16.msra.mxu0 %v1631
        %2050 = vmatprep.subr.bf16.mxu0 %v1636
        %2051 = vmatpush1.bf16.msra.mxu0 %v1635
        %2052 = vmatprep.subr.bf16.mxu0 %v1640
        %2053 = vmatpush1.bf16.msra.mxu0 %v1639
        %2054 = vmatprep.mubr.bf16.mxu0 %v610
        %2055 = vmatmul.mubr.bf16.gmra.mrb[0].mxu0 %v608
        %v2056 = vpop.f32.mrb[0].mxu0
        %v2057 = vadd.f32 %v2016, %v2056
        %v2058 = vpop.f32.mrb[0].mxu0
        %v2059 = vadd.f32 %v2018, %v2058
        %v2060 = vpop.f32.mrb[0].mxu0
        %v2061 = vpop.f32.mrb[0].mxu0
        %2062 = vdwg.mxu0
        %2063 = vmatprep.subr.bf16.mxu0 %v1390
        %2064 = vmatpush1.bf16.msra.mxu0 %v1389
        %2065 = vmatprep.subr.bf16.mxu0 %v1394
        %2066 = vmatpush1.bf16.msra.mxu0 %v1393
        %2067 = vmatprep.subr.bf16.mxu0 %v1398
        %2068 = vmatpush1.bf16.msra.mxu0 %v1397
        %2069 = vmatprep.subr.bf16.mxu0 %v1402
        %2070 = vmatpush1.bf16.msra.mxu0 %v1401
        %2071 = vmatprep.subr.bf16.mxu0 %v1406
        %2072 = vmatpush1.bf16.msra.mxu0 %v1405
        %2073 = vmatprep.subr.bf16.mxu0 %v1410
        %2074 = vmatpush1.bf16.msra.mxu0 %v1409
        %2075 = vmatprep.subr.bf16.mxu0 %v1414
        %2076 = vmatpush1.bf16.msra.mxu0 %v1413
        %2077 = vmatprep.subr.bf16.mxu0 %v1418
        %2078 = vmatpush1.bf16.msra.mxu0 %v1417
        %2079 = vmatprep.subr.bf16.mxu0 %v1422
        %2080 = vmatpush1.bf16.msra.mxu0 %v1421
        %2081 = vmatprep.subr.bf16.mxu0 %v1426
        %2082 = vmatpush1.bf16.msra.mxu0 %v1425
        %2083 = vmatprep.subr.bf16.mxu0 %v1430
        %2084 = vmatpush1.bf16.msra.mxu0 %v1429
        %2085 = vmatprep.subr.bf16.mxu0 %v1434
        %2086 = vmatpush1.bf16.msra.mxu0 %v1433
        %2087 = vmatprep.subr.bf16.mxu0 %v1438
        %2088 = vmatpush1.bf16.msra.mxu0 %v1437
        %2089 = vmatprep.subr.bf16.mxu0 %v1442
        %2090 = vmatpush1.bf16.msra.mxu0 %v1441
        %2091 = vmatprep.subr.bf16.mxu0 %v1446
        %2092 = vmatpush1.bf16.msra.mxu0 %v1445
        %2093 = vmatprep.subr.bf16.mxu0 %v1450
        %2094 = vmatpush1.bf16.msra.mxu0 %v1449
        %2095 = vmatprep.mubr.bf16.mxu0 %v599
        %2096 = vmatmul.mubr.bf16.gmra.mrb[0].mxu0 %v585
        %v2097 = vpop.f32.mrb[0].mxu0
        %v2098 = vadd.f32 0.0, %v2097
        %v2099 = vpop.f32.mrb[0].mxu0
        %v2100 = vadd.f32 0.0, %v2099
        %v2101 = vpop.f32.mrb[0].mxu0
        %v2102 = vpop.f32.mrb[0].mxu0
        %2103 = vdwg.mxu0
        %2104 = vmatprep.subr.bf16.mxu0 %v1454
        %2105 = vmatpush1.bf16.msra.mxu0 %v1453
        %2106 = vmatprep.subr.bf16.mxu0 %v1458
        %2107 = vmatpush1.bf16.msra.mxu0 %v1457
        %2108 = vmatprep.subr.bf16.mxu0 %v1462
        %2109 = vmatpush1.bf16.msra.mxu0 %v1461
        %2110 = vmatprep.subr.bf16.mxu0 %v1466
        %2111 = vmatpush1.bf16.msra.mxu0 %v1465
        %2112 = vmatprep.subr.bf16.mxu0 %v1470
        %2113 = vmatpush1.bf16.msra.mxu0 %v1469
        %2114 = vmatprep.subr.bf16.mxu0 %v1474
        %2115 = vmatpush1.bf16.msra.mxu0 %v1473
        %2116 = vmatprep.subr.bf16.mxu0 %v1478
        %2117 = vmatpush1.bf16.msra.mxu0 %v1477
        %2118 = vmatprep.subr.bf16.mxu0 %v1482
        %2119 = vmatpush1.bf16.msra.mxu0 %v1481
        %2120 = vmatprep.subr.bf16.mxu0 %v1486
        %2121 = vmatpush1.bf16.msra.mxu0 %v1485
        %2122 = vmatprep.subr.bf16.mxu0 %v1490
        %2123 = vmatpush1.bf16.msra.mxu0 %v1489
        %2124 = vmatprep.subr.bf16.mxu0 %v1494
        %2125 = vmatpush1.bf16.msra.mxu0 %v1493
        %2126 = vmatprep.subr.bf16.mxu0 %v1498
        %2127 = vmatpush1.bf16.msra.mxu0 %v1497
        %2128 = vmatprep.subr.bf16.mxu0 %v1502
        %2129 = vmatpush1.bf16.msra.mxu0 %v1501
        %2130 = vmatprep.subr.bf16.mxu0 %v1506
        %2131 = vmatpush1.bf16.msra.mxu0 %v1505
        %2132 = vmatprep.subr.bf16.mxu0 %v1510
        %2133 = vmatpush1.bf16.msra.mxu0 %v1509
        %2134 = vmatprep.subr.bf16.mxu0 %v1514
        %2135 = vmatpush1.bf16.msra.mxu0 %v1513
        %2136 = vmatprep.mubr.bf16.mxu0 %v609
        %2137 = vmatmul.mubr.bf16.gmra.mrb[0].mxu0 %v607
        %v2138 = vpop.f32.mrb[0].mxu0
        %v2139 = vadd.f32 %v2098, %v2138
        %v2140 = vpop.f32.mrb[0].mxu0
        %v2141 = vadd.f32 %v2100, %v2140
        %v2142 = vpop.f32.mrb[0].mxu0
        %v2143 = vpop.f32.mrb[0].mxu0
        %2144 = vdwg.mxu0
        %2145 = vmatprep.subr.bf16.mxu0 %v1518
        %2146 = vmatpush1.bf16.msra.mxu0 %v1517
        %2147 = vmatprep.subr.bf16.mxu0 %v1522
        %2148 = vmatpush1.bf16.msra.mxu0 %v1521
        %2149 = vmatprep.subr.bf16.mxu0 %v1526
        %2150 = vmatpush1.bf16.msra.mxu0 %v1525
        %2151 = vmatprep.subr.bf16.mxu0 %v1530
        %2152 = vmatpush1.bf16.msra.mxu0 %v1529
        %2153 = vmatprep.subr.bf16.mxu0 %v1534
        %2154 = vmatpush1.bf16.msra.mxu0 %v1533
        %2155 = vmatprep.subr.bf16.mxu0 %v1538
        %2156 = vmatpush1.bf16.msra.mxu0 %v1537
        %2157 = vmatprep.subr.bf16.mxu0 %v1542
        %2158 = vmatpush1.bf16.msra.mxu0 %v1541
        %2159 = vmatprep.subr.bf16.mxu0 %v1546
        %2160 = vmatpush1.bf16.msra.mxu0 %v1545
        %2161 = vmatprep.subr.bf16.mxu0 %v1550
        %2162 = vmatpush1.bf16.msra.mxu0 %v1549
        %2163 = vmatprep.subr.bf16.mxu0 %v1554
        %2164 = vmatpush1.bf16.msra.mxu0 %v1553
        %2165 = vmatprep.subr.bf16.mxu0 %v1558
        %2166 = vmatpush1.bf16.msra.mxu0 %v1557
        %2167 = vmatprep.subr.bf16.mxu0 %v1562
        %2168 = vmatpush1.bf16.msra.mxu0 %v1561
        %2169 = vmatprep.subr.bf16.mxu0 %v1566
        %2170 = vmatpush1.bf16.msra.mxu0 %v1565
        %2171 = vmatprep.subr.bf16.mxu0 %v1570
        %2172 = vmatpush1.bf16.msra.mxu0 %v1569
        %2173 = vmatprep.subr.bf16.mxu0 %v1574
        %2174 = vmatpush1.bf16.msra.mxu0 %v1573
        %2175 = vmatprep.subr.bf16.mxu0 %v1578
        %2176 = vmatpush1.bf16.msra.mxu0 %v1577
        %2177 = vmatprep.mubr.bf16.mxu0 %v606
        %2178 = vmatmul.mubr.bf16.gmra.mrb[0].mxu0 %v592
        %v2179 = vpop.f32.mrb[0].mxu0
        %v2180 = vadd.f32 %v2139, %v2179
        %v2181 = vpop.f32.mrb[0].mxu0
        %v2182 = vadd.f32 %v2141, %v2181
        %v2183 = vpop.f32.mrb[0].mxu0
        %v2184 = vpop.f32.mrb[0].mxu0
        %2185 = vdwg.mxu0
        %2186 = vmatprep.subr.bf16.mxu0 %v1582
        %2187 = vmatpush1.bf16.msra.mxu0 %v1581
        %2188 = vmatprep.subr.bf16.mxu0 %v1586
        %2189 = vmatpush1.bf16.msra.mxu0 %v1585
        %2190 = vmatprep.subr.bf16.mxu0 %v1590
        %2191 = vmatpush1.bf16.msra.mxu0 %v1589
        %2192 = vmatprep.subr.bf16.mxu0 %v1594
        %2193 = vmatpush1.bf16.msra.mxu0 %v1593
        %2194 = vmatprep.subr.bf16.mxu0 %v1598
        %2195 = vmatpush1.bf16.msra.mxu0 %v1597
        %2196 = vmatprep.subr.bf16.mxu0 %v1602
        %2197 = vmatpush1.bf16.msra.mxu0 %v1601
        %2198 = vmatprep.subr.bf16.mxu0 %v1606
        %2199 = vmatpush1.bf16.msra.mxu0 %v1605
        %2200 = vmatprep.subr.bf16.mxu0 %v1610
        %2201 = vmatpush1.bf16.msra.mxu0 %v1609
        %2202 = vmatprep.subr.bf16.mxu0 %v1614
        %2203 = vmatpush1.bf16.msra.mxu0 %v1613
        %2204 = vmatprep.subr.bf16.mxu0 %v1618
        %2205 = vmatpush1.bf16.msra.mxu0 %v1617
        %2206 = vmatprep.subr.bf16.mxu0 %v1622
        %2207 = vmatpush1.bf16.msra.mxu0 %v1621
        %2208 = vmatprep.subr.bf16.mxu0 %v1626
        %2209 = vmatpush1.bf16.msra.mxu0 %v1625
        %2210 = vmatprep.subr.bf16.mxu0 %v1630
        %2211 = vmatpush1.bf16.msra.mxu0 %v1629
        %2212 = vmatprep.subr.bf16.mxu0 %v1634
        %2213 = vmatpush1.bf16.msra.mxu0 %v1633
        %2214 = vmatprep.subr.bf16.mxu0 %v1638
        %2215 = vmatpush1.bf16.msra.mxu0 %v1637
        %2216 = vmatprep.subr.bf16.mxu0 %v1642
        %2217 = vmatpush1.bf16.msra.mxu0 %v1641
        %2218 = vmatprep.mubr.bf16.mxu0 %v610
        %2219 = vmatmul.mubr.bf16.gmra.mrb[0].mxu0 %v608
        %v2220 = vpop.f32.mrb[0].mxu0
        %v2221 = vadd.f32 %v2180, %v2220
        %v2222 = vpop.f32.mrb[0].mxu0
        %v2223 = vadd.f32 %v2182, %v2222
        %v2224 = vpop.f32.mrb[0].mxu0
        %v2225 = vpop.f32.mrb[0].mxu0
        %2226 = vdwg.mxu0
        %v2231 = vcombine.low %v2057, %v2059
        %v2232 = vcombine.low %v2221, %v2223
        %v2234 = vunpack.c.l.s4 1983009808
        %v2235 = vunpack.c.0.s8 %v2234
        %v2236 = vlaneseq
        %v2237 = vshrl.u32 %v2236, 7
        %v2238 = vsub.s32 %v2235, %v2237
        %v2239 = vrot.slane %v2231, %v2238
        %v2241 = vunpack.c.l.s4 1983009808
        %v2242 = vunpack.c.0.s8 %v2241
        %v2243 = vlaneseq
        %v2244 = vshrl.u32 %v2243, 7
        %v2245 = vsub.s32 %v2242, %v2244
        %v2246 = vrot.slane %v2232, %v2245
        %v2247 = vcombine.low %v2239, %v2246
        %v2249 = vadd.f32 %v303, %v2247
        %2250 = vst [vmem:[#allocation2] sm:$0xff] %v2249
        %p2251 = scmp.eq.s32.totalorder %s27, 3
        // Predicated region
        $region45: #{cnn_forward.14} parent=31 // pred_check
          %p2252 = pneg %p2251
        $region46: #{cnn_forward.14} parent=31 // pred_check_branch
          %2254 = sbr.rel (%p2252) target = $region48
        $region47: #{cnn_forward.14} parent=31 // pred_region
          %v2255 = vld [vmem:[#allocation2] sm:$0xff]
          %v2256 = vld [vmem:[%s238] sm:$0xf]
          %v2258 = vlaneseq
          %v2259 = vshrl.u32 %v2258, 7
          %v2260 = vsub.s32 0, %v2259
          %v2261 = vrot.slane %v2256, %v2260
          %v2262 = vlaneseq
          %v2263 = vshrl.u32 %v2262, 7
          %v2264 = vsub.s32 1, %v2263
          %v2265 = vrot.slane %v2256, %v2264
          %v2266 = vlaneseq
          %v2267 = vshrl.u32 %v2266, 7
          %v2268 = vsub.s32 2, %v2267
          %v2269 = vrot.slane %v2256, %v2268
          %v2270 = vlaneseq
          %v2271 = vshrl.u32 %v2270, 7
          %v2272 = vsub.s32 3, %v2271
          %v2273 = vrot.slane %v2256, %v2272
          %v2274 = vcombine.low %v2261, %v2265
          %v2275 = vcombine.low %v2269, %v2273
          %v2277 = vunpack.c.l.s4 1983009808
          %v2278 = vunpack.c.0.s8 %v2277
          %v2279 = vlaneseq
          %v2280 = vshrl.u32 %v2279, 7
          %v2281 = vsub.s32 %v2278, %v2280
          %v2282 = vrot.slane %v2274, %v2281
          %v2284 = vunpack.c.l.s4 1983009808
          %v2285 = vunpack.c.0.s8 %v2284
          %v2286 = vlaneseq
          %v2287 = vshrl.u32 %v2286, 7
          %v2288 = vsub.s32 %v2285, %v2287
          %v2289 = vrot.slane %v2275, %v2288
          %v2290 = vcombine.low %v2282, %v2289
          %v2292 = vadd.f32 %v2255, %v2290
          %v2293 = vmax.f32 %v2292, 0.0
          %v2295 = vcombine.high %v2293, %v2293
          %v2297 = vunpack.c.l.s4 1983009808
          %v2298 = vunpack.c.0.s8 %v2297
          %v2299 = vlaneseq
          %v2300 = vshrl.u32 %v2299, 7
          %v2301 = vsub.s32 %v2298, %v2300
          %v2302 = vrot.slane %v2293, %v2301
          %v2304 = vunpack.c.l.s4 1983009808
          %v2305 = vunpack.c.0.s8 %v2304
          %v2306 = vlaneseq
          %v2307 = vshrl.u32 %v2306, 7
          %v2308 = vsub.s32 %v2305, %v2307
          %v2309 = vrot.slane %v2295, %v2308
          %v2310 = vcombine.high %v2302, %v2302
          %v2311 = vcombine.high %v2309, %v2309
          %v2316 = vpack.c.bf16 %v2302, %v2302
          %v2317 = vpack.c.bf16 %v2310, %v2310
          %v2318 = vpack.c.bf16 %v2309, %v2309
          %v2319 = vpack.c.bf16 %v2311, %v2311
          %v2324 = vcombine.low %v2316, %v2317
          %v2325 = vcombine.low %v2318, %v2319
          %v2327 = vunpack.c.l.s4 1966171168
          %v2328 = vunpack.c.0.s8 %v2327
          %v2329 = vlaneseq
          %v2330 = vshrl.u32 %v2329, 7
          %v2331 = vsub.s32 %v2328, %v2330
          %v2332 = vrot.slane %v2324, %v2331
          %v2334 = vunpack.c.l.s4 1966171168
          %v2335 = vunpack.c.0.s8 %v2334
          %v2336 = vlaneseq
          %v2337 = vshrl.u32 %v2336, 7
          %v2338 = vsub.s32 %v2335, %v2337
          %v2339 = vrot.slane %v2325, %v2338
          %v2340 = vcombine.low %v2332, %v2339
          %v2342 = vunpack.c.l.s4 1966171168
          %v2343 = vunpack.c.0.s8 %v2342
          %v2344 = vlaneseq
          %v2345 = vshrl.u32 %v2344, 7
          %v2346 = vsub.s32 %v2343, %v2345
          %v2347 = vrot.slane %v2340, %v2346
          %2349 = vst [vmem:[%s296] sm:$0xf] %v2347
        $region48: #{cnn_forward.14} parent=31 // pred_fallthru
          _
        %s2350 = smul.u32 4, %s26
        %p2351 = scmp.lt.s32.totalorder %s25, 0
        %s2352 = scalar_select %p2351, %s25, 0
        %p2353 = scmp.lt.s32.totalorder %s2350, 15
        %s2354 = scalar_select %p2353, %s2350, 15
        %s2355 = smul.addr %s2352, 16
        %s2356 = sadd.s32 %s2354, %s2355
        %s2357 = scalar_lea.vmem %s3, %s2356
        // Predicated region
        $region49: #{cnn_forward.14} parent=31 // pred_check
          %p2358 = pneg %p141
        $region50: #{cnn_forward.14} parent=31 // pred_check_branch
          %2360 = sbr.rel (%p2358) target = $region52
        $region51: #{cnn_forward.14} parent=31 // pred_region
          %s2361 = smul.u32 4, %s26
        $region52: #{cnn_forward.14} parent=31 // pred_fallthru
          _
      $region32: #{cnn_forward.14} parent=5 // pred_fallthru
        _
      %p2362 = scmp.le.s32.totalorder 2, %s15
      // Predicated region
      $region53: #{cnn_forward.14} parent=5 // pred_check
        %p2363 = pneg %p2362
      $region54: #{cnn_forward.14} parent=5 // pred_check_branch
        %2365 = sbr.rel (%p2363) target = $region56
      $region55: #{cnn_forward.14} parent=5 // pred_region
        %s2366 = ssub.s32 %s15, 2
        // Predicated region
        $region57: #{cnn_forward.14} parent=55 // pred_check
          %p2367 = pneg %p147
        $region58: #{cnn_forward.14} parent=55 // pred_check_branch
          %2369 = sbr.rel (%p2367) target = $region60
        $region59: #{cnn_forward.14} parent=55 // pred_region
          %s2370 = smul.u32 4, %s29
          %p2371 = scmp.lt.s32.totalorder %s28, 0
          %s2372 = scalar_select %p2371, %s28, 0
          %p2373 = scmp.lt.s32.totalorder %s2370, 15
          %s2374 = scalar_select %p2373, %s2370, 15
          %s2375 = smul.addr %s2372, 16
          %s2376 = sadd.s32 %s2374, %s2375
          %s2377 = scalar_lea.vmem %s3, %s2376
        $region60: #{cnn_forward.14} parent=55 // pred_fallthru
          _
      $region56: #{cnn_forward.14} parent=5 // pred_fallthru
        _
    $region6: #{cnn_forward.14} parent=1 // loop_footer
      %s19 = sadd.s32 1, %s15
    $region7: #{cnn_forward.14} parent=1 // loop_footer_branch
      %14 = sbr.rel target = $region3
    $region8: #{cnn_forward.14} parent=1 // loop_exit
      _
    %2378 = vsyncpa [#allocation4], 1
    %s2379 = scalar_lea.sflag [#allocation4], 1
    %2380 = vsyncpa %s2379, 1
    %2381 = vsyncpa [#allocation6], 1
    %s2382 = scalar_lea.sflag [#allocation6], 1
    %2383 = vsyncpa %s2382, 1

</llo_original>
